<compile_context>
chip_gen: v5e
topology: v5e:2x2
jax: 0.10.0
libtpu: 0.0.40
codegen_flags: <defaults>
</compile_context>

<pallas_src>
import numpy as np
import jax
import jax.numpy as jnp
from jax.experimental import pallas as pl
from jax.experimental.pallas import tpu as pltpu

LATENT_DIM = 12

S1, S1P = 668, 639
S2, S2P = 639, 581
S3 = 465
M1, M2 = 58, 116           # zero margins for conv2 / conv3 padding reads
P1M_LEN = M1 + S1P + M1    # 755
P2M_LEN = M2 + S2P         # 697 (conv3 never reads past the valid span on the right)


def make_params(latent_dim=LATENT_DIM):
    """Deterministic synthetic parameters, PyTorch layouts."""
    key = jax.random.PRNGKey(0)
    ks = jax.random.split(key, 8)

    def init(k, shape, fan_in):
        return jax.random.normal(k, shape, jnp.float32) / np.sqrt(fan_in)

    return dict(
        w1=init(ks[0], (16, 1, 5, 5), 1 * 25),   b1=init(ks[1], (16,), 1 * 25),
        w2=init(ks[2], (32, 16, 3, 3), 16 * 9),  b2=init(ks[3], (32,), 16 * 9),
        w3=init(ks[4], (64, 32, 3, 3), 32 * 9),  b3=init(ks[5], (64,), 32 * 9),
        wfc=init(ks[6], (latent_dim, 576), 576), bfc=init(ks[7], (latent_dim,), 576),
    )


def prep_kernel_params(p):
    """Rearrange PyTorch-layout weights into kernel-friendly small tensors."""
    w1 = np.asarray(p["w1"]).reshape(16, 25)                                  # (co, kh*5+kw)
    w2 = np.transpose(np.asarray(p["w2"]), (2, 3, 0, 1)).reshape(9, 32, 16)   # (tap, co, ci)
    w3 = np.transpose(np.asarray(p["w3"]), (2, 3, 0, 1)).reshape(9, 64, 32)   # (tap, co, ci)
    # fc weight: PyTorch flatten index c*9 + (i*3+j)  ->  column order p*64 + c
    wfc = np.asarray(p["wfc"]).reshape(LATENT_DIM, 64, 9).transpose(0, 2, 1)
    wfc = wfc.reshape(LATENT_DIM, 576)

    mask1 = np.zeros((1, S1P), np.float32)   # valid pool1 positions (12x12 @ dil 2)
    for i in range(12):
        for j in range(12):
            mask1[0, 2 * i * 28 + 2 * j] = 1.0
    mask2 = np.zeros((1, S2P), np.float32)   # valid pool2 positions (6x6 @ dil 4)
    for i in range(6):
        for j in range(6):
            mask2[0, 4 * i * 28 + 4 * j] = 1.0

    return dict(
        w1=jnp.asarray(w1),  b1=jnp.asarray(p["b1"]).reshape(16, 1),
        w2=jnp.asarray(w2),  b2=jnp.asarray(p["b2"]).reshape(32, 1),
        w3=jnp.asarray(w3),  b3=jnp.asarray(p["b3"]).reshape(64, 1),
        wfc=jnp.asarray(wfc), bfc=jnp.asarray(p["bfc"]).reshape(LATENT_DIM, 1),
        mask1=jnp.asarray(mask1), mask2=jnp.asarray(mask2),
    )


def encoder_kernel(x_ref, w1_ref, b1_ref, w2_ref, b2_ref, w3_ref, b3_ref,
                   wfc_ref, bfc_ref, m1_ref, m2_ref,
                   out_ref, p1m_ref, p2m_ref):
    x = x_ref[0]               # (1, 784)  one image, flat pitch-28
    w1 = w1_ref[...]           # (16, 25)

    # --- conv1 (1->16, k5, s1, p0) + bias + ReLU ------------------------------
    acc1 = jnp.zeros((16, S1), jnp.float32)
    for kh in range(5):
        for kw in range(5):
            off = kh * 28 + kw
            t = kh * 5 + kw
            acc1 = acc1 + w1[:, t:t + 1] * x[:, off:off + S1]
    a1 = jnp.maximum(acc1 + b1_ref[...], 0.0)                 # (16, 668)

    # --- maxpool 2x2 s2  (valid results on the dilation-2 grid) --------------
    p1 = jnp.maximum(jnp.maximum(a1[:, 0:S1P], a1[:, 1:1 + S1P]),
                     jnp.maximum(a1[:, 28:28 + S1P], a1[:, 29:29 + S1P]))

    # mask garbage lanes, drop into a zero-margined canvas for padded conv2
    p1m_ref[...] = jnp.zeros(p1m_ref.shape, p1m_ref.dtype)
    p1m_ref[:, M1:M1 + S1P] = p1 * m1_ref[...]

    # --- conv2 (16->32, k3, s1, p1) + bias + ReLU  (dilation 2) ---------------
    acc2 = jnp.zeros((32, S2), jnp.float32)
    for kh in range(3):
        for kw in range(3):
            start = M1 + 2 * (kh - 1) * 28 + 2 * (kw - 1)
            t = kh * 3 + kw
            acc2 = acc2 + jnp.dot(w2_ref[t], p1m_ref[:, start:start + S2],
                                  preferred_element_type=jnp.float32)
    a2 = jnp.maximum(acc2 + b2_ref[...], 0.0)                 # (32, 639)

    # --- maxpool 2x2 s2 on the dilation-2 grid -> dilation 4 ------------------
    p2 = jnp.maximum(jnp.maximum(a2[:, 0:S2P], a2[:, 2:2 + S2P]),
                     jnp.maximum(a2[:, 56:56 + S2P], a2[:, 58:58 + S2P]))

    p2m_ref[...] = jnp.zeros(p2m_ref.shape, p2m_ref.dtype)
    p2m_ref[:, M2:M2 + S2P] = p2 * m2_ref[...]

    # --- conv3 (32->64, k3, s2, p1) + bias + ReLU  (output @ dilation 8) ------
    acc3 = jnp.zeros((64, S3), jnp.float32)
    for kh in range(3):
        for kw in range(3):
            start = M2 + 4 * (kh - 1) * 28 + 4 * (kw - 1)
            t = kh * 3 + kw
            acc3 = acc3 + jnp.dot(w3_ref[t], p2m_ref[:, start:start + S3],
                                  preferred_element_type=jnp.float32)
    a3 = jnp.maximum(acc3 + b3_ref[...], 0.0)                 # (64, 465)

    # --- flatten (3x3x64 valid positions) + fc --------------------------------
    wfc = wfc_ref[...]                                        # (12, 576), cols = p*64 + c
    acc = bfc_ref[...]                                        # (12, 1)
    for i in range(3):
        for j in range(3):
            p = i * 3 + j
            s = 8 * i * 28 + 8 * j
            acc = acc + jnp.dot(wfc[:, p * 64:(p + 1) * 64], a3[:, s:s + 1],
                                preferred_element_type=jnp.float32)
    out_ref[...] = acc[None]                                  # (1, 12, 1)


def encoder_forward(x, kparams):
    B = x.shape[0]
    x_flat = x.reshape(B, 1, 28 * 28).astype(jnp.float32)

    weight_args = (kparams["w1"], kparams["b1"], kparams["w2"], kparams["b2"],
                   kparams["w3"], kparams["b3"], kparams["wfc"], kparams["bfc"],
                   kparams["mask1"], kparams["mask2"])

    def _const_spec(arr):
        nd = arr.ndim
        return pl.BlockSpec(arr.shape, lambda b, _nd=nd: (0,) * _nd)

    grid_spec = pltpu.PrefetchScalarGridSpec(
        num_scalar_prefetch=0,
        grid=(B,),
        in_specs=[pl.BlockSpec((1, 1, 28 * 28), lambda b: (b, 0, 0))]
                 + [_const_spec(a) for a in weight_args],
        out_specs=pl.BlockSpec((1, LATENT_DIM, 1), lambda b: (b, 0, 0)),
        scratch_shapes=[pltpu.VMEM((16, P1M_LEN), jnp.float32),
                        pltpu.VMEM((32, P2M_LEN), jnp.float32)],
    )

    out = pl.pallas_call(
        encoder_kernel,
        out_shape=jax.ShapeDtypeStruct((B, LATENT_DIM, 1), jnp.float32),
        grid_spec=grid_spec,
        compiler_params=pltpu.CompilerParams(
            dimension_semantics=("parallel",)),
    )(x_flat, *weight_args)
    return out.reshape(B, LATENT_DIM)


encoder_forward_jit = jax.jit(encoder_forward)


def encoder_reference(x, p):
    """Pure-JAX reference matching the PyTorch module (for self-check)."""
    def conv(h, w, b, stride, pad):
        y = jax.lax.conv_general_dilated(
            h, w, window_strides=(stride, stride),
            padding=[(pad, pad), (pad, pad)],
            dimension_numbers=("NCHW", "OIHW", "NCHW"))
        return y + b[None, :, None, None]

    def maxpool(h):
        return jax.lax.reduce_window(h, -jnp.inf, jax.lax.max,
                                     (1, 1, 2, 2), (1, 1, 2, 2), "VALID")

    h = jnp.maximum(conv(x, p["w1"], p["b1"], 1, 0), 0.0)
    h = maxpool(h)
    h = jnp.maximum(conv(h, p["w2"], p["b2"], 1, 1), 0.0)
    h = maxpool(h)
    h = jnp.maximum(conv(h, p["w3"], p["b3"], 2, 1), 0.0)
    h = h.reshape(x.shape[0], -1)
    return h @ p["wfc"].T + p["bfc"]


if __name__ == "__main__":
    raw = make_params(LATENT_DIM)
    kparams = prep_kernel_params(raw)

    x = jax.random.normal(jax.random.PRNGKey(0), (2, 1, 28, 28), jnp.float32)

    out = jax.block_until_ready(encoder_forward_jit(x, kparams))
    assert out.shape == (2, LATENT_DIM), out.shape
    assert bool(jnp.all(jnp.isfinite(out)))

    ref = jax.block_until_ready(encoder_reference(x, raw))
    max_err = float(jnp.max(jnp.abs(out - ref)))
    assert bool(jnp.allclose(out, ref, atol=1e-4, rtol=1e-4)), max_err

    print("KERNEL_OK")
</pallas_src>

<mosaic_0001>
module attributes {stable_mosaic.version = 11 : i64} {
  func.func @encoder_kernel(%arg0: i32, %arg1: memref<1x1x784xf32, #tpu.memory_space<vmem>>, %arg2: memref<16x25xf32, #tpu.memory_space<vmem>>, %arg3: memref<16x1xf32, #tpu.memory_space<vmem>>, %arg4: memref<9x32x16xf32, #tpu.memory_space<vmem>>, %arg5: memref<32x1xf32, #tpu.memory_space<vmem>>, %arg6: memref<9x64x32xf32, #tpu.memory_space<vmem>>, %arg7: memref<64x1xf32, #tpu.memory_space<vmem>>, %arg8: memref<12x576xf32, #tpu.memory_space<vmem>>, %arg9: memref<12x1xf32, #tpu.memory_space<vmem>>, %arg10: memref<1x639xf32, #tpu.memory_space<vmem>>, %arg11: memref<1x581xf32, #tpu.memory_space<vmem>>, %arg12: memref<1x12x1xf32, #tpu.memory_space<vmem>>, %arg13: memref<16x755xf32, #tpu.memory_space<vmem>>, %arg14: memref<32x697xf32, #tpu.memory_space<vmem>>) attributes {dimension_semantics = [#tpu.dimension_semantics<parallel>], iteration_bounds = array<i64: 2>, scalar_prefetch = 0 : i64, scratch_operands = 2 : i64, tpu.core_type = #tpu.core_type<tc>, window_params = [{transform_indices = @transform_0, window_bounds = array<i64: 1, 1, 784>}, {pipeline_mode = #tpu.pipeline_mode<synchronous>, transform_indices = @transform_1, window_bounds = array<i64: 16, 25>}, {pipeline_mode = #tpu.pipeline_mode<synchronous>, transform_indices = @transform_2, window_bounds = array<i64: 16, 1>}, {pipeline_mode = #tpu.pipeline_mode<synchronous>, transform_indices = @transform_3, window_bounds = array<i64: 9, 32, 16>}, {pipeline_mode = #tpu.pipeline_mode<synchronous>, transform_indices = @transform_4, window_bounds = array<i64: 32, 1>}, {pipeline_mode = #tpu.pipeline_mode<synchronous>, transform_indices = @transform_5, window_bounds = array<i64: 9, 64, 32>}, {pipeline_mode = #tpu.pipeline_mode<synchronous>, transform_indices = @transform_6, window_bounds = array<i64: 64, 1>}, {pipeline_mode = #tpu.pipeline_mode<synchronous>, transform_indices = @transform_7, window_bounds = array<i64: 12, 576>}, {pipeline_mode = #tpu.pipeline_mode<synchronous>, transform_indices = @transform_8, window_bounds = array<i64: 12, 1>}, {pipeline_mode = #tpu.pipeline_mode<synchronous>, transform_indices = @transform_9, window_bounds = array<i64: 1, 639>}, {pipeline_mode = #tpu.pipeline_mode<synchronous>, transform_indices = @transform_10, window_bounds = array<i64: 1, 581>}, {transform_indices = @transform_11, window_bounds = array<i64: 1, 12, 1>}]} {
    %c0 = arith.constant 0 : index
    %c0_0 = arith.constant 0 : index
    %c0_1 = arith.constant 0 : index
    %0 = vector.load %arg1[%c0, %c0_0, %c0_1] : memref<1x1x784xf32, #tpu.memory_space<vmem>>, vector<1x1x784xf32>
    %1 = vector.shape_cast %0 : vector<1x1x784xf32> to vector<1x784xf32>
    %c0_2 = arith.constant 0 : index
    %c0_3 = arith.constant 0 : index
    %2 = vector.load %arg2[%c0_2, %c0_3] : memref<16x25xf32, #tpu.memory_space<vmem>>, vector<16x25xf32>
    %cst = arith.constant 0.000000e+00 : f32
    %3 = vector.broadcast %cst : f32 to vector<16x668xf32>
    %4 = vector.extract_strided_slice %2 {offsets = [0, 0], sizes = [16, 1], strides = [1, 1]} : vector<16x25xf32> to vector<16x1xf32>
    %5 = vector.extract_strided_slice %1 {offsets = [0, 0], sizes = [1, 668], strides = [1, 1]} : vector<1x784xf32> to vector<1x668xf32>
    %6 = vector.broadcast %4 : vector<16x1xf32> to vector<16x668xf32>
    %7 = vector.broadcast %5 : vector<1x668xf32> to vector<16x668xf32>
    %8 = arith.mulf %6, %7 : vector<16x668xf32>
    %9 = arith.addf %3, %8 : vector<16x668xf32>
    %10 = vector.extract_strided_slice %2 {offsets = [0, 1], sizes = [16, 1], strides = [1, 1]} : vector<16x25xf32> to vector<16x1xf32>
    %11 = vector.extract_strided_slice %1 {offsets = [0, 1], sizes = [1, 668], strides = [1, 1]} : vector<1x784xf32> to vector<1x668xf32>
    %12 = vector.broadcast %10 : vector<16x1xf32> to vector<16x668xf32>
    %13 = vector.broadcast %11 : vector<1x668xf32> to vector<16x668xf32>
    %14 = arith.mulf %12, %13 : vector<16x668xf32>
    %15 = arith.addf %9, %14 : vector<16x668xf32>
    %16 = vector.extract_strided_slice %2 {offsets = [0, 2], sizes = [16, 1], strides = [1, 1]} : vector<16x25xf32> to vector<16x1xf32>
    %17 = vector.extract_strided_slice %1 {offsets = [0, 2], sizes = [1, 668], strides = [1, 1]} : vector<1x784xf32> to vector<1x668xf32>
    %18 = vector.broadcast %16 : vector<16x1xf32> to vector<16x668xf32>
    %19 = vector.broadcast %17 : vector<1x668xf32> to vector<16x668xf32>
    %20 = arith.mulf %18, %19 : vector<16x668xf32>
    %21 = arith.addf %15, %20 : vector<16x668xf32>
    %22 = vector.extract_strided_slice %2 {offsets = [0, 3], sizes = [16, 1], strides = [1, 1]} : vector<16x25xf32> to vector<16x1xf32>
    %23 = vector.extract_strided_slice %1 {offsets = [0, 3], sizes = [1, 668], strides = [1, 1]} : vector<1x784xf32> to vector<1x668xf32>
    %24 = vector.broadcast %22 : vector<16x1xf32> to vector<16x668xf32>
    %25 = vector.broadcast %23 : vector<1x668xf32> to vector<16x668xf32>
    %26 = arith.mulf %24, %25 : vector<16x668xf32>
    %27 = arith.addf %21, %26 : vector<16x668xf32>
    %28 = vector.extract_strided_slice %2 {offsets = [0, 4], sizes = [16, 1], strides = [1, 1]} : vector<16x25xf32> to vector<16x1xf32>
    %29 = vector.extract_strided_slice %1 {offsets = [0, 4], sizes = [1, 668], strides = [1, 1]} : vector<1x784xf32> to vector<1x668xf32>
    %30 = vector.broadcast %28 : vector<16x1xf32> to vector<16x668xf32>
    %31 = vector.broadcast %29 : vector<1x668xf32> to vector<16x668xf32>
    %32 = arith.mulf %30, %31 : vector<16x668xf32>
    %33 = arith.addf %27, %32 : vector<16x668xf32>
    %34 = vector.extract_strided_slice %2 {offsets = [0, 5], sizes = [16, 1], strides = [1, 1]} : vector<16x25xf32> to vector<16x1xf32>
    %35 = vector.extract_strided_slice %1 {offsets = [0, 28], sizes = [1, 668], strides = [1, 1]} : vector<1x784xf32> to vector<1x668xf32>
    %36 = vector.broadcast %34 : vector<16x1xf32> to vector<16x668xf32>
    %37 = vector.broadcast %35 : vector<1x668xf32> to vector<16x668xf32>
    %38 = arith.mulf %36, %37 : vector<16x668xf32>
    %39 = arith.addf %33, %38 : vector<16x668xf32>
    %40 = vector.extract_strided_slice %2 {offsets = [0, 6], sizes = [16, 1], strides = [1, 1]} : vector<16x25xf32> to vector<16x1xf32>
    %41 = vector.extract_strided_slice %1 {offsets = [0, 29], sizes = [1, 668], strides = [1, 1]} : vector<1x784xf32> to vector<1x668xf32>
    %42 = vector.broadcast %40 : vector<16x1xf32> to vector<16x668xf32>
    %43 = vector.broadcast %41 : vector<1x668xf32> to vector<16x668xf32>
    %44 = arith.mulf %42, %43 : vector<16x668xf32>
    %45 = arith.addf %39, %44 : vector<16x668xf32>
    %46 = vector.extract_strided_slice %2 {offsets = [0, 7], sizes = [16, 1], strides = [1, 1]} : vector<16x25xf32> to vector<16x1xf32>
    %47 = vector.extract_strided_slice %1 {offsets = [0, 30], sizes = [1, 668], strides = [1, 1]} : vector<1x784xf32> to vector<1x668xf32>
    %48 = vector.broadcast %46 : vector<16x1xf32> to vector<16x668xf32>
    %49 = vector.broadcast %47 : vector<1x668xf32> to vector<16x668xf32>
    %50 = arith.mulf %48, %49 : vector<16x668xf32>
    %51 = arith.addf %45, %50 : vector<16x668xf32>
    %52 = vector.extract_strided_slice %2 {offsets = [0, 8], sizes = [16, 1], strides = [1, 1]} : vector<16x25xf32> to vector<16x1xf32>
    %53 = vector.extract_strided_slice %1 {offsets = [0, 31], sizes = [1, 668], strides = [1, 1]} : vector<1x784xf32> to vector<1x668xf32>
    %54 = vector.broadcast %52 : vector<16x1xf32> to vector<16x668xf32>
    %55 = vector.broadcast %53 : vector<1x668xf32> to vector<16x668xf32>
    %56 = arith.mulf %54, %55 : vector<16x668xf32>
    %57 = arith.addf %51, %56 : vector<16x668xf32>
    %58 = vector.extract_strided_slice %2 {offsets = [0, 9], sizes = [16, 1], strides = [1, 1]} : vector<16x25xf32> to vector<16x1xf32>
    %59 = vector.extract_strided_slice %1 {offsets = [0, 32], sizes = [1, 668], strides = [1, 1]} : vector<1x784xf32> to vector<1x668xf32>
    %60 = vector.broadcast %58 : vector<16x1xf32> to vector<16x668xf32>
    %61 = vector.broadcast %59 : vector<1x668xf32> to vector<16x668xf32>
    %62 = arith.mulf %60, %61 : vector<16x668xf32>
    %63 = arith.addf %57, %62 : vector<16x668xf32>
    %64 = vector.extract_strided_slice %2 {offsets = [0, 10], sizes = [16, 1], strides = [1, 1]} : vector<16x25xf32> to vector<16x1xf32>
    %65 = vector.extract_strided_slice %1 {offsets = [0, 56], sizes = [1, 668], strides = [1, 1]} : vector<1x784xf32> to vector<1x668xf32>
    %66 = vector.broadcast %64 : vector<16x1xf32> to vector<16x668xf32>
    %67 = vector.broadcast %65 : vector<1x668xf32> to vector<16x668xf32>
    %68 = arith.mulf %66, %67 : vector<16x668xf32>
    %69 = arith.addf %63, %68 : vector<16x668xf32>
    %70 = vector.extract_strided_slice %2 {offsets = [0, 11], sizes = [16, 1], strides = [1, 1]} : vector<16x25xf32> to vector<16x1xf32>
    %71 = vector.extract_strided_slice %1 {offsets = [0, 57], sizes = [1, 668], strides = [1, 1]} : vector<1x784xf32> to vector<1x668xf32>
    %72 = vector.broadcast %70 : vector<16x1xf32> to vector<16x668xf32>
    %73 = vector.broadcast %71 : vector<1x668xf32> to vector<16x668xf32>
    %74 = arith.mulf %72, %73 : vector<16x668xf32>
    %75 = arith.addf %69, %74 : vector<16x668xf32>
    %76 = vector.extract_strided_slice %2 {offsets = [0, 12], sizes = [16, 1], strides = [1, 1]} : vector<16x25xf32> to vector<16x1xf32>
    %77 = vector.extract_strided_slice %1 {offsets = [0, 58], sizes = [1, 668], strides = [1, 1]} : vector<1x784xf32> to vector<1x668xf32>
    %78 = vector.broadcast %76 : vector<16x1xf32> to vector<16x668xf32>
    %79 = vector.broadcast %77 : vector<1x668xf32> to vector<16x668xf32>
    %80 = arith.mulf %78, %79 : vector<16x668xf32>
    %81 = arith.addf %75, %80 : vector<16x668xf32>
    %82 = vector.extract_strided_slice %2 {offsets = [0, 13], sizes = [16, 1], strides = [1, 1]} : vector<16x25xf32> to vector<16x1xf32>
    %83 = vector.extract_strided_slice %1 {offsets = [0, 59], sizes = [1, 668], strides = [1, 1]} : vector<1x784xf32> to vector<1x668xf32>
    %84 = vector.broadcast %82 : vector<16x1xf32> to vector<16x668xf32>
    %85 = vector.broadcast %83 : vector<1x668xf32> to vector<16x668xf32>
    %86 = arith.mulf %84, %85 : vector<16x668xf32>
    %87 = arith.addf %81, %86 : vector<16x668xf32>
    %88 = vector.extract_strided_slice %2 {offsets = [0, 14], sizes = [16, 1], strides = [1, 1]} : vector<16x25xf32> to vector<16x1xf32>
    %89 = vector.extract_strided_slice %1 {offsets = [0, 60], sizes = [1, 668], strides = [1, 1]} : vector<1x784xf32> to vector<1x668xf32>
    %90 = vector.broadcast %88 : vector<16x1xf32> to vector<16x668xf32>
    %91 = vector.broadcast %89 : vector<1x668xf32> to vector<16x668xf32>
    %92 = arith.mulf %90, %91 : vector<16x668xf32>
    %93 = arith.addf %87, %92 : vector<16x668xf32>
    %94 = vector.extract_strided_slice %2 {offsets = [0, 15], sizes = [16, 1], strides = [1, 1]} : vector<16x25xf32> to vector<16x1xf32>
    %95 = vector.extract_strided_slice %1 {offsets = [0, 84], sizes = [1, 668], strides = [1, 1]} : vector<1x784xf32> to vector<1x668xf32>
    %96 = vector.broadcast %94 : vector<16x1xf32> to vector<16x668xf32>
    %97 = vector.broadcast %95 : vector<1x668xf32> to vector<16x668xf32>
    %98 = arith.mulf %96, %97 : vector<16x668xf32>
    %99 = arith.addf %93, %98 : vector<16x668xf32>
    %100 = vector.extract_strided_slice %2 {offsets = [0, 16], sizes = [16, 1], strides = [1, 1]} : vector<16x25xf32> to vector<16x1xf32>
    %101 = vector.extract_strided_slice %1 {offsets = [0, 85], sizes = [1, 668], strides = [1, 1]} : vector<1x784xf32> to vector<1x668xf32>
    %102 = vector.broadcast %100 : vector<16x1xf32> to vector<16x668xf32>
    %103 = vector.broadcast %101 : vector<1x668xf32> to vector<16x668xf32>
    %104 = arith.mulf %102, %103 : vector<16x668xf32>
    %105 = arith.addf %99, %104 : vector<16x668xf32>
    %106 = vector.extract_strided_slice %2 {offsets = [0, 17], sizes = [16, 1], strides = [1, 1]} : vector<16x25xf32> to vector<16x1xf32>
    %107 = vector.extract_strided_slice %1 {offsets = [0, 86], sizes = [1, 668], strides = [1, 1]} : vector<1x784xf32> to vector<1x668xf32>
    %108 = vector.broadcast %106 : vector<16x1xf32> to vector<16x668xf32>
    %109 = vector.broadcast %107 : vector<1x668xf32> to vector<16x668xf32>
    %110 = arith.mulf %108, %109 : vector<16x668xf32>
    %111 = arith.addf %105, %110 : vector<16x668xf32>
    %112 = vector.extract_strided_slice %2 {offsets = [0, 18], sizes = [16, 1], strides = [1, 1]} : vector<16x25xf32> to vector<16x1xf32>
    %113 = vector.extract_strided_slice %1 {offsets = [0, 87], sizes = [1, 668], strides = [1, 1]} : vector<1x784xf32> to vector<1x668xf32>
    %114 = vector.broadcast %112 : vector<16x1xf32> to vector<16x668xf32>
    %115 = vector.broadcast %113 : vector<1x668xf32> to vector<16x668xf32>
    %116 = arith.mulf %114, %115 : vector<16x668xf32>
    %117 = arith.addf %111, %116 : vector<16x668xf32>
    %118 = vector.extract_strided_slice %2 {offsets = [0, 19], sizes = [16, 1], strides = [1, 1]} : vector<16x25xf32> to vector<16x1xf32>
    %119 = vector.extract_strided_slice %1 {offsets = [0, 88], sizes = [1, 668], strides = [1, 1]} : vector<1x784xf32> to vector<1x668xf32>
    %120 = vector.broadcast %118 : vector<16x1xf32> to vector<16x668xf32>
    %121 = vector.broadcast %119 : vector<1x668xf32> to vector<16x668xf32>
    %122 = arith.mulf %120, %121 : vector<16x668xf32>
    %123 = arith.addf %117, %122 : vector<16x668xf32>
    %124 = vector.extract_strided_slice %2 {offsets = [0, 20], sizes = [16, 1], strides = [1, 1]} : vector<16x25xf32> to vector<16x1xf32>
    %125 = vector.extract_strided_slice %1 {offsets = [0, 112], sizes = [1, 668], strides = [1, 1]} : vector<1x784xf32> to vector<1x668xf32>
    %126 = vector.broadcast %124 : vector<16x1xf32> to vector<16x668xf32>
    %127 = vector.broadcast %125 : vector<1x668xf32> to vector<16x668xf32>
    %128 = arith.mulf %126, %127 : vector<16x668xf32>
    %129 = arith.addf %123, %128 : vector<16x668xf32>
    %130 = vector.extract_strided_slice %2 {offsets = [0, 21], sizes = [16, 1], strides = [1, 1]} : vector<16x25xf32> to vector<16x1xf32>
    %131 = vector.extract_strided_slice %1 {offsets = [0, 113], sizes = [1, 668], strides = [1, 1]} : vector<1x784xf32> to vector<1x668xf32>
    %132 = vector.broadcast %130 : vector<16x1xf32> to vector<16x668xf32>
    %133 = vector.broadcast %131 : vector<1x668xf32> to vector<16x668xf32>
    %134 = arith.mulf %132, %133 : vector<16x668xf32>
    %135 = arith.addf %129, %134 : vector<16x668xf32>
    %136 = vector.extract_strided_slice %2 {offsets = [0, 22], sizes = [16, 1], strides = [1, 1]} : vector<16x25xf32> to vector<16x1xf32>
    %137 = vector.extract_strided_slice %1 {offsets = [0, 114], sizes = [1, 668], strides = [1, 1]} : vector<1x784xf32> to vector<1x668xf32>
    %138 = vector.broadcast %136 : vector<16x1xf32> to vector<16x668xf32>
    %139 = vector.broadcast %137 : vector<1x668xf32> to vector<16x668xf32>
    %140 = arith.mulf %138, %139 : vector<16x668xf32>
    %141 = arith.addf %135, %140 : vector<16x668xf32>
    %142 = vector.extract_strided_slice %2 {offsets = [0, 23], sizes = [16, 1], strides = [1, 1]} : vector<16x25xf32> to vector<16x1xf32>
    %143 = vector.extract_strided_slice %1 {offsets = [0, 115], sizes = [1, 668], strides = [1, 1]} : vector<1x784xf32> to vector<1x668xf32>
    %144 = vector.broadcast %142 : vector<16x1xf32> to vector<16x668xf32>
    %145 = vector.broadcast %143 : vector<1x668xf32> to vector<16x668xf32>
    %146 = arith.mulf %144, %145 : vector<16x668xf32>
    %147 = arith.addf %141, %146 : vector<16x668xf32>
    %148 = vector.extract_strided_slice %2 {offsets = [0, 24], sizes = [16, 1], strides = [1, 1]} : vector<16x25xf32> to vector<16x1xf32>
    %149 = vector.extract_strided_slice %1 {offsets = [0, 116], sizes = [1, 668], strides = [1, 1]} : vector<1x784xf32> to vector<1x668xf32>
    %150 = vector.broadcast %148 : vector<16x1xf32> to vector<16x668xf32>
    %151 = vector.broadcast %149 : vector<1x668xf32> to vector<16x668xf32>
    %152 = arith.mulf %150, %151 : vector<16x668xf32>
    %153 = arith.addf %147, %152 : vector<16x668xf32>
    %c0_4 = arith.constant 0 : index
    %c0_5 = arith.constant 0 : index
    %154 = vector.load %arg3[%c0_4, %c0_5] : memref<16x1xf32, #tpu.memory_space<vmem>>, vector<16x1xf32>
    %155 = vector.broadcast %154 : vector<16x1xf32> to vector<16x668xf32>
    %156 = arith.addf %153, %155 : vector<16x668xf32>
    %cst_6 = arith.constant 0.000000e+00 : f32
    %157 = vector.broadcast %cst_6 : f32 to vector<16x668xf32>
    %158 = arith.maximumf %156, %157 : vector<16x668xf32>
    %159 = vector.extract_strided_slice %158 {offsets = [0, 0], sizes = [16, 639], strides = [1, 1]} : vector<16x668xf32> to vector<16x639xf32>
    %160 = vector.extract_strided_slice %158 {offsets = [0, 1], sizes = [16, 639], strides = [1, 1]} : vector<16x668xf32> to vector<16x639xf32>
    %161 = arith.maximumf %159, %160 : vector<16x639xf32>
    %162 = vector.extract_strided_slice %158 {offsets = [0, 28], sizes = [16, 639], strides = [1, 1]} : vector<16x668xf32> to vector<16x639xf32>
    %163 = vector.extract_strided_slice %158 {offsets = [0, 29], sizes = [16, 639], strides = [1, 1]} : vector<16x668xf32> to vector<16x639xf32>
    %164 = arith.maximumf %162, %163 : vector<16x639xf32>
    %165 = arith.maximumf %161, %164 : vector<16x639xf32>
    %cst_7 = arith.constant 0.000000e+00 : f32
    %166 = vector.broadcast %cst_7 : f32 to vector<16x755xf32>
    %c0_8 = arith.constant 0 : index
    %c0_9 = arith.constant 0 : index
    %167 = vector.load %arg13[%c0_8, %c0_9] : memref<16x755xf32, #tpu.memory_space<vmem>>, vector<16x755xf32>
    tpu.vector_store %arg13[%c0_8, %c0_9], %166 {strides = array<i32>} : memref<16x755xf32, #tpu.memory_space<vmem>>, vector<16x755xf32>,
    %c0_10 = arith.constant 0 : index
    %c0_11 = arith.constant 0 : index
    %168 = vector.load %arg10[%c0_10, %c0_11] : memref<1x639xf32, #tpu.memory_space<vmem>>, vector<1x639xf32>
    %169 = vector.broadcast %168 : vector<1x639xf32> to vector<16x639xf32>
    %170 = arith.mulf %165, %169 : vector<16x639xf32>
    %c0_12 = arith.constant 0 : index
    %c58 = arith.constant 58 : index
    %171 = vector.load %arg13[%c0_12, %c58] : memref<16x755xf32, #tpu.memory_space<vmem>>, vector<16x639xf32>
    tpu.vector_store %arg13[%c0_12, %c58], %170 {strides = array<i32>} : memref<16x755xf32, #tpu.memory_space<vmem>>, vector<16x639xf32>,
    %cst_13 = arith.constant 0.000000e+00 : f32
    %172 = vector.broadcast %cst_13 : f32 to vector<32x639xf32>
    %c0_14 = arith.constant 0 : index
    %c0_15 = arith.constant 0 : index
    %c0_16 = arith.constant 0 : index
    %173 = vector.load %arg4[%c0_14, %c0_15, %c0_16] : memref<9x32x16xf32, #tpu.memory_space<vmem>>, vector<1x32x16xf32>
    %174 = vector.shape_cast %173 : vector<1x32x16xf32> to vector<32x16xf32>
    %c0_17 = arith.constant 0 : index
    %c0_18 = arith.constant 0 : index
    %175 = vector.load %arg13[%c0_17, %c0_18] : memref<16x755xf32, #tpu.memory_space<vmem>>, vector<16x639xf32>
    %cst_19 = arith.constant dense<0.000000e+00> : vector<32x639xf32>
    %176 = tpu.matmul %174, %175, %cst_19 {dimension_numbers = #tpu.dot_dimension_numbers<[1], [0], [0], [1], [0, 0, 1, 1], [], []>} : vector<32x16xf32>, vector<16x639xf32>, vector<32x639xf32> -> vector<32x639xf32>
    %177 = arith.addf %172, %176 : vector<32x639xf32>
    %c1 = arith.constant 1 : index
    %c0_20 = arith.constant 0 : index
    %c0_21 = arith.constant 0 : index
    %178 = vector.load %arg4[%c1, %c0_20, %c0_21] : memref<9x32x16xf32, #tpu.memory_space<vmem>>, vector<1x32x16xf32>
    %179 = vector.shape_cast %178 : vector<1x32x16xf32> to vector<32x16xf32>
    %c0_22 = arith.constant 0 : index
    %c2 = arith.constant 2 : index
    %180 = vector.load %arg13[%c0_22, %c2] : memref<16x755xf32, #tpu.memory_space<vmem>>, vector<16x639xf32>
    %cst_23 = arith.constant dense<0.000000e+00> : vector<32x639xf32>
    %181 = tpu.matmul %179, %180, %cst_23 {dimension_numbers = #tpu.dot_dimension_numbers<[1], [0], [0], [1], [0, 0, 1, 1], [], []>} : vector<32x16xf32>, vector<16x639xf32>, vector<32x639xf32> -> vector<32x639xf32>
    %182 = arith.addf %177, %181 : vector<32x639xf32>
    %c2_24 = arith.constant 2 : index
    %c0_25 = arith.constant 0 : index
    %c0_26 = arith.constant 0 : index
    %183 = vector.load %arg4[%c2_24, %c0_25, %c0_26] : memref<9x32x16xf32, #tpu.memory_space<vmem>>, vector<1x32x16xf32>
    %184 = vector.shape_cast %183 : vector<1x32x16xf32> to vector<32x16xf32>
    %c0_27 = arith.constant 0 : index
    %c4 = arith.constant 4 : index
    %185 = vector.load %arg13[%c0_27, %c4] : memref<16x755xf32, #tpu.memory_space<vmem>>, vector<16x639xf32>
    %cst_28 = arith.constant dense<0.000000e+00> : vector<32x639xf32>
    %186 = tpu.matmul %184, %185, %cst_28 {dimension_numbers = #tpu.dot_dimension_numbers<[1], [0], [0], [1], [0, 0, 1, 1], [], []>} : vector<32x16xf32>, vector<16x639xf32>, vector<32x639xf32> -> vector<32x639xf32>
    %187 = arith.addf %182, %186 : vector<32x639xf32>
    %c3 = arith.constant 3 : index
    %c0_29 = arith.constant 0 : index
    %c0_30 = arith.constant 0 : index
    %188 = vector.load %arg4[%c3, %c0_29, %c0_30] : memref<9x32x16xf32, #tpu.memory_space<vmem>>, vector<1x32x16xf32>
    %189 = vector.shape_cast %188 : vector<1x32x16xf32> to vector<32x16xf32>
    %c0_31 = arith.constant 0 : index
    %c56 = arith.constant 56 : index
    %190 = vector.load %arg13[%c0_31, %c56] : memref<16x755xf32, #tpu.memory_space<vmem>>, vector<16x639xf32>
    %cst_32 = arith.constant dense<0.000000e+00> : vector<32x639xf32>
    %191 = tpu.matmul %189, %190, %cst_32 {dimension_numbers = #tpu.dot_dimension_numbers<[1], [0], [0], [1], [0, 0, 1, 1], [], []>} : vector<32x16xf32>, vector<16x639xf32>, vector<32x639xf32> -> vector<32x639xf32>
    %192 = arith.addf %187, %191 : vector<32x639xf32>
    %c4_33 = arith.constant 4 : index
    %c0_34 = arith.constant 0 : index
    %c0_35 = arith.constant 0 : index
    %193 = vector.load %arg4[%c4_33, %c0_34, %c0_35] : memref<9x32x16xf32, #tpu.memory_space<vmem>>, vector<1x32x16xf32>
    %194 = vector.shape_cast %193 : vector<1x32x16xf32> to vector<32x16xf32>
    %c0_36 = arith.constant 0 : index
    %c58_37 = arith.constant 58 : index
    %195 = vector.load %arg13[%c0_36, %c58_37] : memref<16x755xf32, #tpu.memory_space<vmem>>, vector<16x639xf32>
    %cst_38 = arith.constant dense<0.000000e+00> : vector<32x639xf32>
    %196 = tpu.matmul %194, %195, %cst_38 {dimension_numbers = #tpu.dot_dimension_numbers<[1], [0], [0], [1], [0, 0, 1, 1], [], []>} : vector<32x16xf32>, vector<16x639xf32>, vector<32x639xf32> -> vector<32x639xf32>
    %197 = arith.addf %192, %196 : vector<32x639xf32>
    %c5 = arith.constant 5 : index
    %c0_39 = arith.constant 0 : index
    %c0_40 = arith.constant 0 : index
    %198 = vector.load %arg4[%c5, %c0_39, %c0_40] : memref<9x32x16xf32, #tpu.memory_space<vmem>>, vector<1x32x16xf32>
    %199 = vector.shape_cast %198 : vector<1x32x16xf32> to vector<32x16xf32>
    %c0_41 = arith.constant 0 : index
    %c60 = arith.constant 60 : index
    %200 = vector.load %arg13[%c0_41, %c60] : memref<16x755xf32, #tpu.memory_space<vmem>>, vector<16x639xf32>
    %cst_42 = arith.constant dense<0.000000e+00> : vector<32x639xf32>
    %201 = tpu.matmul %199, %200, %cst_42 {dimension_numbers = #tpu.dot_dimension_numbers<[1], [0], [0], [1], [0, 0, 1, 1], [], []>} : vector<32x16xf32>, vector<16x639xf32>, vector<32x639xf32> -> vector<32x639xf32>
    %202 = arith.addf %197, %201 : vector<32x639xf32>
    %c6 = arith.constant 6 : index
    %c0_43 = arith.constant 0 : index
    %c0_44 = arith.constant 0 : index
    %203 = vector.load %arg4[%c6, %c0_43, %c0_44] : memref<9x32x16xf32, #tpu.memory_space<vmem>>, vector<1x32x16xf32>
    %204 = vector.shape_cast %203 : vector<1x32x16xf32> to vector<32x16xf32>
    %c0_45 = arith.constant 0 : index
    %c112 = arith.constant 112 : index
    %205 = vector.load %arg13[%c0_45, %c112] : memref<16x755xf32, #tpu.memory_space<vmem>>, vector<16x639xf32>
    %cst_46 = arith.constant dense<0.000000e+00> : vector<32x639xf32>
    %206 = tpu.matmul %204, %205, %cst_46 {dimension_numbers = #tpu.dot_dimension_numbers<[1], [0], [0], [1], [0, 0, 1, 1], [], []>} : vector<32x16xf32>, vector<16x639xf32>, vector<32x639xf32> -> vector<32x639xf32>
    %207 = arith.addf %202, %206 : vector<32x639xf32>
    %c7 = arith.constant 7 : index
    %c0_47 = arith.constant 0 : index
    %c0_48 = arith.constant 0 : index
    %208 = vector.load %arg4[%c7, %c0_47, %c0_48] : memref<9x32x16xf32, #tpu.memory_space<vmem>>, vector<1x32x16xf32>
    %209 = vector.shape_cast %208 : vector<1x32x16xf32> to vector<32x16xf32>
    %c0_49 = arith.constant 0 : index
    %c114 = arith.constant 114 : index
    %210 = vector.load %arg13[%c0_49, %c114] : memref<16x755xf32, #tpu.memory_space<vmem>>, vector<16x639xf32>
    %cst_50 = arith.constant dense<0.000000e+00> : vector<32x639xf32>
    %211 = tpu.matmul %209, %210, %cst_50 {dimension_numbers = #tpu.dot_dimension_numbers<[1], [0], [0], [1], [0, 0, 1, 1], [], []>} : vector<32x16xf32>, vector<16x639xf32>, vector<32x639xf32> -> vector<32x639xf32>
    %212 = arith.addf %207, %211 : vector<32x639xf32>
    %c8 = arith.constant 8 : index
    %c0_51 = arith.constant 0 : index
    %c0_52 = arith.constant 0 : index
    %213 = vector.load %arg4[%c8, %c0_51, %c0_52] : memref<9x32x16xf32, #tpu.memory_space<vmem>>, vector<1x32x16xf32>
    %214 = vector.shape_cast %213 : vector<1x32x16xf32> to vector<32x16xf32>
    %c0_53 = arith.constant 0 : index
    %c116 = arith.constant 116 : index
    %215 = vector.load %arg13[%c0_53, %c116] : memref<16x755xf32, #tpu.memory_space<vmem>>, vector<16x639xf32>
    %cst_54 = arith.constant dense<0.000000e+00> : vector<32x639xf32>
    %216 = tpu.matmul %214, %215, %cst_54 {dimension_numbers = #tpu.dot_dimension_numbers<[1], [0], [0], [1], [0, 0, 1, 1], [], []>} : vector<32x16xf32>, vector<16x639xf32>, vector<32x639xf32> -> vector<32x639xf32>
    %217 = arith.addf %212, %216 : vector<32x639xf32>
    %c0_55 = arith.constant 0 : index
    %c0_56 = arith.constant 0 : index
    %218 = vector.load %arg5[%c0_55, %c0_56] : memref<32x1xf32, #tpu.memory_space<vmem>>, vector<32x1xf32>
    %219 = vector.broadcast %218 : vector<32x1xf32> to vector<32x639xf32>
    %220 = arith.addf %217, %219 : vector<32x639xf32>
    %cst_57 = arith.constant 0.000000e+00 : f32
    %221 = vector.broadcast %cst_57 : f32 to vector<32x639xf32>
    %222 = arith.maximumf %220, %221 : vector<32x639xf32>
    %223 = vector.extract_strided_slice %222 {offsets = [0, 0], sizes = [32, 581], strides = [1, 1]} : vector<32x639xf32> to vector<32x581xf32>
    %224 = vector.extract_strided_slice %222 {offsets = [0, 2], sizes = [32, 581], strides = [1, 1]} : vector<32x639xf32> to vector<32x581xf32>
    %225 = arith.maximumf %223, %224 : vector<32x581xf32>
    %226 = vector.extract_strided_slice %222 {offsets = [0, 56], sizes = [32, 581], strides = [1, 1]} : vector<32x639xf32> to vector<32x581xf32>
    %227 = vector.extract_strided_slice %222 {offsets = [0, 58], sizes = [32, 581], strides = [1, 1]} : vector<32x639xf32> to vector<32x581xf32>
    %228 = arith.maximumf %226, %227 : vector<32x581xf32>
    %229 = arith.maximumf %225, %228 : vector<32x581xf32>
    %cst_58 = arith.constant 0.000000e+00 : f32
    %230 = vector.broadcast %cst_58 : f32 to vector<32x697xf32>
    %c0_59 = arith.constant 0 : index
    %c0_60 = arith.constant 0 : index
    %231 = vector.load %arg14[%c0_59, %c0_60] : memref<32x697xf32, #tpu.memory_space<vmem>>, vector<32x697xf32>
    tpu.vector_store %arg14[%c0_59, %c0_60], %230 {strides = array<i32>} : memref<32x697xf32, #tpu.memory_space<vmem>>, vector<32x697xf32>,
    %c0_61 = arith.constant 0 : index
    %c0_62 = arith.constant 0 : index
    %232 = vector.load %arg11[%c0_61, %c0_62] : memref<1x581xf32, #tpu.memory_space<vmem>>, vector<1x581xf32>
    %233 = vector.broadcast %232 : vector<1x581xf32> to vector<32x581xf32>
    %234 = arith.mulf %229, %233 : vector<32x581xf32>
    %c0_63 = arith.constant 0 : index
    %c116_64 = arith.constant 116 : index
    %235 = vector.load %arg14[%c0_63, %c116_64] : memref<32x697xf32, #tpu.memory_space<vmem>>, vector<32x581xf32>
    tpu.vector_store %arg14[%c0_63, %c116_64], %234 {strides = array<i32>} : memref<32x697xf32, #tpu.memory_space<vmem>>, vector<32x581xf32>,
    %cst_65 = arith.constant 0.000000e+00 : f32
    %236 = vector.broadcast %cst_65 : f32 to vector<64x465xf32>
    %c0_66 = arith.constant 0 : index
    %c0_67 = arith.constant 0 : index
    %c0_68 = arith.constant 0 : index
    %237 = vector.load %arg6[%c0_66, %c0_67, %c0_68] : memref<9x64x32xf32, #tpu.memory_space<vmem>>, vector<1x64x32xf32>
    %238 = vector.shape_cast %237 : vector<1x64x32xf32> to vector<64x32xf32>
    %c0_69 = arith.constant 0 : index
    %c0_70 = arith.constant 0 : index
    %239 = vector.load %arg14[%c0_69, %c0_70] : memref<32x697xf32, #tpu.memory_space<vmem>>, vector<32x465xf32>
    %cst_71 = arith.constant dense<0.000000e+00> : vector<64x465xf32>
    %240 = tpu.matmul %238, %239, %cst_71 {dimension_numbers = #tpu.dot_dimension_numbers<[1], [0], [0], [1], [0, 0, 1, 1], [], []>} : vector<64x32xf32>, vector<32x465xf32>, vector<64x465xf32> -> vector<64x465xf32>
    %241 = arith.addf %236, %240 : vector<64x465xf32>
    %c1_72 = arith.constant 1 : index
    %c0_73 = arith.constant 0 : index
    %c0_74 = arith.constant 0 : index
    %242 = vector.load %arg6[%c1_72, %c0_73, %c0_74] : memref<9x64x32xf32, #tpu.memory_space<vmem>>, vector<1x64x32xf32>
    %243 = vector.shape_cast %242 : vector<1x64x32xf32> to vector<64x32xf32>
    %c0_75 = arith.constant 0 : index
    %c4_76 = arith.constant 4 : index
    %244 = vector.load %arg14[%c0_75, %c4_76] : memref<32x697xf32, #tpu.memory_space<vmem>>, vector<32x465xf32>
    %cst_77 = arith.constant dense<0.000000e+00> : vector<64x465xf32>
    %245 = tpu.matmul %243, %244, %cst_77 {dimension_numbers = #tpu.dot_dimension_numbers<[1], [0], [0], [1], [0, 0, 1, 1], [], []>} : vector<64x32xf32>, vector<32x465xf32>, vector<64x465xf32> -> vector<64x465xf32>
    %246 = arith.addf %241, %245 : vector<64x465xf32>
    %c2_78 = arith.constant 2 : index
    %c0_79 = arith.constant 0 : index
    %c0_80 = arith.constant 0 : index
    %247 = vector.load %arg6[%c2_78, %c0_79, %c0_80] : memref<9x64x32xf32, #tpu.memory_space<vmem>>, vector<1x64x32xf32>
    %248 = vector.shape_cast %247 : vector<1x64x32xf32> to vector<64x32xf32>
    %c0_81 = arith.constant 0 : index
    %c8_82 = arith.constant 8 : index
    %249 = vector.load %arg14[%c0_81, %c8_82] : memref<32x697xf32, #tpu.memory_space<vmem>>, vector<32x465xf32>
    %cst_83 = arith.constant dense<0.000000e+00> : vector<64x465xf32>
    %250 = tpu.matmul %248, %249, %cst_83 {dimension_numbers = #tpu.dot_dimension_numbers<[1], [0], [0], [1], [0, 0, 1, 1], [], []>} : vector<64x32xf32>, vector<32x465xf32>, vector<64x465xf32> -> vector<64x465xf32>
    %251 = arith.addf %246, %250 : vector<64x465xf32>
    %c3_84 = arith.constant 3 : index
    %c0_85 = arith.constant 0 : index
    %c0_86 = arith.constant 0 : index
    %252 = vector.load %arg6[%c3_84, %c0_85, %c0_86] : memref<9x64x32xf32, #tpu.memory_space<vmem>>, vector<1x64x32xf32>
    %253 = vector.shape_cast %252 : vector<1x64x32xf32> to vector<64x32xf32>
    %c0_87 = arith.constant 0 : index
    %c112_88 = arith.constant 112 : index
    %254 = vector.load %arg14[%c0_87, %c112_88] : memref<32x697xf32, #tpu.memory_space<vmem>>, vector<32x465xf32>
    %cst_89 = arith.constant dense<0.000000e+00> : vector<64x465xf32>
    %255 = tpu.matmul %253, %254, %cst_89 {dimension_numbers = #tpu.dot_dimension_numbers<[1], [0], [0], [1], [0, 0, 1, 1], [], []>} : vector<64x32xf32>, vector<32x465xf32>, vector<64x465xf32> -> vector<64x465xf32>
    %256 = arith.addf %251, %255 : vector<64x465xf32>
    %c4_90 = arith.constant 4 : index
    %c0_91 = arith.constant 0 : index
    %c0_92 = arith.constant 0 : index
    %257 = vector.load %arg6[%c4_90, %c0_91, %c0_92] : memref<9x64x32xf32, #tpu.memory_space<vmem>>, vector<1x64x32xf32>
    %258 = vector.shape_cast %257 : vector<1x64x32xf32> to vector<64x32xf32>
    %c0_93 = arith.constant 0 : index
    %c116_94 = arith.constant 116 : index
    %259 = vector.load %arg14[%c0_93, %c116_94] : memref<32x697xf32, #tpu.memory_space<vmem>>, vector<32x465xf32>
    %cst_95 = arith.constant dense<0.000000e+00> : vector<64x465xf32>
    %260 = tpu.matmul %258, %259, %cst_95 {dimension_numbers = #tpu.dot_dimension_numbers<[1], [0], [0], [1], [0, 0, 1, 1], [], []>} : vector<64x32xf32>, vector<32x465xf32>, vector<64x465xf32> -> vector<64x465xf32>
    %261 = arith.addf %256, %260 : vector<64x465xf32>
    %c5_96 = arith.constant 5 : index
    %c0_97 = arith.constant 0 : index
    %c0_98 = arith.constant 0 : index
    %262 = vector.load %arg6[%c5_96, %c0_97, %c0_98] : memref<9x64x32xf32, #tpu.memory_space<vmem>>, vector<1x64x32xf32>
    %263 = vector.shape_cast %262 : vector<1x64x32xf32> to vector<64x32xf32>
    %c0_99 = arith.constant 0 : index
    %c120 = arith.constant 120 : index
    %264 = vector.load %arg14[%c0_99, %c120] : memref<32x697xf32, #tpu.memory_space<vmem>>, vector<32x465xf32>
    %cst_100 = arith.constant dense<0.000000e+00> : vector<64x465xf32>
    %265 = tpu.matmul %263, %264, %cst_100 {dimension_numbers = #tpu.dot_dimension_numbers<[1], [0], [0], [1], [0, 0, 1, 1], [], []>} : vector<64x32xf32>, vector<32x465xf32>, vector<64x465xf32> -> vector<64x465xf32>
    %266 = arith.addf %261, %265 : vector<64x465xf32>
    %c6_101 = arith.constant 6 : index
    %c0_102 = arith.constant 0 : index
    %c0_103 = arith.constant 0 : index
    %267 = vector.load %arg6[%c6_101, %c0_102, %c0_103] : memref<9x64x32xf32, #tpu.memory_space<vmem>>, vector<1x64x32xf32>
    %268 = vector.shape_cast %267 : vector<1x64x32xf32> to vector<64x32xf32>
    %c0_104 = arith.constant 0 : index
    %c224 = arith.constant 224 : index
    %269 = vector.load %arg14[%c0_104, %c224] : memref<32x697xf32, #tpu.memory_space<vmem>>, vector<32x465xf32>
    %cst_105 = arith.constant dense<0.000000e+00> : vector<64x465xf32>
    %270 = tpu.matmul %268, %269, %cst_105 {dimension_numbers = #tpu.dot_dimension_numbers<[1], [0], [0], [1], [0, 0, 1, 1], [], []>} : vector<64x32xf32>, vector<32x465xf32>, vector<64x465xf32> -> vector<64x465xf32>
    %271 = arith.addf %266, %270 : vector<64x465xf32>
    %c7_106 = arith.constant 7 : index
    %c0_107 = arith.constant 0 : index
    %c0_108 = arith.constant 0 : index
    %272 = vector.load %arg6[%c7_106, %c0_107, %c0_108] : memref<9x64x32xf32, #tpu.memory_space<vmem>>, vector<1x64x32xf32>
    %273 = vector.shape_cast %272 : vector<1x64x32xf32> to vector<64x32xf32>
    %c0_109 = arith.constant 0 : index
    %c228 = arith.constant 228 : index
    %274 = vector.load %arg14[%c0_109, %c228] : memref<32x697xf32, #tpu.memory_space<vmem>>, vector<32x465xf32>
    %cst_110 = arith.constant dense<0.000000e+00> : vector<64x465xf32>
    %275 = tpu.matmul %273, %274, %cst_110 {dimension_numbers = #tpu.dot_dimension_numbers<[1], [0], [0], [1], [0, 0, 1, 1], [], []>} : vector<64x32xf32>, vector<32x465xf32>, vector<64x465xf32> -> vector<64x465xf32>
    %276 = arith.addf %271, %275 : vector<64x465xf32>
    %c8_111 = arith.constant 8 : index
    %c0_112 = arith.constant 0 : index
    %c0_113 = arith.constant 0 : index
    %277 = vector.load %arg6[%c8_111, %c0_112, %c0_113] : memref<9x64x32xf32, #tpu.memory_space<vmem>>, vector<1x64x32xf32>
    %278 = vector.shape_cast %277 : vector<1x64x32xf32> to vector<64x32xf32>
    %c0_114 = arith.constant 0 : index
    %c232 = arith.constant 232 : index
    %279 = vector.load %arg14[%c0_114, %c232] : memref<32x697xf32, #tpu.memory_space<vmem>>, vector<32x465xf32>
    %cst_115 = arith.constant dense<0.000000e+00> : vector<64x465xf32>
    %280 = tpu.matmul %278, %279, %cst_115 {dimension_numbers = #tpu.dot_dimension_numbers<[1], [0], [0], [1], [0, 0, 1, 1], [], []>} : vector<64x32xf32>, vector<32x465xf32>, vector<64x465xf32> -> vector<64x465xf32>
    %281 = arith.addf %276, %280 : vector<64x465xf32>
    %c0_116 = arith.constant 0 : index
    %c0_117 = arith.constant 0 : index
    %282 = vector.load %arg7[%c0_116, %c0_117] : memref<64x1xf32, #tpu.memory_space<vmem>>, vector<64x1xf32>
    %283 = vector.broadcast %282 : vector<64x1xf32> to vector<64x465xf32>
    %284 = arith.addf %281, %283 : vector<64x465xf32>
    %cst_118 = arith.constant 0.000000e+00 : f32
    %285 = vector.broadcast %cst_118 : f32 to vector<64x465xf32>
    %286 = arith.maximumf %284, %285 : vector<64x465xf32>
    %c0_119 = arith.constant 0 : index
    %c0_120 = arith.constant 0 : index
    %287 = vector.load %arg8[%c0_119, %c0_120] : memref<12x576xf32, #tpu.memory_space<vmem>>, vector<12x576xf32>
    %c0_121 = arith.constant 0 : index
    %c0_122 = arith.constant 0 : index
    %288 = vector.load %arg9[%c0_121, %c0_122] : memref<12x1xf32, #tpu.memory_space<vmem>>, vector<12x1xf32>
    %289 = vector.extract_strided_slice %287 {offsets = [0, 0], sizes = [12, 64], strides = [1, 1]} : vector<12x576xf32> to vector<12x64xf32>
    %290 = vector.extract_strided_slice %286 {offsets = [0, 0], sizes = [64, 1], strides = [1, 1]} : vector<64x465xf32> to vector<64x1xf32>
    %cst_123 = arith.constant dense<0.000000e+00> : vector<12x1xf32>
    %291 = tpu.matmul %289, %290, %cst_123 {dimension_numbers = #tpu.dot_dimension_numbers<[1], [0], [0], [1], [0, 0, 1, 1], [], []>} : vector<12x64xf32>, vector<64x1xf32>, vector<12x1xf32> -> vector<12x1xf32>
    %292 = arith.addf %288, %291 : vector<12x1xf32>
    %293 = vector.extract_strided_slice %287 {offsets = [0, 64], sizes = [12, 64], strides = [1, 1]} : vector<12x576xf32> to vector<12x64xf32>
    %294 = vector.extract_strided_slice %286 {offsets = [0, 8], sizes = [64, 1], strides = [1, 1]} : vector<64x465xf32> to vector<64x1xf32>
    %cst_124 = arith.constant dense<0.000000e+00> : vector<12x1xf32>
    %295 = tpu.matmul %293, %294, %cst_124 {dimension_numbers = #tpu.dot_dimension_numbers<[1], [0], [0], [1], [0, 0, 1, 1], [], []>} : vector<12x64xf32>, vector<64x1xf32>, vector<12x1xf32> -> vector<12x1xf32>
    %296 = arith.addf %292, %295 : vector<12x1xf32>
    %297 = vector.extract_strided_slice %287 {offsets = [0, 128], sizes = [12, 64], strides = [1, 1]} : vector<12x576xf32> to vector<12x64xf32>
    %298 = vector.extract_strided_slice %286 {offsets = [0, 16], sizes = [64, 1], strides = [1, 1]} : vector<64x465xf32> to vector<64x1xf32>
    %cst_125 = arith.constant dense<0.000000e+00> : vector<12x1xf32>
    %299 = tpu.matmul %297, %298, %cst_125 {dimension_numbers = #tpu.dot_dimension_numbers<[1], [0], [0], [1], [0, 0, 1, 1], [], []>} : vector<12x64xf32>, vector<64x1xf32>, vector<12x1xf32> -> vector<12x1xf32>
    %300 = arith.addf %296, %299 : vector<12x1xf32>
    %301 = vector.extract_strided_slice %287 {offsets = [0, 192], sizes = [12, 64], strides = [1, 1]} : vector<12x576xf32> to vector<12x64xf32>
    %302 = vector.extract_strided_slice %286 {offsets = [0, 224], sizes = [64, 1], strides = [1, 1]} : vector<64x465xf32> to vector<64x1xf32>
    %cst_126 = arith.constant dense<0.000000e+00> : vector<12x1xf32>
    %303 = tpu.matmul %301, %302, %cst_126 {dimension_numbers = #tpu.dot_dimension_numbers<[1], [0], [0], [1], [0, 0, 1, 1], [], []>} : vector<12x64xf32>, vector<64x1xf32>, vector<12x1xf32> -> vector<12x1xf32>
    %304 = arith.addf %300, %303 : vector<12x1xf32>
    %305 = vector.extract_strided_slice %287 {offsets = [0, 256], sizes = [12, 64], strides = [1, 1]} : vector<12x576xf32> to vector<12x64xf32>
    %306 = vector.extract_strided_slice %286 {offsets = [0, 232], sizes = [64, 1], strides = [1, 1]} : vector<64x465xf32> to vector<64x1xf32>
    %cst_127 = arith.constant dense<0.000000e+00> : vector<12x1xf32>
    %307 = tpu.matmul %305, %306, %cst_127 {dimension_numbers = #tpu.dot_dimension_numbers<[1], [0], [0], [1], [0, 0, 1, 1], [], []>} : vector<12x64xf32>, vector<64x1xf32>, vector<12x1xf32> -> vector<12x1xf32>
    %308 = arith.addf %304, %307 : vector<12x1xf32>
    %309 = vector.extract_strided_slice %287 {offsets = [0, 320], sizes = [12, 64], strides = [1, 1]} : vector<12x576xf32> to vector<12x64xf32>
    %310 = vector.extract_strided_slice %286 {offsets = [0, 240], sizes = [64, 1], strides = [1, 1]} : vector<64x465xf32> to vector<64x1xf32>
    %cst_128 = arith.constant dense<0.000000e+00> : vector<12x1xf32>
    %311 = tpu.matmul %309, %310, %cst_128 {dimension_numbers = #tpu.dot_dimension_numbers<[1], [0], [0], [1], [0, 0, 1, 1], [], []>} : vector<12x64xf32>, vector<64x1xf32>, vector<12x1xf32> -> vector<12x1xf32>
    %312 = arith.addf %308, %311 : vector<12x1xf32>
    %313 = vector.extract_strided_slice %287 {offsets = [0, 384], sizes = [12, 64], strides = [1, 1]} : vector<12x576xf32> to vector<12x64xf32>
    %314 = vector.extract_strided_slice %286 {offsets = [0, 448], sizes = [64, 1], strides = [1, 1]} : vector<64x465xf32> to vector<64x1xf32>
    %cst_129 = arith.constant dense<0.000000e+00> : vector<12x1xf32>
    %315 = tpu.matmul %313, %314, %cst_129 {dimension_numbers = #tpu.dot_dimension_numbers<[1], [0], [0], [1], [0, 0, 1, 1], [], []>} : vector<12x64xf32>, vector<64x1xf32>, vector<12x1xf32> -> vector<12x1xf32>
    %316 = arith.addf %312, %315 : vector<12x1xf32>
    %317 = vector.extract_strided_slice %287 {offsets = [0, 448], sizes = [12, 64], strides = [1, 1]} : vector<12x576xf32> to vector<12x64xf32>
    %318 = vector.extract_strided_slice %286 {offsets = [0, 456], sizes = [64, 1], strides = [1, 1]} : vector<64x465xf32> to vector<64x1xf32>
    %cst_130 = arith.constant dense<0.000000e+00> : vector<12x1xf32>
    %319 = tpu.matmul %317, %318, %cst_130 {dimension_numbers = #tpu.dot_dimension_numbers<[1], [0], [0], [1], [0, 0, 1, 1], [], []>} : vector<12x64xf32>, vector<64x1xf32>, vector<12x1xf32> -> vector<12x1xf32>
    %320 = arith.addf %316, %319 : vector<12x1xf32>
    %321 = vector.extract_strided_slice %287 {offsets = [0, 512], sizes = [12, 64], strides = [1, 1]} : vector<12x576xf32> to vector<12x64xf32>
    %322 = vector.extract_strided_slice %286 {offsets = [0, 464], sizes = [64, 1], strides = [1, 1]} : vector<64x465xf32> to vector<64x1xf32>
    %cst_131 = arith.constant dense<0.000000e+00> : vector<12x1xf32>
    %323 = tpu.matmul %321, %322, %cst_131 {dimension_numbers = #tpu.dot_dimension_numbers<[1], [0], [0], [1], [0, 0, 1, 1], [], []>} : vector<12x64xf32>, vector<64x1xf32>, vector<12x1xf32> -> vector<12x1xf32>
    %324 = arith.addf %320, %323 : vector<12x1xf32>
    %325 = vector.shape_cast %324 : vector<12x1xf32> to vector<1x12x1xf32>
    %c0_132 = arith.constant 0 : index
    %c0_133 = arith.constant 0 : index
    %c0_134 = arith.constant 0 : index
    %326 = vector.load %arg12[%c0_132, %c0_133, %c0_134] : memref<1x12x1xf32, #tpu.memory_space<vmem>>, vector<1x12x1xf32>
    tpu.vector_store %arg12[%c0_132, %c0_133, %c0_134], %325 {strides = array<i32>} : memref<1x12x1xf32, #tpu.memory_space<vmem>>, vector<1x12x1xf32>,
    return
  }
  func.func @transform_0(%arg0: i32) -> (i32, i32, i32) {
    %c0_i32 = arith.constant 0 : i32
    %c0_i32_0 = arith.constant 0 : i32
    %c0_i32_1 = arith.constant 0 : i32
    return %arg0, %c0_i32, %c0_i32_0 : i32, i32, i32
  }
  func.func @transform_1(%arg0: i32) -> (i32, i32) {
    %c0_i32 = arith.constant 0 : i32
    %c0_i32_0 = arith.constant 0 : i32
    %c0_i32_1 = arith.constant 0 : i32
    return %c0_i32, %c0_i32_0 : i32, i32
  }
  func.func @transform_2(%arg0: i32) -> (i32, i32) {
    %c0_i32 = arith.constant 0 : i32
    %c0_i32_0 = arith.constant 0 : i32
    %c0_i32_1 = arith.constant 0 : i32
    return %c0_i32, %c0_i32_0 : i32, i32
  }
  func.func @transform_3(%arg0: i32) -> (i32, i32, i32) {
    %c0_i32 = arith.constant 0 : i32
    %c0_i32_0 = arith.constant 0 : i32
    %c0_i32_1 = arith.constant 0 : i32
    %c0_i32_2 = arith.constant 0 : i32
    return %c0_i32, %c0_i32_0, %c0_i32_1 : i32, i32, i32
  }
  func.func @transform_4(%arg0: i32) -> (i32, i32) {
    %c0_i32 = arith.constant 0 : i32
    %c0_i32_0 = arith.constant 0 : i32
    %c0_i32_1 = arith.constant 0 : i32
    return %c0_i32, %c0_i32_0 : i32, i32
  }
  func.func @transform_5(%arg0: i32) -> (i32, i32, i32) {
    %c0_i32 = arith.constant 0 : i32
    %c0_i32_0 = arith.constant 0 : i32
    %c0_i32_1 = arith.constant 0 : i32
    %c0_i32_2 = arith.constant 0 : i32
    return %c0_i32, %c0_i32_0, %c0_i32_1 : i32, i32, i32
  }
  func.func @transform_6(%arg0: i32) -> (i32, i32) {
    %c0_i32 = arith.constant 0 : i32
    %c0_i32_0 = arith.constant 0 : i32
    %c0_i32_1 = arith.constant 0 : i32
    return %c0_i32, %c0_i32_0 : i32, i32
  }
  func.func @transform_7(%arg0: i32) -> (i32, i32) {
    %c0_i32 = arith.constant 0 : i32
    %c0_i32_0 = arith.constant 0 : i32
    %c0_i32_1 = arith.constant 0 : i32
    return %c0_i32, %c0_i32_0 : i32, i32
  }
  func.func @transform_8(%arg0: i32) -> (i32, i32) {
    %c0_i32 = arith.constant 0 : i32
    %c0_i32_0 = arith.constant 0 : i32
    %c0_i32_1 = arith.constant 0 : i32
    return %c0_i32, %c0_i32_0 : i32, i32
  }
  func.func @transform_9(%arg0: i32) -> (i32, i32) {
    %c0_i32 = arith.constant 0 : i32
    %c0_i32_0 = arith.constant 0 : i32
    %c0_i32_1 = arith.constant 0 : i32
    return %c0_i32, %c0_i32_0 : i32, i32
  }
  func.func @transform_10(%arg0: i32) -> (i32, i32) {
    %c0_i32 = arith.constant 0 : i32
    %c0_i32_0 = arith.constant 0 : i32
    %c0_i32_1 = arith.constant 0 : i32
    return %c0_i32, %c0_i32_0 : i32, i32
  }
  func.func @transform_11(%arg0: i32) -> (i32, i32, i32) {
    %c0_i32 = arith.constant 0 : i32
    %c0_i32_0 = arith.constant 0 : i32
    %c0_i32_1 = arith.constant 0 : i32
    return %arg0, %c0_i32, %c0_i32_0 : i32, i32, i32
  }
}

</mosaic_0001>

<llo_original>
// kernel: encoder_forward.1
$region0: #{encoder_forward.1}
  #allocation0 [shape = 'u32[]', space=smem, size = 0x4, offset = 0x4, fixed_abs, tag = 'smem constant byte address 0x4 - core index']
  #allocation1 [shape = 'u32[72,128]{1,0:T(1,128)}', space=vmem, size = 0x9000, scoped, tag = 'internal scratch']
  #allocation2 [shape = 'f32[16,755]{1,0:T(8,128)}', space=vmem, size = 0xc000, scoped, tag = 'scratch operand']
  #allocation3 [shape = 'f32[32,697]{1,0:T(8,128)}', space=vmem, size = 0x18000, scoped, tag = 'scratch operand']
  %s0 = inlined_call_operand.vmem [shape: f32[2,1,784], index: 0, kind: input, shape index: {}]
  %s1 = inlined_call_operand.vmem [shape: f32[16,25], index: 1, kind: input, shape index: {}]
  %s2 = inlined_call_operand.vmem [shape: f32[16,1], index: 2, kind: input, shape index: {}]
  %s3 = inlined_call_operand.vmem [shape: f32[9,32,16], index: 3, kind: input, shape index: {}]
  %s4 = inlined_call_operand.vmem [shape: f32[32,1], index: 4, kind: input, shape index: {}]
  %s5 = inlined_call_operand.vmem [shape: f32[9,64,32], index: 5, kind: input, shape index: {}]
  %s6 = inlined_call_operand.vmem [shape: f32[64,1], index: 6, kind: input, shape index: {}]
  %s7 = inlined_call_operand.vmem [shape: f32[12,576], index: 7, kind: input, shape index: {}]
  %s8 = inlined_call_operand.vmem [shape: f32[12,1], index: 8, kind: input, shape index: {}]
  %s9 = inlined_call_operand.vmem [shape: f32[1,639], index: 9, kind: input, shape index: {}]
  %s10 = inlined_call_operand.vmem [shape: f32[1,581], index: 10, kind: input, shape index: {}]
  %s11 = inlined_call_operand.vmem [shape: f32[2,12,1], index: 11, kind: output, shape index: {}]
  %s12 = sld [smem:[#allocation0]]
  $region77: #{encoder_forward.1} parent=0
    _
  %s14 = ssub.s32 1, %s12
  %s15 = scalar_select 0, %s14, %s12
  loop: start=0, step=1, limit=4
  $region2: #{encoder_forward.1} parent=0 // loop_pre_header
    _
  $region3: #{encoder_forward.1} parent=0 // loop_header
    %s17 = sphi 0, %s21
    %p18 = scmp.ge.s32.totalorder %s17, 4
    %s27 = sphi 0, %s29
    %s30 = sphi 0, %s27
    %s31 = sphi 0, %s30
    %s47 = sphi 0, %s31
    %s51 = sphi 0, %s51
    %s53 = sphi 0, %s51
    %s54 = sphi 0, %s53
    %s68 = sphi 0, %s54
    %s72 = sphi 0, %s72
    %s74 = sphi 0, %s72
    %s75 = sphi 0, %s74
    %s89 = sphi 0, %s75
    %s93 = sphi 0, %s93
    %s95 = sphi 0, %s93
    %s96 = sphi 0, %s95
    %s110 = sphi 0, %s96
    %s114 = sphi 0, %s114
    %s116 = sphi 0, %s114
    %s117 = sphi 0, %s116
    %s131 = sphi 0, %s117
    %s135 = sphi 0, %s135
    %s137 = sphi 0, %s135
    %s138 = sphi 0, %s137
    %s152 = sphi 0, %s138
    %s156 = sphi 0, %s156
    %s158 = sphi 0, %s156
    %s159 = sphi 0, %s158
    %s173 = sphi 0, %s159
    %s177 = sphi 0, %s177
    %s179 = sphi 0, %s177
    %s180 = sphi 0, %s179
    %s194 = sphi 0, %s180
    %s198 = sphi 0, %s198
    %s200 = sphi 0, %s198
    %s201 = sphi 0, %s200
    %s215 = sphi 0, %s201
    %s219 = sphi 0, %s219
    %s221 = sphi 0, %s219
    %s222 = sphi 0, %s221
    %s236 = sphi 0, %s222
    %s240 = sphi 0, %s240
    %s242 = sphi 0, %s240
    %s243 = sphi 0, %s242
    %s257 = sphi 0, %s243
    %s263 = sphi 0, %s265
    %s266 = sphi 0, %s263
    %s267 = sphi 0, %s266
    %s283 = sphi 0, %s267
  $region4: #{encoder_forward.1} parent=0 // loop_header_branch
    %20 = sbr.rel (%p18) target = $region8
  $region5: #{encoder_forward.1} parent=0 // loop_body
    %s22 = ssub.s32 %s17, 1
    %s23 = ssub.s32 %s17, 2
    %s24 = sadd.s32 %s17, 1
    %s25 = ssub.s32 %s17, %s24
    %p26 = scmp.eq.s32.totalorder %s25, 0
    %s28 = sadd.s32 %s27, 1
    %s29 = scalar_select %p26, %s27, %s28
    %p32 = pneg %p26
    %p33 = scmp.eq.s32.totalorder %s17, 1
    %p34 = por %p32, %p33
    %p35 = scmp.ne.s32.totalorder %s27, %s30
    %p36 = scmp.eq.s32.totalorder %s17, 0
    %p37 = por %p35, %p36
    %p38 = scmp.ne.s32.totalorder %s27, %s30
    %p39 = scmp.eq.s32.totalorder %s22, 1
    %p40 = por %p38, %p39
    %p41 = scmp.ne.s32.totalorder %s30, %s31
    %p42 = scmp.eq.s32.totalorder %s22, 0
    %p43 = por %p41, %p42
    %p44 = scmp.ne.s32.totalorder %s30, %s31
    %p45 = scmp.eq.s32.totalorder %s23, 1
    %p46 = por %p44, %p45
    %p48 = scmp.ne.s32.totalorder %s31, %s47
    %p49 = scmp.eq.s32.totalorder %s23, 0
    %p50 = por %p48, %p49
    %s52 = sadd.s32 %s51, 1
    %p55 = scmp.eq.s32.totalorder %s17, 1
    %p56 = scmp.ne.s32.totalorder %s51, %s53
    %p57 = scmp.eq.s32.totalorder %s17, 0
    %p58 = por %p56, %p57
    %p59 = scmp.ne.s32.totalorder %s51, %s53
    %p60 = scmp.eq.s32.totalorder %s22, 1
    %p61 = por %p59, %p60
    %p62 = scmp.ne.s32.totalorder %s53, %s54
    %p63 = scmp.eq.s32.totalorder %s22, 0
    %p64 = por %p62, %p63
    %p65 = scmp.ne.s32.totalorder %s53, %s54
    %p66 = scmp.eq.s32.totalorder %s23, 1
    %p67 = por %p65, %p66
    %p69 = scmp.ne.s32.totalorder %s54, %s68
    %p70 = scmp.eq.s32.totalorder %s23, 0
    %p71 = por %p69, %p70
    %s73 = sadd.s32 %s72, 1
    %p76 = scmp.eq.s32.totalorder %s17, 1
    %p77 = scmp.ne.s32.totalorder %s72, %s74
    %p78 = scmp.eq.s32.totalorder %s17, 0
    %p79 = por %p77, %p78
    %p80 = scmp.ne.s32.totalorder %s72, %s74
    %p81 = scmp.eq.s32.totalorder %s22, 1
    %p82 = por %p80, %p81
    %p83 = scmp.ne.s32.totalorder %s74, %s75
    %p84 = scmp.eq.s32.totalorder %s22, 0
    %p85 = por %p83, %p84
    %p86 = scmp.ne.s32.totalorder %s74, %s75
    %p87 = scmp.eq.s32.totalorder %s23, 1
    %p88 = por %p86, %p87
    %p90 = scmp.ne.s32.totalorder %s75, %s89
    %p91 = scmp.eq.s32.totalorder %s23, 0
    %p92 = por %p90, %p91
    %s94 = sadd.s32 %s93, 1
    %p97 = scmp.eq.s32.totalorder %s17, 1
    %p98 = scmp.ne.s32.totalorder %s93, %s95
    %p99 = scmp.eq.s32.totalorder %s17, 0
    %p100 = por %p98, %p99
    %p101 = scmp.ne.s32.totalorder %s93, %s95
    %p102 = scmp.eq.s32.totalorder %s22, 1
    %p103 = por %p101, %p102
    %p104 = scmp.ne.s32.totalorder %s95, %s96
    %p105 = scmp.eq.s32.totalorder %s22, 0
    %p106 = por %p104, %p105
    %p107 = scmp.ne.s32.totalorder %s95, %s96
    %p108 = scmp.eq.s32.totalorder %s23, 1
    %p109 = por %p107, %p108
    %p111 = scmp.ne.s32.totalorder %s96, %s110
    %p112 = scmp.eq.s32.totalorder %s23, 0
    %p113 = por %p111, %p112
    %s115 = sadd.s32 %s114, 1
    %p118 = scmp.eq.s32.totalorder %s17, 1
    %p119 = scmp.ne.s32.totalorder %s114, %s116
    %p120 = scmp.eq.s32.totalorder %s17, 0
    %p121 = por %p119, %p120
    %p122 = scmp.ne.s32.totalorder %s114, %s116
    %p123 = scmp.eq.s32.totalorder %s22, 1
    %p124 = por %p122, %p123
    %p125 = scmp.ne.s32.totalorder %s116, %s117
    %p126 = scmp.eq.s32.totalorder %s22, 0
    %p127 = por %p125, %p126
    %p128 = scmp.ne.s32.totalorder %s116, %s117
    %p129 = scmp.eq.s32.totalorder %s23, 1
    %p130 = por %p128, %p129
    %p132 = scmp.ne.s32.totalorder %s117, %s131
    %p133 = scmp.eq.s32.totalorder %s23, 0
    %p134 = por %p132, %p133
    %s136 = sadd.s32 %s135, 1
    %p139 = scmp.eq.s32.totalorder %s17, 1
    %p140 = scmp.ne.s32.totalorder %s135, %s137
    %p141 = scmp.eq.s32.totalorder %s17, 0
    %p142 = por %p140, %p141
    %p143 = scmp.ne.s32.totalorder %s135, %s137
    %p144 = scmp.eq.s32.totalorder %s22, 1
    %p145 = por %p143, %p144
    %p146 = scmp.ne.s32.totalorder %s137, %s138
    %p147 = scmp.eq.s32.totalorder %s22, 0
    %p148 = por %p146, %p147
    %p149 = scmp.ne.s32.totalorder %s137, %s138
    %p150 = scmp.eq.s32.totalorder %s23, 1
    %p151 = por %p149, %p150
    %p153 = scmp.ne.s32.totalorder %s138, %s152
    %p154 = scmp.eq.s32.totalorder %s23, 0
    %p155 = por %p153, %p154
    %s157 = sadd.s32 %s156, 1
    %p160 = scmp.eq.s32.totalorder %s17, 1
    %p161 = scmp.ne.s32.totalorder %s156, %s158
    %p162 = scmp.eq.s32.totalorder %s17, 0
    %p163 = por %p161, %p162
    %p164 = scmp.ne.s32.totalorder %s156, %s158
    %p165 = scmp.eq.s32.totalorder %s22, 1
    %p166 = por %p164, %p165
    %p167 = scmp.ne.s32.totalorder %s158, %s159
    %p168 = scmp.eq.s32.totalorder %s22, 0
    %p169 = por %p167, %p168
    %p170 = scmp.ne.s32.totalorder %s158, %s159
    %p171 = scmp.eq.s32.totalorder %s23, 1
    %p172 = por %p170, %p171
    %p174 = scmp.ne.s32.totalorder %s159, %s173
    %p175 = scmp.eq.s32.totalorder %s23, 0
    %p176 = por %p174, %p175
    %s178 = sadd.s32 %s177, 1
    %p181 = scmp.eq.s32.totalorder %s17, 1
    %p182 = scmp.ne.s32.totalorder %s177, %s179
    %p183 = scmp.eq.s32.totalorder %s17, 0
    %p184 = por %p182, %p183
    %p185 = scmp.ne.s32.totalorder %s177, %s179
    %p186 = scmp.eq.s32.totalorder %s22, 1
    %p187 = por %p185, %p186
    %p188 = scmp.ne.s32.totalorder %s179, %s180
    %p189 = scmp.eq.s32.totalorder %s22, 0
    %p190 = por %p188, %p189
    %p191 = scmp.ne.s32.totalorder %s179, %s180
    %p192 = scmp.eq.s32.totalorder %s23, 1
    %p193 = por %p191, %p192
    %p195 = scmp.ne.s32.totalorder %s180, %s194
    %p196 = scmp.eq.s32.totalorder %s23, 0
    %p197 = por %p195, %p196
    %s199 = sadd.s32 %s198, 1
    %p202 = scmp.eq.s32.totalorder %s17, 1
    %p203 = scmp.ne.s32.totalorder %s198, %s200
    %p204 = scmp.eq.s32.totalorder %s17, 0
    %p205 = por %p203, %p204
    %p206 = scmp.ne.s32.totalorder %s198, %s200
    %p207 = scmp.eq.s32.totalorder %s22, 1
    %p208 = por %p206, %p207
    %p209 = scmp.ne.s32.totalorder %s200, %s201
    %p210 = scmp.eq.s32.totalorder %s22, 0
    %p211 = por %p209, %p210
    %p212 = scmp.ne.s32.totalorder %s200, %s201
    %p213 = scmp.eq.s32.totalorder %s23, 1
    %p214 = por %p212, %p213
    %p216 = scmp.ne.s32.totalorder %s201, %s215
    %p217 = scmp.eq.s32.totalorder %s23, 0
    %p218 = por %p216, %p217
    %s220 = sadd.s32 %s219, 1
    %p223 = scmp.eq.s32.totalorder %s17, 1
    %p224 = scmp.ne.s32.totalorder %s219, %s221
    %p225 = scmp.eq.s32.totalorder %s17, 0
    %p226 = por %p224, %p225
    %p227 = scmp.ne.s32.totalorder %s219, %s221
    %p228 = scmp.eq.s32.totalorder %s22, 1
    %p229 = por %p227, %p228
    %p230 = scmp.ne.s32.totalorder %s221, %s222
    %p231 = scmp.eq.s32.totalorder %s22, 0
    %p232 = por %p230, %p231
    %p233 = scmp.ne.s32.totalorder %s221, %s222
    %p234 = scmp.eq.s32.totalorder %s23, 1
    %p235 = por %p233, %p234
    %p237 = scmp.ne.s32.totalorder %s222, %s236
    %p238 = scmp.eq.s32.totalorder %s23, 0
    %p239 = por %p237, %p238
    %s241 = sadd.s32 %s240, 1
    %p244 = scmp.eq.s32.totalorder %s17, 1
    %p245 = scmp.ne.s32.totalorder %s240, %s242
    %p246 = scmp.eq.s32.totalorder %s17, 0
    %p247 = por %p245, %p246
    %p248 = scmp.ne.s32.totalorder %s240, %s242
    %p249 = scmp.eq.s32.totalorder %s22, 1
    %p250 = por %p248, %p249
    %p251 = scmp.ne.s32.totalorder %s242, %s243
    %p252 = scmp.eq.s32.totalorder %s22, 0
    %p253 = por %p251, %p252
    %p254 = scmp.ne.s32.totalorder %s242, %s243
    %p255 = scmp.eq.s32.totalorder %s23, 1
    %p256 = por %p254, %p255
    %p258 = scmp.ne.s32.totalorder %s243, %s257
    %p259 = scmp.eq.s32.totalorder %s23, 0
    %p260 = por %p258, %p259
    %s261 = ssub.s32 %s17, %s24
    %p262 = scmp.eq.s32.totalorder %s261, 0
    %s264 = sadd.s32 %s263, 1
    %s265 = scalar_select %p262, %s263, %s264
    %p268 = pneg %p262
    %p269 = scmp.eq.s32.totalorder %s17, 1
    %p270 = por %p268, %p269
    %p271 = scmp.ne.s32.totalorder %s263, %s266
    %p272 = scmp.eq.s32.totalorder %s17, 0
    %p273 = por %p271, %p272
    %p274 = scmp.ne.s32.totalorder %s263, %s266
    %p275 = scmp.eq.s32.totalorder %s22, 1
    %p276 = por %p274, %p275
    %p277 = scmp.ne.s32.totalorder %s266, %s267
    %p278 = scmp.eq.s32.totalorder %s22, 0
    %p279 = por %p277, %p278
    %p280 = scmp.ne.s32.totalorder %s266, %s267
    %p281 = scmp.eq.s32.totalorder %s23, 1
    %p282 = por %p280, %p281
    %p284 = scmp.ne.s32.totalorder %s267, %s283
    %p285 = scmp.eq.s32.totalorder %s23, 0
    %p286 = por %p284, %p285
    %p287 = scmp.le.s32.totalorder 1, %s17
    %p288 = scmp.lt.s32.totalorder %s17, 3
    %p289 = pnand %p287, %p288
    %p290 = pneg %p289
    // Predicated region
    $region9: #{encoder_forward.1} parent=5 // pred_check
      _
    $region10: #{encoder_forward.1} parent=5 // pred_check_branch
      %292 = sbr.rel (%p289) target = $region12
    $region11: #{encoder_forward.1} parent=5 // pred_region
      %s293 = ssub.s32 %s17, 1
      // Predicated region
      $region13: #{encoder_forward.1} parent=11 // pred_check
        %p294 = pneg %p64
      $region14: #{encoder_forward.1} parent=11 // pred_check_branch
        %296 = sbr.rel (%p294) target = $region16
      $region15: #{encoder_forward.1} parent=11 // pred_region
        _
      $region16: #{encoder_forward.1} parent=11 // pred_fallthru
        _
      // Predicated region
      $region17: #{encoder_forward.1} parent=11 // pred_check
        %p297 = pneg %p85
      $region18: #{encoder_forward.1} parent=11 // pred_check_branch
        %299 = sbr.rel (%p297) target = $region20
      $region19: #{encoder_forward.1} parent=11 // pred_region
        _
      $region20: #{encoder_forward.1} parent=11 // pred_fallthru
        _
      // Predicated region
      $region21: #{encoder_forward.1} parent=11 // pred_check
        %p300 = pneg %p106
      $region22: #{encoder_forward.1} parent=11 // pred_check_branch
        %302 = sbr.rel (%p300) target = $region24
      $region23: #{encoder_forward.1} parent=11 // pred_region
        _
      $region24: #{encoder_forward.1} parent=11 // pred_fallthru
        _
      // Predicated region
      $region25: #{encoder_forward.1} parent=11 // pred_check
        %p303 = pneg %p127
      $region26: #{encoder_forward.1} parent=11 // pred_check_branch
        %305 = sbr.rel (%p303) target = $region28
      $region27: #{encoder_forward.1} parent=11 // pred_region
        _
      $region28: #{encoder_forward.1} parent=11 // pred_fallthru
        _
      // Predicated region
      $region29: #{encoder_forward.1} parent=11 // pred_check
        %p306 = pneg %p148
      $region30: #{encoder_forward.1} parent=11 // pred_check_branch
        %308 = sbr.rel (%p306) target = $region32
      $region31: #{encoder_forward.1} parent=11 // pred_region
        _
      $region32: #{encoder_forward.1} parent=11 // pred_fallthru
        _
      // Predicated region
      $region33: #{encoder_forward.1} parent=11 // pred_check
        %p309 = pneg %p169
      $region34: #{encoder_forward.1} parent=11 // pred_check_branch
        %311 = sbr.rel (%p309) target = $region36
      $region35: #{encoder_forward.1} parent=11 // pred_region
        _
      $region36: #{encoder_forward.1} parent=11 // pred_fallthru
        _
      // Predicated region
      $region37: #{encoder_forward.1} parent=11 // pred_check
        %p312 = pneg %p190
      $region38: #{encoder_forward.1} parent=11 // pred_check_branch
        %314 = sbr.rel (%p312) target = $region40
      $region39: #{encoder_forward.1} parent=11 // pred_region
        _
      $region40: #{encoder_forward.1} parent=11 // pred_fallthru
        _
      // Predicated region
      $region41: #{encoder_forward.1} parent=11 // pred_check
        %p315 = pneg %p211
      $region42: #{encoder_forward.1} parent=11 // pred_check_branch
        %317 = sbr.rel (%p315) target = $region44
      $region43: #{encoder_forward.1} parent=11 // pred_region
        _
      $region44: #{encoder_forward.1} parent=11 // pred_fallthru
        _
      // Predicated region
      $region45: #{encoder_forward.1} parent=11 // pred_check
        %p318 = pneg %p232
      $region46: #{encoder_forward.1} parent=11 // pred_check_branch
        %320 = sbr.rel (%p318) target = $region48
      $region47: #{encoder_forward.1} parent=11 // pred_region
        _
      $region48: #{encoder_forward.1} parent=11 // pred_fallthru
        _
      // Predicated region
      $region49: #{encoder_forward.1} parent=11 // pred_check
        %p321 = pneg %p253
      $region50: #{encoder_forward.1} parent=11 // pred_check_branch
        %323 = sbr.rel (%p321) target = $region52
      $region51: #{encoder_forward.1} parent=11 // pred_region
        _
      $region52: #{encoder_forward.1} parent=11 // pred_fallthru
        _
    $region12: #{encoder_forward.1} parent=5 // pred_fallthru
      _
    %p324 = scmp.lt.s32.totalorder %s17, 2
    // Predicated region
    $region53: #{encoder_forward.1} parent=5 // pred_check
      %p325 = pneg %p324
    $region54: #{encoder_forward.1} parent=5 // pred_check_branch
      %327 = sbr.rel (%p325) target = $region56
    $region55: #{encoder_forward.1} parent=5 // pred_region
      // Predicated region
      $region57: #{encoder_forward.1} parent=55 // pred_check
        %p328 = pneg %p37
      $region58: #{encoder_forward.1} parent=55 // pred_check_branch
        %330 = sbr.rel (%p328) target = $region60
      $region59: #{encoder_forward.1} parent=55 // pred_region
        %p331 = scmp.lt.s32.totalorder %s17, 1
        %s332 = scalar_select %p331, %s17, 1
        %s333 = smul.addr %s332, 7
        %s334 = scalar_lea.vmem %s0, %s333
      $region60: #{encoder_forward.1} parent=55 // pred_fallthru
        _
    $region56: #{encoder_forward.1} parent=5 // pred_fallthru
      _
    %p335 = scmp.le.s32.totalorder 1, %s17
    %p336 = scmp.lt.s32.totalorder %s17, 3
    %p337 = pnand %p335, %p336
    %p338 = pneg %p337
    // Predicated region
    $region61: #{encoder_forward.1} parent=5 // pred_check
      _
    $region62: #{encoder_forward.1} parent=5 // pred_check_branch
      %340 = sbr.rel (%p337) target = $region64
    $region63: #{encoder_forward.1} parent=5 // pred_region
      %s341 = ssub.s32 %s17, 1
      %p342 = scmp.lt.s32.totalorder %s22, 1
      %s343 = scalar_select %p342, %s22, 1
      %s344 = smul.addr %s343, 7
      %s345 = scalar_lea.vmem %s0, %s344
      %p346 = pneg %p43
      %p347 = pneg %p40
      %p348 = pneg %p64
      %p349 = pneg %p61
      %p350 = pneg %p85
      %p351 = pneg %p82
      %p352 = pneg %p106
      %p353 = pneg %p103
      %p354 = pneg %p127
      %p355 = pneg %p124
      %p356 = pneg %p148
      %p357 = pneg %p145
      %p358 = pneg %p169
      %p359 = pneg %p166
      %p360 = pneg %p190
      %p361 = pneg %p187
      %p362 = pneg %p211
      %p363 = pneg %p208
      %p364 = pneg %p232
      %p365 = pneg %p229
      %p366 = pneg %p253
      %p367 = pneg %p250
      %p368 = pneg %p279
      %p369 = pneg %p276
      %p370 = scmp.lt.s32.totalorder %s22, 1
      %s371 = scalar_select %p370, %s22, 1
      %s372 = smul.addr %s371, 2
      %s373 = smul.addr %s372, 8
      %s374 = scalar_lea.vmem %s11, %s373
      %p375 = scmp.lt.s32.totalorder %s22, 1
      %s376 = scalar_select %p375, %s22, 1
      %s377 = smul.addr %s376, 7
      %s378 = scalar_lea.vmem %s0, %s377
      %p379 = scmp.lt.s32.totalorder %s22, 1
      %s380 = scalar_select %p379, %s22, 1
      %s381 = smul.addr %s380, 2
      %s382 = smul.addr %s381, 8
      %s383 = scalar_lea.vmem %s11, %s382
      %v384 = vld [vmem:[%s378] sm:$0x7f]
      %v385 = vld [vmem:[%s1] sm:$0xff]
      %v386 = vld [vmem:[%s1 + $0x8] sm:$0xff]
      %388 = vset.pattern.permute.xlu0 0
      %389 = vperm.xlu0 %388, %v385
      %v390 = vpop.permute.xlu0 %389
      %393 = vset.pattern.permute.xlu0 0
      %394 = vperm.xlu0 %393, %v386
      %v395 = vpop.permute.xlu0 %394
      %v398 = vperm.slane %v384, 0
      %v399 = vperm.slane %v384, 1
      %v400 = vperm.slane %v384, 2
      %v401 = vperm.slane %v384, 3
      %v402 = vperm.slane %v384, 4
      %v403 = vperm.slane %v384, 5
      %v410 = vmul.f32 %v390, %v398
      %v411 = vmul.f32 %v390, %v399
      %v412 = vmul.f32 %v390, %v400
      %v413 = vmul.f32 %v390, %v401
      %v414 = vmul.f32 %v390, %v402
      %v415 = vmul.f32 %v390, %v403
      %v416 = vmul.f32 %v395, %v398
      %v417 = vmul.f32 %v395, %v399
      %v418 = vmul.f32 %v395, %v400
      %v419 = vmul.f32 %v395, %v401
      %v420 = vmul.f32 %v395, %v402
      %v421 = vmul.f32 %v395, %v403
      %v422 = vadd.f32 %v410, 0.0
      %v423 = vadd.f32 %v411, 0.0
      %v424 = vadd.f32 %v412, 0.0
      %v425 = vadd.f32 %v413, 0.0
      %v426 = vadd.f32 %v414, 0.0
      %v427 = vadd.f32 %v415, 0.0
      %v428 = vadd.f32 %v416, 0.0
      %v429 = vadd.f32 %v417, 0.0
      %v430 = vadd.f32 %v418, 0.0
      %v431 = vadd.f32 %v419, 0.0
      %v432 = vadd.f32 %v420, 0.0
      %v433 = vadd.f32 %v421, 0.0
      %434 = vset.pattern.permute.xlu0 1
      %435 = vperm.xlu0 %434, %v385
      %v436 = vpop.permute.xlu0 %435
      %438 = vset.pattern.permute.xlu0 1
      %439 = vperm.xlu0 %438, %v386
      %v440 = vpop.permute.xlu0 %439
      %v442 = vmul.f32 %v436, %v398
      %v443 = vmul.f32 %v436, %v399
      %v444 = vmul.f32 %v436, %v400
      %v445 = vmul.f32 %v436, %v401
      %v446 = vmul.f32 %v436, %v402
      %v447 = vmul.f32 %v436, %v403
      %v448 = vmul.f32 %v440, %v398
      %v449 = vmul.f32 %v440, %v399
      %v450 = vmul.f32 %v440, %v400
      %v451 = vmul.f32 %v440, %v401
      %v452 = vmul.f32 %v440, %v402
      %v453 = vmul.f32 %v440, %v403
      %466 = vrot.lane.b32.xlu0 %v442, 127
      %v467 = vpop.permute.xlu0 %466
      %468 = vrot.lane.b32.xlu0 %v443, 127
      %v469 = vpop.permute.xlu0 %468
      %470 = vrot.lane.b32.xlu0 %v444, 127
      %v471 = vpop.permute.xlu0 %470
      %472 = vrot.lane.b32.xlu0 %v445, 127
      %v473 = vpop.permute.xlu0 %472
      %474 = vrot.lane.b32.xlu0 %v446, 127
      %v475 = vpop.permute.xlu0 %474
      %476 = vrot.lane.b32.xlu0 %v447, 127
      %v477 = vpop.permute.xlu0 %476
      %478 = vrot.lane.b32.xlu0 %v448, 127
      %v479 = vpop.permute.xlu0 %478
      %480 = vrot.lane.b32.xlu0 %v449, 127
      %v481 = vpop.permute.xlu0 %480
      %482 = vrot.lane.b32.xlu0 %v450, 127
      %v483 = vpop.permute.xlu0 %482
      %484 = vrot.lane.b32.xlu0 %v451, 127
      %v485 = vpop.permute.xlu0 %484
      %486 = vrot.lane.b32.xlu0 %v452, 127
      %v487 = vpop.permute.xlu0 %486
      %488 = vrot.lane.b32.xlu0 %v453, 127
      %v489 = vpop.permute.xlu0 %488
      %vm490 = vcmask 1039360
      %v491 = vsel %vm490, %v467, %v469
      %v492 = vsel %vm490, %v469, %v471
      %v493 = vsel %vm490, %v471, %v473
      %v494 = vsel %vm490, %v473, %v475
      %v495 = vsel %vm490, %v475, %v477
      %v496 = vsel %vm490, %v479, %v481
      %v497 = vsel %vm490, %v481, %v483
      %v498 = vsel %vm490, %v483, %v485
      %v499 = vsel %vm490, %v485, %v487
      %v500 = vsel %vm490, %v487, %v489
      %v513 = vadd.f32 %v422, %v491
      %v514 = vadd.f32 %v423, %v492
      %v515 = vadd.f32 %v424, %v493
      %v516 = vadd.f32 %v425, %v494
      %v517 = vadd.f32 %v426, %v495
      %v518 = vadd.f32 %v427, %v477
      %v519 = vadd.f32 %v428, %v496
      %v520 = vadd.f32 %v429, %v497
      %v521 = vadd.f32 %v430, %v498
      %v522 = vadd.f32 %v431, %v499
      %v523 = vadd.f32 %v432, %v500
      %v524 = vadd.f32 %v433, %v489
      %525 = vset.pattern.permute.xlu0 2
      %526 = vperm.xlu0 %525, %v385
      %v527 = vpop.permute.xlu0 %526
      %529 = vset.pattern.permute.xlu0 2
      %530 = vperm.xlu0 %529, %v386
      %v531 = vpop.permute.xlu0 %530
      %v533 = vmul.f32 %v527, %v398
      %v534 = vmul.f32 %v527, %v399
      %v535 = vmul.f32 %v527, %v400
      %v536 = vmul.f32 %v527, %v401
      %v537 = vmul.f32 %v527, %v402
      %v538 = vmul.f32 %v527, %v403
      %v539 = vmul.f32 %v531, %v398
      %v540 = vmul.f32 %v531, %v399
      %v541 = vmul.f32 %v531, %v400
      %v542 = vmul.f32 %v531, %v401
      %v543 = vmul.f32 %v531, %v402
      %v544 = vmul.f32 %v531, %v403
      %557 = vrot.lane.b32.xlu0 %v533, 126
      %v558 = vpop.permute.xlu0 %557
      %559 = vrot.lane.b32.xlu0 %v534, 126
      %v560 = vpop.permute.xlu0 %559
      %561 = vrot.lane.b32.xlu0 %v535, 126
      %v562 = vpop.permute.xlu0 %561
      %563 = vrot.lane.b32.xlu0 %v536, 126
      %v564 = vpop.permute.xlu0 %563
      %565 = vrot.lane.b32.xlu0 %v537, 126
      %v566 = vpop.permute.xlu0 %565
      %567 = vrot.lane.b32.xlu0 %v538, 126
      %v568 = vpop.permute.xlu0 %567
      %569 = vrot.lane.b32.xlu0 %v539, 126
      %v570 = vpop.permute.xlu0 %569
      %571 = vrot.lane.b32.xlu0 %v540, 126
      %v572 = vpop.permute.xlu0 %571
      %573 = vrot.lane.b32.xlu0 %v541, 126
      %v574 = vpop.permute.xlu0 %573
      %575 = vrot.lane.b32.xlu0 %v542, 126
      %v576 = vpop.permute.xlu0 %575
      %577 = vrot.lane.b32.xlu0 %v543, 126
      %v578 = vpop.permute.xlu0 %577
      %579 = vrot.lane.b32.xlu0 %v544, 126
      %v580 = vpop.permute.xlu0 %579
      %vm581 = vcmask 1031168
      %v582 = vsel %vm581, %v558, %v560
      %v583 = vsel %vm581, %v560, %v562
      %v584 = vsel %vm581, %v562, %v564
      %v585 = vsel %vm581, %v564, %v566
      %v586 = vsel %vm581, %v566, %v568
      %v587 = vsel %vm581, %v570, %v572
      %v588 = vsel %vm581, %v572, %v574
      %v589 = vsel %vm581, %v574, %v576
      %v590 = vsel %vm581, %v576, %v578
      %v591 = vsel %vm581, %v578, %v580
      %v604 = vadd.f32 %v513, %v582
      %v605 = vadd.f32 %v514, %v583
      %v606 = vadd.f32 %v515, %v584
      %v607 = vadd.f32 %v516, %v585
      %v608 = vadd.f32 %v517, %v586
      %v609 = vadd.f32 %v518, %v568
      %v610 = vadd.f32 %v519, %v587
      %v611 = vadd.f32 %v520, %v588
      %v612 = vadd.f32 %v521, %v589
      %v613 = vadd.f32 %v522, %v590
      %v614 = vadd.f32 %v523, %v591
      %v615 = vadd.f32 %v524, %v580
      %616 = vset.pattern.permute.xlu0 3
      %617 = vperm.xlu0 %616, %v385
      %v618 = vpop.permute.xlu0 %617
      %620 = vset.pattern.permute.xlu0 3
      %621 = vperm.xlu0 %620, %v386
      %v622 = vpop.permute.xlu0 %621
      %v624 = vmul.f32 %v618, %v398
      %v625 = vmul.f32 %v618, %v399
      %v626 = vmul.f32 %v618, %v400
      %v627 = vmul.f32 %v618, %v401
      %v628 = vmul.f32 %v618, %v402
      %v629 = vmul.f32 %v618, %v403
      %v630 = vmul.f32 %v622, %v398
      %v631 = vmul.f32 %v622, %v399
      %v632 = vmul.f32 %v622, %v400
      %v633 = vmul.f32 %v622, %v401
      %v634 = vmul.f32 %v622, %v402
      %v635 = vmul.f32 %v622, %v403
      %648 = vrot.lane.b32.xlu0 %v624, 125
      %v649 = vpop.permute.xlu0 %648
      %650 = vrot.lane.b32.xlu0 %v625, 125
      %v651 = vpop.permute.xlu0 %650
      %652 = vrot.lane.b32.xlu0 %v626, 125
      %v653 = vpop.permute.xlu0 %652
      %654 = vrot.lane.b32.xlu0 %v627, 125
      %v655 = vpop.permute.xlu0 %654
      %656 = vrot.lane.b32.xlu0 %v628, 125
      %v657 = vpop.permute.xlu0 %656
      %658 = vrot.lane.b32.xlu0 %v629, 125
      %v659 = vpop.permute.xlu0 %658
      %660 = vrot.lane.b32.xlu0 %v630, 125
      %v661 = vpop.permute.xlu0 %660
      %662 = vrot.lane.b32.xlu0 %v631, 125
      %v663 = vpop.permute.xlu0 %662
      %664 = vrot.lane.b32.xlu0 %v632, 125
      %v665 = vpop.permute.xlu0 %664
      %666 = vrot.lane.b32.xlu0 %v633, 125
      %v667 = vpop.permute.xlu0 %666
      %668 = vrot.lane.b32.xlu0 %v634, 125
      %v669 = vpop.permute.xlu0 %668
      %670 = vrot.lane.b32.xlu0 %v635, 125
      %v671 = vpop.permute.xlu0 %670
      %vm672 = vcmask 1022976
      %v673 = vsel %vm672, %v649, %v651
      %v674 = vsel %vm672, %v651, %v653
      %v675 = vsel %vm672, %v653, %v655
      %v676 = vsel %vm672, %v655, %v657
      %v677 = vsel %vm672, %v657, %v659
      %v678 = vsel %vm672, %v661, %v663
      %v679 = vsel %vm672, %v663, %v665
      %v680 = vsel %vm672, %v665, %v667
      %v681 = vsel %vm672, %v667, %v669
      %v682 = vsel %vm672, %v669, %v671
      %v695 = vadd.f32 %v604, %v673
      %v696 = vadd.f32 %v605, %v674
      %v697 = vadd.f32 %v606, %v675
      %v698 = vadd.f32 %v607, %v676
      %v699 = vadd.f32 %v608, %v677
      %v700 = vadd.f32 %v609, %v659
      %v701 = vadd.f32 %v610, %v678
      %v702 = vadd.f32 %v611, %v679
      %v703 = vadd.f32 %v612, %v680
      %v704 = vadd.f32 %v613, %v681
      %v705 = vadd.f32 %v614, %v682
      %v706 = vadd.f32 %v615, %v671
      %707 = vset.pattern.permute.xlu0 4
      %708 = vperm.xlu0 %707, %v385
      %v709 = vpop.permute.xlu0 %708
      %711 = vset.pattern.permute.xlu0 4
      %712 = vperm.xlu0 %711, %v386
      %v713 = vpop.permute.xlu0 %712
      %v715 = vmul.f32 %v709, %v398
      %v716 = vmul.f32 %v709, %v399
      %v717 = vmul.f32 %v709, %v400
      %v718 = vmul.f32 %v709, %v401
      %v719 = vmul.f32 %v709, %v402
      %v720 = vmul.f32 %v709, %v403
      %v721 = vmul.f32 %v713, %v398
      %v722 = vmul.f32 %v713, %v399
      %v723 = vmul.f32 %v713, %v400
      %v724 = vmul.f32 %v713, %v401
      %v725 = vmul.f32 %v713, %v402
      %v726 = vmul.f32 %v713, %v403
      %739 = vrot.lane.b32.xlu0 %v715, 124
      %v740 = vpop.permute.xlu0 %739
      %741 = vrot.lane.b32.xlu0 %v716, 124
      %v742 = vpop.permute.xlu0 %741
      %743 = vrot.lane.b32.xlu0 %v717, 124
      %v744 = vpop.permute.xlu0 %743
      %745 = vrot.lane.b32.xlu0 %v718, 124
      %v746 = vpop.permute.xlu0 %745
      %747 = vrot.lane.b32.xlu0 %v719, 124
      %v748 = vpop.permute.xlu0 %747
      %749 = vrot.lane.b32.xlu0 %v720, 124
      %v750 = vpop.permute.xlu0 %749
      %751 = vrot.lane.b32.xlu0 %v721, 124
      %v752 = vpop.permute.xlu0 %751
      %753 = vrot.lane.b32.xlu0 %v722, 124
      %v754 = vpop.permute.xlu0 %753
      %755 = vrot.lane.b32.xlu0 %v723, 124
      %v756 = vpop.permute.xlu0 %755
      %757 = vrot.lane.b32.xlu0 %v724, 124
      %v758 = vpop.permute.xlu0 %757
      %759 = vrot.lane.b32.xlu0 %v725, 124
      %v760 = vpop.permute.xlu0 %759
      %761 = vrot.lane.b32.xlu0 %v726, 124
      %v762 = vpop.permute.xlu0 %761
      %vm763 = vcmask 1014784
      %v764 = vsel %vm763, %v740, %v742
      %v765 = vsel %vm763, %v742, %v744
      %v766 = vsel %vm763, %v744, %v746
      %v767 = vsel %vm763, %v746, %v748
      %v768 = vsel %vm763, %v748, %v750
      %v769 = vsel %vm763, %v752, %v754
      %v770 = vsel %vm763, %v754, %v756
      %v771 = vsel %vm763, %v756, %v758
      %v772 = vsel %vm763, %v758, %v760
      %v773 = vsel %vm763, %v760, %v762
      %v786 = vadd.f32 %v695, %v764
      %v787 = vadd.f32 %v696, %v765
      %v788 = vadd.f32 %v697, %v766
      %v789 = vadd.f32 %v698, %v767
      %v790 = vadd.f32 %v699, %v768
      %v791 = vadd.f32 %v700, %v750
      %v792 = vadd.f32 %v701, %v769
      %v793 = vadd.f32 %v702, %v770
      %v794 = vadd.f32 %v703, %v771
      %v795 = vadd.f32 %v704, %v772
      %v796 = vadd.f32 %v705, %v773
      %v797 = vadd.f32 %v706, %v762
      %798 = vset.pattern.permute.xlu0 5
      %799 = vperm.xlu0 %798, %v385
      %v800 = vpop.permute.xlu0 %799
      %802 = vset.pattern.permute.xlu0 5
      %803 = vperm.xlu0 %802, %v386
      %v804 = vpop.permute.xlu0 %803
      %v806 = vmul.f32 %v800, %v398
      %v807 = vmul.f32 %v800, %v399
      %v808 = vmul.f32 %v800, %v400
      %v809 = vmul.f32 %v800, %v401
      %v810 = vmul.f32 %v800, %v402
      %v811 = vmul.f32 %v800, %v403
      %v812 = vmul.f32 %v804, %v398
      %v813 = vmul.f32 %v804, %v399
      %v814 = vmul.f32 %v804, %v400
      %v815 = vmul.f32 %v804, %v401
      %v816 = vmul.f32 %v804, %v402
      %v817 = vmul.f32 %v804, %v403
      %830 = vrot.lane.b32.xlu0 %v806, 100
      %v831 = vpop.permute.xlu0 %830
      %832 = vrot.lane.b32.xlu0 %v807, 100
      %v833 = vpop.permute.xlu0 %832
      %834 = vrot.lane.b32.xlu0 %v808, 100
      %v835 = vpop.permute.xlu0 %834
      %836 = vrot.lane.b32.xlu0 %v809, 100
      %v837 = vpop.permute.xlu0 %836
      %838 = vrot.lane.b32.xlu0 %v810, 100
      %v839 = vpop.permute.xlu0 %838
      %840 = vrot.lane.b32.xlu0 %v811, 100
      %v841 = vpop.permute.xlu0 %840
      %842 = vrot.lane.b32.xlu0 %v812, 100
      %v843 = vpop.permute.xlu0 %842
      %844 = vrot.lane.b32.xlu0 %v813, 100
      %v845 = vpop.permute.xlu0 %844
      %846 = vrot.lane.b32.xlu0 %v814, 100
      %v847 = vpop.permute.xlu0 %846
      %848 = vrot.lane.b32.xlu0 %v815, 100
      %v849 = vpop.permute.xlu0 %848
      %850 = vrot.lane.b32.xlu0 %v816, 100
      %v851 = vpop.permute.xlu0 %850
      %852 = vrot.lane.b32.xlu0 %v817, 100
      %v853 = vpop.permute.xlu0 %852
      %vm854 = vcmask 818176
      %v855 = vsel %vm854, %v831, %v833
      %v856 = vsel %vm854, %v833, %v835
      %v857 = vsel %vm854, %v835, %v837
      %v858 = vsel %vm854, %v837, %v839
      %v859 = vsel %vm854, %v839, %v841
      %v860 = vsel %vm854, %v843, %v845
      %v861 = vsel %vm854, %v845, %v847
      %v862 = vsel %vm854, %v847, %v849
      %v863 = vsel %vm854, %v849, %v851
      %v864 = vsel %vm854, %v851, %v853
      %v877 = vadd.f32 %v786, %v855
      %v878 = vadd.f32 %v787, %v856
      %v879 = vadd.f32 %v788, %v857
      %v880 = vadd.f32 %v789, %v858
      %v881 = vadd.f32 %v790, %v859
      %v882 = vadd.f32 %v791, %v841
      %v883 = vadd.f32 %v792, %v860
      %v884 = vadd.f32 %v793, %v861
      %v885 = vadd.f32 %v794, %v862
      %v886 = vadd.f32 %v795, %v863
      %v887 = vadd.f32 %v796, %v864
      %v888 = vadd.f32 %v797, %v853
      %889 = vset.pattern.permute.xlu0 6
      %890 = vperm.xlu0 %889, %v385
      %v891 = vpop.permute.xlu0 %890
      %893 = vset.pattern.permute.xlu0 6
      %894 = vperm.xlu0 %893, %v386
      %v895 = vpop.permute.xlu0 %894
      %v897 = vmul.f32 %v891, %v398
      %v898 = vmul.f32 %v891, %v399
      %v899 = vmul.f32 %v891, %v400
      %v900 = vmul.f32 %v891, %v401
      %v901 = vmul.f32 %v891, %v402
      %v902 = vmul.f32 %v891, %v403
      %v903 = vmul.f32 %v895, %v398
      %v904 = vmul.f32 %v895, %v399
      %v905 = vmul.f32 %v895, %v400
      %v906 = vmul.f32 %v895, %v401
      %v907 = vmul.f32 %v895, %v402
      %v908 = vmul.f32 %v895, %v403
      %921 = vrot.lane.b32.xlu0 %v897, 99
      %v922 = vpop.permute.xlu0 %921
      %923 = vrot.lane.b32.xlu0 %v898, 99
      %v924 = vpop.permute.xlu0 %923
      %925 = vrot.lane.b32.xlu0 %v899, 99
      %v926 = vpop.permute.xlu0 %925
      %927 = vrot.lane.b32.xlu0 %v900, 99
      %v928 = vpop.permute.xlu0 %927
      %929 = vrot.lane.b32.xlu0 %v901, 99
      %v930 = vpop.permute.xlu0 %929
      %931 = vrot.lane.b32.xlu0 %v902, 99
      %v932 = vpop.permute.xlu0 %931
      %933 = vrot.lane.b32.xlu0 %v903, 99
      %v934 = vpop.permute.xlu0 %933
      %935 = vrot.lane.b32.xlu0 %v904, 99
      %v936 = vpop.permute.xlu0 %935
      %937 = vrot.lane.b32.xlu0 %v905, 99
      %v938 = vpop.permute.xlu0 %937
      %939 = vrot.lane.b32.xlu0 %v906, 99
      %v940 = vpop.permute.xlu0 %939
      %941 = vrot.lane.b32.xlu0 %v907, 99
      %v942 = vpop.permute.xlu0 %941
      %943 = vrot.lane.b32.xlu0 %v908, 99
      %v944 = vpop.permute.xlu0 %943
      %vm945 = vcmask 809984
      %v946 = vsel %vm945, %v922, %v924
      %v947 = vsel %vm945, %v924, %v926
      %v948 = vsel %vm945, %v926, %v928
      %v949 = vsel %vm945, %v928, %v930
      %v950 = vsel %vm945, %v930, %v932
      %v951 = vsel %vm945, %v934, %v936
      %v952 = vsel %vm945, %v936, %v938
      %v953 = vsel %vm945, %v938, %v940
      %v954 = vsel %vm945, %v940, %v942
      %v955 = vsel %vm945, %v942, %v944
      %v968 = vadd.f32 %v877, %v946
      %v969 = vadd.f32 %v878, %v947
      %v970 = vadd.f32 %v879, %v948
      %v971 = vadd.f32 %v880, %v949
      %v972 = vadd.f32 %v881, %v950
      %v973 = vadd.f32 %v882, %v932
      %v974 = vadd.f32 %v883, %v951
      %v975 = vadd.f32 %v884, %v952
      %v976 = vadd.f32 %v885, %v953
      %v977 = vadd.f32 %v886, %v954
      %v978 = vadd.f32 %v887, %v955
      %v979 = vadd.f32 %v888, %v944
      %980 = vset.pattern.permute.xlu0 7
      %981 = vperm.xlu0 %980, %v385
      %v982 = vpop.permute.xlu0 %981
      %984 = vset.pattern.permute.xlu0 7
      %985 = vperm.xlu0 %984, %v386
      %v986 = vpop.permute.xlu0 %985
      %v988 = vmul.f32 %v982, %v398
      %v989 = vmul.f32 %v982, %v399
      %v990 = vmul.f32 %v982, %v400
      %v991 = vmul.f32 %v982, %v401
      %v992 = vmul.f32 %v982, %v402
      %v993 = vmul.f32 %v982, %v403
      %v994 = vmul.f32 %v986, %v398
      %v995 = vmul.f32 %v986, %v399
      %v996 = vmul.f32 %v986, %v400
      %v997 = vmul.f32 %v986, %v401
      %v998 = vmul.f32 %v986, %v402
      %v999 = vmul.f32 %v986, %v403
      %1012 = vrot.lane.b32.xlu0 %v988, 98
      %v1013 = vpop.permute.xlu0 %1012
      %1014 = vrot.lane.b32.xlu0 %v989, 98
      %v1015 = vpop.permute.xlu0 %1014
      %1016 = vrot.lane.b32.xlu0 %v990, 98
      %v1017 = vpop.permute.xlu0 %1016
      %1018 = vrot.lane.b32.xlu0 %v991, 98
      %v1019 = vpop.permute.xlu0 %1018
      %1020 = vrot.lane.b32.xlu0 %v992, 98
      %v1021 = vpop.permute.xlu0 %1020
      %1022 = vrot.lane.b32.xlu0 %v993, 98
      %v1023 = vpop.permute.xlu0 %1022
      %1024 = vrot.lane.b32.xlu0 %v994, 98
      %v1025 = vpop.permute.xlu0 %1024
      %1026 = vrot.lane.b32.xlu0 %v995, 98
      %v1027 = vpop.permute.xlu0 %1026
      %1028 = vrot.lane.b32.xlu0 %v996, 98
      %v1029 = vpop.permute.xlu0 %1028
      %1030 = vrot.lane.b32.xlu0 %v997, 98
      %v1031 = vpop.permute.xlu0 %1030
      %1032 = vrot.lane.b32.xlu0 %v998, 98
      %v1033 = vpop.permute.xlu0 %1032
      %1034 = vrot.lane.b32.xlu0 %v999, 98
      %v1035 = vpop.permute.xlu0 %1034
      %vm1036 = vcmask 801792
      %v1037 = vsel %vm1036, %v1013, %v1015
      %v1038 = vsel %vm1036, %v1015, %v1017
      %v1039 = vsel %vm1036, %v1017, %v1019
      %v1040 = vsel %vm1036, %v1019, %v1021
      %v1041 = vsel %vm1036, %v1021, %v1023
      %v1042 = vsel %vm1036, %v1025, %v1027
      %v1043 = vsel %vm1036, %v1027, %v1029
      %v1044 = vsel %vm1036, %v1029, %v1031
      %v1045 = vsel %vm1036, %v1031, %v1033
      %v1046 = vsel %vm1036, %v1033, %v1035
      %v1059 = vadd.f32 %v968, %v1037
      %v1060 = vadd.f32 %v969, %v1038
      %v1061 = vadd.f32 %v970, %v1039
      %v1062 = vadd.f32 %v971, %v1040
      %v1063 = vadd.f32 %v972, %v1041
      %v1064 = vadd.f32 %v973, %v1023
      %v1065 = vadd.f32 %v974, %v1042
      %v1066 = vadd.f32 %v975, %v1043
      %v1067 = vadd.f32 %v976, %v1044
      %v1068 = vadd.f32 %v977, %v1045
      %v1069 = vadd.f32 %v978, %v1046
      %v1070 = vadd.f32 %v979, %v1035
      %1071 = vset.pattern.permute.xlu0 8
      %1072 = vperm.xlu0 %1071, %v385
      %v1073 = vpop.permute.xlu0 %1072
      %1075 = vset.pattern.permute.xlu0 8
      %1076 = vperm.xlu0 %1075, %v386
      %v1077 = vpop.permute.xlu0 %1076
      %v1079 = vmul.f32 %v1073, %v398
      %v1080 = vmul.f32 %v1073, %v399
      %v1081 = vmul.f32 %v1073, %v400
      %v1082 = vmul.f32 %v1073, %v401
      %v1083 = vmul.f32 %v1073, %v402
      %v1084 = vmul.f32 %v1073, %v403
      %v1085 = vmul.f32 %v1077, %v398
      %v1086 = vmul.f32 %v1077, %v399
      %v1087 = vmul.f32 %v1077, %v400
      %v1088 = vmul.f32 %v1077, %v401
      %v1089 = vmul.f32 %v1077, %v402
      %v1090 = vmul.f32 %v1077, %v403
      %1103 = vrot.lane.b32.xlu0 %v1079, 97
      %v1104 = vpop.permute.xlu0 %1103
      %1105 = vrot.lane.b32.xlu0 %v1080, 97
      %v1106 = vpop.permute.xlu0 %1105
      %1107 = vrot.lane.b32.xlu0 %v1081, 97
      %v1108 = vpop.permute.xlu0 %1107
      %1109 = vrot.lane.b32.xlu0 %v1082, 97
      %v1110 = vpop.permute.xlu0 %1109
      %1111 = vrot.lane.b32.xlu0 %v1083, 97
      %v1112 = vpop.permute.xlu0 %1111
      %1113 = vrot.lane.b32.xlu0 %v1084, 97
      %v1114 = vpop.permute.xlu0 %1113
      %1115 = vrot.lane.b32.xlu0 %v1085, 97
      %v1116 = vpop.permute.xlu0 %1115
      %1117 = vrot.lane.b32.xlu0 %v1086, 97
      %v1118 = vpop.permute.xlu0 %1117
      %1119 = vrot.lane.b32.xlu0 %v1087, 97
      %v1120 = vpop.permute.xlu0 %1119
      %1121 = vrot.lane.b32.xlu0 %v1088, 97
      %v1122 = vpop.permute.xlu0 %1121
      %1123 = vrot.lane.b32.xlu0 %v1089, 97
      %v1124 = vpop.permute.xlu0 %1123
      %1125 = vrot.lane.b32.xlu0 %v1090, 97
      %v1126 = vpop.permute.xlu0 %1125
      %vm1127 = vcmask 793600
      %v1128 = vsel %vm1127, %v1104, %v1106
      %v1129 = vsel %vm1127, %v1106, %v1108
      %v1130 = vsel %vm1127, %v1108, %v1110
      %v1131 = vsel %vm1127, %v1110, %v1112
      %v1132 = vsel %vm1127, %v1112, %v1114
      %v1133 = vsel %vm1127, %v1116, %v1118
      %v1134 = vsel %vm1127, %v1118, %v1120
      %v1135 = vsel %vm1127, %v1120, %v1122
      %v1136 = vsel %vm1127, %v1122, %v1124
      %v1137 = vsel %vm1127, %v1124, %v1126
      %v1150 = vadd.f32 %v1059, %v1128
      %v1151 = vadd.f32 %v1060, %v1129
      %v1152 = vadd.f32 %v1061, %v1130
      %v1153 = vadd.f32 %v1062, %v1131
      %v1154 = vadd.f32 %v1063, %v1132
      %v1155 = vadd.f32 %v1064, %v1114
      %v1156 = vadd.f32 %v1065, %v1133
      %v1157 = vadd.f32 %v1066, %v1134
      %v1158 = vadd.f32 %v1067, %v1135
      %v1159 = vadd.f32 %v1068, %v1136
      %v1160 = vadd.f32 %v1069, %v1137
      %v1161 = vadd.f32 %v1070, %v1126
      %1162 = vset.pattern.permute.xlu0 9
      %1163 = vperm.xlu0 %1162, %v385
      %v1164 = vpop.permute.xlu0 %1163
      %1166 = vset.pattern.permute.xlu0 9
      %1167 = vperm.xlu0 %1166, %v386
      %v1168 = vpop.permute.xlu0 %1167
      %v1170 = vmul.f32 %v1164, %v398
      %v1171 = vmul.f32 %v1164, %v399
      %v1172 = vmul.f32 %v1164, %v400
      %v1173 = vmul.f32 %v1164, %v401
      %v1174 = vmul.f32 %v1164, %v402
      %v1175 = vmul.f32 %v1164, %v403
      %v1176 = vmul.f32 %v1168, %v398
      %v1177 = vmul.f32 %v1168, %v399
      %v1178 = vmul.f32 %v1168, %v400
      %v1179 = vmul.f32 %v1168, %v401
      %v1180 = vmul.f32 %v1168, %v402
      %v1181 = vmul.f32 %v1168, %v403
      %1194 = vrot.lane.b32.xlu0 %v1170, 96
      %v1195 = vpop.permute.xlu0 %1194
      %1196 = vrot.lane.b32.xlu0 %v1171, 96
      %v1197 = vpop.permute.xlu0 %1196
      %1198 = vrot.lane.b32.xlu0 %v1172, 96
      %v1199 = vpop.permute.xlu0 %1198
      %1200 = vrot.lane.b32.xlu0 %v1173, 96
      %v1201 = vpop.permute.xlu0 %1200
      %1202 = vrot.lane.b32.xlu0 %v1174, 96
      %v1203 = vpop.permute.xlu0 %1202
      %1204 = vrot.lane.b32.xlu0 %v1175, 96
      %v1205 = vpop.permute.xlu0 %1204
      %1206 = vrot.lane.b32.xlu0 %v1176, 96
      %v1207 = vpop.permute.xlu0 %1206
      %1208 = vrot.lane.b32.xlu0 %v1177, 96
      %v1209 = vpop.permute.xlu0 %1208
      %1210 = vrot.lane.b32.xlu0 %v1178, 96
      %v1211 = vpop.permute.xlu0 %1210
      %1212 = vrot.lane.b32.xlu0 %v1179, 96
      %v1213 = vpop.permute.xlu0 %1212
      %1214 = vrot.lane.b32.xlu0 %v1180, 96
      %v1215 = vpop.permute.xlu0 %1214
      %1216 = vrot.lane.b32.xlu0 %v1181, 96
      %v1217 = vpop.permute.xlu0 %1216
      %vm1218 = vcmask 785408
      %v1219 = vsel %vm1218, %v1195, %v1197
      %v1220 = vsel %vm1218, %v1197, %v1199
      %v1221 = vsel %vm1218, %v1199, %v1201
      %v1222 = vsel %vm1218, %v1201, %v1203
      %v1223 = vsel %vm1218, %v1203, %v1205
      %v1224 = vsel %vm1218, %v1207, %v1209
      %v1225 = vsel %vm1218, %v1209, %v1211
      %v1226 = vsel %vm1218, %v1211, %v1213
      %v1227 = vsel %vm1218, %v1213, %v1215
      %v1228 = vsel %vm1218, %v1215, %v1217
      %v1241 = vadd.f32 %v1150, %v1219
      %v1242 = vadd.f32 %v1151, %v1220
      %v1243 = vadd.f32 %v1152, %v1221
      %v1244 = vadd.f32 %v1153, %v1222
      %v1245 = vadd.f32 %v1154, %v1223
      %v1246 = vadd.f32 %v1155, %v1205
      %v1247 = vadd.f32 %v1156, %v1224
      %v1248 = vadd.f32 %v1157, %v1225
      %v1249 = vadd.f32 %v1158, %v1226
      %v1250 = vadd.f32 %v1159, %v1227
      %v1251 = vadd.f32 %v1160, %v1228
      %v1252 = vadd.f32 %v1161, %v1217
      %1253 = vset.pattern.permute.xlu0 10
      %1254 = vperm.xlu0 %1253, %v385
      %v1255 = vpop.permute.xlu0 %1254
      %1257 = vset.pattern.permute.xlu0 10
      %1258 = vperm.xlu0 %1257, %v386
      %v1259 = vpop.permute.xlu0 %1258
      %v1261 = vmul.f32 %v1255, %v398
      %v1262 = vmul.f32 %v1255, %v399
      %v1263 = vmul.f32 %v1255, %v400
      %v1264 = vmul.f32 %v1255, %v401
      %v1265 = vmul.f32 %v1255, %v402
      %v1266 = vmul.f32 %v1255, %v403
      %v1267 = vmul.f32 %v1259, %v398
      %v1268 = vmul.f32 %v1259, %v399
      %v1269 = vmul.f32 %v1259, %v400
      %v1270 = vmul.f32 %v1259, %v401
      %v1271 = vmul.f32 %v1259, %v402
      %v1272 = vmul.f32 %v1259, %v403
      %1285 = vrot.lane.b32.xlu0 %v1261, 72
      %v1286 = vpop.permute.xlu0 %1285
      %1287 = vrot.lane.b32.xlu0 %v1262, 72
      %v1288 = vpop.permute.xlu0 %1287
      %1289 = vrot.lane.b32.xlu0 %v1263, 72
      %v1290 = vpop.permute.xlu0 %1289
      %1291 = vrot.lane.b32.xlu0 %v1264, 72
      %v1292 = vpop.permute.xlu0 %1291
      %1293 = vrot.lane.b32.xlu0 %v1265, 72
      %v1294 = vpop.permute.xlu0 %1293
      %1295 = vrot.lane.b32.xlu0 %v1266, 72
      %v1296 = vpop.permute.xlu0 %1295
      %1297 = vrot.lane.b32.xlu0 %v1267, 72
      %v1298 = vpop.permute.xlu0 %1297
      %1299 = vrot.lane.b32.xlu0 %v1268, 72
      %v1300 = vpop.permute.xlu0 %1299
      %1301 = vrot.lane.b32.xlu0 %v1269, 72
      %v1302 = vpop.permute.xlu0 %1301
      %1303 = vrot.lane.b32.xlu0 %v1270, 72
      %v1304 = vpop.permute.xlu0 %1303
      %1305 = vrot.lane.b32.xlu0 %v1271, 72
      %v1306 = vpop.permute.xlu0 %1305
      %1307 = vrot.lane.b32.xlu0 %v1272, 72
      %v1308 = vpop.permute.xlu0 %1307
      %vm1309 = vcmask 588800
      %v1310 = vsel %vm1309, %v1286, %v1288
      %v1311 = vsel %vm1309, %v1288, %v1290
      %v1312 = vsel %vm1309, %v1290, %v1292
      %v1313 = vsel %vm1309, %v1292, %v1294
      %v1314 = vsel %vm1309, %v1294, %v1296
      %v1315 = vsel %vm1309, %v1298, %v1300
      %v1316 = vsel %vm1309, %v1300, %v1302
      %v1317 = vsel %vm1309, %v1302, %v1304
      %v1318 = vsel %vm1309, %v1304, %v1306
      %v1319 = vsel %vm1309, %v1306, %v1308
      %v1332 = vadd.f32 %v1241, %v1310
      %v1333 = vadd.f32 %v1242, %v1311
      %v1334 = vadd.f32 %v1243, %v1312
      %v1335 = vadd.f32 %v1244, %v1313
      %v1336 = vadd.f32 %v1245, %v1314
      %v1337 = vadd.f32 %v1246, %v1296
      %v1338 = vadd.f32 %v1247, %v1315
      %v1339 = vadd.f32 %v1248, %v1316
      %v1340 = vadd.f32 %v1249, %v1317
      %v1341 = vadd.f32 %v1250, %v1318
      %v1342 = vadd.f32 %v1251, %v1319
      %v1343 = vadd.f32 %v1252, %v1308
      %1344 = vset.pattern.permute.xlu0 11
      %1345 = vperm.xlu0 %1344, %v385
      %v1346 = vpop.permute.xlu0 %1345
      %1348 = vset.pattern.permute.xlu0 11
      %1349 = vperm.xlu0 %1348, %v386
      %v1350 = vpop.permute.xlu0 %1349
      %v1352 = vmul.f32 %v1346, %v398
      %v1353 = vmul.f32 %v1346, %v399
      %v1354 = vmul.f32 %v1346, %v400
      %v1355 = vmul.f32 %v1346, %v401
      %v1356 = vmul.f32 %v1346, %v402
      %v1357 = vmul.f32 %v1346, %v403
      %v1358 = vmul.f32 %v1350, %v398
      %v1359 = vmul.f32 %v1350, %v399
      %v1360 = vmul.f32 %v1350, %v400
      %v1361 = vmul.f32 %v1350, %v401
      %v1362 = vmul.f32 %v1350, %v402
      %v1363 = vmul.f32 %v1350, %v403
      %1376 = vrot.lane.b32.xlu0 %v1352, 71
      %v1377 = vpop.permute.xlu0 %1376
      %1378 = vrot.lane.b32.xlu0 %v1353, 71
      %v1379 = vpop.permute.xlu0 %1378
      %1380 = vrot.lane.b32.xlu0 %v1354, 71
      %v1381 = vpop.permute.xlu0 %1380
      %1382 = vrot.lane.b32.xlu0 %v1355, 71
      %v1383 = vpop.permute.xlu0 %1382
      %1384 = vrot.lane.b32.xlu0 %v1356, 71
      %v1385 = vpop.permute.xlu0 %1384
      %1386 = vrot.lane.b32.xlu0 %v1357, 71
      %v1387 = vpop.permute.xlu0 %1386
      %1388 = vrot.lane.b32.xlu0 %v1358, 71
      %v1389 = vpop.permute.xlu0 %1388
      %1390 = vrot.lane.b32.xlu0 %v1359, 71
      %v1391 = vpop.permute.xlu0 %1390
      %1392 = vrot.lane.b32.xlu0 %v1360, 71
      %v1393 = vpop.permute.xlu0 %1392
      %1394 = vrot.lane.b32.xlu0 %v1361, 71
      %v1395 = vpop.permute.xlu0 %1394
      %1396 = vrot.lane.b32.xlu0 %v1362, 71
      %v1397 = vpop.permute.xlu0 %1396
      %1398 = vrot.lane.b32.xlu0 %v1363, 71
      %v1399 = vpop.permute.xlu0 %1398
      %vm1400 = vcmask 580608
      %v1401 = vsel %vm1400, %v1377, %v1379
      %v1402 = vsel %vm1400, %v1379, %v1381
      %v1403 = vsel %vm1400, %v1381, %v1383
      %v1404 = vsel %vm1400, %v1383, %v1385
      %v1405 = vsel %vm1400, %v1385, %v1387
      %v1406 = vsel %vm1400, %v1389, %v1391
      %v1407 = vsel %vm1400, %v1391, %v1393
      %v1408 = vsel %vm1400, %v1393, %v1395
      %v1409 = vsel %vm1400, %v1395, %v1397
      %v1410 = vsel %vm1400, %v1397, %v1399
      %v1423 = vadd.f32 %v1332, %v1401
      %v1424 = vadd.f32 %v1333, %v1402
      %v1425 = vadd.f32 %v1334, %v1403
      %v1426 = vadd.f32 %v1335, %v1404
      %v1427 = vadd.f32 %v1336, %v1405
      %v1428 = vadd.f32 %v1337, %v1387
      %v1429 = vadd.f32 %v1338, %v1406
      %v1430 = vadd.f32 %v1339, %v1407
      %v1431 = vadd.f32 %v1340, %v1408
      %v1432 = vadd.f32 %v1341, %v1409
      %v1433 = vadd.f32 %v1342, %v1410
      %v1434 = vadd.f32 %v1343, %v1399
      %1435 = vset.pattern.permute.xlu0 12
      %1436 = vperm.xlu0 %1435, %v385
      %v1437 = vpop.permute.xlu0 %1436
      %1439 = vset.pattern.permute.xlu0 12
      %1440 = vperm.xlu0 %1439, %v386
      %v1441 = vpop.permute.xlu0 %1440
      %v1443 = vmul.f32 %v1437, %v398
      %v1444 = vmul.f32 %v1437, %v399
      %v1445 = vmul.f32 %v1437, %v400
      %v1446 = vmul.f32 %v1437, %v401
      %v1447 = vmul.f32 %v1437, %v402
      %v1448 = vmul.f32 %v1437, %v403
      %v1449 = vmul.f32 %v1441, %v398
      %v1450 = vmul.f32 %v1441, %v399
      %v1451 = vmul.f32 %v1441, %v400
      %v1452 = vmul.f32 %v1441, %v401
      %v1453 = vmul.f32 %v1441, %v402
      %v1454 = vmul.f32 %v1441, %v403
      %1467 = vrot.lane.b32.xlu0 %v1443, 70
      %v1468 = vpop.permute.xlu0 %1467
      %1469 = vrot.lane.b32.xlu0 %v1444, 70
      %v1470 = vpop.permute.xlu0 %1469
      %1471 = vrot.lane.b32.xlu0 %v1445, 70
      %v1472 = vpop.permute.xlu0 %1471
      %1473 = vrot.lane.b32.xlu0 %v1446, 70
      %v1474 = vpop.permute.xlu0 %1473
      %1475 = vrot.lane.b32.xlu0 %v1447, 70
      %v1476 = vpop.permute.xlu0 %1475
      %1477 = vrot.lane.b32.xlu0 %v1448, 70
      %v1478 = vpop.permute.xlu0 %1477
      %1479 = vrot.lane.b32.xlu0 %v1449, 70
      %v1480 = vpop.permute.xlu0 %1479
      %1481 = vrot.lane.b32.xlu0 %v1450, 70
      %v1482 = vpop.permute.xlu0 %1481
      %1483 = vrot.lane.b32.xlu0 %v1451, 70
      %v1484 = vpop.permute.xlu0 %1483
      %1485 = vrot.lane.b32.xlu0 %v1452, 70
      %v1486 = vpop.permute.xlu0 %1485
      %1487 = vrot.lane.b32.xlu0 %v1453, 70
      %v1488 = vpop.permute.xlu0 %1487
      %1489 = vrot.lane.b32.xlu0 %v1454, 70
      %v1490 = vpop.permute.xlu0 %1489
      %vm1491 = vcmask 572416
      %v1492 = vsel %vm1491, %v1468, %v1470
      %v1493 = vsel %vm1491, %v1470, %v1472
      %v1494 = vsel %vm1491, %v1472, %v1474
      %v1495 = vsel %vm1491, %v1474, %v1476
      %v1496 = vsel %vm1491, %v1476, %v1478
      %v1497 = vsel %vm1491, %v1480, %v1482
      %v1498 = vsel %vm1491, %v1482, %v1484
      %v1499 = vsel %vm1491, %v1484, %v1486
      %v1500 = vsel %vm1491, %v1486, %v1488
      %v1501 = vsel %vm1491, %v1488, %v1490
      %v1514 = vadd.f32 %v1423, %v1492
      %v1515 = vadd.f32 %v1424, %v1493
      %v1516 = vadd.f32 %v1425, %v1494
      %v1517 = vadd.f32 %v1426, %v1495
      %v1518 = vadd.f32 %v1427, %v1496
      %v1519 = vadd.f32 %v1428, %v1478
      %v1520 = vadd.f32 %v1429, %v1497
      %v1521 = vadd.f32 %v1430, %v1498
      %v1522 = vadd.f32 %v1431, %v1499
      %v1523 = vadd.f32 %v1432, %v1500
      %v1524 = vadd.f32 %v1433, %v1501
      %v1525 = vadd.f32 %v1434, %v1490
      %1526 = vset.pattern.permute.xlu0 13
      %1527 = vperm.xlu0 %1526, %v385
      %v1528 = vpop.permute.xlu0 %1527
      %1530 = vset.pattern.permute.xlu0 13
      %1531 = vperm.xlu0 %1530, %v386
      %v1532 = vpop.permute.xlu0 %1531
      %v1534 = vmul.f32 %v1528, %v398
      %v1535 = vmul.f32 %v1528, %v399
      %v1536 = vmul.f32 %v1528, %v400
      %v1537 = vmul.f32 %v1528, %v401
      %v1538 = vmul.f32 %v1528, %v402
      %v1539 = vmul.f32 %v1528, %v403
      %v1540 = vmul.f32 %v1532, %v398
      %v1541 = vmul.f32 %v1532, %v399
      %v1542 = vmul.f32 %v1532, %v400
      %v1543 = vmul.f32 %v1532, %v401
      %v1544 = vmul.f32 %v1532, %v402
      %v1545 = vmul.f32 %v1532, %v403
      %1558 = vrot.lane.b32.xlu0 %v1534, 69
      %v1559 = vpop.permute.xlu0 %1558
      %1560 = vrot.lane.b32.xlu0 %v1535, 69
      %v1561 = vpop.permute.xlu0 %1560
      %1562 = vrot.lane.b32.xlu0 %v1536, 69
      %v1563 = vpop.permute.xlu0 %1562
      %1564 = vrot.lane.b32.xlu0 %v1537, 69
      %v1565 = vpop.permute.xlu0 %1564
      %1566 = vrot.lane.b32.xlu0 %v1538, 69
      %v1567 = vpop.permute.xlu0 %1566
      %1568 = vrot.lane.b32.xlu0 %v1539, 69
      %v1569 = vpop.permute.xlu0 %1568
      %1570 = vrot.lane.b32.xlu0 %v1540, 69
      %v1571 = vpop.permute.xlu0 %1570
      %1572 = vrot.lane.b32.xlu0 %v1541, 69
      %v1573 = vpop.permute.xlu0 %1572
      %1574 = vrot.lane.b32.xlu0 %v1542, 69
      %v1575 = vpop.permute.xlu0 %1574
      %1576 = vrot.lane.b32.xlu0 %v1543, 69
      %v1577 = vpop.permute.xlu0 %1576
      %1578 = vrot.lane.b32.xlu0 %v1544, 69
      %v1579 = vpop.permute.xlu0 %1578
      %1580 = vrot.lane.b32.xlu0 %v1545, 69
      %v1581 = vpop.permute.xlu0 %1580
      %vm1582 = vcmask 564224
      %v1583 = vsel %vm1582, %v1559, %v1561
      %v1584 = vsel %vm1582, %v1561, %v1563
      %v1585 = vsel %vm1582, %v1563, %v1565
      %v1586 = vsel %vm1582, %v1565, %v1567
      %v1587 = vsel %vm1582, %v1567, %v1569
      %v1588 = vsel %vm1582, %v1571, %v1573
      %v1589 = vsel %vm1582, %v1573, %v1575
      %v1590 = vsel %vm1582, %v1575, %v1577
      %v1591 = vsel %vm1582, %v1577, %v1579
      %v1592 = vsel %vm1582, %v1579, %v1581
      %v1605 = vadd.f32 %v1514, %v1583
      %v1606 = vadd.f32 %v1515, %v1584
      %v1607 = vadd.f32 %v1516, %v1585
      %v1608 = vadd.f32 %v1517, %v1586
      %v1609 = vadd.f32 %v1518, %v1587
      %v1610 = vadd.f32 %v1519, %v1569
      %v1611 = vadd.f32 %v1520, %v1588
      %v1612 = vadd.f32 %v1521, %v1589
      %v1613 = vadd.f32 %v1522, %v1590
      %v1614 = vadd.f32 %v1523, %v1591
      %v1615 = vadd.f32 %v1524, %v1592
      %v1616 = vadd.f32 %v1525, %v1581
      %1617 = vset.pattern.permute.xlu0 14
      %1618 = vperm.xlu0 %1617, %v385
      %v1619 = vpop.permute.xlu0 %1618
      %1621 = vset.pattern.permute.xlu0 14
      %1622 = vperm.xlu0 %1621, %v386
      %v1623 = vpop.permute.xlu0 %1622
      %v1625 = vmul.f32 %v1619, %v398
      %v1626 = vmul.f32 %v1619, %v399
      %v1627 = vmul.f32 %v1619, %v400
      %v1628 = vmul.f32 %v1619, %v401
      %v1629 = vmul.f32 %v1619, %v402
      %v1630 = vmul.f32 %v1619, %v403
      %v1631 = vmul.f32 %v1623, %v398
      %v1632 = vmul.f32 %v1623, %v399
      %v1633 = vmul.f32 %v1623, %v400
      %v1634 = vmul.f32 %v1623, %v401
      %v1635 = vmul.f32 %v1623, %v402
      %v1636 = vmul.f32 %v1623, %v403
      %1649 = vrot.lane.b32.xlu0 %v1625, 68
      %v1650 = vpop.permute.xlu0 %1649
      %1651 = vrot.lane.b32.xlu0 %v1626, 68
      %v1652 = vpop.permute.xlu0 %1651
      %1653 = vrot.lane.b32.xlu0 %v1627, 68
      %v1654 = vpop.permute.xlu0 %1653
      %1655 = vrot.lane.b32.xlu0 %v1628, 68
      %v1656 = vpop.permute.xlu0 %1655
      %1657 = vrot.lane.b32.xlu0 %v1629, 68
      %v1658 = vpop.permute.xlu0 %1657
      %1659 = vrot.lane.b32.xlu0 %v1630, 68
      %v1660 = vpop.permute.xlu0 %1659
      %1661 = vrot.lane.b32.xlu0 %v1631, 68
      %v1662 = vpop.permute.xlu0 %1661
      %1663 = vrot.lane.b32.xlu0 %v1632, 68
      %v1664 = vpop.permute.xlu0 %1663
      %1665 = vrot.lane.b32.xlu0 %v1633, 68
      %v1666 = vpop.permute.xlu0 %1665
      %1667 = vrot.lane.b32.xlu0 %v1634, 68
      %v1668 = vpop.permute.xlu0 %1667
      %1669 = vrot.lane.b32.xlu0 %v1635, 68
      %v1670 = vpop.permute.xlu0 %1669
      %1671 = vrot.lane.b32.xlu0 %v1636, 68
      %v1672 = vpop.permute.xlu0 %1671
      %vm1673 = vcmask 556032
      %v1674 = vsel %vm1673, %v1650, %v1652
      %v1675 = vsel %vm1673, %v1652, %v1654
      %v1676 = vsel %vm1673, %v1654, %v1656
      %v1677 = vsel %vm1673, %v1656, %v1658
      %v1678 = vsel %vm1673, %v1658, %v1660
      %v1679 = vsel %vm1673, %v1662, %v1664
      %v1680 = vsel %vm1673, %v1664, %v1666
      %v1681 = vsel %vm1673, %v1666, %v1668
      %v1682 = vsel %vm1673, %v1668, %v1670
      %v1683 = vsel %vm1673, %v1670, %v1672
      %v1696 = vadd.f32 %v1605, %v1674
      %v1697 = vadd.f32 %v1606, %v1675
      %v1698 = vadd.f32 %v1607, %v1676
      %v1699 = vadd.f32 %v1608, %v1677
      %v1700 = vadd.f32 %v1609, %v1678
      %v1701 = vadd.f32 %v1610, %v1660
      %v1702 = vadd.f32 %v1611, %v1679
      %v1703 = vadd.f32 %v1612, %v1680
      %v1704 = vadd.f32 %v1613, %v1681
      %v1705 = vadd.f32 %v1614, %v1682
      %v1706 = vadd.f32 %v1615, %v1683
      %v1707 = vadd.f32 %v1616, %v1672
      %1708 = vset.pattern.permute.xlu0 15
      %1709 = vperm.xlu0 %1708, %v385
      %v1710 = vpop.permute.xlu0 %1709
      %1712 = vset.pattern.permute.xlu0 15
      %1713 = vperm.xlu0 %1712, %v386
      %v1714 = vpop.permute.xlu0 %1713
      %v1716 = vmul.f32 %v1710, %v398
      %v1717 = vmul.f32 %v1710, %v399
      %v1718 = vmul.f32 %v1710, %v400
      %v1719 = vmul.f32 %v1710, %v401
      %v1720 = vmul.f32 %v1710, %v402
      %v1721 = vmul.f32 %v1710, %v403
      %v1722 = vmul.f32 %v1714, %v398
      %v1723 = vmul.f32 %v1714, %v399
      %v1724 = vmul.f32 %v1714, %v400
      %v1725 = vmul.f32 %v1714, %v401
      %v1726 = vmul.f32 %v1714, %v402
      %v1727 = vmul.f32 %v1714, %v403
      %1740 = vrot.lane.b32.xlu0 %v1716, 44
      %v1741 = vpop.permute.xlu0 %1740
      %1742 = vrot.lane.b32.xlu0 %v1717, 44
      %v1743 = vpop.permute.xlu0 %1742
      %1744 = vrot.lane.b32.xlu0 %v1718, 44
      %v1745 = vpop.permute.xlu0 %1744
      %1746 = vrot.lane.b32.xlu0 %v1719, 44
      %v1747 = vpop.permute.xlu0 %1746
      %1748 = vrot.lane.b32.xlu0 %v1720, 44
      %v1749 = vpop.permute.xlu0 %1748
      %1750 = vrot.lane.b32.xlu0 %v1721, 44
      %v1751 = vpop.permute.xlu0 %1750
      %1752 = vrot.lane.b32.xlu0 %v1722, 44
      %v1753 = vpop.permute.xlu0 %1752
      %1754 = vrot.lane.b32.xlu0 %v1723, 44
      %v1755 = vpop.permute.xlu0 %1754
      %1756 = vrot.lane.b32.xlu0 %v1724, 44
      %v1757 = vpop.permute.xlu0 %1756
      %1758 = vrot.lane.b32.xlu0 %v1725, 44
      %v1759 = vpop.permute.xlu0 %1758
      %1760 = vrot.lane.b32.xlu0 %v1726, 44
      %v1761 = vpop.permute.xlu0 %1760
      %1762 = vrot.lane.b32.xlu0 %v1727, 44
      %v1763 = vpop.permute.xlu0 %1762
      %vm1764 = vcmask 359424
      %v1765 = vsel %vm1764, %v1741, %v1743
      %v1766 = vsel %vm1764, %v1743, %v1745
      %v1767 = vsel %vm1764, %v1745, %v1747
      %v1768 = vsel %vm1764, %v1747, %v1749
      %v1769 = vsel %vm1764, %v1749, %v1751
      %v1770 = vsel %vm1764, %v1753, %v1755
      %v1771 = vsel %vm1764, %v1755, %v1757
      %v1772 = vsel %vm1764, %v1757, %v1759
      %v1773 = vsel %vm1764, %v1759, %v1761
      %v1774 = vsel %vm1764, %v1761, %v1763
      %v1787 = vadd.f32 %v1696, %v1765
      %v1788 = vadd.f32 %v1697, %v1766
      %v1789 = vadd.f32 %v1698, %v1767
      %v1790 = vadd.f32 %v1699, %v1768
      %v1791 = vadd.f32 %v1700, %v1769
      %v1792 = vadd.f32 %v1701, %v1751
      %v1793 = vadd.f32 %v1702, %v1770
      %v1794 = vadd.f32 %v1703, %v1771
      %v1795 = vadd.f32 %v1704, %v1772
      %v1796 = vadd.f32 %v1705, %v1773
      %v1797 = vadd.f32 %v1706, %v1774
      %v1798 = vadd.f32 %v1707, %v1763
      %1799 = vset.pattern.permute.xlu0 16
      %1800 = vperm.xlu0 %1799, %v385
      %v1801 = vpop.permute.xlu0 %1800
      %1803 = vset.pattern.permute.xlu0 16
      %1804 = vperm.xlu0 %1803, %v386
      %v1805 = vpop.permute.xlu0 %1804
      %v1807 = vmul.f32 %v1801, %v398
      %v1808 = vmul.f32 %v1801, %v399
      %v1809 = vmul.f32 %v1801, %v400
      %v1810 = vmul.f32 %v1801, %v401
      %v1811 = vmul.f32 %v1801, %v402
      %v1812 = vmul.f32 %v1801, %v403
      %v1813 = vmul.f32 %v1805, %v398
      %v1814 = vmul.f32 %v1805, %v399
      %v1815 = vmul.f32 %v1805, %v400
      %v1816 = vmul.f32 %v1805, %v401
      %v1817 = vmul.f32 %v1805, %v402
      %v1818 = vmul.f32 %v1805, %v403
      %1831 = vrot.lane.b32.xlu0 %v1807, 43
      %v1832 = vpop.permute.xlu0 %1831
      %1833 = vrot.lane.b32.xlu0 %v1808, 43
      %v1834 = vpop.permute.xlu0 %1833
      %1835 = vrot.lane.b32.xlu0 %v1809, 43
      %v1836 = vpop.permute.xlu0 %1835
      %1837 = vrot.lane.b32.xlu0 %v1810, 43
      %v1838 = vpop.permute.xlu0 %1837
      %1839 = vrot.lane.b32.xlu0 %v1811, 43
      %v1840 = vpop.permute.xlu0 %1839
      %1841 = vrot.lane.b32.xlu0 %v1812, 43
      %v1842 = vpop.permute.xlu0 %1841
      %1843 = vrot.lane.b32.xlu0 %v1813, 43
      %v1844 = vpop.permute.xlu0 %1843
      %1845 = vrot.lane.b32.xlu0 %v1814, 43
      %v1846 = vpop.permute.xlu0 %1845
      %1847 = vrot.lane.b32.xlu0 %v1815, 43
      %v1848 = vpop.permute.xlu0 %1847
      %1849 = vrot.lane.b32.xlu0 %v1816, 43
      %v1850 = vpop.permute.xlu0 %1849
      %1851 = vrot.lane.b32.xlu0 %v1817, 43
      %v1852 = vpop.permute.xlu0 %1851
      %1853 = vrot.lane.b32.xlu0 %v1818, 43
      %v1854 = vpop.permute.xlu0 %1853
      %vm1855 = vcmask 351232
      %v1856 = vsel %vm1855, %v1832, %v1834
      %v1857 = vsel %vm1855, %v1834, %v1836
      %v1858 = vsel %vm1855, %v1836, %v1838
      %v1859 = vsel %vm1855, %v1838, %v1840
      %v1860 = vsel %vm1855, %v1840, %v1842
      %v1861 = vsel %vm1855, %v1844, %v1846
      %v1862 = vsel %vm1855, %v1846, %v1848
      %v1863 = vsel %vm1855, %v1848, %v1850
      %v1864 = vsel %vm1855, %v1850, %v1852
      %v1865 = vsel %vm1855, %v1852, %v1854
      %v1878 = vadd.f32 %v1787, %v1856
      %v1879 = vadd.f32 %v1788, %v1857
      %v1880 = vadd.f32 %v1789, %v1858
      %v1881 = vadd.f32 %v1790, %v1859
      %v1882 = vadd.f32 %v1791, %v1860
      %v1883 = vadd.f32 %v1792, %v1842
      %v1884 = vadd.f32 %v1793, %v1861
      %v1885 = vadd.f32 %v1794, %v1862
      %v1886 = vadd.f32 %v1795, %v1863
      %v1887 = vadd.f32 %v1796, %v1864
      %v1888 = vadd.f32 %v1797, %v1865
      %v1889 = vadd.f32 %v1798, %v1854
      %1890 = vset.pattern.permute.xlu0 17
      %1891 = vperm.xlu0 %1890, %v385
      %v1892 = vpop.permute.xlu0 %1891
      %1894 = vset.pattern.permute.xlu0 17
      %1895 = vperm.xlu0 %1894, %v386
      %v1896 = vpop.permute.xlu0 %1895
      %v1898 = vmul.f32 %v1892, %v398
      %v1899 = vmul.f32 %v1892, %v399
      %v1900 = vmul.f32 %v1892, %v400
      %v1901 = vmul.f32 %v1892, %v401
      %v1902 = vmul.f32 %v1892, %v402
      %v1903 = vmul.f32 %v1892, %v403
      %v1904 = vmul.f32 %v1896, %v398
      %v1905 = vmul.f32 %v1896, %v399
      %v1906 = vmul.f32 %v1896, %v400
      %v1907 = vmul.f32 %v1896, %v401
      %v1908 = vmul.f32 %v1896, %v402
      %v1909 = vmul.f32 %v1896, %v403
      %1922 = vrot.lane.b32.xlu0 %v1898, 42
      %v1923 = vpop.permute.xlu0 %1922
      %1924 = vrot.lane.b32.xlu0 %v1899, 42
      %v1925 = vpop.permute.xlu0 %1924
      %1926 = vrot.lane.b32.xlu0 %v1900, 42
      %v1927 = vpop.permute.xlu0 %1926
      %1928 = vrot.lane.b32.xlu0 %v1901, 42
      %v1929 = vpop.permute.xlu0 %1928
      %1930 = vrot.lane.b32.xlu0 %v1902, 42
      %v1931 = vpop.permute.xlu0 %1930
      %1932 = vrot.lane.b32.xlu0 %v1903, 42
      %v1933 = vpop.permute.xlu0 %1932
      %1934 = vrot.lane.b32.xlu0 %v1904, 42
      %v1935 = vpop.permute.xlu0 %1934
      %1936 = vrot.lane.b32.xlu0 %v1905, 42
      %v1937 = vpop.permute.xlu0 %1936
      %1938 = vrot.lane.b32.xlu0 %v1906, 42
      %v1939 = vpop.permute.xlu0 %1938
      %1940 = vrot.lane.b32.xlu0 %v1907, 42
      %v1941 = vpop.permute.xlu0 %1940
      %1942 = vrot.lane.b32.xlu0 %v1908, 42
      %v1943 = vpop.permute.xlu0 %1942
      %1944 = vrot.lane.b32.xlu0 %v1909, 42
      %v1945 = vpop.permute.xlu0 %1944
      %vm1946 = vcmask 343040
      %v1947 = vsel %vm1946, %v1923, %v1925
      %v1948 = vsel %vm1946, %v1925, %v1927
      %v1949 = vsel %vm1946, %v1927, %v1929
      %v1950 = vsel %vm1946, %v1929, %v1931
      %v1951 = vsel %vm1946, %v1931, %v1933
      %v1952 = vsel %vm1946, %v1935, %v1937
      %v1953 = vsel %vm1946, %v1937, %v1939
      %v1954 = vsel %vm1946, %v1939, %v1941
      %v1955 = vsel %vm1946, %v1941, %v1943
      %v1956 = vsel %vm1946, %v1943, %v1945
      %v1969 = vadd.f32 %v1878, %v1947
      %v1970 = vadd.f32 %v1879, %v1948
      %v1971 = vadd.f32 %v1880, %v1949
      %v1972 = vadd.f32 %v1881, %v1950
      %v1973 = vadd.f32 %v1882, %v1951
      %v1974 = vadd.f32 %v1883, %v1933
      %v1975 = vadd.f32 %v1884, %v1952
      %v1976 = vadd.f32 %v1885, %v1953
      %v1977 = vadd.f32 %v1886, %v1954
      %v1978 = vadd.f32 %v1887, %v1955
      %v1979 = vadd.f32 %v1888, %v1956
      %v1980 = vadd.f32 %v1889, %v1945
      %1981 = vset.pattern.permute.xlu0 18
      %1982 = vperm.xlu0 %1981, %v385
      %v1983 = vpop.permute.xlu0 %1982
      %1985 = vset.pattern.permute.xlu0 18
      %1986 = vperm.xlu0 %1985, %v386
      %v1987 = vpop.permute.xlu0 %1986
      %v1989 = vmul.f32 %v1983, %v398
      %v1990 = vmul.f32 %v1983, %v399
      %v1991 = vmul.f32 %v1983, %v400
      %v1992 = vmul.f32 %v1983, %v401
      %v1993 = vmul.f32 %v1983, %v402
      %v1994 = vmul.f32 %v1983, %v403
      %v1995 = vmul.f32 %v1987, %v398
      %v1996 = vmul.f32 %v1987, %v399
      %v1997 = vmul.f32 %v1987, %v400
      %v1998 = vmul.f32 %v1987, %v401
      %v1999 = vmul.f32 %v1987, %v402
      %v2000 = vmul.f32 %v1987, %v403
      %2013 = vrot.lane.b32.xlu0 %v1989, 41
      %v2014 = vpop.permute.xlu0 %2013
      %2015 = vrot.lane.b32.xlu0 %v1990, 41
      %v2016 = vpop.permute.xlu0 %2015
      %2017 = vrot.lane.b32.xlu0 %v1991, 41
      %v2018 = vpop.permute.xlu0 %2017
      %2019 = vrot.lane.b32.xlu0 %v1992, 41
      %v2020 = vpop.permute.xlu0 %2019
      %2021 = vrot.lane.b32.xlu0 %v1993, 41
      %v2022 = vpop.permute.xlu0 %2021
      %2023 = vrot.lane.b32.xlu0 %v1994, 41
      %v2024 = vpop.permute.xlu0 %2023
      %2025 = vrot.lane.b32.xlu0 %v1995, 41
      %v2026 = vpop.permute.xlu0 %2025
      %2027 = vrot.lane.b32.xlu0 %v1996, 41
      %v2028 = vpop.permute.xlu0 %2027
      %2029 = vrot.lane.b32.xlu0 %v1997, 41
      %v2030 = vpop.permute.xlu0 %2029
      %2031 = vrot.lane.b32.xlu0 %v1998, 41
      %v2032 = vpop.permute.xlu0 %2031
      %2033 = vrot.lane.b32.xlu0 %v1999, 41
      %v2034 = vpop.permute.xlu0 %2033
      %2035 = vrot.lane.b32.xlu0 %v2000, 41
      %v2036 = vpop.permute.xlu0 %2035
      %vm2037 = vcmask 334848
      %v2038 = vsel %vm2037, %v2014, %v2016
      %v2039 = vsel %vm2037, %v2016, %v2018
      %v2040 = vsel %vm2037, %v2018, %v2020
      %v2041 = vsel %vm2037, %v2020, %v2022
      %v2042 = vsel %vm2037, %v2022, %v2024
      %v2043 = vsel %vm2037, %v2026, %v2028
      %v2044 = vsel %vm2037, %v2028, %v2030
      %v2045 = vsel %vm2037, %v2030, %v2032
      %v2046 = vsel %vm2037, %v2032, %v2034
      %v2047 = vsel %vm2037, %v2034, %v2036
      %v2060 = vadd.f32 %v1969, %v2038
      %v2061 = vadd.f32 %v1970, %v2039
      %v2062 = vadd.f32 %v1971, %v2040
      %v2063 = vadd.f32 %v1972, %v2041
      %v2064 = vadd.f32 %v1973, %v2042
      %v2065 = vadd.f32 %v1974, %v2024
      %v2066 = vadd.f32 %v1975, %v2043
      %v2067 = vadd.f32 %v1976, %v2044
      %v2068 = vadd.f32 %v1977, %v2045
      %v2069 = vadd.f32 %v1978, %v2046
      %v2070 = vadd.f32 %v1979, %v2047
      %v2071 = vadd.f32 %v1980, %v2036
      %2072 = vset.pattern.permute.xlu0 19
      %2073 = vperm.xlu0 %2072, %v385
      %v2074 = vpop.permute.xlu0 %2073
      %2076 = vset.pattern.permute.xlu0 19
      %2077 = vperm.xlu0 %2076, %v386
      %v2078 = vpop.permute.xlu0 %2077
      %v2080 = vmul.f32 %v2074, %v398
      %v2081 = vmul.f32 %v2074, %v399
      %v2082 = vmul.f32 %v2074, %v400
      %v2083 = vmul.f32 %v2074, %v401
      %v2084 = vmul.f32 %v2074, %v402
      %v2085 = vmul.f32 %v2074, %v403
      %v2086 = vmul.f32 %v2078, %v398
      %v2087 = vmul.f32 %v2078, %v399
      %v2088 = vmul.f32 %v2078, %v400
      %v2089 = vmul.f32 %v2078, %v401
      %v2090 = vmul.f32 %v2078, %v402
      %v2091 = vmul.f32 %v2078, %v403
      %2104 = vrot.lane.b32.xlu0 %v2080, 40
      %v2105 = vpop.permute.xlu0 %2104
      %2106 = vrot.lane.b32.xlu0 %v2081, 40
      %v2107 = vpop.permute.xlu0 %2106
      %2108 = vrot.lane.b32.xlu0 %v2082, 40
      %v2109 = vpop.permute.xlu0 %2108
      %2110 = vrot.lane.b32.xlu0 %v2083, 40
      %v2111 = vpop.permute.xlu0 %2110
      %2112 = vrot.lane.b32.xlu0 %v2084, 40
      %v2113 = vpop.permute.xlu0 %2112
      %2114 = vrot.lane.b32.xlu0 %v2085, 40
      %v2115 = vpop.permute.xlu0 %2114
      %2116 = vrot.lane.b32.xlu0 %v2086, 40
      %v2117 = vpop.permute.xlu0 %2116
      %2118 = vrot.lane.b32.xlu0 %v2087, 40
      %v2119 = vpop.permute.xlu0 %2118
      %2120 = vrot.lane.b32.xlu0 %v2088, 40
      %v2121 = vpop.permute.xlu0 %2120
      %2122 = vrot.lane.b32.xlu0 %v2089, 40
      %v2123 = vpop.permute.xlu0 %2122
      %2124 = vrot.lane.b32.xlu0 %v2090, 40
      %v2125 = vpop.permute.xlu0 %2124
      %2126 = vrot.lane.b32.xlu0 %v2091, 40
      %v2127 = vpop.permute.xlu0 %2126
      %vm2128 = vcmask 326656
      %v2129 = vsel %vm2128, %v2105, %v2107
      %v2130 = vsel %vm2128, %v2107, %v2109
      %v2131 = vsel %vm2128, %v2109, %v2111
      %v2132 = vsel %vm2128, %v2111, %v2113
      %v2133 = vsel %vm2128, %v2113, %v2115
      %v2134 = vsel %vm2128, %v2117, %v2119
      %v2135 = vsel %vm2128, %v2119, %v2121
      %v2136 = vsel %vm2128, %v2121, %v2123
      %v2137 = vsel %vm2128, %v2123, %v2125
      %v2138 = vsel %vm2128, %v2125, %v2127
      %v2151 = vadd.f32 %v2060, %v2129
      %v2152 = vadd.f32 %v2061, %v2130
      %v2153 = vadd.f32 %v2062, %v2131
      %v2154 = vadd.f32 %v2063, %v2132
      %v2155 = vadd.f32 %v2064, %v2133
      %v2156 = vadd.f32 %v2065, %v2115
      %v2157 = vadd.f32 %v2066, %v2134
      %v2158 = vadd.f32 %v2067, %v2135
      %v2159 = vadd.f32 %v2068, %v2136
      %v2160 = vadd.f32 %v2069, %v2137
      %v2161 = vadd.f32 %v2070, %v2138
      %v2162 = vadd.f32 %v2071, %v2127
      %2163 = vset.pattern.permute.xlu0 20
      %2164 = vperm.xlu0 %2163, %v385
      %v2165 = vpop.permute.xlu0 %2164
      %2167 = vset.pattern.permute.xlu0 20
      %2168 = vperm.xlu0 %2167, %v386
      %v2169 = vpop.permute.xlu0 %2168
      %v2171 = vperm.slane %v384, 6
      %v2173 = vmul.f32 %v2165, %v398
      %v2174 = vmul.f32 %v2165, %v399
      %v2175 = vmul.f32 %v2165, %v400
      %v2176 = vmul.f32 %v2165, %v401
      %v2177 = vmul.f32 %v2165, %v402
      %v2178 = vmul.f32 %v2165, %v403
      %v2179 = vmul.f32 %v2165, %v2171
      %v2180 = vmul.f32 %v2169, %v398
      %v2181 = vmul.f32 %v2169, %v399
      %v2182 = vmul.f32 %v2169, %v400
      %v2183 = vmul.f32 %v2169, %v401
      %v2184 = vmul.f32 %v2169, %v402
      %v2185 = vmul.f32 %v2169, %v403
      %v2186 = vmul.f32 %v2169, %v2171
      %2201 = vrot.lane.b32.xlu0 %v2173, 16
      %v2202 = vpop.permute.xlu0 %2201
      %2203 = vrot.lane.b32.xlu0 %v2174, 16
      %v2204 = vpop.permute.xlu0 %2203
      %2205 = vrot.lane.b32.xlu0 %v2175, 16
      %v2206 = vpop.permute.xlu0 %2205
      %2207 = vrot.lane.b32.xlu0 %v2176, 16
      %v2208 = vpop.permute.xlu0 %2207
      %2209 = vrot.lane.b32.xlu0 %v2177, 16
      %v2210 = vpop.permute.xlu0 %2209
      %2211 = vrot.lane.b32.xlu0 %v2178, 16
      %v2212 = vpop.permute.xlu0 %2211
      %2213 = vrot.lane.b32.xlu0 %v2179, 16
      %v2214 = vpop.permute.xlu0 %2213
      %2215 = vrot.lane.b32.xlu0 %v2180, 16
      %v2216 = vpop.permute.xlu0 %2215
      %2217 = vrot.lane.b32.xlu0 %v2181, 16
      %v2218 = vpop.permute.xlu0 %2217
      %2219 = vrot.lane.b32.xlu0 %v2182, 16
      %v2220 = vpop.permute.xlu0 %2219
      %2221 = vrot.lane.b32.xlu0 %v2183, 16
      %v2222 = vpop.permute.xlu0 %2221
      %2223 = vrot.lane.b32.xlu0 %v2184, 16
      %v2224 = vpop.permute.xlu0 %2223
      %2225 = vrot.lane.b32.xlu0 %v2185, 16
      %v2226 = vpop.permute.xlu0 %2225
      %2227 = vrot.lane.b32.xlu0 %v2186, 16
      %v2228 = vpop.permute.xlu0 %2227
      %vm2229 = vcmask 130048
      %v2230 = vsel %vm2229, %v2202, %v2204
      %v2231 = vsel %vm2229, %v2204, %v2206
      %v2232 = vsel %vm2229, %v2206, %v2208
      %v2233 = vsel %vm2229, %v2208, %v2210
      %v2234 = vsel %vm2229, %v2210, %v2212
      %v2235 = vsel %vm2229, %v2212, %v2214
      %v2236 = vsel %vm2229, %v2216, %v2218
      %v2237 = vsel %vm2229, %v2218, %v2220
      %v2238 = vsel %vm2229, %v2220, %v2222
      %v2239 = vsel %vm2229, %v2222, %v2224
      %v2240 = vsel %vm2229, %v2224, %v2226
      %v2241 = vsel %vm2229, %v2226, %v2228
      %v2254 = vadd.f32 %v2151, %v2230
      %v2255 = vadd.f32 %v2152, %v2231
      %v2256 = vadd.f32 %v2153, %v2232
      %v2257 = vadd.f32 %v2154, %v2233
      %v2258 = vadd.f32 %v2155, %v2234
      %v2259 = vadd.f32 %v2156, %v2235
      %v2260 = vadd.f32 %v2157, %v2236
      %v2261 = vadd.f32 %v2158, %v2237
      %v2262 = vadd.f32 %v2159, %v2238
      %v2263 = vadd.f32 %v2160, %v2239
      %v2264 = vadd.f32 %v2161, %v2240
      %v2265 = vadd.f32 %v2162, %v2241
      %2266 = vset.pattern.permute.xlu0 21
      %2267 = vperm.xlu0 %2266, %v385
      %v2268 = vpop.permute.xlu0 %2267
      %2270 = vset.pattern.permute.xlu0 21
      %2271 = vperm.xlu0 %2270, %v386
      %v2272 = vpop.permute.xlu0 %2271
      %v2274 = vmul.f32 %v2268, %v398
      %v2275 = vmul.f32 %v2268, %v399
      %v2276 = vmul.f32 %v2268, %v400
      %v2277 = vmul.f32 %v2268, %v401
      %v2278 = vmul.f32 %v2268, %v402
      %v2279 = vmul.f32 %v2268, %v403
      %v2280 = vmul.f32 %v2268, %v2171
      %v2281 = vmul.f32 %v2272, %v398
      %v2282 = vmul.f32 %v2272, %v399
      %v2283 = vmul.f32 %v2272, %v400
      %v2284 = vmul.f32 %v2272, %v401
      %v2285 = vmul.f32 %v2272, %v402
      %v2286 = vmul.f32 %v2272, %v403
      %v2287 = vmul.f32 %v2272, %v2171
      %2302 = vrot.lane.b32.xlu0 %v2274, 15
      %v2303 = vpop.permute.xlu0 %2302
      %2304 = vrot.lane.b32.xlu0 %v2275, 15
      %v2305 = vpop.permute.xlu0 %2304
      %2306 = vrot.lane.b32.xlu0 %v2276, 15
      %v2307 = vpop.permute.xlu0 %2306
      %2308 = vrot.lane.b32.xlu0 %v2277, 15
      %v2309 = vpop.permute.xlu0 %2308
      %2310 = vrot.lane.b32.xlu0 %v2278, 15
      %v2311 = vpop.permute.xlu0 %2310
      %2312 = vrot.lane.b32.xlu0 %v2279, 15
      %v2313 = vpop.permute.xlu0 %2312
      %2314 = vrot.lane.b32.xlu0 %v2280, 15
      %v2315 = vpop.permute.xlu0 %2314
      %2316 = vrot.lane.b32.xlu0 %v2281, 15
      %v2317 = vpop.permute.xlu0 %2316
      %2318 = vrot.lane.b32.xlu0 %v2282, 15
      %v2319 = vpop.permute.xlu0 %2318
      %2320 = vrot.lane.b32.xlu0 %v2283, 15
      %v2321 = vpop.permute.xlu0 %2320
      %2322 = vrot.lane.b32.xlu0 %v2284, 15
      %v2323 = vpop.permute.xlu0 %2322
      %2324 = vrot.lane.b32.xlu0 %v2285, 15
      %v2325 = vpop.permute.xlu0 %2324
      %2326 = vrot.lane.b32.xlu0 %v2286, 15
      %v2327 = vpop.permute.xlu0 %2326
      %2328 = vrot.lane.b32.xlu0 %v2287, 15
      %v2329 = vpop.permute.xlu0 %2328
      %vm2330 = vcmask 121856
      %v2331 = vsel %vm2330, %v2303, %v2305
      %v2332 = vsel %vm2330, %v2305, %v2307
      %v2333 = vsel %vm2330, %v2307, %v2309
      %v2334 = vsel %vm2330, %v2309, %v2311
      %v2335 = vsel %vm2330, %v2311, %v2313
      %v2336 = vsel %vm2330, %v2313, %v2315
      %v2337 = vsel %vm2330, %v2317, %v2319
      %v2338 = vsel %vm2330, %v2319, %v2321
      %v2339 = vsel %vm2330, %v2321, %v2323
      %v2340 = vsel %vm2330, %v2323, %v2325
      %v2341 = vsel %vm2330, %v2325, %v2327
      %v2342 = vsel %vm2330, %v2327, %v2329
      %v2355 = vadd.f32 %v2254, %v2331
      %v2356 = vadd.f32 %v2255, %v2332
      %v2357 = vadd.f32 %v2256, %v2333
      %v2358 = vadd.f32 %v2257, %v2334
      %v2359 = vadd.f32 %v2258, %v2335
      %v2360 = vadd.f32 %v2259, %v2336
      %v2361 = vadd.f32 %v2260, %v2337
      %v2362 = vadd.f32 %v2261, %v2338
      %v2363 = vadd.f32 %v2262, %v2339
      %v2364 = vadd.f32 %v2263, %v2340
      %v2365 = vadd.f32 %v2264, %v2341
      %v2366 = vadd.f32 %v2265, %v2342
      %2367 = vset.pattern.permute.xlu0 22
      %2368 = vperm.xlu0 %2367, %v385
      %v2369 = vpop.permute.xlu0 %2368
      %2371 = vset.pattern.permute.xlu0 22
      %2372 = vperm.xlu0 %2371, %v386
      %v2373 = vpop.permute.xlu0 %2372
      %v2375 = vmul.f32 %v2369, %v398
      %v2376 = vmul.f32 %v2369, %v399
      %v2377 = vmul.f32 %v2369, %v400
      %v2378 = vmul.f32 %v2369, %v401
      %v2379 = vmul.f32 %v2369, %v402
      %v2380 = vmul.f32 %v2369, %v403
      %v2381 = vmul.f32 %v2369, %v2171
      %v2382 = vmul.f32 %v2373, %v398
      %v2383 = vmul.f32 %v2373, %v399
      %v2384 = vmul.f32 %v2373, %v400
      %v2385 = vmul.f32 %v2373, %v401
      %v2386 = vmul.f32 %v2373, %v402
      %v2387 = vmul.f32 %v2373, %v403
      %v2388 = vmul.f32 %v2373, %v2171
      %2403 = vrot.lane.b32.xlu0 %v2375, 14
      %v2404 = vpop.permute.xlu0 %2403
      %2405 = vrot.lane.b32.xlu0 %v2376, 14
      %v2406 = vpop.permute.xlu0 %2405
      %2407 = vrot.lane.b32.xlu0 %v2377, 14
      %v2408 = vpop.permute.xlu0 %2407
      %2409 = vrot.lane.b32.xlu0 %v2378, 14
      %v2410 = vpop.permute.xlu0 %2409
      %2411 = vrot.lane.b32.xlu0 %v2379, 14
      %v2412 = vpop.permute.xlu0 %2411
      %2413 = vrot.lane.b32.xlu0 %v2380, 14
      %v2414 = vpop.permute.xlu0 %2413
      %2415 = vrot.lane.b32.xlu0 %v2381, 14
      %v2416 = vpop.permute.xlu0 %2415
      %2417 = vrot.lane.b32.xlu0 %v2382, 14
      %v2418 = vpop.permute.xlu0 %2417
      %2419 = vrot.lane.b32.xlu0 %v2383, 14
      %v2420 = vpop.permute.xlu0 %2419
      %2421 = vrot.lane.b32.xlu0 %v2384, 14
      %v2422 = vpop.permute.xlu0 %2421
      %2423 = vrot.lane.b32.xlu0 %v2385, 14
      %v2424 = vpop.permute.xlu0 %2423
      %2425 = vrot.lane.b32.xlu0 %v2386, 14
      %v2426 = vpop.permute.xlu0 %2425
      %2427 = vrot.lane.b32.xlu0 %v2387, 14
      %v2428 = vpop.permute.xlu0 %2427
      %2429 = vrot.lane.b32.xlu0 %v2388, 14
      %v2430 = vpop.permute.xlu0 %2429
      %vm2431 = vcmask 113664
      %v2432 = vsel %vm2431, %v2404, %v2406
      %v2433 = vsel %vm2431, %v2406, %v2408
      %v2434 = vsel %vm2431, %v2408, %v2410
      %v2435 = vsel %vm2431, %v2410, %v2412
      %v2436 = vsel %vm2431, %v2412, %v2414
      %v2437 = vsel %vm2431, %v2414, %v2416
      %v2438 = vsel %vm2431, %v2418, %v2420
      %v2439 = vsel %vm2431, %v2420, %v2422
      %v2440 = vsel %vm2431, %v2422, %v2424
      %v2441 = vsel %vm2431, %v2424, %v2426
      %v2442 = vsel %vm2431, %v2426, %v2428
      %v2443 = vsel %vm2431, %v2428, %v2430
      %v2456 = vadd.f32 %v2355, %v2432
      %v2457 = vadd.f32 %v2356, %v2433
      %v2458 = vadd.f32 %v2357, %v2434
      %v2459 = vadd.f32 %v2358, %v2435
      %v2460 = vadd.f32 %v2359, %v2436
      %v2461 = vadd.f32 %v2360, %v2437
      %v2462 = vadd.f32 %v2361, %v2438
      %v2463 = vadd.f32 %v2362, %v2439
      %v2464 = vadd.f32 %v2363, %v2440
      %v2465 = vadd.f32 %v2364, %v2441
      %v2466 = vadd.f32 %v2365, %v2442
      %v2467 = vadd.f32 %v2366, %v2443
      %2468 = vset.pattern.permute.xlu0 23
      %2469 = vperm.xlu0 %2468, %v385
      %v2470 = vpop.permute.xlu0 %2469
      %2472 = vset.pattern.permute.xlu0 23
      %2473 = vperm.xlu0 %2472, %v386
      %v2474 = vpop.permute.xlu0 %2473
      %v2476 = vmul.f32 %v2470, %v398
      %v2477 = vmul.f32 %v2470, %v399
      %v2478 = vmul.f32 %v2470, %v400
      %v2479 = vmul.f32 %v2470, %v401
      %v2480 = vmul.f32 %v2470, %v402
      %v2481 = vmul.f32 %v2470, %v403
      %v2482 = vmul.f32 %v2470, %v2171
      %v2483 = vmul.f32 %v2474, %v398
      %v2484 = vmul.f32 %v2474, %v399
      %v2485 = vmul.f32 %v2474, %v400
      %v2486 = vmul.f32 %v2474, %v401
      %v2487 = vmul.f32 %v2474, %v402
      %v2488 = vmul.f32 %v2474, %v403
      %v2489 = vmul.f32 %v2474, %v2171
      %2504 = vrot.lane.b32.xlu0 %v2476, 13
      %v2505 = vpop.permute.xlu0 %2504
      %2506 = vrot.lane.b32.xlu0 %v2477, 13
      %v2507 = vpop.permute.xlu0 %2506
      %2508 = vrot.lane.b32.xlu0 %v2478, 13
      %v2509 = vpop.permute.xlu0 %2508
      %2510 = vrot.lane.b32.xlu0 %v2479, 13
      %v2511 = vpop.permute.xlu0 %2510
      %2512 = vrot.lane.b32.xlu0 %v2480, 13
      %v2513 = vpop.permute.xlu0 %2512
      %2514 = vrot.lane.b32.xlu0 %v2481, 13
      %v2515 = vpop.permute.xlu0 %2514
      %2516 = vrot.lane.b32.xlu0 %v2482, 13
      %v2517 = vpop.permute.xlu0 %2516
      %2518 = vrot.lane.b32.xlu0 %v2483, 13
      %v2519 = vpop.permute.xlu0 %2518
      %2520 = vrot.lane.b32.xlu0 %v2484, 13
      %v2521 = vpop.permute.xlu0 %2520
      %2522 = vrot.lane.b32.xlu0 %v2485, 13
      %v2523 = vpop.permute.xlu0 %2522
      %2524 = vrot.lane.b32.xlu0 %v2486, 13
      %v2525 = vpop.permute.xlu0 %2524
      %2526 = vrot.lane.b32.xlu0 %v2487, 13
      %v2527 = vpop.permute.xlu0 %2526
      %2528 = vrot.lane.b32.xlu0 %v2488, 13
      %v2529 = vpop.permute.xlu0 %2528
      %2530 = vrot.lane.b32.xlu0 %v2489, 13
      %v2531 = vpop.permute.xlu0 %2530
      %vm2532 = vcmask 105472
      %v2533 = vsel %vm2532, %v2505, %v2507
      %v2534 = vsel %vm2532, %v2507, %v2509
      %v2535 = vsel %vm2532, %v2509, %v2511
      %v2536 = vsel %vm2532, %v2511, %v2513
      %v2537 = vsel %vm2532, %v2513, %v2515
      %v2538 = vsel %vm2532, %v2515, %v2517
      %v2539 = vsel %vm2532, %v2519, %v2521
      %v2540 = vsel %vm2532, %v2521, %v2523
      %v2541 = vsel %vm2532, %v2523, %v2525
      %v2542 = vsel %vm2532, %v2525, %v2527
      %v2543 = vsel %vm2532, %v2527, %v2529
      %v2544 = vsel %vm2532, %v2529, %v2531
      %v2557 = vadd.f32 %v2456, %v2533
      %v2558 = vadd.f32 %v2457, %v2534
      %v2559 = vadd.f32 %v2458, %v2535
      %v2560 = vadd.f32 %v2459, %v2536
      %v2561 = vadd.f32 %v2460, %v2537
      %v2562 = vadd.f32 %v2461, %v2538
      %v2563 = vadd.f32 %v2462, %v2539
      %v2564 = vadd.f32 %v2463, %v2540
      %v2565 = vadd.f32 %v2464, %v2541
      %v2566 = vadd.f32 %v2465, %v2542
      %v2567 = vadd.f32 %v2466, %v2543
      %v2568 = vadd.f32 %v2467, %v2544
      %2569 = vset.pattern.permute.xlu0 24
      %2570 = vperm.xlu0 %2569, %v385
      %v2571 = vpop.permute.xlu0 %2570
      %2573 = vset.pattern.permute.xlu0 24
      %2574 = vperm.xlu0 %2573, %v386
      %v2575 = vpop.permute.xlu0 %2574
      %v2577 = vmul.f32 %v2571, %v398
      %v2578 = vmul.f32 %v2571, %v399
      %v2579 = vmul.f32 %v2571, %v400
      %v2580 = vmul.f32 %v2571, %v401
      %v2581 = vmul.f32 %v2571, %v402
      %v2582 = vmul.f32 %v2571, %v403
      %v2583 = vmul.f32 %v2571, %v2171
      %v2584 = vmul.f32 %v2575, %v398
      %v2585 = vmul.f32 %v2575, %v399
      %v2586 = vmul.f32 %v2575, %v400
      %v2587 = vmul.f32 %v2575, %v401
      %v2588 = vmul.f32 %v2575, %v402
      %v2589 = vmul.f32 %v2575, %v403
      %v2590 = vmul.f32 %v2575, %v2171
      %2605 = vrot.lane.b32.xlu0 %v2577, 12
      %v2606 = vpop.permute.xlu0 %2605
      %2607 = vrot.lane.b32.xlu0 %v2578, 12
      %v2608 = vpop.permute.xlu0 %2607
      %2609 = vrot.lane.b32.xlu0 %v2579, 12
      %v2610 = vpop.permute.xlu0 %2609
      %2611 = vrot.lane.b32.xlu0 %v2580, 12
      %v2612 = vpop.permute.xlu0 %2611
      %2613 = vrot.lane.b32.xlu0 %v2581, 12
      %v2614 = vpop.permute.xlu0 %2613
      %2615 = vrot.lane.b32.xlu0 %v2582, 12
      %v2616 = vpop.permute.xlu0 %2615
      %2617 = vrot.lane.b32.xlu0 %v2583, 12
      %v2618 = vpop.permute.xlu0 %2617
      %2619 = vrot.lane.b32.xlu0 %v2584, 12
      %v2620 = vpop.permute.xlu0 %2619
      %2621 = vrot.lane.b32.xlu0 %v2585, 12
      %v2622 = vpop.permute.xlu0 %2621
      %2623 = vrot.lane.b32.xlu0 %v2586, 12
      %v2624 = vpop.permute.xlu0 %2623
      %2625 = vrot.lane.b32.xlu0 %v2587, 12
      %v2626 = vpop.permute.xlu0 %2625
      %2627 = vrot.lane.b32.xlu0 %v2588, 12
      %v2628 = vpop.permute.xlu0 %2627
      %2629 = vrot.lane.b32.xlu0 %v2589, 12
      %v2630 = vpop.permute.xlu0 %2629
      %2631 = vrot.lane.b32.xlu0 %v2590, 12
      %v2632 = vpop.permute.xlu0 %2631
      %vm2633 = vcmask 97280
      %v2634 = vsel %vm2633, %v2606, %v2608
      %v2635 = vsel %vm2633, %v2608, %v2610
      %v2636 = vsel %vm2633, %v2610, %v2612
      %v2637 = vsel %vm2633, %v2612, %v2614
      %v2638 = vsel %vm2633, %v2614, %v2616
      %v2639 = vsel %vm2633, %v2616, %v2618
      %v2640 = vsel %vm2633, %v2620, %v2622
      %v2641 = vsel %vm2633, %v2622, %v2624
      %v2642 = vsel %vm2633, %v2624, %v2626
      %v2643 = vsel %vm2633, %v2626, %v2628
      %v2644 = vsel %vm2633, %v2628, %v2630
      %v2645 = vsel %vm2633, %v2630, %v2632
      %v2658 = vadd.f32 %v2557, %v2634
      %v2659 = vadd.f32 %v2558, %v2635
      %v2660 = vadd.f32 %v2559, %v2636
      %v2661 = vadd.f32 %v2560, %v2637
      %v2662 = vadd.f32 %v2561, %v2638
      %v2663 = vadd.f32 %v2562, %v2639
      %v2664 = vadd.f32 %v2563, %v2640
      %v2665 = vadd.f32 %v2564, %v2641
      %v2666 = vadd.f32 %v2565, %v2642
      %v2667 = vadd.f32 %v2566, %v2643
      %v2668 = vadd.f32 %v2567, %v2644
      %v2669 = vadd.f32 %v2568, %v2645
      %v2670 = vld [vmem:[%s2] sm:$0xff]
      %v2671 = vld [vmem:[%s2 + $0x8] sm:$0xff]
      %2673 = vset.pattern.permute.xlu0 0
      %2674 = vperm.xlu0 %2673, %v2670
      %v2675 = vpop.permute.xlu0 %2674
      %2678 = vset.pattern.permute.xlu0 0
      %2679 = vperm.xlu0 %2678, %v2671
      %v2680 = vpop.permute.xlu0 %2679
      %v2682 = vadd.f32 %v2658, %v2675
      %v2683 = vadd.f32 %v2659, %v2675
      %v2684 = vadd.f32 %v2660, %v2675
      %v2685 = vadd.f32 %v2661, %v2675
      %v2686 = vadd.f32 %v2662, %v2675
      %v2687 = vadd.f32 %v2663, %v2675
      %v2688 = vadd.f32 %v2664, %v2680
      %v2689 = vadd.f32 %v2665, %v2680
      %v2690 = vadd.f32 %v2666, %v2680
      %v2691 = vadd.f32 %v2667, %v2680
      %v2692 = vadd.f32 %v2668, %v2680
      %v2693 = vadd.f32 %v2669, %v2680
      %v2694 = vmax.f32 %v2682, 0.0
      %v2695 = vmax.f32 %v2683, 0.0
      %v2696 = vmax.f32 %v2684, 0.0
      %v2697 = vmax.f32 %v2685, 0.0
      %v2698 = vmax.f32 %v2686, 0.0
      %v2699 = vmax.f32 %v2687, 0.0
      %v2700 = vmax.f32 %v2688, 0.0
      %v2701 = vmax.f32 %v2689, 0.0
      %v2702 = vmax.f32 %v2690, 0.0
      %v2703 = vmax.f32 %v2691, 0.0
      %v2704 = vmax.f32 %v2692, 0.0
      %v2705 = vmax.f32 %v2693, 0.0
      %2716 = vrot.lane.b32.xlu0 %v2694, 127
      %v2717 = vpop.permute.xlu0 %2716
      %2718 = vrot.lane.b32.xlu0 %v2695, 127
      %v2719 = vpop.permute.xlu0 %2718
      %2720 = vrot.lane.b32.xlu0 %v2696, 127
      %v2721 = vpop.permute.xlu0 %2720
      %2722 = vrot.lane.b32.xlu0 %v2697, 127
      %v2723 = vpop.permute.xlu0 %2722
      %2724 = vrot.lane.b32.xlu0 %v2698, 127
      %v2725 = vpop.permute.xlu0 %2724
      %2726 = vrot.lane.b32.xlu0 %v2700, 127
      %v2727 = vpop.permute.xlu0 %2726
      %2728 = vrot.lane.b32.xlu0 %v2701, 127
      %v2729 = vpop.permute.xlu0 %2728
      %2730 = vrot.lane.b32.xlu0 %v2702, 127
      %v2731 = vpop.permute.xlu0 %2730
      %2732 = vrot.lane.b32.xlu0 %v2703, 127
      %v2733 = vpop.permute.xlu0 %2732
      %2734 = vrot.lane.b32.xlu0 %v2704, 127
      %v2735 = vpop.permute.xlu0 %2734
      %v2736 = vsel %vm490, %v2717, %v2719
      %v2737 = vsel %vm490, %v2719, %v2721
      %v2738 = vsel %vm490, %v2721, %v2723
      %v2739 = vsel %vm490, %v2723, %v2725
      %v2740 = vsel %vm490, %v2727, %v2729
      %v2741 = vsel %vm490, %v2729, %v2731
      %v2742 = vsel %vm490, %v2731, %v2733
      %v2743 = vsel %vm490, %v2733, %v2735
      %v2754 = vmax.f32 %v2694, %v2736
      %v2755 = vmax.f32 %v2695, %v2737
      %v2756 = vmax.f32 %v2696, %v2738
      %v2757 = vmax.f32 %v2697, %v2739
      %v2758 = vmax.f32 %v2698, %v2725
      %v2759 = vmax.f32 %v2700, %v2740
      %v2760 = vmax.f32 %v2701, %v2741
      %v2761 = vmax.f32 %v2702, %v2742
      %v2762 = vmax.f32 %v2703, %v2743
      %v2763 = vmax.f32 %v2704, %v2735
      %2766 = vrot.lane.b32.xlu0 %v2699, 127
      %v2767 = vpop.permute.xlu0 %2766
      %2768 = vrot.lane.b32.xlu0 %v2705, 127
      %v2769 = vpop.permute.xlu0 %2768
      %v2770 = vsel %vm490, %v2725, %v2767
      %v2771 = vsel %vm490, %v2735, %v2769
      %v2776 = vmax.f32 %v2698, %v2770
      %v2777 = vmax.f32 %v2699, %v2767
      %v2778 = vmax.f32 %v2704, %v2771
      %v2779 = vmax.f32 %v2705, %v2769
      %2792 = vrot.lane.b32.xlu0 %v2754, 100
      %v2793 = vpop.permute.xlu0 %2792
      %2794 = vrot.lane.b32.xlu0 %v2755, 100
      %v2795 = vpop.permute.xlu0 %2794
      %2796 = vrot.lane.b32.xlu0 %v2756, 100
      %v2797 = vpop.permute.xlu0 %2796
      %2798 = vrot.lane.b32.xlu0 %v2757, 100
      %v2799 = vpop.permute.xlu0 %2798
      %2800 = vrot.lane.b32.xlu0 %v2776, 100
      %v2801 = vpop.permute.xlu0 %2800
      %2802 = vrot.lane.b32.xlu0 %v2777, 100
      %v2803 = vpop.permute.xlu0 %2802
      %2804 = vrot.lane.b32.xlu0 %v2759, 100
      %v2805 = vpop.permute.xlu0 %2804
      %2806 = vrot.lane.b32.xlu0 %v2760, 100
      %v2807 = vpop.permute.xlu0 %2806
      %2808 = vrot.lane.b32.xlu0 %v2761, 100
      %v2809 = vpop.permute.xlu0 %2808
      %2810 = vrot.lane.b32.xlu0 %v2762, 100
      %v2811 = vpop.permute.xlu0 %2810
      %2812 = vrot.lane.b32.xlu0 %v2778, 100
      %v2813 = vpop.permute.xlu0 %2812
      %2814 = vrot.lane.b32.xlu0 %v2779, 100
      %v2815 = vpop.permute.xlu0 %2814
      %v2816 = vsel %vm854, %v2793, %v2795
      %v2817 = vsel %vm854, %v2795, %v2797
      %v2818 = vsel %vm854, %v2797, %v2799
      %v2819 = vsel %vm854, %v2799, %v2801
      %v2820 = vsel %vm854, %v2801, %v2803
      %v2821 = vsel %vm854, %v2805, %v2807
      %v2822 = vsel %vm854, %v2807, %v2809
      %v2823 = vsel %vm854, %v2809, %v2811
      %v2824 = vsel %vm854, %v2811, %v2813
      %v2825 = vsel %vm854, %v2813, %v2815
      %v2836 = vmax.f32 %v2754, %v2816
      %v2837 = vmax.f32 %v2755, %v2817
      %v2838 = vmax.f32 %v2756, %v2818
      %v2839 = vmax.f32 %v2757, %v2819
      %v2840 = vmax.f32 %v2758, %v2820
      %v2841 = vmax.f32 %v2759, %v2821
      %v2842 = vmax.f32 %v2760, %v2822
      %v2843 = vmax.f32 %v2761, %v2823
      %v2844 = vmax.f32 %v2762, %v2824
      %v2845 = vmax.f32 %v2763, %v2825
      %2846 = vst [vmem:[#allocation2] sm:$0xff] 0.0
      %2847 = vst [vmem:[#allocation2 + $0x8] sm:$0xff] 0.0
      %2848 = vst [vmem:[#allocation2 + $0x10] sm:$0xff] 0.0
      %2849 = vst [vmem:[#allocation2 + $0x18] sm:$0xff] 0.0
      %2850 = vst [vmem:[#allocation2 + $0x20] sm:$0xff] 0.0
      %vm2851 = vcmask 941056
      %2852 = vst.msk [vmem:[#allocation2 + $0x28] sm:$0xff] %vm2851, 0.0
      %2853 = vst [vmem:[#allocation2 + $0x30] sm:$0xff] 0.0
      %2854 = vst [vmem:[#allocation2 + $0x38] sm:$0xff] 0.0
      %2855 = vst [vmem:[#allocation2 + $0x40] sm:$0xff] 0.0
      %2856 = vst [vmem:[#allocation2 + $0x48] sm:$0xff] 0.0
      %2857 = vst [vmem:[#allocation2 + $0x50] sm:$0xff] 0.0
      %2858 = vst.msk [vmem:[#allocation2 + $0x58] sm:$0xff] %vm2851, 0.0
      %v2859 = vld [vmem:[%s9] sm:$0x1f]
      %v2861 = vperm.slane %v2859, 0
      %v2862 = vperm.slane %v2859, 1
      %v2863 = vperm.slane %v2859, 2
      %v2864 = vperm.slane %v2859, 3
      %v2865 = vperm.slane %v2859, 4
      %v2871 = vmul.f32 %v2836, %v2861
      %v2872 = vmul.f32 %v2837, %v2862
      %v2873 = vmul.f32 %v2838, %v2863
      %v2874 = vmul.f32 %v2839, %v2864
      %v2875 = vmul.f32 %v2840, %v2865
      %v2876 = vmul.f32 %v2841, %v2861
      %v2877 = vmul.f32 %v2842, %v2862
      %v2878 = vmul.f32 %v2843, %v2863
      %v2879 = vmul.f32 %v2844, %v2864
      %v2880 = vmul.f32 %v2845, %v2865
      %2891 = vrot.lane.b32.xlu0 %v2871, 58
      %v2892 = vpop.permute.xlu0 %2891
      %2893 = vrot.lane.b32.xlu0 %v2872, 58
      %v2894 = vpop.permute.xlu0 %2893
      %2895 = vrot.lane.b32.xlu0 %v2873, 58
      %v2896 = vpop.permute.xlu0 %2895
      %2897 = vrot.lane.b32.xlu0 %v2874, 58
      %v2898 = vpop.permute.xlu0 %2897
      %2899 = vrot.lane.b32.xlu0 %v2875, 58
      %v2900 = vpop.permute.xlu0 %2899
      %2901 = vrot.lane.b32.xlu0 %v2876, 58
      %v2902 = vpop.permute.xlu0 %2901
      %2903 = vrot.lane.b32.xlu0 %v2877, 58
      %v2904 = vpop.permute.xlu0 %2903
      %2905 = vrot.lane.b32.xlu0 %v2878, 58
      %v2906 = vpop.permute.xlu0 %2905
      %2907 = vrot.lane.b32.xlu0 %v2879, 58
      %v2908 = vpop.permute.xlu0 %2907
      %2909 = vrot.lane.b32.xlu0 %v2880, 58
      %v2910 = vpop.permute.xlu0 %2909
      %vm2911 = vcmask 474112
      %v2912 = vsel %vm2911, %v2892, %v2894
      %v2913 = vsel %vm2911, %v2894, %v2896
      %v2914 = vsel %vm2911, %v2896, %v2898
      %v2915 = vsel %vm2911, %v2898, %v2900
      %v2916 = vsel %vm2911, %v2902, %v2904
      %v2917 = vsel %vm2911, %v2904, %v2906
      %v2918 = vsel %vm2911, %v2906, %v2908
      %v2919 = vsel %vm2911, %v2908, %v2910
      %vm2932 = vcmask 1048016
      %2933 = vst.msk [vmem:[#allocation2] sm:$0xff] %vm2932, %v2892
      %2934 = vst [vmem:[#allocation2 + $0x8] sm:$0xff] %v2912
      %2935 = vst [vmem:[#allocation2 + $0x10] sm:$0xff] %v2913
      %2936 = vst [vmem:[#allocation2 + $0x18] sm:$0xff] %v2914
      %2937 = vst [vmem:[#allocation2 + $0x20] sm:$0xff] %v2915
      %vm2938 = vcmask 465920
      %2939 = vst.msk [vmem:[#allocation2 + $0x28] sm:$0xff] %vm2938, %v2900
      %2940 = vst.msk [vmem:[#allocation2 + $0x30] sm:$0xff] %vm2932, %v2902
      %2941 = vst [vmem:[#allocation2 + $0x38] sm:$0xff] %v2916
      %2942 = vst [vmem:[#allocation2 + $0x40] sm:$0xff] %v2917
      %2943 = vst [vmem:[#allocation2 + $0x48] sm:$0xff] %v2918
      %2944 = vst [vmem:[#allocation2 + $0x50] sm:$0xff] %v2919
      %2945 = vst.msk [vmem:[#allocation2 + $0x58] sm:$0xff] %vm2938, %v2910
      %v2946 = vld [vmem:[%s3] sm:$0xff]
      %v2947 = vld [vmem:[%s3 + $0x8] sm:$0xff]
      %v2948 = vld [vmem:[%s3 + $0x10] sm:$0xff]
      %v2949 = vld [vmem:[%s3 + $0x18] sm:$0xff]
      %v2950 = vld [vmem:[#allocation2] sm:$0xff]
      %v2951 = vld [vmem:[#allocation2 + $0x8] sm:$0xff]
      %v2952 = vld [vmem:[#allocation2 + $0x10] sm:$0xff]
      %v2953 = vld [vmem:[#allocation2 + $0x18] sm:$0xff]
      %v2954 = vld [vmem:[#allocation2 + $0x20] sm:$0xff]
      %v2955 = vld [vmem:[#allocation2 + $0x30] sm:$0xff]
      %v2956 = vld [vmem:[#allocation2 + $0x38] sm:$0xff]
      %v2957 = vld [vmem:[#allocation2 + $0x40] sm:$0xff]
      %v2958 = vld [vmem:[#allocation2 + $0x48] sm:$0xff]
      %v2959 = vld [vmem:[#allocation2 + $0x50] sm:$0xff]
      %s2960 = scalar_lea.vmem %s3, 32
      %v2961 = vld [vmem:[%s2960] sm:$0xff]
      %v2962 = vld [vmem:[%s2960 + $0x8] sm:$0xff]
      %v2963 = vld [vmem:[%s2960 + $0x10] sm:$0xff]
      %v2964 = vld [vmem:[%s2960 + $0x18] sm:$0xff]
      %v2965 = vld [vmem:[#allocation2 + $0x28] sm:$0xff]
      %v2966 = vld [vmem:[#allocation2 + $0x58] sm:$0xff]
      %2979 = vrot.lane.b32.xlu0 %v2950, 126
      %v2980 = vpop.permute.xlu0 %2979
      %2981 = vrot.lane.b32.xlu0 %v2951, 126
      %v2982 = vpop.permute.xlu0 %2981
      %2983 = vrot.lane.b32.xlu0 %v2952, 126
      %v2984 = vpop.permute.xlu0 %2983
      %2985 = vrot.lane.b32.xlu0 %v2953, 126
      %v2986 = vpop.permute.xlu0 %2985
      %2987 = vrot.lane.b32.xlu0 %v2954, 126
      %v2988 = vpop.permute.xlu0 %2987
      %2989 = vrot.lane.b32.xlu0 %v2965, 126
      %v2990 = vpop.permute.xlu0 %2989
      %2991 = vrot.lane.b32.xlu0 %v2955, 126
      %v2992 = vpop.permute.xlu0 %2991
      %2993 = vrot.lane.b32.xlu0 %v2956, 126
      %v2994 = vpop.permute.xlu0 %2993
      %2995 = vrot.lane.b32.xlu0 %v2957, 126
      %v2996 = vpop.permute.xlu0 %2995
      %2997 = vrot.lane.b32.xlu0 %v2958, 126
      %v2998 = vpop.permute.xlu0 %2997
      %2999 = vrot.lane.b32.xlu0 %v2959, 126
      %v3000 = vpop.permute.xlu0 %2999
      %3001 = vrot.lane.b32.xlu0 %v2966, 126
      %v3002 = vpop.permute.xlu0 %3001
      %v3003 = vsel %vm581, %v2980, %v2982
      %v3004 = vsel %vm581, %v2982, %v2984
      %v3005 = vsel %vm581, %v2984, %v2986
      %v3006 = vsel %vm581, %v2986, %v2988
      %v3007 = vsel %vm581, %v2988, %v2990
      %v3008 = vsel %vm581, %v2992, %v2994
      %v3009 = vsel %vm581, %v2994, %v2996
      %v3010 = vsel %vm581, %v2996, %v2998
      %v3011 = vsel %vm581, %v2998, %v3000
      %v3012 = vsel %vm581, %v3000, %v3002
      %v3024 = vsel %vm2229, %v2961, 0
      %v3027 = vsel %vm2229, %v2962, 0
      %v3030 = vsel %vm2229, %v2963, 0
      %v3033 = vsel %vm2229, %v2964, 0
      %3035 = vmatpush.msra.mxu0 0.0
      %3036 = vmatpush.msra.mxu0 0.0
      %3037 = vmatpush.msra.mxu0 0.0
      %3038 = vmatpush.msra.mxu0 0.0
      %3039 = vmatpush.msra.mxu0 0.0
      %3040 = vmatpush.msra.mxu0 0.0
      %3041 = vmatpush.msra.mxu0 0.0
      %3042 = vmatpush.msra.mxu0 0.0
      %3043 = vmatpush.msra.mxu0 0.0
      %3044 = vmatpush.msra.mxu0 0.0
      %3045 = vmatpush.msra.mxu0 0.0
      %3046 = vmatpush.msra.mxu0 0.0
      %3047 = vmatpush.msra.mxu0 0.0
      %3048 = vmatpush.msra.mxu0 0.0
      %3049 = vmatpush.msra.mxu0 %v3008
      %3050 = vmatpush.msra.mxu0 %v3003
      %3051 = vmatmul.f32.gmra.mxu0 %v3024
      %v3052 = vpop.f32.mrf.mxu0
      %v3053 = vadd.f32 0.0, %v3052
      %3054 = vmatmul.f32.gmra.mxu0 %v3027
      %v3055 = vpop.f32.mrf.mxu0
      %v3056 = vadd.f32 0.0, %v3055
      %3057 = vmatmul.f32.gmra.mxu0 %v3030
      %v3058 = vpop.f32.mrf.mxu0
      %v3059 = vadd.f32 0.0, %v3058
      %3060 = vmatmul.f32.gmra.mxu0 %v3033
      %v3061 = vpop.f32.mrf.mxu0
      %v3062 = vadd.f32 0.0, %v3061
      %3063 = vdwg.mxu0
      %3064 = vmatpush.msra.mxu0 0.0
      %3065 = vmatpush.msra.mxu0 0.0
      %3066 = vmatpush.msra.mxu0 0.0
      %3067 = vmatpush.msra.mxu0 0.0
      %3068 = vmatpush.msra.mxu0 0.0
      %3069 = vmatpush.msra.mxu0 0.0
      %3070 = vmatpush.msra.mxu0 0.0
      %3071 = vmatpush.msra.mxu0 0.0
      %3072 = vmatpush.msra.mxu0 0.0
      %3073 = vmatpush.msra.mxu0 0.0
      %3074 = vmatpush.msra.mxu0 0.0
      %3075 = vmatpush.msra.mxu0 0.0
      %3076 = vmatpush.msra.mxu0 0.0
      %3077 = vmatpush.msra.mxu0 0.0
      %3078 = vmatpush.msra.mxu0 %v3009
      %3079 = vmatpush.msra.mxu0 %v3004
      %3080 = vmatmul.f32.gmra.mxu0 %v3024
      %v3081 = vpop.f32.mrf.mxu0
      %v3082 = vadd.f32 0.0, %v3081
      %3083 = vmatmul.f32.gmra.mxu0 %v3027
      %v3084 = vpop.f32.mrf.mxu0
      %v3085 = vadd.f32 0.0, %v3084
      %3086 = vmatmul.f32.gmra.mxu0 %v3030
      %v3087 = vpop.f32.mrf.mxu0
      %v3088 = vadd.f32 0.0, %v3087
      %3089 = vmatmul.f32.gmra.mxu0 %v3033
      %v3090 = vpop.f32.mrf.mxu0
      %v3091 = vadd.f32 0.0, %v3090
      %3092 = vdwg.mxu0
      %3093 = vmatpush.msra.mxu0 0.0
      %3094 = vmatpush.msra.mxu0 0.0
      %3095 = vmatpush.msra.mxu0 0.0
      %3096 = vmatpush.msra.mxu0 0.0
      %3097 = vmatpush.msra.mxu0 0.0
      %3098 = vmatpush.msra.mxu0 0.0
      %3099 = vmatpush.msra.mxu0 0.0
      %3100 = vmatpush.msra.mxu0 0.0
      %3101 = vmatpush.msra.mxu0 0.0
      %3102 = vmatpush.msra.mxu0 0.0
      %3103 = vmatpush.msra.mxu0 0.0
      %3104 = vmatpush.msra.mxu0 0.0
      %3105 = vmatpush.msra.mxu0 0.0
      %3106 = vmatpush.msra.mxu0 0.0
      %3107 = vmatpush.msra.mxu0 %v3010
      %3108 = vmatpush.msra.mxu0 %v3005
      %3109 = vmatmul.f32.gmra.mxu0 %v3024
      %v3110 = vpop.f32.mrf.mxu0
      %v3111 = vadd.f32 0.0, %v3110
      %3112 = vmatmul.f32.gmra.mxu0 %v3027
      %v3113 = vpop.f32.mrf.mxu0
      %v3114 = vadd.f32 0.0, %v3113
      %3115 = vmatmul.f32.gmra.mxu0 %v3030
      %v3116 = vpop.f32.mrf.mxu0
      %v3117 = vadd.f32 0.0, %v3116
      %3118 = vmatmul.f32.gmra.mxu0 %v3033
      %v3119 = vpop.f32.mrf.mxu0
      %v3120 = vadd.f32 0.0, %v3119
      %3121 = vdwg.mxu0
      %3122 = vmatpush.msra.mxu0 0.0
      %3123 = vmatpush.msra.mxu0 0.0
      %3124 = vmatpush.msra.mxu0 0.0
      %3125 = vmatpush.msra.mxu0 0.0
      %3126 = vmatpush.msra.mxu0 0.0
      %3127 = vmatpush.msra.mxu0 0.0
      %3128 = vmatpush.msra.mxu0 0.0
      %3129 = vmatpush.msra.mxu0 0.0
      %3130 = vmatpush.msra.mxu0 0.0
      %3131 = vmatpush.msra.mxu0 0.0
      %3132 = vmatpush.msra.mxu0 0.0
      %3133 = vmatpush.msra.mxu0 0.0
      %3134 = vmatpush.msra.mxu0 0.0
      %3135 = vmatpush.msra.mxu0 0.0
      %3136 = vmatpush.msra.mxu0 %v3011
      %3137 = vmatpush.msra.mxu0 %v3006
      %3138 = vmatmul.f32.gmra.mxu0 %v3024
      %v3139 = vpop.f32.mrf.mxu0
      %v3140 = vadd.f32 0.0, %v3139
      %3141 = vmatmul.f32.gmra.mxu0 %v3027
      %v3142 = vpop.f32.mrf.mxu0
      %v3143 = vadd.f32 0.0, %v3142
      %3144 = vmatmul.f32.gmra.mxu0 %v3030
      %v3145 = vpop.f32.mrf.mxu0
      %v3146 = vadd.f32 0.0, %v3145
      %3147 = vmatmul.f32.gmra.mxu0 %v3033
      %v3148 = vpop.f32.mrf.mxu0
      %v3149 = vadd.f32 0.0, %v3148
      %3150 = vdwg.mxu0
      %3151 = vmatpush.msra.mxu0 0.0
      %3152 = vmatpush.msra.mxu0 0.0
      %3153 = vmatpush.msra.mxu0 0.0
      %3154 = vmatpush.msra.mxu0 0.0
      %3155 = vmatpush.msra.mxu0 0.0
      %3156 = vmatpush.msra.mxu0 0.0
      %3157 = vmatpush.msra.mxu0 0.0
      %3158 = vmatpush.msra.mxu0 0.0
      %3159 = vmatpush.msra.mxu0 0.0
      %3160 = vmatpush.msra.mxu0 0.0
      %3161 = vmatpush.msra.mxu0 0.0
      %3162 = vmatpush.msra.mxu0 0.0
      %3163 = vmatpush.msra.mxu0 0.0
      %3164 = vmatpush.msra.mxu0 0.0
      %3165 = vmatpush.msra.mxu0 %v3012
      %3166 = vmatpush.msra.mxu0 %v3007
      %3167 = vmatmul.f32.gmra.mxu0 %v3024
      %v3168 = vpop.f32.mrf.mxu0
      %v3169 = vadd.f32 0.0, %v3168
      %3170 = vmatmul.f32.gmra.mxu0 %v3027
      %v3171 = vpop.f32.mrf.mxu0
      %v3172 = vadd.f32 0.0, %v3171
      %3173 = vmatmul.f32.gmra.mxu0 %v3030
      %v3174 = vpop.f32.mrf.mxu0
      %v3175 = vadd.f32 0.0, %v3174
      %3176 = vmatmul.f32.gmra.mxu0 %v3033
      %v3177 = vpop.f32.mrf.mxu0
      %v3178 = vadd.f32 0.0, %v3177
      %3179 = vdwg.mxu0
      %v3181 = vsel %vm2229, %v2946, 0
      %v3184 = vsel %vm2229, %v2947, 0
      %v3187 = vsel %vm2229, %v2948, 0
      %v3190 = vsel %vm2229, %v2949, 0
      %3192 = vmatpush.msra.mxu0 0.0
      %3193 = vmatpush.msra.mxu0 0.0
      %3194 = vmatpush.msra.mxu0 0.0
      %3195 = vmatpush.msra.mxu0 0.0
      %3196 = vmatpush.msra.mxu0 0.0
      %3197 = vmatpush.msra.mxu0 0.0
      %3198 = vmatpush.msra.mxu0 0.0
      %3199 = vmatpush.msra.mxu0 0.0
      %3200 = vmatpush.msra.mxu0 0.0
      %3201 = vmatpush.msra.mxu0 0.0
      %3202 = vmatpush.msra.mxu0 0.0
      %3203 = vmatpush.msra.mxu0 0.0
      %3204 = vmatpush.msra.mxu0 0.0
      %3205 = vmatpush.msra.mxu0 0.0
      %3206 = vmatpush.msra.mxu0 %v2955
      %3207 = vmatpush.msra.mxu0 %v2950
      %3208 = vmatmul.f32.gmra.mxu0 %v3181
      %v3209 = vpop.f32.mrf.mxu0
      %v3210 = vadd.f32 %v3053, %v3209
      %3211 = vmatmul.f32.gmra.mxu0 %v3184
      %v3212 = vpop.f32.mrf.mxu0
      %v3213 = vadd.f32 %v3056, %v3212
      %3214 = vmatmul.f32.gmra.mxu0 %v3187
      %v3215 = vpop.f32.mrf.mxu0
      %v3216 = vadd.f32 %v3059, %v3215
      %3217 = vmatmul.f32.gmra.mxu0 %v3190
      %v3218 = vpop.f32.mrf.mxu0
      %v3219 = vadd.f32 %v3062, %v3218
      %3220 = vdwg.mxu0
      %3221 = vmatpush.msra.mxu0 0.0
      %3222 = vmatpush.msra.mxu0 0.0
      %3223 = vmatpush.msra.mxu0 0.0
      %3224 = vmatpush.msra.mxu0 0.0
      %3225 = vmatpush.msra.mxu0 0.0
      %3226 = vmatpush.msra.mxu0 0.0
      %3227 = vmatpush.msra.mxu0 0.0
      %3228 = vmatpush.msra.mxu0 0.0
      %3229 = vmatpush.msra.mxu0 0.0
      %3230 = vmatpush.msra.mxu0 0.0
      %3231 = vmatpush.msra.mxu0 0.0
      %3232 = vmatpush.msra.mxu0 0.0
      %3233 = vmatpush.msra.mxu0 0.0
      %3234 = vmatpush.msra.mxu0 0.0
      %3235 = vmatpush.msra.mxu0 %v2956
      %3236 = vmatpush.msra.mxu0 %v2951
      %3237 = vmatmul.f32.gmra.mxu0 %v3181
      %v3238 = vpop.f32.mrf.mxu0
      %v3239 = vadd.f32 %v3082, %v3238
      %3240 = vmatmul.f32.gmra.mxu0 %v3184
      %v3241 = vpop.f32.mrf.mxu0
      %v3242 = vadd.f32 %v3085, %v3241
      %3243 = vmatmul.f32.gmra.mxu0 %v3187
      %v3244 = vpop.f32.mrf.mxu0
      %v3245 = vadd.f32 %v3088, %v3244
      %3246 = vmatmul.f32.gmra.mxu0 %v3190
      %v3247 = vpop.f32.mrf.mxu0
      %v3248 = vadd.f32 %v3091, %v3247
      %3249 = vdwg.mxu0
      %3250 = vmatpush.msra.mxu0 0.0
      %3251 = vmatpush.msra.mxu0 0.0
      %3252 = vmatpush.msra.mxu0 0.0
      %3253 = vmatpush.msra.mxu0 0.0
      %3254 = vmatpush.msra.mxu0 0.0
      %3255 = vmatpush.msra.mxu0 0.0
      %3256 = vmatpush.msra.mxu0 0.0
      %3257 = vmatpush.msra.mxu0 0.0
      %3258 = vmatpush.msra.mxu0 0.0
      %3259 = vmatpush.msra.mxu0 0.0
      %3260 = vmatpush.msra.mxu0 0.0
      %3261 = vmatpush.msra.mxu0 0.0
      %3262 = vmatpush.msra.mxu0 0.0
      %3263 = vmatpush.msra.mxu0 0.0
      %3264 = vmatpush.msra.mxu0 %v2957
      %3265 = vmatpush.msra.mxu0 %v2952
      %3266 = vmatmul.f32.gmra.mxu0 %v3181
      %v3267 = vpop.f32.mrf.mxu0
      %v3268 = vadd.f32 %v3111, %v3267
      %3269 = vmatmul.f32.gmra.mxu0 %v3184
      %v3270 = vpop.f32.mrf.mxu0
      %v3271 = vadd.f32 %v3114, %v3270
      %3272 = vmatmul.f32.gmra.mxu0 %v3187
      %v3273 = vpop.f32.mrf.mxu0
      %v3274 = vadd.f32 %v3117, %v3273
      %3275 = vmatmul.f32.gmra.mxu0 %v3190
      %v3276 = vpop.f32.mrf.mxu0
      %v3277 = vadd.f32 %v3120, %v3276
      %3278 = vdwg.mxu0
      %3279 = vmatpush.msra.mxu0 0.0
      %3280 = vmatpush.msra.mxu0 0.0
      %3281 = vmatpush.msra.mxu0 0.0
      %3282 = vmatpush.msra.mxu0 0.0
      %3283 = vmatpush.msra.mxu0 0.0
      %3284 = vmatpush.msra.mxu0 0.0
      %3285 = vmatpush.msra.mxu0 0.0
      %3286 = vmatpush.msra.mxu0 0.0
      %3287 = vmatpush.msra.mxu0 0.0
      %3288 = vmatpush.msra.mxu0 0.0
      %3289 = vmatpush.msra.mxu0 0.0
      %3290 = vmatpush.msra.mxu0 0.0
      %3291 = vmatpush.msra.mxu0 0.0
      %3292 = vmatpush.msra.mxu0 0.0
      %3293 = vmatpush.msra.mxu0 %v2958
      %3294 = vmatpush.msra.mxu0 %v2953
      %3295 = vmatmul.f32.gmra.mxu0 %v3181
      %v3296 = vpop.f32.mrf.mxu0
      %v3297 = vadd.f32 %v3140, %v3296
      %3298 = vmatmul.f32.gmra.mxu0 %v3184
      %v3299 = vpop.f32.mrf.mxu0
      %v3300 = vadd.f32 %v3143, %v3299
      %3301 = vmatmul.f32.gmra.mxu0 %v3187
      %v3302 = vpop.f32.mrf.mxu0
      %v3303 = vadd.f32 %v3146, %v3302
      %3304 = vmatmul.f32.gmra.mxu0 %v3190
      %v3305 = vpop.f32.mrf.mxu0
      %v3306 = vadd.f32 %v3149, %v3305
      %3307 = vdwg.mxu0
      %3308 = vmatpush.msra.mxu0 0.0
      %3309 = vmatpush.msra.mxu0 0.0
      %3310 = vmatpush.msra.mxu0 0.0
      %3311 = vmatpush.msra.mxu0 0.0
      %3312 = vmatpush.msra.mxu0 0.0
      %3313 = vmatpush.msra.mxu0 0.0
      %3314 = vmatpush.msra.mxu0 0.0
      %3315 = vmatpush.msra.mxu0 0.0
      %3316 = vmatpush.msra.mxu0 0.0
      %3317 = vmatpush.msra.mxu0 0.0
      %3318 = vmatpush.msra.mxu0 0.0
      %3319 = vmatpush.msra.mxu0 0.0
      %3320 = vmatpush.msra.mxu0 0.0
      %3321 = vmatpush.msra.mxu0 0.0
      %3322 = vmatpush.msra.mxu0 %v2959
      %3323 = vmatpush.msra.mxu0 %v2954
      %3324 = vmatmul.f32.gmra.mxu0 %v3181
      %v3325 = vpop.f32.mrf.mxu0
      %v3326 = vadd.f32 %v3169, %v3325
      %3327 = vmatmul.f32.gmra.mxu0 %v3184
      %v3328 = vpop.f32.mrf.mxu0
      %v3329 = vadd.f32 %v3172, %v3328
      %3330 = vmatmul.f32.gmra.mxu0 %v3187
      %v3331 = vpop.f32.mrf.mxu0
      %v3332 = vadd.f32 %v3175, %v3331
      %3333 = vmatmul.f32.gmra.mxu0 %v3190
      %v3334 = vpop.f32.mrf.mxu0
      %v3335 = vadd.f32 %v3178, %v3334
      %3336 = vdwg.mxu0
      %s3337 = scalar_lea.vmem %s3, 64
      %v3338 = vld [vmem:[%s3337] sm:$0xff]
      %v3339 = vld [vmem:[%s3337 + $0x8] sm:$0xff]
      %v3340 = vld [vmem:[%s3337 + $0x10] sm:$0xff]
      %v3341 = vld [vmem:[%s3337 + $0x18] sm:$0xff]
      %3342 = vrot.lane.b32.xlu0 %v2950, 124
      %v3343 = vpop.permute.xlu0 %3342
      %3344 = vrot.lane.b32.xlu0 %v2951, 124
      %v3345 = vpop.permute.xlu0 %3344
      %3346 = vrot.lane.b32.xlu0 %v2952, 124
      %v3347 = vpop.permute.xlu0 %3346
      %3348 = vrot.lane.b32.xlu0 %v2953, 124
      %v3349 = vpop.permute.xlu0 %3348
      %3350 = vrot.lane.b32.xlu0 %v2954, 124
      %v3351 = vpop.permute.xlu0 %3350
      %3352 = vrot.lane.b32.xlu0 %v2965, 124
      %v3353 = vpop.permute.xlu0 %3352
      %3354 = vrot.lane.b32.xlu0 %v2955, 124
      %v3355 = vpop.permute.xlu0 %3354
      %3356 = vrot.lane.b32.xlu0 %v2956, 124
      %v3357 = vpop.permute.xlu0 %3356
      %3358 = vrot.lane.b32.xlu0 %v2957, 124
      %v3359 = vpop.permute.xlu0 %3358
      %3360 = vrot.lane.b32.xlu0 %v2958, 124
      %v3361 = vpop.permute.xlu0 %3360
      %3362 = vrot.lane.b32.xlu0 %v2959, 124
      %v3363 = vpop.permute.xlu0 %3362
      %3364 = vrot.lane.b32.xlu0 %v2966, 124
      %v3365 = vpop.permute.xlu0 %3364
      %v3366 = vsel %vm763, %v3343, %v3345
      %v3367 = vsel %vm763, %v3345, %v3347
      %v3368 = vsel %vm763, %v3347, %v3349
      %v3369 = vsel %vm763, %v3349, %v3351
      %v3370 = vsel %vm763, %v3351, %v3353
      %v3371 = vsel %vm763, %v3355, %v3357
      %v3372 = vsel %vm763, %v3357, %v3359
      %v3373 = vsel %vm763, %v3359, %v3361
      %v3374 = vsel %vm763, %v3361, %v3363
      %v3375 = vsel %vm763, %v3363, %v3365
      %v3387 = vsel %vm2229, %v3338, 0
      %v3390 = vsel %vm2229, %v3339, 0
      %v3393 = vsel %vm2229, %v3340, 0
      %v3396 = vsel %vm2229, %v3341, 0
      %3398 = vmatpush.msra.mxu0 0.0
      %3399 = vmatpush.msra.mxu0 0.0
      %3400 = vmatpush.msra.mxu0 0.0
      %3401 = vmatpush.msra.mxu0 0.0
      %3402 = vmatpush.msra.mxu0 0.0
      %3403 = vmatpush.msra.mxu0 0.0
      %3404 = vmatpush.msra.mxu0 0.0
      %3405 = vmatpush.msra.mxu0 0.0
      %3406 = vmatpush.msra.mxu0 0.0
      %3407 = vmatpush.msra.mxu0 0.0
      %3408 = vmatpush.msra.mxu0 0.0
      %3409 = vmatpush.msra.mxu0 0.0
      %3410 = vmatpush.msra.mxu0 0.0
      %3411 = vmatpush.msra.mxu0 0.0
      %3412 = vmatpush.msra.mxu0 %v3371
      %3413 = vmatpush.msra.mxu0 %v3366
      %3414 = vmatmul.f32.gmra.mxu0 %v3387
      %v3415 = vpop.f32.mrf.mxu0
      %v3416 = vadd.f32 0.0, %v3415
      %3417 = vmatmul.f32.gmra.mxu0 %v3390
      %v3418 = vpop.f32.mrf.mxu0
      %v3419 = vadd.f32 0.0, %v3418
      %3420 = vmatmul.f32.gmra.mxu0 %v3393
      %v3421 = vpop.f32.mrf.mxu0
      %v3422 = vadd.f32 0.0, %v3421
      %3423 = vmatmul.f32.gmra.mxu0 %v3396
      %v3424 = vpop.f32.mrf.mxu0
      %v3425 = vadd.f32 0.0, %v3424
      %3426 = vdwg.mxu0
      %3427 = vmatpush.msra.mxu0 0.0
      %3428 = vmatpush.msra.mxu0 0.0
      %3429 = vmatpush.msra.mxu0 0.0
      %3430 = vmatpush.msra.mxu0 0.0
      %3431 = vmatpush.msra.mxu0 0.0
      %3432 = vmatpush.msra.mxu0 0.0
      %3433 = vmatpush.msra.mxu0 0.0
      %3434 = vmatpush.msra.mxu0 0.0
      %3435 = vmatpush.msra.mxu0 0.0
      %3436 = vmatpush.msra.mxu0 0.0
      %3437 = vmatpush.msra.mxu0 0.0
      %3438 = vmatpush.msra.mxu0 0.0
      %3439 = vmatpush.msra.mxu0 0.0
      %3440 = vmatpush.msra.mxu0 0.0
      %3441 = vmatpush.msra.mxu0 %v3372
      %3442 = vmatpush.msra.mxu0 %v3367
      %3443 = vmatmul.f32.gmra.mxu0 %v3387
      %v3444 = vpop.f32.mrf.mxu0
      %v3445 = vadd.f32 0.0, %v3444
      %3446 = vmatmul.f32.gmra.mxu0 %v3390
      %v3447 = vpop.f32.mrf.mxu0
      %v3448 = vadd.f32 0.0, %v3447
      %3449 = vmatmul.f32.gmra.mxu0 %v3393
      %v3450 = vpop.f32.mrf.mxu0
      %v3451 = vadd.f32 0.0, %v3450
      %3452 = vmatmul.f32.gmra.mxu0 %v3396
      %v3453 = vpop.f32.mrf.mxu0
      %v3454 = vadd.f32 0.0, %v3453
      %3455 = vdwg.mxu0
      %3456 = vmatpush.msra.mxu0 0.0
      %3457 = vmatpush.msra.mxu0 0.0
      %3458 = vmatpush.msra.mxu0 0.0
      %3459 = vmatpush.msra.mxu0 0.0
      %3460 = vmatpush.msra.mxu0 0.0
      %3461 = vmatpush.msra.mxu0 0.0
      %3462 = vmatpush.msra.mxu0 0.0
      %3463 = vmatpush.msra.mxu0 0.0
      %3464 = vmatpush.msra.mxu0 0.0
      %3465 = vmatpush.msra.mxu0 0.0
      %3466 = vmatpush.msra.mxu0 0.0
      %3467 = vmatpush.msra.mxu0 0.0
      %3468 = vmatpush.msra.mxu0 0.0
      %3469 = vmatpush.msra.mxu0 0.0
      %3470 = vmatpush.msra.mxu0 %v3373
      %3471 = vmatpush.msra.mxu0 %v3368
      %3472 = vmatmul.f32.gmra.mxu0 %v3387
      %v3473 = vpop.f32.mrf.mxu0
      %v3474 = vadd.f32 0.0, %v3473
      %3475 = vmatmul.f32.gmra.mxu0 %v3390
      %v3476 = vpop.f32.mrf.mxu0
      %v3477 = vadd.f32 0.0, %v3476
      %3478 = vmatmul.f32.gmra.mxu0 %v3393
      %v3479 = vpop.f32.mrf.mxu0
      %v3480 = vadd.f32 0.0, %v3479
      %3481 = vmatmul.f32.gmra.mxu0 %v3396
      %v3482 = vpop.f32.mrf.mxu0
      %v3483 = vadd.f32 0.0, %v3482
      %3484 = vdwg.mxu0
      %3485 = vmatpush.msra.mxu0 0.0
      %3486 = vmatpush.msra.mxu0 0.0
      %3487 = vmatpush.msra.mxu0 0.0
      %3488 = vmatpush.msra.mxu0 0.0
      %3489 = vmatpush.msra.mxu0 0.0
      %3490 = vmatpush.msra.mxu0 0.0
      %3491 = vmatpush.msra.mxu0 0.0
      %3492 = vmatpush.msra.mxu0 0.0
      %3493 = vmatpush.msra.mxu0 0.0
      %3494 = vmatpush.msra.mxu0 0.0
      %3495 = vmatpush.msra.mxu0 0.0
      %3496 = vmatpush.msra.mxu0 0.0
      %3497 = vmatpush.msra.mxu0 0.0
      %3498 = vmatpush.msra.mxu0 0.0
      %3499 = vmatpush.msra.mxu0 %v3374
      %3500 = vmatpush.msra.mxu0 %v3369
      %3501 = vmatmul.f32.gmra.mxu0 %v3387
      %v3502 = vpop.f32.mrf.mxu0
      %v3503 = vadd.f32 0.0, %v3502
      %3504 = vmatmul.f32.gmra.mxu0 %v3390
      %v3505 = vpop.f32.mrf.mxu0
      %v3506 = vadd.f32 0.0, %v3505
      %3507 = vmatmul.f32.gmra.mxu0 %v3393
      %v3508 = vpop.f32.mrf.mxu0
      %v3509 = vadd.f32 0.0, %v3508
      %3510 = vmatmul.f32.gmra.mxu0 %v3396
      %v3511 = vpop.f32.mrf.mxu0
      %v3512 = vadd.f32 0.0, %v3511
      %3513 = vdwg.mxu0
      %3514 = vmatpush.msra.mxu0 0.0
      %3515 = vmatpush.msra.mxu0 0.0
      %3516 = vmatpush.msra.mxu0 0.0
      %3517 = vmatpush.msra.mxu0 0.0
      %3518 = vmatpush.msra.mxu0 0.0
      %3519 = vmatpush.msra.mxu0 0.0
      %3520 = vmatpush.msra.mxu0 0.0
      %3521 = vmatpush.msra.mxu0 0.0
      %3522 = vmatpush.msra.mxu0 0.0
      %3523 = vmatpush.msra.mxu0 0.0
      %3524 = vmatpush.msra.mxu0 0.0
      %3525 = vmatpush.msra.mxu0 0.0
      %3526 = vmatpush.msra.mxu0 0.0
      %3527 = vmatpush.msra.mxu0 0.0
      %3528 = vmatpush.msra.mxu0 %v3375
      %3529 = vmatpush.msra.mxu0 %v3370
      %3530 = vmatmul.f32.gmra.mxu0 %v3387
      %v3531 = vpop.f32.mrf.mxu0
      %v3532 = vadd.f32 0.0, %v3531
      %3533 = vmatmul.f32.gmra.mxu0 %v3390
      %v3534 = vpop.f32.mrf.mxu0
      %v3535 = vadd.f32 0.0, %v3534
      %3536 = vmatmul.f32.gmra.mxu0 %v3393
      %v3537 = vpop.f32.mrf.mxu0
      %v3538 = vadd.f32 0.0, %v3537
      %3539 = vmatmul.f32.gmra.mxu0 %v3396
      %v3540 = vpop.f32.mrf.mxu0
      %v3541 = vadd.f32 0.0, %v3540
      %3542 = vdwg.mxu0
      %v3543 = vadd.f32 %v3210, %v3416
      %v3544 = vadd.f32 %v3239, %v3445
      %v3545 = vadd.f32 %v3268, %v3474
      %v3546 = vadd.f32 %v3297, %v3503
      %v3547 = vadd.f32 %v3326, %v3532
      %v3548 = vadd.f32 %v3213, %v3419
      %v3549 = vadd.f32 %v3242, %v3448
      %v3550 = vadd.f32 %v3271, %v3477
      %v3551 = vadd.f32 %v3300, %v3506
      %v3552 = vadd.f32 %v3329, %v3535
      %v3553 = vadd.f32 %v3216, %v3422
      %v3554 = vadd.f32 %v3245, %v3451
      %v3555 = vadd.f32 %v3274, %v3480
      %v3556 = vadd.f32 %v3303, %v3509
      %v3557 = vadd.f32 %v3332, %v3538
      %v3558 = vadd.f32 %v3219, %v3425
      %v3559 = vadd.f32 %v3248, %v3454
      %v3560 = vadd.f32 %v3277, %v3483
      %v3561 = vadd.f32 %v3306, %v3512
      %v3562 = vadd.f32 %v3335, %v3541
      %s3563 = scalar_lea.vmem %s3, 96
      %v3564 = vld [vmem:[%s3563] sm:$0xff]
      %v3565 = vld [vmem:[%s3563 + $0x8] sm:$0xff]
      %v3566 = vld [vmem:[%s3563 + $0x10] sm:$0xff]
      %v3567 = vld [vmem:[%s3563 + $0x18] sm:$0xff]
      %3568 = vrot.lane.b32.xlu0 %v2950, 72
      %v3569 = vpop.permute.xlu0 %3568
      %3570 = vrot.lane.b32.xlu0 %v2951, 72
      %v3571 = vpop.permute.xlu0 %3570
      %3572 = vrot.lane.b32.xlu0 %v2952, 72
      %v3573 = vpop.permute.xlu0 %3572
      %3574 = vrot.lane.b32.xlu0 %v2953, 72
      %v3575 = vpop.permute.xlu0 %3574
      %3576 = vrot.lane.b32.xlu0 %v2954, 72
      %v3577 = vpop.permute.xlu0 %3576
      %3578 = vrot.lane.b32.xlu0 %v2965, 72
      %v3579 = vpop.permute.xlu0 %3578
      %3580 = vrot.lane.b32.xlu0 %v2955, 72
      %v3581 = vpop.permute.xlu0 %3580
      %3582 = vrot.lane.b32.xlu0 %v2956, 72
      %v3583 = vpop.permute.xlu0 %3582
      %3584 = vrot.lane.b32.xlu0 %v2957, 72
      %v3585 = vpop.permute.xlu0 %3584
      %3586 = vrot.lane.b32.xlu0 %v2958, 72
      %v3587 = vpop.permute.xlu0 %3586
      %3588 = vrot.lane.b32.xlu0 %v2959, 72
      %v3589 = vpop.permute.xlu0 %3588
      %3590 = vrot.lane.b32.xlu0 %v2966, 72
      %v3591 = vpop.permute.xlu0 %3590
      %v3592 = vsel %vm1309, %v3569, %v3571
      %v3593 = vsel %vm1309, %v3571, %v3573
      %v3594 = vsel %vm1309, %v3573, %v3575
      %v3595 = vsel %vm1309, %v3575, %v3577
      %v3596 = vsel %vm1309, %v3577, %v3579
      %v3597 = vsel %vm1309, %v3581, %v3583
      %v3598 = vsel %vm1309, %v3583, %v3585
      %v3599 = vsel %vm1309, %v3585, %v3587
      %v3600 = vsel %vm1309, %v3587, %v3589
      %v3601 = vsel %vm1309, %v3589, %v3591
      %v3613 = vsel %vm2229, %v3564, 0
      %v3616 = vsel %vm2229, %v3565, 0
      %v3619 = vsel %vm2229, %v3566, 0
      %v3622 = vsel %vm2229, %v3567, 0
      %3624 = vmatpush.msra.mxu0 0.0
      %3625 = vmatpush.msra.mxu0 0.0
      %3626 = vmatpush.msra.mxu0 0.0
      %3627 = vmatpush.msra.mxu0 0.0
      %3628 = vmatpush.msra.mxu0 0.0
      %3629 = vmatpush.msra.mxu0 0.0
      %3630 = vmatpush.msra.mxu0 0.0
      %3631 = vmatpush.msra.mxu0 0.0
      %3632 = vmatpush.msra.mxu0 0.0
      %3633 = vmatpush.msra.mxu0 0.0
      %3634 = vmatpush.msra.mxu0 0.0
      %3635 = vmatpush.msra.mxu0 0.0
      %3636 = vmatpush.msra.mxu0 0.0
      %3637 = vmatpush.msra.mxu0 0.0
      %3638 = vmatpush.msra.mxu0 %v3597
      %3639 = vmatpush.msra.mxu0 %v3592
      %3640 = vmatmul.f32.gmra.mxu0 %v3613
      %v3641 = vpop.f32.mrf.mxu0
      %v3642 = vadd.f32 0.0, %v3641
      %3643 = vmatmul.f32.gmra.mxu0 %v3616
      %v3644 = vpop.f32.mrf.mxu0
      %v3645 = vadd.f32 0.0, %v3644
      %3646 = vmatmul.f32.gmra.mxu0 %v3619
      %v3647 = vpop.f32.mrf.mxu0
      %v3648 = vadd.f32 0.0, %v3647
      %3649 = vmatmul.f32.gmra.mxu0 %v3622
      %v3650 = vpop.f32.mrf.mxu0
      %v3651 = vadd.f32 0.0, %v3650
      %3652 = vdwg.mxu0
      %3653 = vmatpush.msra.mxu0 0.0
      %3654 = vmatpush.msra.mxu0 0.0
      %3655 = vmatpush.msra.mxu0 0.0
      %3656 = vmatpush.msra.mxu0 0.0
      %3657 = vmatpush.msra.mxu0 0.0
      %3658 = vmatpush.msra.mxu0 0.0
      %3659 = vmatpush.msra.mxu0 0.0
      %3660 = vmatpush.msra.mxu0 0.0
      %3661 = vmatpush.msra.mxu0 0.0
      %3662 = vmatpush.msra.mxu0 0.0
      %3663 = vmatpush.msra.mxu0 0.0
      %3664 = vmatpush.msra.mxu0 0.0
      %3665 = vmatpush.msra.mxu0 0.0
      %3666 = vmatpush.msra.mxu0 0.0
      %3667 = vmatpush.msra.mxu0 %v3598
      %3668 = vmatpush.msra.mxu0 %v3593
      %3669 = vmatmul.f32.gmra.mxu0 %v3613
      %v3670 = vpop.f32.mrf.mxu0
      %v3671 = vadd.f32 0.0, %v3670
      %3672 = vmatmul.f32.gmra.mxu0 %v3616
      %v3673 = vpop.f32.mrf.mxu0
      %v3674 = vadd.f32 0.0, %v3673
      %3675 = vmatmul.f32.gmra.mxu0 %v3619
      %v3676 = vpop.f32.mrf.mxu0
      %v3677 = vadd.f32 0.0, %v3676
      %3678 = vmatmul.f32.gmra.mxu0 %v3622
      %v3679 = vpop.f32.mrf.mxu0
      %v3680 = vadd.f32 0.0, %v3679
      %3681 = vdwg.mxu0
      %3682 = vmatpush.msra.mxu0 0.0
      %3683 = vmatpush.msra.mxu0 0.0
      %3684 = vmatpush.msra.mxu0 0.0
      %3685 = vmatpush.msra.mxu0 0.0
      %3686 = vmatpush.msra.mxu0 0.0
      %3687 = vmatpush.msra.mxu0 0.0
      %3688 = vmatpush.msra.mxu0 0.0
      %3689 = vmatpush.msra.mxu0 0.0
      %3690 = vmatpush.msra.mxu0 0.0
      %3691 = vmatpush.msra.mxu0 0.0
      %3692 = vmatpush.msra.mxu0 0.0
      %3693 = vmatpush.msra.mxu0 0.0
      %3694 = vmatpush.msra.mxu0 0.0
      %3695 = vmatpush.msra.mxu0 0.0
      %3696 = vmatpush.msra.mxu0 %v3599
      %3697 = vmatpush.msra.mxu0 %v3594
      %3698 = vmatmul.f32.gmra.mxu0 %v3613
      %v3699 = vpop.f32.mrf.mxu0
      %v3700 = vadd.f32 0.0, %v3699
      %3701 = vmatmul.f32.gmra.mxu0 %v3616
      %v3702 = vpop.f32.mrf.mxu0
      %v3703 = vadd.f32 0.0, %v3702
      %3704 = vmatmul.f32.gmra.mxu0 %v3619
      %v3705 = vpop.f32.mrf.mxu0
      %v3706 = vadd.f32 0.0, %v3705
      %3707 = vmatmul.f32.gmra.mxu0 %v3622
      %v3708 = vpop.f32.mrf.mxu0
      %v3709 = vadd.f32 0.0, %v3708
      %3710 = vdwg.mxu0
      %3711 = vmatpush.msra.mxu0 0.0
      %3712 = vmatpush.msra.mxu0 0.0
      %3713 = vmatpush.msra.mxu0 0.0
      %3714 = vmatpush.msra.mxu0 0.0
      %3715 = vmatpush.msra.mxu0 0.0
      %3716 = vmatpush.msra.mxu0 0.0
      %3717 = vmatpush.msra.mxu0 0.0
      %3718 = vmatpush.msra.mxu0 0.0
      %3719 = vmatpush.msra.mxu0 0.0
      %3720 = vmatpush.msra.mxu0 0.0
      %3721 = vmatpush.msra.mxu0 0.0
      %3722 = vmatpush.msra.mxu0 0.0
      %3723 = vmatpush.msra.mxu0 0.0
      %3724 = vmatpush.msra.mxu0 0.0
      %3725 = vmatpush.msra.mxu0 %v3600
      %3726 = vmatpush.msra.mxu0 %v3595
      %3727 = vmatmul.f32.gmra.mxu0 %v3613
      %v3728 = vpop.f32.mrf.mxu0
      %v3729 = vadd.f32 0.0, %v3728
      %3730 = vmatmul.f32.gmra.mxu0 %v3616
      %v3731 = vpop.f32.mrf.mxu0
      %v3732 = vadd.f32 0.0, %v3731
      %3733 = vmatmul.f32.gmra.mxu0 %v3619
      %v3734 = vpop.f32.mrf.mxu0
      %v3735 = vadd.f32 0.0, %v3734
      %3736 = vmatmul.f32.gmra.mxu0 %v3622
      %v3737 = vpop.f32.mrf.mxu0
      %v3738 = vadd.f32 0.0, %v3737
      %3739 = vdwg.mxu0
      %3740 = vmatpush.msra.mxu0 0.0
      %3741 = vmatpush.msra.mxu0 0.0
      %3742 = vmatpush.msra.mxu0 0.0
      %3743 = vmatpush.msra.mxu0 0.0
      %3744 = vmatpush.msra.mxu0 0.0
      %3745 = vmatpush.msra.mxu0 0.0
      %3746 = vmatpush.msra.mxu0 0.0
      %3747 = vmatpush.msra.mxu0 0.0
      %3748 = vmatpush.msra.mxu0 0.0
      %3749 = vmatpush.msra.mxu0 0.0
      %3750 = vmatpush.msra.mxu0 0.0
      %3751 = vmatpush.msra.mxu0 0.0
      %3752 = vmatpush.msra.mxu0 0.0
      %3753 = vmatpush.msra.mxu0 0.0
      %3754 = vmatpush.msra.mxu0 %v3601
      %3755 = vmatpush.msra.mxu0 %v3596
      %3756 = vmatmul.f32.gmra.mxu0 %v3613
      %v3757 = vpop.f32.mrf.mxu0
      %v3758 = vadd.f32 0.0, %v3757
      %3759 = vmatmul.f32.gmra.mxu0 %v3616
      %v3760 = vpop.f32.mrf.mxu0
      %v3761 = vadd.f32 0.0, %v3760
      %3762 = vmatmul.f32.gmra.mxu0 %v3619
      %v3763 = vpop.f32.mrf.mxu0
      %v3764 = vadd.f32 0.0, %v3763
      %3765 = vmatmul.f32.gmra.mxu0 %v3622
      %v3766 = vpop.f32.mrf.mxu0
      %v3767 = vadd.f32 0.0, %v3766
      %3768 = vdwg.mxu0
      %v3769 = vadd.f32 %v3543, %v3642
      %v3770 = vadd.f32 %v3544, %v3671
      %v3771 = vadd.f32 %v3545, %v3700
      %v3772 = vadd.f32 %v3546, %v3729
      %v3773 = vadd.f32 %v3547, %v3758
      %v3774 = vadd.f32 %v3548, %v3645
      %v3775 = vadd.f32 %v3549, %v3674
      %v3776 = vadd.f32 %v3550, %v3703
      %v3777 = vadd.f32 %v3551, %v3732
      %v3778 = vadd.f32 %v3552, %v3761
      %v3779 = vadd.f32 %v3553, %v3648
      %v3780 = vadd.f32 %v3554, %v3677
      %v3781 = vadd.f32 %v3555, %v3706
      %v3782 = vadd.f32 %v3556, %v3735
      %v3783 = vadd.f32 %v3557, %v3764
      %v3784 = vadd.f32 %v3558, %v3651
      %v3785 = vadd.f32 %v3559, %v3680
      %v3786 = vadd.f32 %v3560, %v3709
      %v3787 = vadd.f32 %v3561, %v3738
      %v3788 = vadd.f32 %v3562, %v3767
      %s3789 = scalar_lea.vmem %s3, 128
      %v3790 = vld [vmem:[%s3789] sm:$0xff]
      %v3791 = vld [vmem:[%s3789 + $0x8] sm:$0xff]
      %v3792 = vld [vmem:[%s3789 + $0x10] sm:$0xff]
      %v3793 = vld [vmem:[%s3789 + $0x18] sm:$0xff]
      %3794 = vrot.lane.b32.xlu0 %v2950, 70
      %v3795 = vpop.permute.xlu0 %3794
      %3796 = vrot.lane.b32.xlu0 %v2951, 70
      %v3797 = vpop.permute.xlu0 %3796
      %3798 = vrot.lane.b32.xlu0 %v2952, 70
      %v3799 = vpop.permute.xlu0 %3798
      %3800 = vrot.lane.b32.xlu0 %v2953, 70
      %v3801 = vpop.permute.xlu0 %3800
      %3802 = vrot.lane.b32.xlu0 %v2954, 70
      %v3803 = vpop.permute.xlu0 %3802
      %3804 = vrot.lane.b32.xlu0 %v2965, 70
      %v3805 = vpop.permute.xlu0 %3804
      %3806 = vrot.lane.b32.xlu0 %v2955, 70
      %v3807 = vpop.permute.xlu0 %3806
      %3808 = vrot.lane.b32.xlu0 %v2956, 70
      %v3809 = vpop.permute.xlu0 %3808
      %3810 = vrot.lane.b32.xlu0 %v2957, 70
      %v3811 = vpop.permute.xlu0 %3810
      %3812 = vrot.lane.b32.xlu0 %v2958, 70
      %v3813 = vpop.permute.xlu0 %3812
      %3814 = vrot.lane.b32.xlu0 %v2959, 70
      %v3815 = vpop.permute.xlu0 %3814
      %3816 = vrot.lane.b32.xlu0 %v2966, 70
      %v3817 = vpop.permute.xlu0 %3816
      %v3818 = vsel %vm1491, %v3795, %v3797
      %v3819 = vsel %vm1491, %v3797, %v3799
      %v3820 = vsel %vm1491, %v3799, %v3801
      %v3821 = vsel %vm1491, %v3801, %v3803
      %v3822 = vsel %vm1491, %v3803, %v3805
      %v3823 = vsel %vm1491, %v3807, %v3809
      %v3824 = vsel %vm1491, %v3809, %v3811
      %v3825 = vsel %vm1491, %v3811, %v3813
      %v3826 = vsel %vm1491, %v3813, %v3815
      %v3827 = vsel %vm1491, %v3815, %v3817
      %v3839 = vsel %vm2229, %v3790, 0
      %v3842 = vsel %vm2229, %v3791, 0
      %v3845 = vsel %vm2229, %v3792, 0
      %v3848 = vsel %vm2229, %v3793, 0
      %3850 = vmatpush.msra.mxu0 0.0
      %3851 = vmatpush.msra.mxu0 0.0
      %3852 = vmatpush.msra.mxu0 0.0
      %3853 = vmatpush.msra.mxu0 0.0
      %3854 = vmatpush.msra.mxu0 0.0
      %3855 = vmatpush.msra.mxu0 0.0
      %3856 = vmatpush.msra.mxu0 0.0
      %3857 = vmatpush.msra.mxu0 0.0
      %3858 = vmatpush.msra.mxu0 0.0
      %3859 = vmatpush.msra.mxu0 0.0
      %3860 = vmatpush.msra.mxu0 0.0
      %3861 = vmatpush.msra.mxu0 0.0
      %3862 = vmatpush.msra.mxu0 0.0
      %3863 = vmatpush.msra.mxu0 0.0
      %3864 = vmatpush.msra.mxu0 %v3823
      %3865 = vmatpush.msra.mxu0 %v3818
      %3866 = vmatmul.f32.gmra.mxu0 %v3839
      %v3867 = vpop.f32.mrf.mxu0
      %v3868 = vadd.f32 0.0, %v3867
      %3869 = vmatmul.f32.gmra.mxu0 %v3842
      %v3870 = vpop.f32.mrf.mxu0
      %v3871 = vadd.f32 0.0, %v3870
      %3872 = vmatmul.f32.gmra.mxu0 %v3845
      %v3873 = vpop.f32.mrf.mxu0
      %v3874 = vadd.f32 0.0, %v3873
      %3875 = vmatmul.f32.gmra.mxu0 %v3848
      %v3876 = vpop.f32.mrf.mxu0
      %v3877 = vadd.f32 0.0, %v3876
      %3878 = vdwg.mxu0
      %3879 = vmatpush.msra.mxu0 0.0
      %3880 = vmatpush.msra.mxu0 0.0
      %3881 = vmatpush.msra.mxu0 0.0
      %3882 = vmatpush.msra.mxu0 0.0
      %3883 = vmatpush.msra.mxu0 0.0
      %3884 = vmatpush.msra.mxu0 0.0
      %3885 = vmatpush.msra.mxu0 0.0
      %3886 = vmatpush.msra.mxu0 0.0
      %3887 = vmatpush.msra.mxu0 0.0
      %3888 = vmatpush.msra.mxu0 0.0
      %3889 = vmatpush.msra.mxu0 0.0
      %3890 = vmatpush.msra.mxu0 0.0
      %3891 = vmatpush.msra.mxu0 0.0
      %3892 = vmatpush.msra.mxu0 0.0
      %3893 = vmatpush.msra.mxu0 %v3824
      %3894 = vmatpush.msra.mxu0 %v3819
      %3895 = vmatmul.f32.gmra.mxu0 %v3839
      %v3896 = vpop.f32.mrf.mxu0
      %v3897 = vadd.f32 0.0, %v3896
      %3898 = vmatmul.f32.gmra.mxu0 %v3842
      %v3899 = vpop.f32.mrf.mxu0
      %v3900 = vadd.f32 0.0, %v3899
      %3901 = vmatmul.f32.gmra.mxu0 %v3845
      %v3902 = vpop.f32.mrf.mxu0
      %v3903 = vadd.f32 0.0, %v3902
      %3904 = vmatmul.f32.gmra.mxu0 %v3848
      %v3905 = vpop.f32.mrf.mxu0
      %v3906 = vadd.f32 0.0, %v3905
      %3907 = vdwg.mxu0
      %3908 = vmatpush.msra.mxu0 0.0
      %3909 = vmatpush.msra.mxu0 0.0
      %3910 = vmatpush.msra.mxu0 0.0
      %3911 = vmatpush.msra.mxu0 0.0
      %3912 = vmatpush.msra.mxu0 0.0
      %3913 = vmatpush.msra.mxu0 0.0
      %3914 = vmatpush.msra.mxu0 0.0
      %3915 = vmatpush.msra.mxu0 0.0
      %3916 = vmatpush.msra.mxu0 0.0
      %3917 = vmatpush.msra.mxu0 0.0
      %3918 = vmatpush.msra.mxu0 0.0
      %3919 = vmatpush.msra.mxu0 0.0
      %3920 = vmatpush.msra.mxu0 0.0
      %3921 = vmatpush.msra.mxu0 0.0
      %3922 = vmatpush.msra.mxu0 %v3825
      %3923 = vmatpush.msra.mxu0 %v3820
      %3924 = vmatmul.f32.gmra.mxu0 %v3839
      %v3925 = vpop.f32.mrf.mxu0
      %v3926 = vadd.f32 0.0, %v3925
      %3927 = vmatmul.f32.gmra.mxu0 %v3842
      %v3928 = vpop.f32.mrf.mxu0
      %v3929 = vadd.f32 0.0, %v3928
      %3930 = vmatmul.f32.gmra.mxu0 %v3845
      %v3931 = vpop.f32.mrf.mxu0
      %v3932 = vadd.f32 0.0, %v3931
      %3933 = vmatmul.f32.gmra.mxu0 %v3848
      %v3934 = vpop.f32.mrf.mxu0
      %v3935 = vadd.f32 0.0, %v3934
      %3936 = vdwg.mxu0
      %3937 = vmatpush.msra.mxu0 0.0
      %3938 = vmatpush.msra.mxu0 0.0
      %3939 = vmatpush.msra.mxu0 0.0
      %3940 = vmatpush.msra.mxu0 0.0
      %3941 = vmatpush.msra.mxu0 0.0
      %3942 = vmatpush.msra.mxu0 0.0
      %3943 = vmatpush.msra.mxu0 0.0
      %3944 = vmatpush.msra.mxu0 0.0
      %3945 = vmatpush.msra.mxu0 0.0
      %3946 = vmatpush.msra.mxu0 0.0
      %3947 = vmatpush.msra.mxu0 0.0
      %3948 = vmatpush.msra.mxu0 0.0
      %3949 = vmatpush.msra.mxu0 0.0
      %3950 = vmatpush.msra.mxu0 0.0
      %3951 = vmatpush.msra.mxu0 %v3826
      %3952 = vmatpush.msra.mxu0 %v3821
      %3953 = vmatmul.f32.gmra.mxu0 %v3839
      %v3954 = vpop.f32.mrf.mxu0
      %v3955 = vadd.f32 0.0, %v3954
      %3956 = vmatmul.f32.gmra.mxu0 %v3842
      %v3957 = vpop.f32.mrf.mxu0
      %v3958 = vadd.f32 0.0, %v3957
      %3959 = vmatmul.f32.gmra.mxu0 %v3845
      %v3960 = vpop.f32.mrf.mxu0
      %v3961 = vadd.f32 0.0, %v3960
      %3962 = vmatmul.f32.gmra.mxu0 %v3848
      %v3963 = vpop.f32.mrf.mxu0
      %v3964 = vadd.f32 0.0, %v3963
      %3965 = vdwg.mxu0
      %3966 = vmatpush.msra.mxu0 0.0
      %3967 = vmatpush.msra.mxu0 0.0
      %3968 = vmatpush.msra.mxu0 0.0
      %3969 = vmatpush.msra.mxu0 0.0
      %3970 = vmatpush.msra.mxu0 0.0
      %3971 = vmatpush.msra.mxu0 0.0
      %3972 = vmatpush.msra.mxu0 0.0
      %3973 = vmatpush.msra.mxu0 0.0
      %3974 = vmatpush.msra.mxu0 0.0
      %3975 = vmatpush.msra.mxu0 0.0
      %3976 = vmatpush.msra.mxu0 0.0
      %3977 = vmatpush.msra.mxu0 0.0
      %3978 = vmatpush.msra.mxu0 0.0
      %3979 = vmatpush.msra.mxu0 0.0
      %3980 = vmatpush.msra.mxu0 %v3827
      %3981 = vmatpush.msra.mxu0 %v3822
      %3982 = vmatmul.f32.gmra.mxu0 %v3839
      %v3983 = vpop.f32.mrf.mxu0
      %v3984 = vadd.f32 0.0, %v3983
      %3985 = vmatmul.f32.gmra.mxu0 %v3842
      %v3986 = vpop.f32.mrf.mxu0
      %v3987 = vadd.f32 0.0, %v3986
      %3988 = vmatmul.f32.gmra.mxu0 %v3845
      %v3989 = vpop.f32.mrf.mxu0
      %v3990 = vadd.f32 0.0, %v3989
      %3991 = vmatmul.f32.gmra.mxu0 %v3848
      %v3992 = vpop.f32.mrf.mxu0
      %v3993 = vadd.f32 0.0, %v3992
      %3994 = vdwg.mxu0
      %v3995 = vadd.f32 %v3769, %v3868
      %v3996 = vadd.f32 %v3770, %v3897
      %v3997 = vadd.f32 %v3771, %v3926
      %v3998 = vadd.f32 %v3772, %v3955
      %v3999 = vadd.f32 %v3773, %v3984
      %v4000 = vadd.f32 %v3774, %v3871
      %v4001 = vadd.f32 %v3775, %v3900
      %v4002 = vadd.f32 %v3776, %v3929
      %v4003 = vadd.f32 %v3777, %v3958
      %v4004 = vadd.f32 %v3778, %v3987
      %v4005 = vadd.f32 %v3779, %v3874
      %v4006 = vadd.f32 %v3780, %v3903
      %v4007 = vadd.f32 %v3781, %v3932
      %v4008 = vadd.f32 %v3782, %v3961
      %v4009 = vadd.f32 %v3783, %v3990
      %v4010 = vadd.f32 %v3784, %v3877
      %v4011 = vadd.f32 %v3785, %v3906
      %v4012 = vadd.f32 %v3786, %v3935
      %v4013 = vadd.f32 %v3787, %v3964
      %v4014 = vadd.f32 %v3788, %v3993
      %s4015 = scalar_lea.vmem %s3, 160
      %v4016 = vld [vmem:[%s4015] sm:$0xff]
      %v4017 = vld [vmem:[%s4015 + $0x8] sm:$0xff]
      %v4018 = vld [vmem:[%s4015 + $0x10] sm:$0xff]
      %v4019 = vld [vmem:[%s4015 + $0x18] sm:$0xff]
      %4020 = vrot.lane.b32.xlu0 %v2950, 68
      %v4021 = vpop.permute.xlu0 %4020
      %4022 = vrot.lane.b32.xlu0 %v2951, 68
      %v4023 = vpop.permute.xlu0 %4022
      %4024 = vrot.lane.b32.xlu0 %v2952, 68
      %v4025 = vpop.permute.xlu0 %4024
      %4026 = vrot.lane.b32.xlu0 %v2953, 68
      %v4027 = vpop.permute.xlu0 %4026
      %4028 = vrot.lane.b32.xlu0 %v2954, 68
      %v4029 = vpop.permute.xlu0 %4028
      %4030 = vrot.lane.b32.xlu0 %v2965, 68
      %v4031 = vpop.permute.xlu0 %4030
      %4032 = vrot.lane.b32.xlu0 %v2955, 68
      %v4033 = vpop.permute.xlu0 %4032
      %4034 = vrot.lane.b32.xlu0 %v2956, 68
      %v4035 = vpop.permute.xlu0 %4034
      %4036 = vrot.lane.b32.xlu0 %v2957, 68
      %v4037 = vpop.permute.xlu0 %4036
      %4038 = vrot.lane.b32.xlu0 %v2958, 68
      %v4039 = vpop.permute.xlu0 %4038
      %4040 = vrot.lane.b32.xlu0 %v2959, 68
      %v4041 = vpop.permute.xlu0 %4040
      %4042 = vrot.lane.b32.xlu0 %v2966, 68
      %v4043 = vpop.permute.xlu0 %4042
      %v4044 = vsel %vm1673, %v4021, %v4023
      %v4045 = vsel %vm1673, %v4023, %v4025
      %v4046 = vsel %vm1673, %v4025, %v4027
      %v4047 = vsel %vm1673, %v4027, %v4029
      %v4048 = vsel %vm1673, %v4029, %v4031
      %v4049 = vsel %vm1673, %v4033, %v4035
      %v4050 = vsel %vm1673, %v4035, %v4037
      %v4051 = vsel %vm1673, %v4037, %v4039
      %v4052 = vsel %vm1673, %v4039, %v4041
      %v4053 = vsel %vm1673, %v4041, %v4043
      %v4065 = vsel %vm2229, %v4016, 0
      %v4068 = vsel %vm2229, %v4017, 0
      %v4071 = vsel %vm2229, %v4018, 0
      %v4074 = vsel %vm2229, %v4019, 0
      %4076 = vmatpush.msra.mxu0 0.0
      %4077 = vmatpush.msra.mxu0 0.0
      %4078 = vmatpush.msra.mxu0 0.0
      %4079 = vmatpush.msra.mxu0 0.0
      %4080 = vmatpush.msra.mxu0 0.0
      %4081 = vmatpush.msra.mxu0 0.0
      %4082 = vmatpush.msra.mxu0 0.0
      %4083 = vmatpush.msra.mxu0 0.0
      %4084 = vmatpush.msra.mxu0 0.0
      %4085 = vmatpush.msra.mxu0 0.0
      %4086 = vmatpush.msra.mxu0 0.0
      %4087 = vmatpush.msra.mxu0 0.0
      %4088 = vmatpush.msra.mxu0 0.0
      %4089 = vmatpush.msra.mxu0 0.0
      %4090 = vmatpush.msra.mxu0 %v4049
      %4091 = vmatpush.msra.mxu0 %v4044
      %4092 = vmatmul.f32.gmra.mxu0 %v4065
      %v4093 = vpop.f32.mrf.mxu0
      %v4094 = vadd.f32 0.0, %v4093
      %4095 = vmatmul.f32.gmra.mxu0 %v4068
      %v4096 = vpop.f32.mrf.mxu0
      %v4097 = vadd.f32 0.0, %v4096
      %4098 = vmatmul.f32.gmra.mxu0 %v4071
      %v4099 = vpop.f32.mrf.mxu0
      %v4100 = vadd.f32 0.0, %v4099
      %4101 = vmatmul.f32.gmra.mxu0 %v4074
      %v4102 = vpop.f32.mrf.mxu0
      %v4103 = vadd.f32 0.0, %v4102
      %4104 = vdwg.mxu0
      %4105 = vmatpush.msra.mxu0 0.0
      %4106 = vmatpush.msra.mxu0 0.0
      %4107 = vmatpush.msra.mxu0 0.0
      %4108 = vmatpush.msra.mxu0 0.0
      %4109 = vmatpush.msra.mxu0 0.0
      %4110 = vmatpush.msra.mxu0 0.0
      %4111 = vmatpush.msra.mxu0 0.0
      %4112 = vmatpush.msra.mxu0 0.0
      %4113 = vmatpush.msra.mxu0 0.0
      %4114 = vmatpush.msra.mxu0 0.0
      %4115 = vmatpush.msra.mxu0 0.0
      %4116 = vmatpush.msra.mxu0 0.0
      %4117 = vmatpush.msra.mxu0 0.0
      %4118 = vmatpush.msra.mxu0 0.0
      %4119 = vmatpush.msra.mxu0 %v4050
      %4120 = vmatpush.msra.mxu0 %v4045
      %4121 = vmatmul.f32.gmra.mxu0 %v4065
      %v4122 = vpop.f32.mrf.mxu0
      %v4123 = vadd.f32 0.0, %v4122
      %4124 = vmatmul.f32.gmra.mxu0 %v4068
      %v4125 = vpop.f32.mrf.mxu0
      %v4126 = vadd.f32 0.0, %v4125
      %4127 = vmatmul.f32.gmra.mxu0 %v4071
      %v4128 = vpop.f32.mrf.mxu0
      %v4129 = vadd.f32 0.0, %v4128
      %4130 = vmatmul.f32.gmra.mxu0 %v4074
      %v4131 = vpop.f32.mrf.mxu0
      %v4132 = vadd.f32 0.0, %v4131
      %4133 = vdwg.mxu0
      %4134 = vmatpush.msra.mxu0 0.0
      %4135 = vmatpush.msra.mxu0 0.0
      %4136 = vmatpush.msra.mxu0 0.0
      %4137 = vmatpush.msra.mxu0 0.0
      %4138 = vmatpush.msra.mxu0 0.0
      %4139 = vmatpush.msra.mxu0 0.0
      %4140 = vmatpush.msra.mxu0 0.0
      %4141 = vmatpush.msra.mxu0 0.0
      %4142 = vmatpush.msra.mxu0 0.0
      %4143 = vmatpush.msra.mxu0 0.0
      %4144 = vmatpush.msra.mxu0 0.0
      %4145 = vmatpush.msra.mxu0 0.0
      %4146 = vmatpush.msra.mxu0 0.0
      %4147 = vmatpush.msra.mxu0 0.0
      %4148 = vmatpush.msra.mxu0 %v4051
      %4149 = vmatpush.msra.mxu0 %v4046
      %4150 = vmatmul.f32.gmra.mxu0 %v4065
      %v4151 = vpop.f32.mrf.mxu0
      %v4152 = vadd.f32 0.0, %v4151
      %4153 = vmatmul.f32.gmra.mxu0 %v4068
      %v4154 = vpop.f32.mrf.mxu0
      %v4155 = vadd.f32 0.0, %v4154
      %4156 = vmatmul.f32.gmra.mxu0 %v4071
      %v4157 = vpop.f32.mrf.mxu0
      %v4158 = vadd.f32 0.0, %v4157
      %4159 = vmatmul.f32.gmra.mxu0 %v4074
      %v4160 = vpop.f32.mrf.mxu0
      %v4161 = vadd.f32 0.0, %v4160
      %4162 = vdwg.mxu0
      %4163 = vmatpush.msra.mxu0 0.0
      %4164 = vmatpush.msra.mxu0 0.0
      %4165 = vmatpush.msra.mxu0 0.0
      %4166 = vmatpush.msra.mxu0 0.0
      %4167 = vmatpush.msra.mxu0 0.0
      %4168 = vmatpush.msra.mxu0 0.0
      %4169 = vmatpush.msra.mxu0 0.0
      %4170 = vmatpush.msra.mxu0 0.0
      %4171 = vmatpush.msra.mxu0 0.0
      %4172 = vmatpush.msra.mxu0 0.0
      %4173 = vmatpush.msra.mxu0 0.0
      %4174 = vmatpush.msra.mxu0 0.0
      %4175 = vmatpush.msra.mxu0 0.0
      %4176 = vmatpush.msra.mxu0 0.0
      %4177 = vmatpush.msra.mxu0 %v4052
      %4178 = vmatpush.msra.mxu0 %v4047
      %4179 = vmatmul.f32.gmra.mxu0 %v4065
      %v4180 = vpop.f32.mrf.mxu0
      %v4181 = vadd.f32 0.0, %v4180
      %4182 = vmatmul.f32.gmra.mxu0 %v4068
      %v4183 = vpop.f32.mrf.mxu0
      %v4184 = vadd.f32 0.0, %v4183
      %4185 = vmatmul.f32.gmra.mxu0 %v4071
      %v4186 = vpop.f32.mrf.mxu0
      %v4187 = vadd.f32 0.0, %v4186
      %4188 = vmatmul.f32.gmra.mxu0 %v4074
      %v4189 = vpop.f32.mrf.mxu0
      %v4190 = vadd.f32 0.0, %v4189
      %4191 = vdwg.mxu0
      %4192 = vmatpush.msra.mxu0 0.0
      %4193 = vmatpush.msra.mxu0 0.0
      %4194 = vmatpush.msra.mxu0 0.0
      %4195 = vmatpush.msra.mxu0 0.0
      %4196 = vmatpush.msra.mxu0 0.0
      %4197 = vmatpush.msra.mxu0 0.0
      %4198 = vmatpush.msra.mxu0 0.0
      %4199 = vmatpush.msra.mxu0 0.0
      %4200 = vmatpush.msra.mxu0 0.0
      %4201 = vmatpush.msra.mxu0 0.0
      %4202 = vmatpush.msra.mxu0 0.0
      %4203 = vmatpush.msra.mxu0 0.0
      %4204 = vmatpush.msra.mxu0 0.0
      %4205 = vmatpush.msra.mxu0 0.0
      %4206 = vmatpush.msra.mxu0 %v4053
      %4207 = vmatpush.msra.mxu0 %v4048
      %4208 = vmatmul.f32.gmra.mxu0 %v4065
      %v4209 = vpop.f32.mrf.mxu0
      %v4210 = vadd.f32 0.0, %v4209
      %4211 = vmatmul.f32.gmra.mxu0 %v4068
      %v4212 = vpop.f32.mrf.mxu0
      %v4213 = vadd.f32 0.0, %v4212
      %4214 = vmatmul.f32.gmra.mxu0 %v4071
      %v4215 = vpop.f32.mrf.mxu0
      %v4216 = vadd.f32 0.0, %v4215
      %4217 = vmatmul.f32.gmra.mxu0 %v4074
      %v4218 = vpop.f32.mrf.mxu0
      %v4219 = vadd.f32 0.0, %v4218
      %4220 = vdwg.mxu0
      %v4221 = vadd.f32 %v3995, %v4094
      %v4222 = vadd.f32 %v3996, %v4123
      %v4223 = vadd.f32 %v3997, %v4152
      %v4224 = vadd.f32 %v3998, %v4181
      %v4225 = vadd.f32 %v3999, %v4210
      %v4226 = vadd.f32 %v4000, %v4097
      %v4227 = vadd.f32 %v4001, %v4126
      %v4228 = vadd.f32 %v4002, %v4155
      %v4229 = vadd.f32 %v4003, %v4184
      %v4230 = vadd.f32 %v4004, %v4213
      %v4231 = vadd.f32 %v4005, %v4100
      %v4232 = vadd.f32 %v4006, %v4129
      %v4233 = vadd.f32 %v4007, %v4158
      %v4234 = vadd.f32 %v4008, %v4187
      %v4235 = vadd.f32 %v4009, %v4216
      %v4236 = vadd.f32 %v4010, %v4103
      %v4237 = vadd.f32 %v4011, %v4132
      %v4238 = vadd.f32 %v4012, %v4161
      %v4239 = vadd.f32 %v4013, %v4190
      %v4240 = vadd.f32 %v4014, %v4219
      %s4241 = scalar_lea.vmem %s3, 192
      %v4242 = vld [vmem:[%s4241] sm:$0xff]
      %v4243 = vld [vmem:[%s4241 + $0x8] sm:$0xff]
      %v4244 = vld [vmem:[%s4241 + $0x10] sm:$0xff]
      %v4245 = vld [vmem:[%s4241 + $0x18] sm:$0xff]
      %4246 = vrot.lane.b32.xlu0 %v2950, 16
      %v4247 = vpop.permute.xlu0 %4246
      %4248 = vrot.lane.b32.xlu0 %v2951, 16
      %v4249 = vpop.permute.xlu0 %4248
      %4250 = vrot.lane.b32.xlu0 %v2952, 16
      %v4251 = vpop.permute.xlu0 %4250
      %4252 = vrot.lane.b32.xlu0 %v2953, 16
      %v4253 = vpop.permute.xlu0 %4252
      %4254 = vrot.lane.b32.xlu0 %v2954, 16
      %v4255 = vpop.permute.xlu0 %4254
      %4256 = vrot.lane.b32.xlu0 %v2965, 16
      %v4257 = vpop.permute.xlu0 %4256
      %4258 = vrot.lane.b32.xlu0 %v2955, 16
      %v4259 = vpop.permute.xlu0 %4258
      %4260 = vrot.lane.b32.xlu0 %v2956, 16
      %v4261 = vpop.permute.xlu0 %4260
      %4262 = vrot.lane.b32.xlu0 %v2957, 16
      %v4263 = vpop.permute.xlu0 %4262
      %4264 = vrot.lane.b32.xlu0 %v2958, 16
      %v4265 = vpop.permute.xlu0 %4264
      %4266 = vrot.lane.b32.xlu0 %v2959, 16
      %v4267 = vpop.permute.xlu0 %4266
      %4268 = vrot.lane.b32.xlu0 %v2966, 16
      %v4269 = vpop.permute.xlu0 %4268
      %v4270 = vsel %vm2229, %v4247, %v4249
      %v4271 = vsel %vm2229, %v4249, %v4251
      %v4272 = vsel %vm2229, %v4251, %v4253
      %v4273 = vsel %vm2229, %v4253, %v4255
      %v4274 = vsel %vm2229, %v4255, %v4257
      %v4275 = vsel %vm2229, %v4259, %v4261
      %v4276 = vsel %vm2229, %v4261, %v4263
      %v4277 = vsel %vm2229, %v4263, %v4265
      %v4278 = vsel %vm2229, %v4265, %v4267
      %v4279 = vsel %vm2229, %v4267, %v4269
      %v4291 = vsel %vm2229, %v4242, 0
      %v4294 = vsel %vm2229, %v4243, 0
      %v4297 = vsel %vm2229, %v4244, 0
      %v4300 = vsel %vm2229, %v4245, 0
      %4302 = vmatpush.msra.mxu0 0.0
      %4303 = vmatpush.msra.mxu0 0.0
      %4304 = vmatpush.msra.mxu0 0.0
      %4305 = vmatpush.msra.mxu0 0.0
      %4306 = vmatpush.msra.mxu0 0.0
      %4307 = vmatpush.msra.mxu0 0.0
      %4308 = vmatpush.msra.mxu0 0.0
      %4309 = vmatpush.msra.mxu0 0.0
      %4310 = vmatpush.msra.mxu0 0.0
      %4311 = vmatpush.msra.mxu0 0.0
      %4312 = vmatpush.msra.mxu0 0.0
      %4313 = vmatpush.msra.mxu0 0.0
      %4314 = vmatpush.msra.mxu0 0.0
      %4315 = vmatpush.msra.mxu0 0.0
      %4316 = vmatpush.msra.mxu0 %v4275
      %4317 = vmatpush.msra.mxu0 %v4270
      %4318 = vmatmul.f32.gmra.mxu0 %v4291
      %v4319 = vpop.f32.mrf.mxu0
      %v4320 = vadd.f32 0.0, %v4319
      %4321 = vmatmul.f32.gmra.mxu0 %v4294
      %v4322 = vpop.f32.mrf.mxu0
      %v4323 = vadd.f32 0.0, %v4322
      %4324 = vmatmul.f32.gmra.mxu0 %v4297
      %v4325 = vpop.f32.mrf.mxu0
      %v4326 = vadd.f32 0.0, %v4325
      %4327 = vmatmul.f32.gmra.mxu0 %v4300
      %v4328 = vpop.f32.mrf.mxu0
      %v4329 = vadd.f32 0.0, %v4328
      %4330 = vdwg.mxu0
      %4331 = vmatpush.msra.mxu0 0.0
      %4332 = vmatpush.msra.mxu0 0.0
      %4333 = vmatpush.msra.mxu0 0.0
      %4334 = vmatpush.msra.mxu0 0.0
      %4335 = vmatpush.msra.mxu0 0.0
      %4336 = vmatpush.msra.mxu0 0.0
      %4337 = vmatpush.msra.mxu0 0.0
      %4338 = vmatpush.msra.mxu0 0.0
      %4339 = vmatpush.msra.mxu0 0.0
      %4340 = vmatpush.msra.mxu0 0.0
      %4341 = vmatpush.msra.mxu0 0.0
      %4342 = vmatpush.msra.mxu0 0.0
      %4343 = vmatpush.msra.mxu0 0.0
      %4344 = vmatpush.msra.mxu0 0.0
      %4345 = vmatpush.msra.mxu0 %v4276
      %4346 = vmatpush.msra.mxu0 %v4271
      %4347 = vmatmul.f32.gmra.mxu0 %v4291
      %v4348 = vpop.f32.mrf.mxu0
      %v4349 = vadd.f32 0.0, %v4348
      %4350 = vmatmul.f32.gmra.mxu0 %v4294
      %v4351 = vpop.f32.mrf.mxu0
      %v4352 = vadd.f32 0.0, %v4351
      %4353 = vmatmul.f32.gmra.mxu0 %v4297
      %v4354 = vpop.f32.mrf.mxu0
      %v4355 = vadd.f32 0.0, %v4354
      %4356 = vmatmul.f32.gmra.mxu0 %v4300
      %v4357 = vpop.f32.mrf.mxu0
      %v4358 = vadd.f32 0.0, %v4357
      %4359 = vdwg.mxu0
      %4360 = vmatpush.msra.mxu0 0.0
      %4361 = vmatpush.msra.mxu0 0.0
      %4362 = vmatpush.msra.mxu0 0.0
      %4363 = vmatpush.msra.mxu0 0.0
      %4364 = vmatpush.msra.mxu0 0.0
      %4365 = vmatpush.msra.mxu0 0.0
      %4366 = vmatpush.msra.mxu0 0.0
      %4367 = vmatpush.msra.mxu0 0.0
      %4368 = vmatpush.msra.mxu0 0.0
      %4369 = vmatpush.msra.mxu0 0.0
      %4370 = vmatpush.msra.mxu0 0.0
      %4371 = vmatpush.msra.mxu0 0.0
      %4372 = vmatpush.msra.mxu0 0.0
      %4373 = vmatpush.msra.mxu0 0.0
      %4374 = vmatpush.msra.mxu0 %v4277
      %4375 = vmatpush.msra.mxu0 %v4272
      %4376 = vmatmul.f32.gmra.mxu0 %v4291
      %v4377 = vpop.f32.mrf.mxu0
      %v4378 = vadd.f32 0.0, %v4377
      %4379 = vmatmul.f32.gmra.mxu0 %v4294
      %v4380 = vpop.f32.mrf.mxu0
      %v4381 = vadd.f32 0.0, %v4380
      %4382 = vmatmul.f32.gmra.mxu0 %v4297
      %v4383 = vpop.f32.mrf.mxu0
      %v4384 = vadd.f32 0.0, %v4383
      %4385 = vmatmul.f32.gmra.mxu0 %v4300
      %v4386 = vpop.f32.mrf.mxu0
      %v4387 = vadd.f32 0.0, %v4386
      %4388 = vdwg.mxu0
      %4389 = vmatpush.msra.mxu0 0.0
      %4390 = vmatpush.msra.mxu0 0.0
      %4391 = vmatpush.msra.mxu0 0.0
      %4392 = vmatpush.msra.mxu0 0.0
      %4393 = vmatpush.msra.mxu0 0.0
      %4394 = vmatpush.msra.mxu0 0.0
      %4395 = vmatpush.msra.mxu0 0.0
      %4396 = vmatpush.msra.mxu0 0.0
      %4397 = vmatpush.msra.mxu0 0.0
      %4398 = vmatpush.msra.mxu0 0.0
      %4399 = vmatpush.msra.mxu0 0.0
      %4400 = vmatpush.msra.mxu0 0.0
      %4401 = vmatpush.msra.mxu0 0.0
      %4402 = vmatpush.msra.mxu0 0.0
      %4403 = vmatpush.msra.mxu0 %v4278
      %4404 = vmatpush.msra.mxu0 %v4273
      %4405 = vmatmul.f32.gmra.mxu0 %v4291
      %v4406 = vpop.f32.mrf.mxu0
      %v4407 = vadd.f32 0.0, %v4406
      %4408 = vmatmul.f32.gmra.mxu0 %v4294
      %v4409 = vpop.f32.mrf.mxu0
      %v4410 = vadd.f32 0.0, %v4409
      %4411 = vmatmul.f32.gmra.mxu0 %v4297
      %v4412 = vpop.f32.mrf.mxu0
      %v4413 = vadd.f32 0.0, %v4412
      %4414 = vmatmul.f32.gmra.mxu0 %v4300
      %v4415 = vpop.f32.mrf.mxu0
      %v4416 = vadd.f32 0.0, %v4415
      %4417 = vdwg.mxu0
      %4418 = vmatpush.msra.mxu0 0.0
      %4419 = vmatpush.msra.mxu0 0.0
      %4420 = vmatpush.msra.mxu0 0.0
      %4421 = vmatpush.msra.mxu0 0.0
      %4422 = vmatpush.msra.mxu0 0.0
      %4423 = vmatpush.msra.mxu0 0.0
      %4424 = vmatpush.msra.mxu0 0.0
      %4425 = vmatpush.msra.mxu0 0.0
      %4426 = vmatpush.msra.mxu0 0.0
      %4427 = vmatpush.msra.mxu0 0.0
      %4428 = vmatpush.msra.mxu0 0.0
      %4429 = vmatpush.msra.mxu0 0.0
      %4430 = vmatpush.msra.mxu0 0.0
      %4431 = vmatpush.msra.mxu0 0.0
      %4432 = vmatpush.msra.mxu0 %v4279
      %4433 = vmatpush.msra.mxu0 %v4274
      %4434 = vmatmul.f32.gmra.mxu0 %v4291
      %v4435 = vpop.f32.mrf.mxu0
      %v4436 = vadd.f32 0.0, %v4435
      %4437 = vmatmul.f32.gmra.mxu0 %v4294
      %v4438 = vpop.f32.mrf.mxu0
      %v4439 = vadd.f32 0.0, %v4438
      %4440 = vmatmul.f32.gmra.mxu0 %v4297
      %v4441 = vpop.f32.mrf.mxu0
      %v4442 = vadd.f32 0.0, %v4441
      %4443 = vmatmul.f32.gmra.mxu0 %v4300
      %v4444 = vpop.f32.mrf.mxu0
      %v4445 = vadd.f32 0.0, %v4444
      %4446 = vdwg.mxu0
      %v4447 = vadd.f32 %v4221, %v4320
      %v4448 = vadd.f32 %v4222, %v4349
      %v4449 = vadd.f32 %v4223, %v4378
      %v4450 = vadd.f32 %v4224, %v4407
      %v4451 = vadd.f32 %v4225, %v4436
      %v4452 = vadd.f32 %v4226, %v4323
      %v4453 = vadd.f32 %v4227, %v4352
      %v4454 = vadd.f32 %v4228, %v4381
      %v4455 = vadd.f32 %v4229, %v4410
      %v4456 = vadd.f32 %v4230, %v4439
      %v4457 = vadd.f32 %v4231, %v4326
      %v4458 = vadd.f32 %v4232, %v4355
      %v4459 = vadd.f32 %v4233, %v4384
      %v4460 = vadd.f32 %v4234, %v4413
      %v4461 = vadd.f32 %v4235, %v4442
      %v4462 = vadd.f32 %v4236, %v4329
      %v4463 = vadd.f32 %v4237, %v4358
      %v4464 = vadd.f32 %v4238, %v4387
      %v4465 = vadd.f32 %v4239, %v4416
      %v4466 = vadd.f32 %v4240, %v4445
      %s4467 = scalar_lea.vmem %s3, 224
      %v4468 = vld [vmem:[%s4467] sm:$0xff]
      %v4469 = vld [vmem:[%s4467 + $0x8] sm:$0xff]
      %v4470 = vld [vmem:[%s4467 + $0x10] sm:$0xff]
      %v4471 = vld [vmem:[%s4467 + $0x18] sm:$0xff]
      %4472 = vrot.lane.b32.xlu0 %v2950, 14
      %v4473 = vpop.permute.xlu0 %4472
      %4474 = vrot.lane.b32.xlu0 %v2951, 14
      %v4475 = vpop.permute.xlu0 %4474
      %4476 = vrot.lane.b32.xlu0 %v2952, 14
      %v4477 = vpop.permute.xlu0 %4476
      %4478 = vrot.lane.b32.xlu0 %v2953, 14
      %v4479 = vpop.permute.xlu0 %4478
      %4480 = vrot.lane.b32.xlu0 %v2954, 14
      %v4481 = vpop.permute.xlu0 %4480
      %4482 = vrot.lane.b32.xlu0 %v2965, 14
      %v4483 = vpop.permute.xlu0 %4482
      %4484 = vrot.lane.b32.xlu0 %v2955, 14
      %v4485 = vpop.permute.xlu0 %4484
      %4486 = vrot.lane.b32.xlu0 %v2956, 14
      %v4487 = vpop.permute.xlu0 %4486
      %4488 = vrot.lane.b32.xlu0 %v2957, 14
      %v4489 = vpop.permute.xlu0 %4488
      %4490 = vrot.lane.b32.xlu0 %v2958, 14
      %v4491 = vpop.permute.xlu0 %4490
      %4492 = vrot.lane.b32.xlu0 %v2959, 14
      %v4493 = vpop.permute.xlu0 %4492
      %4494 = vrot.lane.b32.xlu0 %v2966, 14
      %v4495 = vpop.permute.xlu0 %4494
      %v4496 = vsel %vm2431, %v4473, %v4475
      %v4497 = vsel %vm2431, %v4475, %v4477
      %v4498 = vsel %vm2431, %v4477, %v4479
      %v4499 = vsel %vm2431, %v4479, %v4481
      %v4500 = vsel %vm2431, %v4481, %v4483
      %v4501 = vsel %vm2431, %v4485, %v4487
      %v4502 = vsel %vm2431, %v4487, %v4489
      %v4503 = vsel %vm2431, %v4489, %v4491
      %v4504 = vsel %vm2431, %v4491, %v4493
      %v4505 = vsel %vm2431, %v4493, %v4495
      %v4517 = vsel %vm2229, %v4468, 0
      %v4520 = vsel %vm2229, %v4469, 0
      %v4523 = vsel %vm2229, %v4470, 0
      %v4526 = vsel %vm2229, %v4471, 0
      %4528 = vmatpush.msra.mxu0 0.0
      %4529 = vmatpush.msra.mxu0 0.0
      %4530 = vmatpush.msra.mxu0 0.0
      %4531 = vmatpush.msra.mxu0 0.0
      %4532 = vmatpush.msra.mxu0 0.0
      %4533 = vmatpush.msra.mxu0 0.0
      %4534 = vmatpush.msra.mxu0 0.0
      %4535 = vmatpush.msra.mxu0 0.0
      %4536 = vmatpush.msra.mxu0 0.0
      %4537 = vmatpush.msra.mxu0 0.0
      %4538 = vmatpush.msra.mxu0 0.0
      %4539 = vmatpush.msra.mxu0 0.0
      %4540 = vmatpush.msra.mxu0 0.0
      %4541 = vmatpush.msra.mxu0 0.0
      %4542 = vmatpush.msra.mxu0 %v4501
      %4543 = vmatpush.msra.mxu0 %v4496
      %4544 = vmatmul.f32.gmra.mxu0 %v4517
      %v4545 = vpop.f32.mrf.mxu0
      %v4546 = vadd.f32 0.0, %v4545
      %4547 = vmatmul.f32.gmra.mxu0 %v4520
      %v4548 = vpop.f32.mrf.mxu0
      %v4549 = vadd.f32 0.0, %v4548
      %4550 = vmatmul.f32.gmra.mxu0 %v4523
      %v4551 = vpop.f32.mrf.mxu0
      %v4552 = vadd.f32 0.0, %v4551
      %4553 = vmatmul.f32.gmra.mxu0 %v4526
      %v4554 = vpop.f32.mrf.mxu0
      %v4555 = vadd.f32 0.0, %v4554
      %4556 = vdwg.mxu0
      %4557 = vmatpush.msra.mxu0 0.0
      %4558 = vmatpush.msra.mxu0 0.0
      %4559 = vmatpush.msra.mxu0 0.0
      %4560 = vmatpush.msra.mxu0 0.0
      %4561 = vmatpush.msra.mxu0 0.0
      %4562 = vmatpush.msra.mxu0 0.0
      %4563 = vmatpush.msra.mxu0 0.0
      %4564 = vmatpush.msra.mxu0 0.0
      %4565 = vmatpush.msra.mxu0 0.0
      %4566 = vmatpush.msra.mxu0 0.0
      %4567 = vmatpush.msra.mxu0 0.0
      %4568 = vmatpush.msra.mxu0 0.0
      %4569 = vmatpush.msra.mxu0 0.0
      %4570 = vmatpush.msra.mxu0 0.0
      %4571 = vmatpush.msra.mxu0 %v4502
      %4572 = vmatpush.msra.mxu0 %v4497
      %4573 = vmatmul.f32.gmra.mxu0 %v4517
      %v4574 = vpop.f32.mrf.mxu0
      %v4575 = vadd.f32 0.0, %v4574
      %4576 = vmatmul.f32.gmra.mxu0 %v4520
      %v4577 = vpop.f32.mrf.mxu0
      %v4578 = vadd.f32 0.0, %v4577
      %4579 = vmatmul.f32.gmra.mxu0 %v4523
      %v4580 = vpop.f32.mrf.mxu0
      %v4581 = vadd.f32 0.0, %v4580
      %4582 = vmatmul.f32.gmra.mxu0 %v4526
      %v4583 = vpop.f32.mrf.mxu0
      %v4584 = vadd.f32 0.0, %v4583
      %4585 = vdwg.mxu0
      %4586 = vmatpush.msra.mxu0 0.0
      %4587 = vmatpush.msra.mxu0 0.0
      %4588 = vmatpush.msra.mxu0 0.0
      %4589 = vmatpush.msra.mxu0 0.0
      %4590 = vmatpush.msra.mxu0 0.0
      %4591 = vmatpush.msra.mxu0 0.0
      %4592 = vmatpush.msra.mxu0 0.0
      %4593 = vmatpush.msra.mxu0 0.0
      %4594 = vmatpush.msra.mxu0 0.0
      %4595 = vmatpush.msra.mxu0 0.0
      %4596 = vmatpush.msra.mxu0 0.0
      %4597 = vmatpush.msra.mxu0 0.0
      %4598 = vmatpush.msra.mxu0 0.0
      %4599 = vmatpush.msra.mxu0 0.0
      %4600 = vmatpush.msra.mxu0 %v4503
      %4601 = vmatpush.msra.mxu0 %v4498
      %4602 = vmatmul.f32.gmra.mxu0 %v4517
      %v4603 = vpop.f32.mrf.mxu0
      %v4604 = vadd.f32 0.0, %v4603
      %4605 = vmatmul.f32.gmra.mxu0 %v4520
      %v4606 = vpop.f32.mrf.mxu0
      %v4607 = vadd.f32 0.0, %v4606
      %4608 = vmatmul.f32.gmra.mxu0 %v4523
      %v4609 = vpop.f32.mrf.mxu0
      %v4610 = vadd.f32 0.0, %v4609
      %4611 = vmatmul.f32.gmra.mxu0 %v4526
      %v4612 = vpop.f32.mrf.mxu0
      %v4613 = vadd.f32 0.0, %v4612
      %4614 = vdwg.mxu0
      %4615 = vmatpush.msra.mxu0 0.0
      %4616 = vmatpush.msra.mxu0 0.0
      %4617 = vmatpush.msra.mxu0 0.0
      %4618 = vmatpush.msra.mxu0 0.0
      %4619 = vmatpush.msra.mxu0 0.0
      %4620 = vmatpush.msra.mxu0 0.0
      %4621 = vmatpush.msra.mxu0 0.0
      %4622 = vmatpush.msra.mxu0 0.0
      %4623 = vmatpush.msra.mxu0 0.0
      %4624 = vmatpush.msra.mxu0 0.0
      %4625 = vmatpush.msra.mxu0 0.0
      %4626 = vmatpush.msra.mxu0 0.0
      %4627 = vmatpush.msra.mxu0 0.0
      %4628 = vmatpush.msra.mxu0 0.0
      %4629 = vmatpush.msra.mxu0 %v4504
      %4630 = vmatpush.msra.mxu0 %v4499
      %4631 = vmatmul.f32.gmra.mxu0 %v4517
      %v4632 = vpop.f32.mrf.mxu0
      %v4633 = vadd.f32 0.0, %v4632
      %4634 = vmatmul.f32.gmra.mxu0 %v4520
      %v4635 = vpop.f32.mrf.mxu0
      %v4636 = vadd.f32 0.0, %v4635
      %4637 = vmatmul.f32.gmra.mxu0 %v4523
      %v4638 = vpop.f32.mrf.mxu0
      %v4639 = vadd.f32 0.0, %v4638
      %4640 = vmatmul.f32.gmra.mxu0 %v4526
      %v4641 = vpop.f32.mrf.mxu0
      %v4642 = vadd.f32 0.0, %v4641
      %4643 = vdwg.mxu0
      %4644 = vmatpush.msra.mxu0 0.0
      %4645 = vmatpush.msra.mxu0 0.0
      %4646 = vmatpush.msra.mxu0 0.0
      %4647 = vmatpush.msra.mxu0 0.0
      %4648 = vmatpush.msra.mxu0 0.0
      %4649 = vmatpush.msra.mxu0 0.0
      %4650 = vmatpush.msra.mxu0 0.0
      %4651 = vmatpush.msra.mxu0 0.0
      %4652 = vmatpush.msra.mxu0 0.0
      %4653 = vmatpush.msra.mxu0 0.0
      %4654 = vmatpush.msra.mxu0 0.0
      %4655 = vmatpush.msra.mxu0 0.0
      %4656 = vmatpush.msra.mxu0 0.0
      %4657 = vmatpush.msra.mxu0 0.0
      %4658 = vmatpush.msra.mxu0 %v4505
      %4659 = vmatpush.msra.mxu0 %v4500
      %4660 = vmatmul.f32.gmra.mxu0 %v4517
      %v4661 = vpop.f32.mrf.mxu0
      %v4662 = vadd.f32 0.0, %v4661
      %4663 = vmatmul.f32.gmra.mxu0 %v4520
      %v4664 = vpop.f32.mrf.mxu0
      %v4665 = vadd.f32 0.0, %v4664
      %4666 = vmatmul.f32.gmra.mxu0 %v4523
      %v4667 = vpop.f32.mrf.mxu0
      %v4668 = vadd.f32 0.0, %v4667
      %4669 = vmatmul.f32.gmra.mxu0 %v4526
      %v4670 = vpop.f32.mrf.mxu0
      %v4671 = vadd.f32 0.0, %v4670
      %4672 = vdwg.mxu0
      %v4673 = vadd.f32 %v4447, %v4546
      %v4674 = vadd.f32 %v4448, %v4575
      %v4675 = vadd.f32 %v4449, %v4604
      %v4676 = vadd.f32 %v4450, %v4633
      %v4677 = vadd.f32 %v4451, %v4662
      %v4678 = vadd.f32 %v4452, %v4549
      %v4679 = vadd.f32 %v4453, %v4578
      %v4680 = vadd.f32 %v4454, %v4607
      %v4681 = vadd.f32 %v4455, %v4636
      %v4682 = vadd.f32 %v4456, %v4665
      %v4683 = vadd.f32 %v4457, %v4552
      %v4684 = vadd.f32 %v4458, %v4581
      %v4685 = vadd.f32 %v4459, %v4610
      %v4686 = vadd.f32 %v4460, %v4639
      %v4687 = vadd.f32 %v4461, %v4668
      %v4688 = vadd.f32 %v4462, %v4555
      %v4689 = vadd.f32 %v4463, %v4584
      %v4690 = vadd.f32 %v4464, %v4613
      %v4691 = vadd.f32 %v4465, %v4642
      %v4692 = vadd.f32 %v4466, %v4671
      %s4693 = scalar_lea.vmem %s3, 256
      %v4694 = vld [vmem:[%s4693] sm:$0xff]
      %v4695 = vld [vmem:[%s4693 + $0x8] sm:$0xff]
      %v4696 = vld [vmem:[%s4693 + $0x10] sm:$0xff]
      %v4697 = vld [vmem:[%s4693 + $0x18] sm:$0xff]
      %4698 = vrot.lane.b32.xlu0 %v2950, 12
      %v4699 = vpop.permute.xlu0 %4698
      %4700 = vrot.lane.b32.xlu0 %v2951, 12
      %v4701 = vpop.permute.xlu0 %4700
      %4702 = vrot.lane.b32.xlu0 %v2952, 12
      %v4703 = vpop.permute.xlu0 %4702
      %4704 = vrot.lane.b32.xlu0 %v2953, 12
      %v4705 = vpop.permute.xlu0 %4704
      %4706 = vrot.lane.b32.xlu0 %v2954, 12
      %v4707 = vpop.permute.xlu0 %4706
      %4708 = vrot.lane.b32.xlu0 %v2965, 12
      %v4709 = vpop.permute.xlu0 %4708
      %4710 = vrot.lane.b32.xlu0 %v2955, 12
      %v4711 = vpop.permute.xlu0 %4710
      %4712 = vrot.lane.b32.xlu0 %v2956, 12
      %v4713 = vpop.permute.xlu0 %4712
      %4714 = vrot.lane.b32.xlu0 %v2957, 12
      %v4715 = vpop.permute.xlu0 %4714
      %4716 = vrot.lane.b32.xlu0 %v2958, 12
      %v4717 = vpop.permute.xlu0 %4716
      %4718 = vrot.lane.b32.xlu0 %v2959, 12
      %v4719 = vpop.permute.xlu0 %4718
      %4720 = vrot.lane.b32.xlu0 %v2966, 12
      %v4721 = vpop.permute.xlu0 %4720
      %v4722 = vsel %vm2633, %v4699, %v4701
      %v4723 = vsel %vm2633, %v4701, %v4703
      %v4724 = vsel %vm2633, %v4703, %v4705
      %v4725 = vsel %vm2633, %v4705, %v4707
      %v4726 = vsel %vm2633, %v4707, %v4709
      %v4727 = vsel %vm2633, %v4711, %v4713
      %v4728 = vsel %vm2633, %v4713, %v4715
      %v4729 = vsel %vm2633, %v4715, %v4717
      %v4730 = vsel %vm2633, %v4717, %v4719
      %v4731 = vsel %vm2633, %v4719, %v4721
      %v4743 = vsel %vm2229, %v4694, 0
      %v4746 = vsel %vm2229, %v4695, 0
      %v4749 = vsel %vm2229, %v4696, 0
      %v4752 = vsel %vm2229, %v4697, 0
      %4754 = vmatpush.msra.mxu0 0.0
      %4755 = vmatpush.msra.mxu0 0.0
      %4756 = vmatpush.msra.mxu0 0.0
      %4757 = vmatpush.msra.mxu0 0.0
      %4758 = vmatpush.msra.mxu0 0.0
      %4759 = vmatpush.msra.mxu0 0.0
      %4760 = vmatpush.msra.mxu0 0.0
      %4761 = vmatpush.msra.mxu0 0.0
      %4762 = vmatpush.msra.mxu0 0.0
      %4763 = vmatpush.msra.mxu0 0.0
      %4764 = vmatpush.msra.mxu0 0.0
      %4765 = vmatpush.msra.mxu0 0.0
      %4766 = vmatpush.msra.mxu0 0.0
      %4767 = vmatpush.msra.mxu0 0.0
      %4768 = vmatpush.msra.mxu0 %v4727
      %4769 = vmatpush.msra.mxu0 %v4722
      %4770 = vmatmul.f32.gmra.mxu0 %v4743
      %v4771 = vpop.f32.mrf.mxu0
      %v4772 = vadd.f32 0.0, %v4771
      %4773 = vmatmul.f32.gmra.mxu0 %v4746
      %v4774 = vpop.f32.mrf.mxu0
      %v4775 = vadd.f32 0.0, %v4774
      %4776 = vmatmul.f32.gmra.mxu0 %v4749
      %v4777 = vpop.f32.mrf.mxu0
      %v4778 = vadd.f32 0.0, %v4777
      %4779 = vmatmul.f32.gmra.mxu0 %v4752
      %v4780 = vpop.f32.mrf.mxu0
      %v4781 = vadd.f32 0.0, %v4780
      %4782 = vdwg.mxu0
      %4783 = vmatpush.msra.mxu0 0.0
      %4784 = vmatpush.msra.mxu0 0.0
      %4785 = vmatpush.msra.mxu0 0.0
      %4786 = vmatpush.msra.mxu0 0.0
      %4787 = vmatpush.msra.mxu0 0.0
      %4788 = vmatpush.msra.mxu0 0.0
      %4789 = vmatpush.msra.mxu0 0.0
      %4790 = vmatpush.msra.mxu0 0.0
      %4791 = vmatpush.msra.mxu0 0.0
      %4792 = vmatpush.msra.mxu0 0.0
      %4793 = vmatpush.msra.mxu0 0.0
      %4794 = vmatpush.msra.mxu0 0.0
      %4795 = vmatpush.msra.mxu0 0.0
      %4796 = vmatpush.msra.mxu0 0.0
      %4797 = vmatpush.msra.mxu0 %v4728
      %4798 = vmatpush.msra.mxu0 %v4723
      %4799 = vmatmul.f32.gmra.mxu0 %v4743
      %v4800 = vpop.f32.mrf.mxu0
      %v4801 = vadd.f32 0.0, %v4800
      %4802 = vmatmul.f32.gmra.mxu0 %v4746
      %v4803 = vpop.f32.mrf.mxu0
      %v4804 = vadd.f32 0.0, %v4803
      %4805 = vmatmul.f32.gmra.mxu0 %v4749
      %v4806 = vpop.f32.mrf.mxu0
      %v4807 = vadd.f32 0.0, %v4806
      %4808 = vmatmul.f32.gmra.mxu0 %v4752
      %v4809 = vpop.f32.mrf.mxu0
      %v4810 = vadd.f32 0.0, %v4809
      %4811 = vdwg.mxu0
      %4812 = vmatpush.msra.mxu0 0.0
      %4813 = vmatpush.msra.mxu0 0.0
      %4814 = vmatpush.msra.mxu0 0.0
      %4815 = vmatpush.msra.mxu0 0.0
      %4816 = vmatpush.msra.mxu0 0.0
      %4817 = vmatpush.msra.mxu0 0.0
      %4818 = vmatpush.msra.mxu0 0.0
      %4819 = vmatpush.msra.mxu0 0.0
      %4820 = vmatpush.msra.mxu0 0.0
      %4821 = vmatpush.msra.mxu0 0.0
      %4822 = vmatpush.msra.mxu0 0.0
      %4823 = vmatpush.msra.mxu0 0.0
      %4824 = vmatpush.msra.mxu0 0.0
      %4825 = vmatpush.msra.mxu0 0.0
      %4826 = vmatpush.msra.mxu0 %v4729
      %4827 = vmatpush.msra.mxu0 %v4724
      %4828 = vmatmul.f32.gmra.mxu0 %v4743
      %v4829 = vpop.f32.mrf.mxu0
      %v4830 = vadd.f32 0.0, %v4829
      %4831 = vmatmul.f32.gmra.mxu0 %v4746
      %v4832 = vpop.f32.mrf.mxu0
      %v4833 = vadd.f32 0.0, %v4832
      %4834 = vmatmul.f32.gmra.mxu0 %v4749
      %v4835 = vpop.f32.mrf.mxu0
      %v4836 = vadd.f32 0.0, %v4835
      %4837 = vmatmul.f32.gmra.mxu0 %v4752
      %v4838 = vpop.f32.mrf.mxu0
      %v4839 = vadd.f32 0.0, %v4838
      %4840 = vdwg.mxu0
      %4841 = vmatpush.msra.mxu0 0.0
      %4842 = vmatpush.msra.mxu0 0.0
      %4843 = vmatpush.msra.mxu0 0.0
      %4844 = vmatpush.msra.mxu0 0.0
      %4845 = vmatpush.msra.mxu0 0.0
      %4846 = vmatpush.msra.mxu0 0.0
      %4847 = vmatpush.msra.mxu0 0.0
      %4848 = vmatpush.msra.mxu0 0.0
      %4849 = vmatpush.msra.mxu0 0.0
      %4850 = vmatpush.msra.mxu0 0.0
      %4851 = vmatpush.msra.mxu0 0.0
      %4852 = vmatpush.msra.mxu0 0.0
      %4853 = vmatpush.msra.mxu0 0.0
      %4854 = vmatpush.msra.mxu0 0.0
      %4855 = vmatpush.msra.mxu0 %v4730
      %4856 = vmatpush.msra.mxu0 %v4725
      %4857 = vmatmul.f32.gmra.mxu0 %v4743
      %v4858 = vpop.f32.mrf.mxu0
      %v4859 = vadd.f32 0.0, %v4858
      %4860 = vmatmul.f32.gmra.mxu0 %v4746
      %v4861 = vpop.f32.mrf.mxu0
      %v4862 = vadd.f32 0.0, %v4861
      %4863 = vmatmul.f32.gmra.mxu0 %v4749
      %v4864 = vpop.f32.mrf.mxu0
      %v4865 = vadd.f32 0.0, %v4864
      %4866 = vmatmul.f32.gmra.mxu0 %v4752
      %v4867 = vpop.f32.mrf.mxu0
      %v4868 = vadd.f32 0.0, %v4867
      %4869 = vdwg.mxu0
      %4870 = vmatpush.msra.mxu0 0.0
      %4871 = vmatpush.msra.mxu0 0.0
      %4872 = vmatpush.msra.mxu0 0.0
      %4873 = vmatpush.msra.mxu0 0.0
      %4874 = vmatpush.msra.mxu0 0.0
      %4875 = vmatpush.msra.mxu0 0.0
      %4876 = vmatpush.msra.mxu0 0.0
      %4877 = vmatpush.msra.mxu0 0.0
      %4878 = vmatpush.msra.mxu0 0.0
      %4879 = vmatpush.msra.mxu0 0.0
      %4880 = vmatpush.msra.mxu0 0.0
      %4881 = vmatpush.msra.mxu0 0.0
      %4882 = vmatpush.msra.mxu0 0.0
      %4883 = vmatpush.msra.mxu0 0.0
      %4884 = vmatpush.msra.mxu0 %v4731
      %4885 = vmatpush.msra.mxu0 %v4726
      %4886 = vmatmul.f32.gmra.mxu0 %v4743
      %v4887 = vpop.f32.mrf.mxu0
      %v4888 = vadd.f32 0.0, %v4887
      %4889 = vmatmul.f32.gmra.mxu0 %v4746
      %v4890 = vpop.f32.mrf.mxu0
      %v4891 = vadd.f32 0.0, %v4890
      %4892 = vmatmul.f32.gmra.mxu0 %v4749
      %v4893 = vpop.f32.mrf.mxu0
      %v4894 = vadd.f32 0.0, %v4893
      %4895 = vmatmul.f32.gmra.mxu0 %v4752
      %v4896 = vpop.f32.mrf.mxu0
      %v4897 = vadd.f32 0.0, %v4896
      %4898 = vdwg.mxu0
      %v4899 = vadd.f32 %v4673, %v4772
      %v4900 = vadd.f32 %v4674, %v4801
      %v4901 = vadd.f32 %v4675, %v4830
      %v4902 = vadd.f32 %v4676, %v4859
      %v4903 = vadd.f32 %v4677, %v4888
      %v4904 = vadd.f32 %v4678, %v4775
      %v4905 = vadd.f32 %v4679, %v4804
      %v4906 = vadd.f32 %v4680, %v4833
      %v4907 = vadd.f32 %v4681, %v4862
      %v4908 = vadd.f32 %v4682, %v4891
      %v4909 = vadd.f32 %v4683, %v4778
      %v4910 = vadd.f32 %v4684, %v4807
      %v4911 = vadd.f32 %v4685, %v4836
      %v4912 = vadd.f32 %v4686, %v4865
      %v4913 = vadd.f32 %v4687, %v4894
      %v4914 = vadd.f32 %v4688, %v4781
      %v4915 = vadd.f32 %v4689, %v4810
      %v4916 = vadd.f32 %v4690, %v4839
      %v4917 = vadd.f32 %v4691, %v4868
      %v4918 = vadd.f32 %v4692, %v4897
      %v4919 = vld [vmem:[%s4] sm:$0xff]
      %v4920 = vld [vmem:[%s4 + $0x8] sm:$0xff]
      %v4921 = vld [vmem:[%s4 + $0x10] sm:$0xff]
      %v4922 = vld [vmem:[%s4 + $0x18] sm:$0xff]
      %4924 = vset.pattern.permute.xlu0 0
      %4925 = vperm.xlu0 %4924, %v4919
      %v4926 = vpop.permute.xlu0 %4925
      %4929 = vset.pattern.permute.xlu0 0
      %4930 = vperm.xlu0 %4929, %v4920
      %v4931 = vpop.permute.xlu0 %4930
      %4934 = vset.pattern.permute.xlu0 0
      %4935 = vperm.xlu0 %4934, %v4921
      %v4936 = vpop.permute.xlu0 %4935
      %4939 = vset.pattern.permute.xlu0 0
      %4940 = vperm.xlu0 %4939, %v4922
      %v4941 = vpop.permute.xlu0 %4940
      %v4943 = vadd.f32 %v4899, %v4926
      %v4944 = vadd.f32 %v4900, %v4926
      %v4945 = vadd.f32 %v4901, %v4926
      %v4946 = vadd.f32 %v4902, %v4926
      %v4947 = vadd.f32 %v4903, %v4926
      %v4948 = vadd.f32 %v4904, %v4931
      %v4949 = vadd.f32 %v4905, %v4931
      %v4950 = vadd.f32 %v4906, %v4931
      %v4951 = vadd.f32 %v4907, %v4931
      %v4952 = vadd.f32 %v4908, %v4931
      %v4953 = vadd.f32 %v4909, %v4936
      %v4954 = vadd.f32 %v4910, %v4936
      %v4955 = vadd.f32 %v4911, %v4936
      %v4956 = vadd.f32 %v4912, %v4936
      %v4957 = vadd.f32 %v4913, %v4936
      %v4958 = vadd.f32 %v4914, %v4941
      %v4959 = vadd.f32 %v4915, %v4941
      %v4960 = vadd.f32 %v4916, %v4941
      %v4961 = vadd.f32 %v4917, %v4941
      %v4962 = vadd.f32 %v4918, %v4941
      %v4963 = vmax.f32 %v4943, 0.0
      %v4964 = vmax.f32 %v4944, 0.0
      %v4965 = vmax.f32 %v4945, 0.0
      %v4966 = vmax.f32 %v4946, 0.0
      %v4967 = vmax.f32 %v4947, 0.0
      %v4968 = vmax.f32 %v4948, 0.0
      %v4969 = vmax.f32 %v4949, 0.0
      %v4970 = vmax.f32 %v4950, 0.0
      %v4971 = vmax.f32 %v4951, 0.0
      %v4972 = vmax.f32 %v4952, 0.0
      %v4973 = vmax.f32 %v4953, 0.0
      %v4974 = vmax.f32 %v4954, 0.0
      %v4975 = vmax.f32 %v4955, 0.0
      %v4976 = vmax.f32 %v4956, 0.0
      %v4977 = vmax.f32 %v4957, 0.0
      %v4978 = vmax.f32 %v4958, 0.0
      %v4979 = vmax.f32 %v4959, 0.0
      %v4980 = vmax.f32 %v4960, 0.0
      %v4981 = vmax.f32 %v4961, 0.0
      %v4982 = vmax.f32 %v4962, 0.0
      %5003 = vrot.lane.b32.xlu0 %v4963, 126
      %v5004 = vpop.permute.xlu0 %5003
      %5005 = vrot.lane.b32.xlu0 %v4964, 126
      %v5006 = vpop.permute.xlu0 %5005
      %5007 = vrot.lane.b32.xlu0 %v4965, 126
      %v5008 = vpop.permute.xlu0 %5007
      %5009 = vrot.lane.b32.xlu0 %v4966, 126
      %v5010 = vpop.permute.xlu0 %5009
      %5011 = vrot.lane.b32.xlu0 %v4967, 126
      %v5012 = vpop.permute.xlu0 %5011
      %5013 = vrot.lane.b32.xlu0 %v4968, 126
      %v5014 = vpop.permute.xlu0 %5013
      %5015 = vrot.lane.b32.xlu0 %v4969, 126
      %v5016 = vpop.permute.xlu0 %5015
      %5017 = vrot.lane.b32.xlu0 %v4970, 126
      %v5018 = vpop.permute.xlu0 %5017
      %5019 = vrot.lane.b32.xlu0 %v4971, 126
      %v5020 = vpop.permute.xlu0 %5019
      %5021 = vrot.lane.b32.xlu0 %v4972, 126
      %v5022 = vpop.permute.xlu0 %5021
      %5023 = vrot.lane.b32.xlu0 %v4973, 126
      %v5024 = vpop.permute.xlu0 %5023
      %5025 = vrot.lane.b32.xlu0 %v4974, 126
      %v5026 = vpop.permute.xlu0 %5025
      %5027 = vrot.lane.b32.xlu0 %v4975, 126
      %v5028 = vpop.permute.xlu0 %5027
      %5029 = vrot.lane.b32.xlu0 %v4976, 126
      %v5030 = vpop.permute.xlu0 %5029
      %5031 = vrot.lane.b32.xlu0 %v4977, 126
      %v5032 = vpop.permute.xlu0 %5031
      %5033 = vrot.lane.b32.xlu0 %v4978, 126
      %v5034 = vpop.permute.xlu0 %5033
      %5035 = vrot.lane.b32.xlu0 %v4979, 126
      %v5036 = vpop.permute.xlu0 %5035
      %5037 = vrot.lane.b32.xlu0 %v4980, 126
      %v5038 = vpop.permute.xlu0 %5037
      %5039 = vrot.lane.b32.xlu0 %v4981, 126
      %v5040 = vpop.permute.xlu0 %5039
      %5041 = vrot.lane.b32.xlu0 %v4982, 126
      %v5042 = vpop.permute.xlu0 %5041
      %v5043 = vsel %vm581, %v5004, %v5006
      %v5044 = vsel %vm581, %v5006, %v5008
      %v5045 = vsel %vm581, %v5008, %v5010
      %v5046 = vsel %vm581, %v5010, %v5012
      %v5047 = vsel %vm581, %v5014, %v5016
      %v5048 = vsel %vm581, %v5016, %v5018
      %v5049 = vsel %vm581, %v5018, %v5020
      %v5050 = vsel %vm581, %v5020, %v5022
      %v5051 = vsel %vm581, %v5024, %v5026
      %v5052 = vsel %vm581, %v5026, %v5028
      %v5053 = vsel %vm581, %v5028, %v5030
      %v5054 = vsel %vm581, %v5030, %v5032
      %v5055 = vsel %vm581, %v5034, %v5036
      %v5056 = vsel %vm581, %v5036, %v5038
      %v5057 = vsel %vm581, %v5038, %v5040
      %v5058 = vsel %vm581, %v5040, %v5042
      %v5079 = vmax.f32 %v4963, %v5043
      %v5080 = vmax.f32 %v4964, %v5044
      %v5081 = vmax.f32 %v4965, %v5045
      %v5082 = vmax.f32 %v4966, %v5046
      %v5083 = vmax.f32 %v4967, %v5012
      %v5084 = vmax.f32 %v4968, %v5047
      %v5085 = vmax.f32 %v4969, %v5048
      %v5086 = vmax.f32 %v4970, %v5049
      %v5087 = vmax.f32 %v4971, %v5050
      %v5088 = vmax.f32 %v4972, %v5022
      %v5089 = vmax.f32 %v4973, %v5051
      %v5090 = vmax.f32 %v4974, %v5052
      %v5091 = vmax.f32 %v4975, %v5053
      %v5092 = vmax.f32 %v4976, %v5054
      %v5093 = vmax.f32 %v4977, %v5032
      %v5094 = vmax.f32 %v4978, %v5055
      %v5095 = vmax.f32 %v4979, %v5056
      %v5096 = vmax.f32 %v4980, %v5057
      %v5097 = vmax.f32 %v4981, %v5058
      %v5098 = vmax.f32 %v4982, %v5042
      %5119 = vrot.lane.b32.xlu0 %v5079, 72
      %v5120 = vpop.permute.xlu0 %5119
      %5121 = vrot.lane.b32.xlu0 %v5080, 72
      %v5122 = vpop.permute.xlu0 %5121
      %5123 = vrot.lane.b32.xlu0 %v5081, 72
      %v5124 = vpop.permute.xlu0 %5123
      %5125 = vrot.lane.b32.xlu0 %v5082, 72
      %v5126 = vpop.permute.xlu0 %5125
      %5127 = vrot.lane.b32.xlu0 %v5083, 72
      %v5128 = vpop.permute.xlu0 %5127
      %5129 = vrot.lane.b32.xlu0 %v5084, 72
      %v5130 = vpop.permute.xlu0 %5129
      %5131 = vrot.lane.b32.xlu0 %v5085, 72
      %v5132 = vpop.permute.xlu0 %5131
      %5133 = vrot.lane.b32.xlu0 %v5086, 72
      %v5134 = vpop.permute.xlu0 %5133
      %5135 = vrot.lane.b32.xlu0 %v5087, 72
      %v5136 = vpop.permute.xlu0 %5135
      %5137 = vrot.lane.b32.xlu0 %v5088, 72
      %v5138 = vpop.permute.xlu0 %5137
      %5139 = vrot.lane.b32.xlu0 %v5089, 72
      %v5140 = vpop.permute.xlu0 %5139
      %5141 = vrot.lane.b32.xlu0 %v5090, 72
      %v5142 = vpop.permute.xlu0 %5141
      %5143 = vrot.lane.b32.xlu0 %v5091, 72
      %v5144 = vpop.permute.xlu0 %5143
      %5145 = vrot.lane.b32.xlu0 %v5092, 72
      %v5146 = vpop.permute.xlu0 %5145
      %5147 = vrot.lane.b32.xlu0 %v5093, 72
      %v5148 = vpop.permute.xlu0 %5147
      %5149 = vrot.lane.b32.xlu0 %v5094, 72
      %v5150 = vpop.permute.xlu0 %5149
      %5151 = vrot.lane.b32.xlu0 %v5095, 72
      %v5152 = vpop.permute.xlu0 %5151
      %5153 = vrot.lane.b32.xlu0 %v5096, 72
      %v5154 = vpop.permute.xlu0 %5153
      %5155 = vrot.lane.b32.xlu0 %v5097, 72
      %v5156 = vpop.permute.xlu0 %5155
      %5157 = vrot.lane.b32.xlu0 %v5098, 72
      %v5158 = vpop.permute.xlu0 %5157
      %v5159 = vsel %vm1309, %v5120, %v5122
      %v5160 = vsel %vm1309, %v5122, %v5124
      %v5161 = vsel %vm1309, %v5124, %v5126
      %v5162 = vsel %vm1309, %v5126, %v5128
      %v5163 = vsel %vm1309, %v5130, %v5132
      %v5164 = vsel %vm1309, %v5132, %v5134
      %v5165 = vsel %vm1309, %v5134, %v5136
      %v5166 = vsel %vm1309, %v5136, %v5138
      %v5167 = vsel %vm1309, %v5140, %v5142
      %v5168 = vsel %vm1309, %v5142, %v5144
      %v5169 = vsel %vm1309, %v5144, %v5146
      %v5170 = vsel %vm1309, %v5146, %v5148
      %v5171 = vsel %vm1309, %v5150, %v5152
      %v5172 = vsel %vm1309, %v5152, %v5154
      %v5173 = vsel %vm1309, %v5154, %v5156
      %v5174 = vsel %vm1309, %v5156, %v5158
      %v5195 = vmax.f32 %v5079, %v5159
      %v5196 = vmax.f32 %v5080, %v5160
      %v5197 = vmax.f32 %v5081, %v5161
      %v5198 = vmax.f32 %v5082, %v5162
      %v5199 = vmax.f32 %v5083, %v5128
      %v5200 = vmax.f32 %v5084, %v5163
      %v5201 = vmax.f32 %v5085, %v5164
      %v5202 = vmax.f32 %v5086, %v5165
      %v5203 = vmax.f32 %v5087, %v5166
      %v5204 = vmax.f32 %v5088, %v5138
      %v5205 = vmax.f32 %v5089, %v5167
      %v5206 = vmax.f32 %v5090, %v5168
      %v5207 = vmax.f32 %v5091, %v5169
      %v5208 = vmax.f32 %v5092, %v5170
      %v5209 = vmax.f32 %v5093, %v5148
      %v5210 = vmax.f32 %v5094, %v5171
      %v5211 = vmax.f32 %v5095, %v5172
      %v5212 = vmax.f32 %v5096, %v5173
      %v5213 = vmax.f32 %v5097, %v5174
      %v5214 = vmax.f32 %v5098, %v5158
      %5215 = vst [vmem:[#allocation3] sm:$0xff] 0.0
      %5216 = vst [vmem:[#allocation3 + $0x8] sm:$0xff] 0.0
      %5217 = vst [vmem:[#allocation3 + $0x10] sm:$0xff] 0.0
      %5218 = vst [vmem:[#allocation3 + $0x18] sm:$0xff] 0.0
      %5219 = vst [vmem:[#allocation3 + $0x20] sm:$0xff] 0.0
      %5220 = vst.msk [vmem:[#allocation3 + $0x28] sm:$0xff] %vm2938, 0.0
      %5221 = vst [vmem:[#allocation3 + $0x30] sm:$0xff] 0.0
      %5222 = vst [vmem:[#allocation3 + $0x38] sm:$0xff] 0.0
      %5223 = vst [vmem:[#allocation3 + $0x40] sm:$0xff] 0.0
      %5224 = vst [vmem:[#allocation3 + $0x48] sm:$0xff] 0.0
      %5225 = vst [vmem:[#allocation3 + $0x50] sm:$0xff] 0.0
      %5226 = vst.msk [vmem:[#allocation3 + $0x58] sm:$0xff] %vm2938, 0.0
      %5227 = vst [vmem:[#allocation3 + $0x60] sm:$0xff] 0.0
      %5228 = vst [vmem:[#allocation3 + $0x68] sm:$0xff] 0.0
      %5229 = vst [vmem:[#allocation3 + $0x70] sm:$0xff] 0.0
      %5230 = vst [vmem:[#allocation3 + $0x78] sm:$0xff] 0.0
      %5231 = vst [vmem:[#allocation3 + $0x80] sm:$0xff] 0.0
      %5232 = vst.msk [vmem:[#allocation3 + $0x88] sm:$0xff] %vm2938, 0.0
      %5233 = vst [vmem:[#allocation3 + $0x90] sm:$0xff] 0.0
      %5234 = vst [vmem:[#allocation3 + $0x98] sm:$0xff] 0.0
      %5235 = vst [vmem:[#allocation3 + $0xa0] sm:$0xff] 0.0
      %5236 = vst [vmem:[#allocation3 + $0xa8] sm:$0xff] 0.0
      %5237 = vst [vmem:[#allocation3 + $0xb0] sm:$0xff] 0.0
      %5238 = vst.msk [vmem:[#allocation3 + $0xb8] sm:$0xff] %vm2938, 0.0
      %v5239 = vld [vmem:[%s10] sm:$0x1f]
      %v5241 = vperm.slane %v5239, 0
      %v5242 = vperm.slane %v5239, 1
      %v5243 = vperm.slane %v5239, 2
      %v5244 = vperm.slane %v5239, 3
      %v5245 = vperm.slane %v5239, 4
      %v5251 = vmul.f32 %v5195, %v5241
      %v5252 = vmul.f32 %v5196, %v5242
      %v5253 = vmul.f32 %v5197, %v5243
      %v5254 = vmul.f32 %v5198, %v5244
      %v5255 = vmul.f32 %v5199, %v5245
      %v5256 = vmul.f32 %v5200, %v5241
      %v5257 = vmul.f32 %v5201, %v5242
      %v5258 = vmul.f32 %v5202, %v5243
      %v5259 = vmul.f32 %v5203, %v5244
      %v5260 = vmul.f32 %v5204, %v5245
      %v5261 = vmul.f32 %v5205, %v5241
      %v5262 = vmul.f32 %v5206, %v5242
      %v5263 = vmul.f32 %v5207, %v5243
      %v5264 = vmul.f32 %v5208, %v5244
      %v5265 = vmul.f32 %v5209, %v5245
      %v5266 = vmul.f32 %v5210, %v5241
      %v5267 = vmul.f32 %v5211, %v5242
      %v5268 = vmul.f32 %v5212, %v5243
      %v5269 = vmul.f32 %v5213, %v5244
      %v5270 = vmul.f32 %v5214, %v5245
      %5291 = vrot.lane.b32.xlu0 %v5251, 116
      %v5292 = vpop.permute.xlu0 %5291
      %5293 = vrot.lane.b32.xlu0 %v5252, 116
      %v5294 = vpop.permute.xlu0 %5293
      %5295 = vrot.lane.b32.xlu0 %v5253, 116
      %v5296 = vpop.permute.xlu0 %5295
      %5297 = vrot.lane.b32.xlu0 %v5254, 116
      %v5298 = vpop.permute.xlu0 %5297
      %5299 = vrot.lane.b32.xlu0 %v5255, 116
      %v5300 = vpop.permute.xlu0 %5299
      %5301 = vrot.lane.b32.xlu0 %v5256, 116
      %v5302 = vpop.permute.xlu0 %5301
      %5303 = vrot.lane.b32.xlu0 %v5257, 116
      %v5304 = vpop.permute.xlu0 %5303
      %5305 = vrot.lane.b32.xlu0 %v5258, 116
      %v5306 = vpop.permute.xlu0 %5305
      %5307 = vrot.lane.b32.xlu0 %v5259, 116
      %v5308 = vpop.permute.xlu0 %5307
      %5309 = vrot.lane.b32.xlu0 %v5260, 116
      %v5310 = vpop.permute.xlu0 %5309
      %5311 = vrot.lane.b32.xlu0 %v5261, 116
      %v5312 = vpop.permute.xlu0 %5311
      %5313 = vrot.lane.b32.xlu0 %v5262, 116
      %v5314 = vpop.permute.xlu0 %5313
      %5315 = vrot.lane.b32.xlu0 %v5263, 116
      %v5316 = vpop.permute.xlu0 %5315
      %5317 = vrot.lane.b32.xlu0 %v5264, 116
      %v5318 = vpop.permute.xlu0 %5317
      %5319 = vrot.lane.b32.xlu0 %v5265, 116
      %v5320 = vpop.permute.xlu0 %5319
      %5321 = vrot.lane.b32.xlu0 %v5266, 116
      %v5322 = vpop.permute.xlu0 %5321
      %5323 = vrot.lane.b32.xlu0 %v5267, 116
      %v5324 = vpop.permute.xlu0 %5323
      %5325 = vrot.lane.b32.xlu0 %v5268, 116
      %v5326 = vpop.permute.xlu0 %5325
      %5327 = vrot.lane.b32.xlu0 %v5269, 116
      %v5328 = vpop.permute.xlu0 %5327
      %5329 = vrot.lane.b32.xlu0 %v5270, 116
      %v5330 = vpop.permute.xlu0 %5329
      %vm5331 = vcmask 949248
      %v5332 = vsel %vm5331, %v5292, %v5294
      %v5333 = vsel %vm5331, %v5294, %v5296
      %v5334 = vsel %vm5331, %v5296, %v5298
      %v5335 = vsel %vm5331, %v5298, %v5300
      %v5336 = vsel %vm5331, %v5302, %v5304
      %v5337 = vsel %vm5331, %v5304, %v5306
      %v5338 = vsel %vm5331, %v5306, %v5308
      %v5339 = vsel %vm5331, %v5308, %v5310
      %v5340 = vsel %vm5331, %v5312, %v5314
      %v5341 = vsel %vm5331, %v5314, %v5316
      %v5342 = vsel %vm5331, %v5316, %v5318
      %v5343 = vsel %vm5331, %v5318, %v5320
      %v5344 = vsel %vm5331, %v5322, %v5324
      %v5345 = vsel %vm5331, %v5324, %v5326
      %v5346 = vsel %vm5331, %v5326, %v5328
      %v5347 = vsel %vm5331, %v5328, %v5330
      %vm5372 = vcmask 1048480
      %5373 = vst.msk [vmem:[#allocation3] sm:$0xff] %vm5372, %v5292
      %5374 = vst [vmem:[#allocation3 + $0x8] sm:$0xff] %v5332
      %5375 = vst [vmem:[#allocation3 + $0x10] sm:$0xff] %v5333
      %5376 = vst [vmem:[#allocation3 + $0x18] sm:$0xff] %v5334
      %5377 = vst [vmem:[#allocation3 + $0x20] sm:$0xff] %v5335
      %5378 = vst.msk [vmem:[#allocation3 + $0x28] sm:$0xff] %vm2938, %v5300
      %5379 = vst.msk [vmem:[#allocation3 + $0x30] sm:$0xff] %vm5372, %v5302
      %5380 = vst [vmem:[#allocation3 + $0x38] sm:$0xff] %v5336
      %5381 = vst [vmem:[#allocation3 + $0x40] sm:$0xff] %v5337
      %5382 = vst [vmem:[#allocation3 + $0x48] sm:$0xff] %v5338
      %5383 = vst [vmem:[#allocation3 + $0x50] sm:$0xff] %v5339
      %5384 = vst.msk [vmem:[#allocation3 + $0x58] sm:$0xff] %vm2938, %v5310
      %5385 = vst.msk [vmem:[#allocation3 + $0x60] sm:$0xff] %vm5372, %v5312
      %5386 = vst [vmem:[#allocation3 + $0x68] sm:$0xff] %v5340
      %5387 = vst [vmem:[#allocation3 + $0x70] sm:$0xff] %v5341
      %5388 = vst [vmem:[#allocation3 + $0x78] sm:$0xff] %v5342
      %5389 = vst [vmem:[#allocation3 + $0x80] sm:$0xff] %v5343
      %5390 = vst.msk [vmem:[#allocation3 + $0x88] sm:$0xff] %vm2938, %v5320
      %5391 = vst.msk [vmem:[#allocation3 + $0x90] sm:$0xff] %vm5372, %v5322
      %5392 = vst [vmem:[#allocation3 + $0x98] sm:$0xff] %v5344
      %5393 = vst [vmem:[#allocation3 + $0xa0] sm:$0xff] %v5345
      %5394 = vst [vmem:[#allocation3 + $0xa8] sm:$0xff] %v5346
      %5395 = vst [vmem:[#allocation3 + $0xb0] sm:$0xff] %v5347
      %5396 = vst.msk [vmem:[#allocation3 + $0xb8] sm:$0xff] %vm2938, %v5330
      %v5397 = vld [vmem:[%s5] sm:$0xff]
      %v5398 = vld [vmem:[%s5 + $0x8] sm:$0xff]
      %v5399 = vld [vmem:[%s5 + $0x10] sm:$0xff]
      %v5400 = vld [vmem:[%s5 + $0x18] sm:$0xff]
      %v5401 = vld [vmem:[%s5 + $0x20] sm:$0xff]
      %v5402 = vld [vmem:[%s5 + $0x28] sm:$0xff]
      %v5403 = vld [vmem:[%s5 + $0x30] sm:$0xff]
      %v5404 = vld [vmem:[%s5 + $0x38] sm:$0xff]
      %v5405 = vld [vmem:[#allocation3] sm:$0xff]
      %v5406 = vld [vmem:[#allocation3 + $0x8] sm:$0xff]
      %v5407 = vld [vmem:[#allocation3 + $0x18] sm:$0xff]
      %v5408 = vld [vmem:[#allocation3 + $0x30] sm:$0xff]
      %v5409 = vld [vmem:[#allocation3 + $0x38] sm:$0xff]
      %v5410 = vld [vmem:[#allocation3 + $0x48] sm:$0xff]
      %v5411 = vld [vmem:[#allocation3 + $0x60] sm:$0xff]
      %v5412 = vld [vmem:[#allocation3 + $0x68] sm:$0xff]
      %v5413 = vld [vmem:[#allocation3 + $0x78] sm:$0xff]
      %v5414 = vld [vmem:[#allocation3 + $0x90] sm:$0xff]
      %v5415 = vld [vmem:[#allocation3 + $0x98] sm:$0xff]
      %v5416 = vld [vmem:[#allocation3 + $0xa8] sm:$0xff]
      %s5417 = scalar_lea.vmem %s5, 64
      %v5418 = vld [vmem:[%s5417] sm:$0xff]
      %v5419 = vld [vmem:[%s5417 + $0x8] sm:$0xff]
      %v5420 = vld [vmem:[%s5417 + $0x10] sm:$0xff]
      %v5421 = vld [vmem:[%s5417 + $0x18] sm:$0xff]
      %v5422 = vld [vmem:[%s5417 + $0x20] sm:$0xff]
      %v5423 = vld [vmem:[%s5417 + $0x28] sm:$0xff]
      %v5424 = vld [vmem:[%s5417 + $0x30] sm:$0xff]
      %v5425 = vld [vmem:[%s5417 + $0x38] sm:$0xff]
      %v5426 = vld [vmem:[#allocation3 + $0x10] sm:$0xff]
      %v5427 = vld [vmem:[#allocation3 + $0x40] sm:$0xff]
      %v5428 = vld [vmem:[#allocation3 + $0x70] sm:$0xff]
      %v5429 = vld [vmem:[#allocation3 + $0xa0] sm:$0xff]
      %5446 = vrot.lane.b32.xlu0 %v5405, 124
      %v5447 = vpop.permute.xlu0 %5446
      %5448 = vrot.lane.b32.xlu0 %v5406, 124
      %v5449 = vpop.permute.xlu0 %5448
      %5450 = vrot.lane.b32.xlu0 %v5426, 124
      %v5451 = vpop.permute.xlu0 %5450
      %5452 = vrot.lane.b32.xlu0 %v5407, 124
      %v5453 = vpop.permute.xlu0 %5452
      %5454 = vrot.lane.b32.xlu0 %v5408, 124
      %v5455 = vpop.permute.xlu0 %5454
      %5456 = vrot.lane.b32.xlu0 %v5409, 124
      %v5457 = vpop.permute.xlu0 %5456
      %5458 = vrot.lane.b32.xlu0 %v5427, 124
      %v5459 = vpop.permute.xlu0 %5458
      %5460 = vrot.lane.b32.xlu0 %v5410, 124
      %v5461 = vpop.permute.xlu0 %5460
      %5462 = vrot.lane.b32.xlu0 %v5411, 124
      %v5463 = vpop.permute.xlu0 %5462
      %5464 = vrot.lane.b32.xlu0 %v5412, 124
      %v5465 = vpop.permute.xlu0 %5464
      %5466 = vrot.lane.b32.xlu0 %v5428, 124
      %v5467 = vpop.permute.xlu0 %5466
      %5468 = vrot.lane.b32.xlu0 %v5413, 124
      %v5469 = vpop.permute.xlu0 %5468
      %5470 = vrot.lane.b32.xlu0 %v5414, 124
      %v5471 = vpop.permute.xlu0 %5470
      %5472 = vrot.lane.b32.xlu0 %v5415, 124
      %v5473 = vpop.permute.xlu0 %5472
      %5474 = vrot.lane.b32.xlu0 %v5429, 124
      %v5475 = vpop.permute.xlu0 %5474
      %5476 = vrot.lane.b32.xlu0 %v5416, 124
      %v5477 = vpop.permute.xlu0 %5476
      %v5478 = vsel %vm763, %v5447, %v5449
      %v5479 = vsel %vm763, %v5449, %v5451
      %v5480 = vsel %vm763, %v5455, %v5457
      %v5481 = vsel %vm763, %v5457, %v5459
      %v5482 = vsel %vm763, %v5463, %v5465
      %v5483 = vsel %vm763, %v5465, %v5467
      %v5484 = vsel %vm763, %v5471, %v5473
      %v5485 = vsel %vm763, %v5473, %v5475
      %vm5498 = vcmask 261120
      %v5500 = vsel %vm5498, %v5418, 0
      %v5503 = vsel %vm5498, %v5419, 0
      %v5506 = vsel %vm5498, %v5420, 0
      %v5509 = vsel %vm5498, %v5421, 0
      %v5512 = vsel %vm5498, %v5422, 0
      %v5515 = vsel %vm5498, %v5423, 0
      %v5518 = vsel %vm5498, %v5424, 0
      %v5521 = vsel %vm5498, %v5425, 0
      %5523 = vmatpush.msra.mxu0 0.0
      %5524 = vmatpush.msra.mxu0 0.0
      %5525 = vmatpush.msra.mxu0 0.0
      %5526 = vmatpush.msra.mxu0 0.0
      %5527 = vmatpush.msra.mxu0 0.0
      %5528 = vmatpush.msra.mxu0 0.0
      %5529 = vmatpush.msra.mxu0 0.0
      %5530 = vmatpush.msra.mxu0 0.0
      %5531 = vmatpush.msra.mxu0 0.0
      %5532 = vmatpush.msra.mxu0 0.0
      %5533 = vmatpush.msra.mxu0 0.0
      %5534 = vmatpush.msra.mxu0 0.0
      %5535 = vmatpush.msra.mxu0 %v5484
      %5536 = vmatpush.msra.mxu0 %v5482
      %5537 = vmatpush.msra.mxu0 %v5480
      %5538 = vmatpush.msra.mxu0 %v5478
      %5539 = vmatmul.f32.gmra.mxu0 %v5500
      %v5540 = vpop.f32.mrf.mxu0
      %v5541 = vadd.f32 0.0, %v5540
      %5542 = vmatmul.f32.gmra.mxu0 %v5503
      %v5543 = vpop.f32.mrf.mxu0
      %v5544 = vadd.f32 0.0, %v5543
      %5545 = vmatmul.f32.gmra.mxu0 %v5506
      %v5546 = vpop.f32.mrf.mxu0
      %v5547 = vadd.f32 0.0, %v5546
      %5548 = vmatmul.f32.gmra.mxu0 %v5509
      %v5549 = vpop.f32.mrf.mxu0
      %v5550 = vadd.f32 0.0, %v5549
      %5551 = vmatmul.f32.gmra.mxu0 %v5512
      %v5552 = vpop.f32.mrf.mxu0
      %v5553 = vadd.f32 0.0, %v5552
      %5554 = vmatmul.f32.gmra.mxu0 %v5515
      %v5555 = vpop.f32.mrf.mxu0
      %v5556 = vadd.f32 0.0, %v5555
      %5557 = vmatmul.f32.gmra.mxu0 %v5518
      %v5558 = vpop.f32.mrf.mxu0
      %v5559 = vadd.f32 0.0, %v5558
      %5560 = vmatmul.f32.gmra.mxu0 %v5521
      %v5561 = vpop.f32.mrf.mxu0
      %v5562 = vadd.f32 0.0, %v5561
      %5563 = vdwg.mxu0
      %5564 = vmatpush.msra.mxu0 0.0
      %5565 = vmatpush.msra.mxu0 0.0
      %5566 = vmatpush.msra.mxu0 0.0
      %5567 = vmatpush.msra.mxu0 0.0
      %5568 = vmatpush.msra.mxu0 0.0
      %5569 = vmatpush.msra.mxu0 0.0
      %5570 = vmatpush.msra.mxu0 0.0
      %5571 = vmatpush.msra.mxu0 0.0
      %5572 = vmatpush.msra.mxu0 0.0
      %5573 = vmatpush.msra.mxu0 0.0
      %5574 = vmatpush.msra.mxu0 0.0
      %5575 = vmatpush.msra.mxu0 0.0
      %5576 = vmatpush.msra.mxu0 %v5485
      %5577 = vmatpush.msra.mxu0 %v5483
      %5578 = vmatpush.msra.mxu0 %v5481
      %5579 = vmatpush.msra.mxu0 %v5479
      %5580 = vmatmul.f32.gmra.mxu0 %v5500
      %v5581 = vpop.f32.mrf.mxu0
      %v5582 = vadd.f32 0.0, %v5581
      %5583 = vmatmul.f32.gmra.mxu0 %v5503
      %v5584 = vpop.f32.mrf.mxu0
      %v5585 = vadd.f32 0.0, %v5584
      %5586 = vmatmul.f32.gmra.mxu0 %v5506
      %v5587 = vpop.f32.mrf.mxu0
      %v5588 = vadd.f32 0.0, %v5587
      %5589 = vmatmul.f32.gmra.mxu0 %v5509
      %v5590 = vpop.f32.mrf.mxu0
      %v5591 = vadd.f32 0.0, %v5590
      %5592 = vmatmul.f32.gmra.mxu0 %v5512
      %v5593 = vpop.f32.mrf.mxu0
      %v5594 = vadd.f32 0.0, %v5593
      %5595 = vmatmul.f32.gmra.mxu0 %v5515
      %v5596 = vpop.f32.mrf.mxu0
      %v5597 = vadd.f32 0.0, %v5596
      %5598 = vmatmul.f32.gmra.mxu0 %v5518
      %v5599 = vpop.f32.mrf.mxu0
      %v5600 = vadd.f32 0.0, %v5599
      %5601 = vmatmul.f32.gmra.mxu0 %v5521
      %v5602 = vpop.f32.mrf.mxu0
      %v5603 = vadd.f32 0.0, %v5602
      %5604 = vdwg.mxu0
      %5605 = vmatpush.msra.mxu0 0.0
      %5606 = vmatpush.msra.mxu0 0.0
      %5607 = vmatpush.msra.mxu0 0.0
      %5608 = vmatpush.msra.mxu0 0.0
      %5609 = vmatpush.msra.mxu0 0.0
      %5610 = vmatpush.msra.mxu0 0.0
      %5611 = vmatpush.msra.mxu0 0.0
      %5612 = vmatpush.msra.mxu0 0.0
      %5613 = vmatpush.msra.mxu0 0.0
      %5614 = vmatpush.msra.mxu0 0.0
      %5615 = vmatpush.msra.mxu0 0.0
      %5616 = vmatpush.msra.mxu0 0.0
      %5617 = vmatpush.msra.mxu0 %v5477
      %5618 = vmatpush.msra.mxu0 %v5469
      %5619 = vmatpush.msra.mxu0 %v5461
      %5620 = vmatpush.msra.mxu0 %v5453
      %5621 = vmatmul.f32.gmra.mxu0 %v5500
      %v5622 = vpop.f32.mrf.mxu0
      %v5623 = vadd.f32 0.0, %v5622
      %5624 = vmatmul.f32.gmra.mxu0 %v5503
      %v5625 = vpop.f32.mrf.mxu0
      %v5626 = vadd.f32 0.0, %v5625
      %5627 = vmatmul.f32.gmra.mxu0 %v5506
      %v5628 = vpop.f32.mrf.mxu0
      %v5629 = vadd.f32 0.0, %v5628
      %5630 = vmatmul.f32.gmra.mxu0 %v5509
      %v5631 = vpop.f32.mrf.mxu0
      %v5632 = vadd.f32 0.0, %v5631
      %5633 = vmatmul.f32.gmra.mxu0 %v5512
      %v5634 = vpop.f32.mrf.mxu0
      %v5635 = vadd.f32 0.0, %v5634
      %5636 = vmatmul.f32.gmra.mxu0 %v5515
      %v5637 = vpop.f32.mrf.mxu0
      %v5638 = vadd.f32 0.0, %v5637
      %5639 = vmatmul.f32.gmra.mxu0 %v5518
      %v5640 = vpop.f32.mrf.mxu0
      %v5641 = vadd.f32 0.0, %v5640
      %5642 = vmatmul.f32.gmra.mxu0 %v5521
      %v5643 = vpop.f32.mrf.mxu0
      %v5644 = vadd.f32 0.0, %v5643
      %5645 = vdwg.mxu0
      %v5647 = vsel %vm5498, %v5397, 0
      %v5650 = vsel %vm5498, %v5398, 0
      %v5653 = vsel %vm5498, %v5399, 0
      %v5656 = vsel %vm5498, %v5400, 0
      %v5659 = vsel %vm5498, %v5401, 0
      %v5662 = vsel %vm5498, %v5402, 0
      %v5665 = vsel %vm5498, %v5403, 0
      %v5668 = vsel %vm5498, %v5404, 0
      %5670 = vmatpush.msra.mxu0 0.0
      %5671 = vmatpush.msra.mxu0 0.0
      %5672 = vmatpush.msra.mxu0 0.0
      %5673 = vmatpush.msra.mxu0 0.0
      %5674 = vmatpush.msra.mxu0 0.0
      %5675 = vmatpush.msra.mxu0 0.0
      %5676 = vmatpush.msra.mxu0 0.0
      %5677 = vmatpush.msra.mxu0 0.0
      %5678 = vmatpush.msra.mxu0 0.0
      %5679 = vmatpush.msra.mxu0 0.0
      %5680 = vmatpush.msra.mxu0 0.0
      %5681 = vmatpush.msra.mxu0 0.0
      %5682 = vmatpush.msra.mxu0 %v5414
      %5683 = vmatpush.msra.mxu0 %v5411
      %5684 = vmatpush.msra.mxu0 %v5408
      %5685 = vmatpush.msra.mxu0 %v5405
      %5686 = vmatmul.f32.gmra.mxu0 %v5647
      %v5687 = vpop.f32.mrf.mxu0
      %v5688 = vadd.f32 %v5541, %v5687
      %5689 = vmatmul.f32.gmra.mxu0 %v5650
      %v5690 = vpop.f32.mrf.mxu0
      %v5691 = vadd.f32 %v5544, %v5690
      %5692 = vmatmul.f32.gmra.mxu0 %v5653
      %v5693 = vpop.f32.mrf.mxu0
      %v5694 = vadd.f32 %v5547, %v5693
      %5695 = vmatmul.f32.gmra.mxu0 %v5656
      %v5696 = vpop.f32.mrf.mxu0
      %v5697 = vadd.f32 %v5550, %v5696
      %5698 = vmatmul.f32.gmra.mxu0 %v5659
      %v5699 = vpop.f32.mrf.mxu0
      %v5700 = vadd.f32 %v5553, %v5699
      %5701 = vmatmul.f32.gmra.mxu0 %v5662
      %v5702 = vpop.f32.mrf.mxu0
      %v5703 = vadd.f32 %v5556, %v5702
      %5704 = vmatmul.f32.gmra.mxu0 %v5665
      %v5705 = vpop.f32.mrf.mxu0
      %v5706 = vadd.f32 %v5559, %v5705
      %5707 = vmatmul.f32.gmra.mxu0 %v5668
      %v5708 = vpop.f32.mrf.mxu0
      %v5709 = vadd.f32 %v5562, %v5708
      %5710 = vdwg.mxu0
      %5711 = vmatpush.msra.mxu0 0.0
      %5712 = vmatpush.msra.mxu0 0.0
      %5713 = vmatpush.msra.mxu0 0.0
      %5714 = vmatpush.msra.mxu0 0.0
      %5715 = vmatpush.msra.mxu0 0.0
      %5716 = vmatpush.msra.mxu0 0.0
      %5717 = vmatpush.msra.mxu0 0.0
      %5718 = vmatpush.msra.mxu0 0.0
      %5719 = vmatpush.msra.mxu0 0.0
      %5720 = vmatpush.msra.mxu0 0.0
      %5721 = vmatpush.msra.mxu0 0.0
      %5722 = vmatpush.msra.mxu0 0.0
      %5723 = vmatpush.msra.mxu0 %v5415
      %5724 = vmatpush.msra.mxu0 %v5412
      %5725 = vmatpush.msra.mxu0 %v5409
      %5726 = vmatpush.msra.mxu0 %v5406
      %5727 = vmatmul.f32.gmra.mxu0 %v5647
      %v5728 = vpop.f32.mrf.mxu0
      %v5729 = vadd.f32 %v5582, %v5728
      %5730 = vmatmul.f32.gmra.mxu0 %v5650
      %v5731 = vpop.f32.mrf.mxu0
      %v5732 = vadd.f32 %v5585, %v5731
      %5733 = vmatmul.f32.gmra.mxu0 %v5653
      %v5734 = vpop.f32.mrf.mxu0
      %v5735 = vadd.f32 %v5588, %v5734
      %5736 = vmatmul.f32.gmra.mxu0 %v5656
      %v5737 = vpop.f32.mrf.mxu0
      %v5738 = vadd.f32 %v5591, %v5737
      %5739 = vmatmul.f32.gmra.mxu0 %v5659
      %v5740 = vpop.f32.mrf.mxu0
      %v5741 = vadd.f32 %v5594, %v5740
      %5742 = vmatmul.f32.gmra.mxu0 %v5662
      %v5743 = vpop.f32.mrf.mxu0
      %v5744 = vadd.f32 %v5597, %v5743
      %5745 = vmatmul.f32.gmra.mxu0 %v5665
      %v5746 = vpop.f32.mrf.mxu0
      %v5747 = vadd.f32 %v5600, %v5746
      %5748 = vmatmul.f32.gmra.mxu0 %v5668
      %v5749 = vpop.f32.mrf.mxu0
      %v5750 = vadd.f32 %v5603, %v5749
      %5751 = vdwg.mxu0
      %5752 = vmatpush.msra.mxu0 0.0
      %5753 = vmatpush.msra.mxu0 0.0
      %5754 = vmatpush.msra.mxu0 0.0
      %5755 = vmatpush.msra.mxu0 0.0
      %5756 = vmatpush.msra.mxu0 0.0
      %5757 = vmatpush.msra.mxu0 0.0
      %5758 = vmatpush.msra.mxu0 0.0
      %5759 = vmatpush.msra.mxu0 0.0
      %5760 = vmatpush.msra.mxu0 0.0
      %5761 = vmatpush.msra.mxu0 0.0
      %5762 = vmatpush.msra.mxu0 0.0
      %5763 = vmatpush.msra.mxu0 0.0
      %5764 = vmatpush.msra.mxu0 %v5416
      %5765 = vmatpush.msra.mxu0 %v5413
      %5766 = vmatpush.msra.mxu0 %v5410
      %5767 = vmatpush.msra.mxu0 %v5407
      %5768 = vmatmul.f32.gmra.mxu0 %v5647
      %v5769 = vpop.f32.mrf.mxu0
      %v5770 = vadd.f32 %v5623, %v5769
      %5771 = vmatmul.f32.gmra.mxu0 %v5650
      %v5772 = vpop.f32.mrf.mxu0
      %v5773 = vadd.f32 %v5626, %v5772
      %5774 = vmatmul.f32.gmra.mxu0 %v5653
      %v5775 = vpop.f32.mrf.mxu0
      %v5776 = vadd.f32 %v5629, %v5775
      %5777 = vmatmul.f32.gmra.mxu0 %v5656
      %v5778 = vpop.f32.mrf.mxu0
      %v5779 = vadd.f32 %v5632, %v5778
      %5780 = vmatmul.f32.gmra.mxu0 %v5659
      %v5781 = vpop.f32.mrf.mxu0
      %v5782 = vadd.f32 %v5635, %v5781
      %5783 = vmatmul.f32.gmra.mxu0 %v5662
      %v5784 = vpop.f32.mrf.mxu0
      %v5785 = vadd.f32 %v5638, %v5784
      %5786 = vmatmul.f32.gmra.mxu0 %v5665
      %v5787 = vpop.f32.mrf.mxu0
      %v5788 = vadd.f32 %v5641, %v5787
      %5789 = vmatmul.f32.gmra.mxu0 %v5668
      %v5790 = vpop.f32.mrf.mxu0
      %v5791 = vadd.f32 %v5644, %v5790
      %5792 = vdwg.mxu0
      %s5793 = scalar_lea.vmem %s5, 128
      %v5794 = vld [vmem:[%s5793] sm:$0xff]
      %v5795 = vld [vmem:[%s5793 + $0x8] sm:$0xff]
      %v5796 = vld [vmem:[%s5793 + $0x10] sm:$0xff]
      %v5797 = vld [vmem:[%s5793 + $0x18] sm:$0xff]
      %v5798 = vld [vmem:[%s5793 + $0x20] sm:$0xff]
      %v5799 = vld [vmem:[%s5793 + $0x28] sm:$0xff]
      %v5800 = vld [vmem:[%s5793 + $0x30] sm:$0xff]
      %v5801 = vld [vmem:[%s5793 + $0x38] sm:$0xff]
      %5802 = vrot.lane.b32.xlu0 %v5405, 120
      %v5803 = vpop.permute.xlu0 %5802
      %5804 = vrot.lane.b32.xlu0 %v5406, 120
      %v5805 = vpop.permute.xlu0 %5804
      %5806 = vrot.lane.b32.xlu0 %v5426, 120
      %v5807 = vpop.permute.xlu0 %5806
      %5808 = vrot.lane.b32.xlu0 %v5407, 120
      %v5809 = vpop.permute.xlu0 %5808
      %5810 = vrot.lane.b32.xlu0 %v5408, 120
      %v5811 = vpop.permute.xlu0 %5810
      %5812 = vrot.lane.b32.xlu0 %v5409, 120
      %v5813 = vpop.permute.xlu0 %5812
      %5814 = vrot.lane.b32.xlu0 %v5427, 120
      %v5815 = vpop.permute.xlu0 %5814
      %5816 = vrot.lane.b32.xlu0 %v5410, 120
      %v5817 = vpop.permute.xlu0 %5816
      %5818 = vrot.lane.b32.xlu0 %v5411, 120
      %v5819 = vpop.permute.xlu0 %5818
      %5820 = vrot.lane.b32.xlu0 %v5412, 120
      %v5821 = vpop.permute.xlu0 %5820
      %5822 = vrot.lane.b32.xlu0 %v5428, 120
      %v5823 = vpop.permute.xlu0 %5822
      %5824 = vrot.lane.b32.xlu0 %v5413, 120
      %v5825 = vpop.permute.xlu0 %5824
      %5826 = vrot.lane.b32.xlu0 %v5414, 120
      %v5827 = vpop.permute.xlu0 %5826
      %5828 = vrot.lane.b32.xlu0 %v5415, 120
      %v5829 = vpop.permute.xlu0 %5828
      %5830 = vrot.lane.b32.xlu0 %v5429, 120
      %v5831 = vpop.permute.xlu0 %5830
      %5832 = vrot.lane.b32.xlu0 %v5416, 120
      %v5833 = vpop.permute.xlu0 %5832
      %vm5834 = vcmask 982016
      %v5835 = vsel %vm5834, %v5803, %v5805
      %v5836 = vsel %vm5834, %v5805, %v5807
      %v5837 = vsel %vm5834, %v5811, %v5813
      %v5838 = vsel %vm5834, %v5813, %v5815
      %v5839 = vsel %vm5834, %v5819, %v5821
      %v5840 = vsel %vm5834, %v5821, %v5823
      %v5841 = vsel %vm5834, %v5827, %v5829
      %v5842 = vsel %vm5834, %v5829, %v5831
      %v5856 = vsel %vm5498, %v5794, 0
      %v5859 = vsel %vm5498, %v5795, 0
      %v5862 = vsel %vm5498, %v5796, 0
      %v5865 = vsel %vm5498, %v5797, 0
      %v5868 = vsel %vm5498, %v5798, 0
      %v5871 = vsel %vm5498, %v5799, 0
      %v5874 = vsel %vm5498, %v5800, 0
      %v5877 = vsel %vm5498, %v5801, 0
      %5879 = vmatpush.msra.mxu0 0.0
      %5880 = vmatpush.msra.mxu0 0.0
      %5881 = vmatpush.msra.mxu0 0.0
      %5882 = vmatpush.msra.mxu0 0.0
      %5883 = vmatpush.msra.mxu0 0.0
      %5884 = vmatpush.msra.mxu0 0.0
      %5885 = vmatpush.msra.mxu0 0.0
      %5886 = vmatpush.msra.mxu0 0.0
      %5887 = vmatpush.msra.mxu0 0.0
      %5888 = vmatpush.msra.mxu0 0.0
      %5889 = vmatpush.msra.mxu0 0.0
      %5890 = vmatpush.msra.mxu0 0.0
      %5891 = vmatpush.msra.mxu0 %v5841
      %5892 = vmatpush.msra.mxu0 %v5839
      %5893 = vmatpush.msra.mxu0 %v5837
      %5894 = vmatpush.msra.mxu0 %v5835
      %5895 = vmatmul.f32.gmra.mxu0 %v5856
      %v5896 = vpop.f32.mrf.mxu0
      %v5897 = vadd.f32 0.0, %v5896
      %5898 = vmatmul.f32.gmra.mxu0 %v5859
      %v5899 = vpop.f32.mrf.mxu0
      %v5900 = vadd.f32 0.0, %v5899
      %5901 = vmatmul.f32.gmra.mxu0 %v5862
      %v5902 = vpop.f32.mrf.mxu0
      %v5903 = vadd.f32 0.0, %v5902
      %5904 = vmatmul.f32.gmra.mxu0 %v5865
      %v5905 = vpop.f32.mrf.mxu0
      %v5906 = vadd.f32 0.0, %v5905
      %5907 = vmatmul.f32.gmra.mxu0 %v5868
      %v5908 = vpop.f32.mrf.mxu0
      %v5909 = vadd.f32 0.0, %v5908
      %5910 = vmatmul.f32.gmra.mxu0 %v5871
      %v5911 = vpop.f32.mrf.mxu0
      %v5912 = vadd.f32 0.0, %v5911
      %5913 = vmatmul.f32.gmra.mxu0 %v5874
      %v5914 = vpop.f32.mrf.mxu0
      %v5915 = vadd.f32 0.0, %v5914
      %5916 = vmatmul.f32.gmra.mxu0 %v5877
      %v5917 = vpop.f32.mrf.mxu0
      %v5918 = vadd.f32 0.0, %v5917
      %5919 = vdwg.mxu0
      %5920 = vmatpush.msra.mxu0 0.0
      %5921 = vmatpush.msra.mxu0 0.0
      %5922 = vmatpush.msra.mxu0 0.0
      %5923 = vmatpush.msra.mxu0 0.0
      %5924 = vmatpush.msra.mxu0 0.0
      %5925 = vmatpush.msra.mxu0 0.0
      %5926 = vmatpush.msra.mxu0 0.0
      %5927 = vmatpush.msra.mxu0 0.0
      %5928 = vmatpush.msra.mxu0 0.0
      %5929 = vmatpush.msra.mxu0 0.0
      %5930 = vmatpush.msra.mxu0 0.0
      %5931 = vmatpush.msra.mxu0 0.0
      %5932 = vmatpush.msra.mxu0 %v5842
      %5933 = vmatpush.msra.mxu0 %v5840
      %5934 = vmatpush.msra.mxu0 %v5838
      %5935 = vmatpush.msra.mxu0 %v5836
      %5936 = vmatmul.f32.gmra.mxu0 %v5856
      %v5937 = vpop.f32.mrf.mxu0
      %v5938 = vadd.f32 0.0, %v5937
      %5939 = vmatmul.f32.gmra.mxu0 %v5859
      %v5940 = vpop.f32.mrf.mxu0
      %v5941 = vadd.f32 0.0, %v5940
      %5942 = vmatmul.f32.gmra.mxu0 %v5862
      %v5943 = vpop.f32.mrf.mxu0
      %v5944 = vadd.f32 0.0, %v5943
      %5945 = vmatmul.f32.gmra.mxu0 %v5865
      %v5946 = vpop.f32.mrf.mxu0
      %v5947 = vadd.f32 0.0, %v5946
      %5948 = vmatmul.f32.gmra.mxu0 %v5868
      %v5949 = vpop.f32.mrf.mxu0
      %v5950 = vadd.f32 0.0, %v5949
      %5951 = vmatmul.f32.gmra.mxu0 %v5871
      %v5952 = vpop.f32.mrf.mxu0
      %v5953 = vadd.f32 0.0, %v5952
      %5954 = vmatmul.f32.gmra.mxu0 %v5874
      %v5955 = vpop.f32.mrf.mxu0
      %v5956 = vadd.f32 0.0, %v5955
      %5957 = vmatmul.f32.gmra.mxu0 %v5877
      %v5958 = vpop.f32.mrf.mxu0
      %v5959 = vadd.f32 0.0, %v5958
      %5960 = vdwg.mxu0
      %5961 = vmatpush.msra.mxu0 0.0
      %5962 = vmatpush.msra.mxu0 0.0
      %5963 = vmatpush.msra.mxu0 0.0
      %5964 = vmatpush.msra.mxu0 0.0
      %5965 = vmatpush.msra.mxu0 0.0
      %5966 = vmatpush.msra.mxu0 0.0
      %5967 = vmatpush.msra.mxu0 0.0
      %5968 = vmatpush.msra.mxu0 0.0
      %5969 = vmatpush.msra.mxu0 0.0
      %5970 = vmatpush.msra.mxu0 0.0
      %5971 = vmatpush.msra.mxu0 0.0
      %5972 = vmatpush.msra.mxu0 0.0
      %5973 = vmatpush.msra.mxu0 %v5833
      %5974 = vmatpush.msra.mxu0 %v5825
      %5975 = vmatpush.msra.mxu0 %v5817
      %5976 = vmatpush.msra.mxu0 %v5809
      %5977 = vmatmul.f32.gmra.mxu0 %v5856
      %v5978 = vpop.f32.mrf.mxu0
      %v5979 = vadd.f32 0.0, %v5978
      %5980 = vmatmul.f32.gmra.mxu0 %v5859
      %v5981 = vpop.f32.mrf.mxu0
      %v5982 = vadd.f32 0.0, %v5981
      %5983 = vmatmul.f32.gmra.mxu0 %v5862
      %v5984 = vpop.f32.mrf.mxu0
      %v5985 = vadd.f32 0.0, %v5984
      %5986 = vmatmul.f32.gmra.mxu0 %v5865
      %v5987 = vpop.f32.mrf.mxu0
      %v5988 = vadd.f32 0.0, %v5987
      %5989 = vmatmul.f32.gmra.mxu0 %v5868
      %v5990 = vpop.f32.mrf.mxu0
      %v5991 = vadd.f32 0.0, %v5990
      %5992 = vmatmul.f32.gmra.mxu0 %v5871
      %v5993 = vpop.f32.mrf.mxu0
      %v5994 = vadd.f32 0.0, %v5993
      %5995 = vmatmul.f32.gmra.mxu0 %v5874
      %v5996 = vpop.f32.mrf.mxu0
      %v5997 = vadd.f32 0.0, %v5996
      %5998 = vmatmul.f32.gmra.mxu0 %v5877
      %v5999 = vpop.f32.mrf.mxu0
      %v6000 = vadd.f32 0.0, %v5999
      %6001 = vdwg.mxu0
      %v6002 = vadd.f32 %v5688, %v5897
      %v6003 = vadd.f32 %v5729, %v5938
      %v6004 = vadd.f32 %v5770, %v5979
      %v6005 = vadd.f32 %v5691, %v5900
      %v6006 = vadd.f32 %v5732, %v5941
      %v6007 = vadd.f32 %v5773, %v5982
      %v6008 = vadd.f32 %v5694, %v5903
      %v6009 = vadd.f32 %v5735, %v5944
      %v6010 = vadd.f32 %v5776, %v5985
      %v6011 = vadd.f32 %v5697, %v5906
      %v6012 = vadd.f32 %v5738, %v5947
      %v6013 = vadd.f32 %v5779, %v5988
      %v6014 = vadd.f32 %v5700, %v5909
      %v6015 = vadd.f32 %v5741, %v5950
      %v6016 = vadd.f32 %v5782, %v5991
      %v6017 = vadd.f32 %v5703, %v5912
      %v6018 = vadd.f32 %v5744, %v5953
      %v6019 = vadd.f32 %v5785, %v5994
      %v6020 = vadd.f32 %v5706, %v5915
      %v6021 = vadd.f32 %v5747, %v5956
      %v6022 = vadd.f32 %v5788, %v5997
      %v6023 = vadd.f32 %v5709, %v5918
      %v6024 = vadd.f32 %v5750, %v5959
      %v6025 = vadd.f32 %v5791, %v6000
      %s6026 = scalar_lea.vmem %s5, 192
      %v6027 = vld [vmem:[%s6026] sm:$0xff]
      %v6028 = vld [vmem:[%s6026 + $0x8] sm:$0xff]
      %v6029 = vld [vmem:[%s6026 + $0x10] sm:$0xff]
      %v6030 = vld [vmem:[%s6026 + $0x18] sm:$0xff]
      %v6031 = vld [vmem:[%s6026 + $0x20] sm:$0xff]
      %v6032 = vld [vmem:[%s6026 + $0x28] sm:$0xff]
      %v6033 = vld [vmem:[%s6026 + $0x30] sm:$0xff]
      %v6034 = vld [vmem:[%s6026 + $0x38] sm:$0xff]
      %v6035 = vld [vmem:[#allocation3] sm:$0xff]
      %v6036 = vld [vmem:[#allocation3 + $0x8] sm:$0xff]
      %v6037 = vld [vmem:[#allocation3 + $0x10] sm:$0xff]
      %v6038 = vld [vmem:[#allocation3 + $0x18] sm:$0xff]
      %v6039 = vld [vmem:[#allocation3 + $0x20] sm:$0xff]
      %v6040 = vld [vmem:[#allocation3 + $0x30] sm:$0xff]
      %v6041 = vld [vmem:[#allocation3 + $0x38] sm:$0xff]
      %v6042 = vld [vmem:[#allocation3 + $0x40] sm:$0xff]
      %v6043 = vld [vmem:[#allocation3 + $0x48] sm:$0xff]
      %v6044 = vld [vmem:[#allocation3 + $0x50] sm:$0xff]
      %v6045 = vld [vmem:[#allocation3 + $0x60] sm:$0xff]
      %v6046 = vld [vmem:[#allocation3 + $0x68] sm:$0xff]
      %v6047 = vld [vmem:[#allocation3 + $0x70] sm:$0xff]
      %v6048 = vld [vmem:[#allocation3 + $0x78] sm:$0xff]
      %v6049 = vld [vmem:[#allocation3 + $0x80] sm:$0xff]
      %v6050 = vld [vmem:[#allocation3 + $0x90] sm:$0xff]
      %v6051 = vld [vmem:[#allocation3 + $0x98] sm:$0xff]
      %v6052 = vld [vmem:[#allocation3 + $0xa0] sm:$0xff]
      %v6053 = vld [vmem:[#allocation3 + $0xa8] sm:$0xff]
      %v6054 = vld [vmem:[#allocation3 + $0xb0] sm:$0xff]
      %6075 = vrot.lane.b32.xlu0 %v6035, 16
      %v6076 = vpop.permute.xlu0 %6075
      %6077 = vrot.lane.b32.xlu0 %v6036, 16
      %v6078 = vpop.permute.xlu0 %6077
      %6079 = vrot.lane.b32.xlu0 %v6037, 16
      %v6080 = vpop.permute.xlu0 %6079
      %6081 = vrot.lane.b32.xlu0 %v6038, 16
      %v6082 = vpop.permute.xlu0 %6081
      %6083 = vrot.lane.b32.xlu0 %v6039, 16
      %v6084 = vpop.permute.xlu0 %6083
      %6085 = vrot.lane.b32.xlu0 %v6040, 16
      %v6086 = vpop.permute.xlu0 %6085
      %6087 = vrot.lane.b32.xlu0 %v6041, 16
      %v6088 = vpop.permute.xlu0 %6087
      %6089 = vrot.lane.b32.xlu0 %v6042, 16
      %v6090 = vpop.permute.xlu0 %6089
      %6091 = vrot.lane.b32.xlu0 %v6043, 16
      %v6092 = vpop.permute.xlu0 %6091
      %6093 = vrot.lane.b32.xlu0 %v6044, 16
      %v6094 = vpop.permute.xlu0 %6093
      %6095 = vrot.lane.b32.xlu0 %v6045, 16
      %v6096 = vpop.permute.xlu0 %6095
      %6097 = vrot.lane.b32.xlu0 %v6046, 16
      %v6098 = vpop.permute.xlu0 %6097
      %6099 = vrot.lane.b32.xlu0 %v6047, 16
      %v6100 = vpop.permute.xlu0 %6099
      %6101 = vrot.lane.b32.xlu0 %v6048, 16
      %v6102 = vpop.permute.xlu0 %6101
      %6103 = vrot.lane.b32.xlu0 %v6049, 16
      %v6104 = vpop.permute.xlu0 %6103
      %6105 = vrot.lane.b32.xlu0 %v6050, 16
      %v6106 = vpop.permute.xlu0 %6105
      %6107 = vrot.lane.b32.xlu0 %v6051, 16
      %v6108 = vpop.permute.xlu0 %6107
      %6109 = vrot.lane.b32.xlu0 %v6052, 16
      %v6110 = vpop.permute.xlu0 %6109
      %6111 = vrot.lane.b32.xlu0 %v6053, 16
      %v6112 = vpop.permute.xlu0 %6111
      %6113 = vrot.lane.b32.xlu0 %v6054, 16
      %v6114 = vpop.permute.xlu0 %6113
      %v6115 = vsel %vm2229, %v6076, %v6078
      %v6116 = vsel %vm2229, %v6078, %v6080
      %v6117 = vsel %vm2229, %v6082, %v6084
      %v6118 = vsel %vm2229, %v6086, %v6088
      %v6119 = vsel %vm2229, %v6088, %v6090
      %v6120 = vsel %vm2229, %v6092, %v6094
      %v6121 = vsel %vm2229, %v6096, %v6098
      %v6122 = vsel %vm2229, %v6098, %v6100
      %v6123 = vsel %vm2229, %v6102, %v6104
      %v6124 = vsel %vm2229, %v6106, %v6108
      %v6125 = vsel %vm2229, %v6108, %v6110
      %v6126 = vsel %vm2229, %v6112, %v6114
      %v6140 = vsel %vm5498, %v6027, 0
      %v6143 = vsel %vm5498, %v6028, 0
      %v6146 = vsel %vm5498, %v6029, 0
      %v6149 = vsel %vm5498, %v6030, 0
      %v6152 = vsel %vm5498, %v6031, 0
      %v6155 = vsel %vm5498, %v6032, 0
      %v6158 = vsel %vm5498, %v6033, 0
      %v6161 = vsel %vm5498, %v6034, 0
      %6163 = vmatpush.msra.mxu0 0.0
      %6164 = vmatpush.msra.mxu0 0.0
      %6165 = vmatpush.msra.mxu0 0.0
      %6166 = vmatpush.msra.mxu0 0.0
      %6167 = vmatpush.msra.mxu0 0.0
      %6168 = vmatpush.msra.mxu0 0.0
      %6169 = vmatpush.msra.mxu0 0.0
      %6170 = vmatpush.msra.mxu0 0.0
      %6171 = vmatpush.msra.mxu0 0.0
      %6172 = vmatpush.msra.mxu0 0.0
      %6173 = vmatpush.msra.mxu0 0.0
      %6174 = vmatpush.msra.mxu0 0.0
      %6175 = vmatpush.msra.mxu0 %v6124
      %6176 = vmatpush.msra.mxu0 %v6121
      %6177 = vmatpush.msra.mxu0 %v6118
      %6178 = vmatpush.msra.mxu0 %v6115
      %6179 = vmatmul.f32.gmra.mxu0 %v6140
      %v6180 = vpop.f32.mrf.mxu0
      %v6181 = vadd.f32 0.0, %v6180
      %6182 = vmatmul.f32.gmra.mxu0 %v6143
      %v6183 = vpop.f32.mrf.mxu0
      %v6184 = vadd.f32 0.0, %v6183
      %6185 = vmatmul.f32.gmra.mxu0 %v6146
      %v6186 = vpop.f32.mrf.mxu0
      %v6187 = vadd.f32 0.0, %v6186
      %6188 = vmatmul.f32.gmra.mxu0 %v6149
      %v6189 = vpop.f32.mrf.mxu0
      %v6190 = vadd.f32 0.0, %v6189
      %6191 = vmatmul.f32.gmra.mxu0 %v6152
      %v6192 = vpop.f32.mrf.mxu0
      %v6193 = vadd.f32 0.0, %v6192
      %6194 = vmatmul.f32.gmra.mxu0 %v6155
      %v6195 = vpop.f32.mrf.mxu0
      %v6196 = vadd.f32 0.0, %v6195
      %6197 = vmatmul.f32.gmra.mxu0 %v6158
      %v6198 = vpop.f32.mrf.mxu0
      %v6199 = vadd.f32 0.0, %v6198
      %6200 = vmatmul.f32.gmra.mxu0 %v6161
      %v6201 = vpop.f32.mrf.mxu0
      %v6202 = vadd.f32 0.0, %v6201
      %6203 = vdwg.mxu0
      %6204 = vmatpush.msra.mxu0 0.0
      %6205 = vmatpush.msra.mxu0 0.0
      %6206 = vmatpush.msra.mxu0 0.0
      %6207 = vmatpush.msra.mxu0 0.0
      %6208 = vmatpush.msra.mxu0 0.0
      %6209 = vmatpush.msra.mxu0 0.0
      %6210 = vmatpush.msra.mxu0 0.0
      %6211 = vmatpush.msra.mxu0 0.0
      %6212 = vmatpush.msra.mxu0 0.0
      %6213 = vmatpush.msra.mxu0 0.0
      %6214 = vmatpush.msra.mxu0 0.0
      %6215 = vmatpush.msra.mxu0 0.0
      %6216 = vmatpush.msra.mxu0 %v6125
      %6217 = vmatpush.msra.mxu0 %v6122
      %6218 = vmatpush.msra.mxu0 %v6119
      %6219 = vmatpush.msra.mxu0 %v6116
      %6220 = vmatmul.f32.gmra.mxu0 %v6140
      %v6221 = vpop.f32.mrf.mxu0
      %v6222 = vadd.f32 0.0, %v6221
      %6223 = vmatmul.f32.gmra.mxu0 %v6143
      %v6224 = vpop.f32.mrf.mxu0
      %v6225 = vadd.f32 0.0, %v6224
      %6226 = vmatmul.f32.gmra.mxu0 %v6146
      %v6227 = vpop.f32.mrf.mxu0
      %v6228 = vadd.f32 0.0, %v6227
      %6229 = vmatmul.f32.gmra.mxu0 %v6149
      %v6230 = vpop.f32.mrf.mxu0
      %v6231 = vadd.f32 0.0, %v6230
      %6232 = vmatmul.f32.gmra.mxu0 %v6152
      %v6233 = vpop.f32.mrf.mxu0
      %v6234 = vadd.f32 0.0, %v6233
      %6235 = vmatmul.f32.gmra.mxu0 %v6155
      %v6236 = vpop.f32.mrf.mxu0
      %v6237 = vadd.f32 0.0, %v6236
      %6238 = vmatmul.f32.gmra.mxu0 %v6158
      %v6239 = vpop.f32.mrf.mxu0
      %v6240 = vadd.f32 0.0, %v6239
      %6241 = vmatmul.f32.gmra.mxu0 %v6161
      %v6242 = vpop.f32.mrf.mxu0
      %v6243 = vadd.f32 0.0, %v6242
      %6244 = vdwg.mxu0
      %6245 = vmatpush.msra.mxu0 0.0
      %6246 = vmatpush.msra.mxu0 0.0
      %6247 = vmatpush.msra.mxu0 0.0
      %6248 = vmatpush.msra.mxu0 0.0
      %6249 = vmatpush.msra.mxu0 0.0
      %6250 = vmatpush.msra.mxu0 0.0
      %6251 = vmatpush.msra.mxu0 0.0
      %6252 = vmatpush.msra.mxu0 0.0
      %6253 = vmatpush.msra.mxu0 0.0
      %6254 = vmatpush.msra.mxu0 0.0
      %6255 = vmatpush.msra.mxu0 0.0
      %6256 = vmatpush.msra.mxu0 0.0
      %6257 = vmatpush.msra.mxu0 %v6126
      %6258 = vmatpush.msra.mxu0 %v6123
      %6259 = vmatpush.msra.mxu0 %v6120
      %6260 = vmatpush.msra.mxu0 %v6117
      %6261 = vmatmul.f32.gmra.mxu0 %v6140
      %v6262 = vpop.f32.mrf.mxu0
      %v6263 = vadd.f32 0.0, %v6262
      %6264 = vmatmul.f32.gmra.mxu0 %v6143
      %v6265 = vpop.f32.mrf.mxu0
      %v6266 = vadd.f32 0.0, %v6265
      %6267 = vmatmul.f32.gmra.mxu0 %v6146
      %v6268 = vpop.f32.mrf.mxu0
      %v6269 = vadd.f32 0.0, %v6268
      %6270 = vmatmul.f32.gmra.mxu0 %v6149
      %v6271 = vpop.f32.mrf.mxu0
      %v6272 = vadd.f32 0.0, %v6271
      %6273 = vmatmul.f32.gmra.mxu0 %v6152
      %v6274 = vpop.f32.mrf.mxu0
      %v6275 = vadd.f32 0.0, %v6274
      %6276 = vmatmul.f32.gmra.mxu0 %v6155
      %v6277 = vpop.f32.mrf.mxu0
      %v6278 = vadd.f32 0.0, %v6277
      %6279 = vmatmul.f32.gmra.mxu0 %v6158
      %v6280 = vpop.f32.mrf.mxu0
      %v6281 = vadd.f32 0.0, %v6280
      %6282 = vmatmul.f32.gmra.mxu0 %v6161
      %v6283 = vpop.f32.mrf.mxu0
      %v6284 = vadd.f32 0.0, %v6283
      %6285 = vdwg.mxu0
      %v6286 = vadd.f32 %v6002, %v6181
      %v6287 = vadd.f32 %v6003, %v6222
      %v6288 = vadd.f32 %v6004, %v6263
      %v6289 = vadd.f32 %v6005, %v6184
      %v6290 = vadd.f32 %v6006, %v6225
      %v6291 = vadd.f32 %v6007, %v6266
      %v6292 = vadd.f32 %v6008, %v6187
      %v6293 = vadd.f32 %v6009, %v6228
      %v6294 = vadd.f32 %v6010, %v6269
      %v6295 = vadd.f32 %v6011, %v6190
      %v6296 = vadd.f32 %v6012, %v6231
      %v6297 = vadd.f32 %v6013, %v6272
      %v6298 = vadd.f32 %v6014, %v6193
      %v6299 = vadd.f32 %v6015, %v6234
      %v6300 = vadd.f32 %v6016, %v6275
      %v6301 = vadd.f32 %v6017, %v6196
      %v6302 = vadd.f32 %v6018, %v6237
      %v6303 = vadd.f32 %v6019, %v6278
      %v6304 = vadd.f32 %v6020, %v6199
      %v6305 = vadd.f32 %v6021, %v6240
      %v6306 = vadd.f32 %v6022, %v6281
      %v6307 = vadd.f32 %v6023, %v6202
      %v6308 = vadd.f32 %v6024, %v6243
      %v6309 = vadd.f32 %v6025, %v6284
      %s6310 = scalar_lea.vmem %s5, 256
      %v6311 = vld [vmem:[%s6310] sm:$0xff]
      %v6312 = vld [vmem:[%s6310 + $0x8] sm:$0xff]
      %v6313 = vld [vmem:[%s6310 + $0x10] sm:$0xff]
      %v6314 = vld [vmem:[%s6310 + $0x18] sm:$0xff]
      %v6315 = vld [vmem:[%s6310 + $0x20] sm:$0xff]
      %v6316 = vld [vmem:[%s6310 + $0x28] sm:$0xff]
      %v6317 = vld [vmem:[%s6310 + $0x30] sm:$0xff]
      %v6318 = vld [vmem:[%s6310 + $0x38] sm:$0xff]
      %6319 = vrot.lane.b32.xlu0 %v6035, 12
      %v6320 = vpop.permute.xlu0 %6319
      %6321 = vrot.lane.b32.xlu0 %v6036, 12
      %v6322 = vpop.permute.xlu0 %6321
      %6323 = vrot.lane.b32.xlu0 %v6037, 12
      %v6324 = vpop.permute.xlu0 %6323
      %6325 = vrot.lane.b32.xlu0 %v6038, 12
      %v6326 = vpop.permute.xlu0 %6325
      %6327 = vrot.lane.b32.xlu0 %v6039, 12
      %v6328 = vpop.permute.xlu0 %6327
      %6329 = vrot.lane.b32.xlu0 %v6040, 12
      %v6330 = vpop.permute.xlu0 %6329
      %6331 = vrot.lane.b32.xlu0 %v6041, 12
      %v6332 = vpop.permute.xlu0 %6331
      %6333 = vrot.lane.b32.xlu0 %v6042, 12
      %v6334 = vpop.permute.xlu0 %6333
      %6335 = vrot.lane.b32.xlu0 %v6043, 12
      %v6336 = vpop.permute.xlu0 %6335
      %6337 = vrot.lane.b32.xlu0 %v6044, 12
      %v6338 = vpop.permute.xlu0 %6337
      %6339 = vrot.lane.b32.xlu0 %v6045, 12
      %v6340 = vpop.permute.xlu0 %6339
      %6341 = vrot.lane.b32.xlu0 %v6046, 12
      %v6342 = vpop.permute.xlu0 %6341
      %6343 = vrot.lane.b32.xlu0 %v6047, 12
      %v6344 = vpop.permute.xlu0 %6343
      %6345 = vrot.lane.b32.xlu0 %v6048, 12
      %v6346 = vpop.permute.xlu0 %6345
      %6347 = vrot.lane.b32.xlu0 %v6049, 12
      %v6348 = vpop.permute.xlu0 %6347
      %6349 = vrot.lane.b32.xlu0 %v6050, 12
      %v6350 = vpop.permute.xlu0 %6349
      %6351 = vrot.lane.b32.xlu0 %v6051, 12
      %v6352 = vpop.permute.xlu0 %6351
      %6353 = vrot.lane.b32.xlu0 %v6052, 12
      %v6354 = vpop.permute.xlu0 %6353
      %6355 = vrot.lane.b32.xlu0 %v6053, 12
      %v6356 = vpop.permute.xlu0 %6355
      %6357 = vrot.lane.b32.xlu0 %v6054, 12
      %v6358 = vpop.permute.xlu0 %6357
      %v6359 = vsel %vm2633, %v6320, %v6322
      %v6360 = vsel %vm2633, %v6322, %v6324
      %v6361 = vsel %vm2633, %v6326, %v6328
      %v6362 = vsel %vm2633, %v6330, %v6332
      %v6363 = vsel %vm2633, %v6332, %v6334
      %v6364 = vsel %vm2633, %v6336, %v6338
      %v6365 = vsel %vm2633, %v6340, %v6342
      %v6366 = vsel %vm2633, %v6342, %v6344
      %v6367 = vsel %vm2633, %v6346, %v6348
      %v6368 = vsel %vm2633, %v6350, %v6352
      %v6369 = vsel %vm2633, %v6352, %v6354
      %v6370 = vsel %vm2633, %v6356, %v6358
      %v6384 = vsel %vm5498, %v6311, 0
      %v6387 = vsel %vm5498, %v6312, 0
      %v6390 = vsel %vm5498, %v6313, 0
      %v6393 = vsel %vm5498, %v6314, 0
      %v6396 = vsel %vm5498, %v6315, 0
      %v6399 = vsel %vm5498, %v6316, 0
      %v6402 = vsel %vm5498, %v6317, 0
      %v6405 = vsel %vm5498, %v6318, 0
      %6407 = vmatpush.msra.mxu0 0.0
      %6408 = vmatpush.msra.mxu0 0.0
      %6409 = vmatpush.msra.mxu0 0.0
      %6410 = vmatpush.msra.mxu0 0.0
      %6411 = vmatpush.msra.mxu0 0.0
      %6412 = vmatpush.msra.mxu0 0.0
      %6413 = vmatpush.msra.mxu0 0.0
      %6414 = vmatpush.msra.mxu0 0.0
      %6415 = vmatpush.msra.mxu0 0.0
      %6416 = vmatpush.msra.mxu0 0.0
      %6417 = vmatpush.msra.mxu0 0.0
      %6418 = vmatpush.msra.mxu0 0.0
      %6419 = vmatpush.msra.mxu0 %v6368
      %6420 = vmatpush.msra.mxu0 %v6365
      %6421 = vmatpush.msra.mxu0 %v6362
      %6422 = vmatpush.msra.mxu0 %v6359
      %6423 = vmatmul.f32.gmra.mxu0 %v6384
      %v6424 = vpop.f32.mrf.mxu0
      %v6425 = vadd.f32 0.0, %v6424
      %6426 = vmatmul.f32.gmra.mxu0 %v6387
      %v6427 = vpop.f32.mrf.mxu0
      %v6428 = vadd.f32 0.0, %v6427
      %6429 = vmatmul.f32.gmra.mxu0 %v6390
      %v6430 = vpop.f32.mrf.mxu0
      %v6431 = vadd.f32 0.0, %v6430
      %6432 = vmatmul.f32.gmra.mxu0 %v6393
      %v6433 = vpop.f32.mrf.mxu0
      %v6434 = vadd.f32 0.0, %v6433
      %6435 = vmatmul.f32.gmra.mxu0 %v6396
      %v6436 = vpop.f32.mrf.mxu0
      %v6437 = vadd.f32 0.0, %v6436
      %6438 = vmatmul.f32.gmra.mxu0 %v6399
      %v6439 = vpop.f32.mrf.mxu0
      %v6440 = vadd.f32 0.0, %v6439
      %6441 = vmatmul.f32.gmra.mxu0 %v6402
      %v6442 = vpop.f32.mrf.mxu0
      %v6443 = vadd.f32 0.0, %v6442
      %6444 = vmatmul.f32.gmra.mxu0 %v6405
      %v6445 = vpop.f32.mrf.mxu0
      %v6446 = vadd.f32 0.0, %v6445
      %6447 = vdwg.mxu0
      %6448 = vmatpush.msra.mxu0 0.0
      %6449 = vmatpush.msra.mxu0 0.0
      %6450 = vmatpush.msra.mxu0 0.0
      %6451 = vmatpush.msra.mxu0 0.0
      %6452 = vmatpush.msra.mxu0 0.0
      %6453 = vmatpush.msra.mxu0 0.0
      %6454 = vmatpush.msra.mxu0 0.0
      %6455 = vmatpush.msra.mxu0 0.0
      %6456 = vmatpush.msra.mxu0 0.0
      %6457 = vmatpush.msra.mxu0 0.0
      %6458 = vmatpush.msra.mxu0 0.0
      %6459 = vmatpush.msra.mxu0 0.0
      %6460 = vmatpush.msra.mxu0 %v6369
      %6461 = vmatpush.msra.mxu0 %v6366
      %6462 = vmatpush.msra.mxu0 %v6363
      %6463 = vmatpush.msra.mxu0 %v6360
      %6464 = vmatmul.f32.gmra.mxu0 %v6384
      %v6465 = vpop.f32.mrf.mxu0
      %v6466 = vadd.f32 0.0, %v6465
      %6467 = vmatmul.f32.gmra.mxu0 %v6387
      %v6468 = vpop.f32.mrf.mxu0
      %v6469 = vadd.f32 0.0, %v6468
      %6470 = vmatmul.f32.gmra.mxu0 %v6390
      %v6471 = vpop.f32.mrf.mxu0
      %v6472 = vadd.f32 0.0, %v6471
      %6473 = vmatmul.f32.gmra.mxu0 %v6393
      %v6474 = vpop.f32.mrf.mxu0
      %v6475 = vadd.f32 0.0, %v6474
      %6476 = vmatmul.f32.gmra.mxu0 %v6396
      %v6477 = vpop.f32.mrf.mxu0
      %v6478 = vadd.f32 0.0, %v6477
      %6479 = vmatmul.f32.gmra.mxu0 %v6399
      %v6480 = vpop.f32.mrf.mxu0
      %v6481 = vadd.f32 0.0, %v6480
      %6482 = vmatmul.f32.gmra.mxu0 %v6402
      %v6483 = vpop.f32.mrf.mxu0
      %v6484 = vadd.f32 0.0, %v6483
      %6485 = vmatmul.f32.gmra.mxu0 %v6405
      %v6486 = vpop.f32.mrf.mxu0
      %v6487 = vadd.f32 0.0, %v6486
      %6488 = vdwg.mxu0
      %6489 = vmatpush.msra.mxu0 0.0
      %6490 = vmatpush.msra.mxu0 0.0
      %6491 = vmatpush.msra.mxu0 0.0
      %6492 = vmatpush.msra.mxu0 0.0
      %6493 = vmatpush.msra.mxu0 0.0
      %6494 = vmatpush.msra.mxu0 0.0
      %6495 = vmatpush.msra.mxu0 0.0
      %6496 = vmatpush.msra.mxu0 0.0
      %6497 = vmatpush.msra.mxu0 0.0
      %6498 = vmatpush.msra.mxu0 0.0
      %6499 = vmatpush.msra.mxu0 0.0
      %6500 = vmatpush.msra.mxu0 0.0
      %6501 = vmatpush.msra.mxu0 %v6370
      %6502 = vmatpush.msra.mxu0 %v6367
      %6503 = vmatpush.msra.mxu0 %v6364
      %6504 = vmatpush.msra.mxu0 %v6361
      %6505 = vmatmul.f32.gmra.mxu0 %v6384
      %v6506 = vpop.f32.mrf.mxu0
      %v6507 = vadd.f32 0.0, %v6506
      %6508 = vmatmul.f32.gmra.mxu0 %v6387
      %v6509 = vpop.f32.mrf.mxu0
      %v6510 = vadd.f32 0.0, %v6509
      %6511 = vmatmul.f32.gmra.mxu0 %v6390
      %v6512 = vpop.f32.mrf.mxu0
      %v6513 = vadd.f32 0.0, %v6512
      %6514 = vmatmul.f32.gmra.mxu0 %v6393
      %v6515 = vpop.f32.mrf.mxu0
      %v6516 = vadd.f32 0.0, %v6515
      %6517 = vmatmul.f32.gmra.mxu0 %v6396
      %v6518 = vpop.f32.mrf.mxu0
      %v6519 = vadd.f32 0.0, %v6518
      %6520 = vmatmul.f32.gmra.mxu0 %v6399
      %v6521 = vpop.f32.mrf.mxu0
      %v6522 = vadd.f32 0.0, %v6521
      %6523 = vmatmul.f32.gmra.mxu0 %v6402
      %v6524 = vpop.f32.mrf.mxu0
      %v6525 = vadd.f32 0.0, %v6524
      %6526 = vmatmul.f32.gmra.mxu0 %v6405
      %v6527 = vpop.f32.mrf.mxu0
      %v6528 = vadd.f32 0.0, %v6527
      %6529 = vdwg.mxu0
      %v6530 = vadd.f32 %v6286, %v6425
      %v6531 = vadd.f32 %v6287, %v6466
      %v6532 = vadd.f32 %v6288, %v6507
      %v6533 = vadd.f32 %v6289, %v6428
      %v6534 = vadd.f32 %v6290, %v6469
      %v6535 = vadd.f32 %v6291, %v6510
      %v6536 = vadd.f32 %v6292, %v6431
      %v6537 = vadd.f32 %v6293, %v6472
      %v6538 = vadd.f32 %v6294, %v6513
      %v6539 = vadd.f32 %v6295, %v6434
      %v6540 = vadd.f32 %v6296, %v6475
      %v6541 = vadd.f32 %v6297, %v6516
      %v6542 = vadd.f32 %v6298, %v6437
      %v6543 = vadd.f32 %v6299, %v6478
      %v6544 = vadd.f32 %v6300, %v6519
      %v6545 = vadd.f32 %v6301, %v6440
      %v6546 = vadd.f32 %v6302, %v6481
      %v6547 = vadd.f32 %v6303, %v6522
      %v6548 = vadd.f32 %v6304, %v6443
      %v6549 = vadd.f32 %v6305, %v6484
      %v6550 = vadd.f32 %v6306, %v6525
      %v6551 = vadd.f32 %v6307, %v6446
      %v6552 = vadd.f32 %v6308, %v6487
      %v6553 = vadd.f32 %v6309, %v6528
      %s6554 = scalar_lea.vmem %s5, 320
      %v6555 = vld [vmem:[%s6554] sm:$0xff]
      %v6556 = vld [vmem:[%s6554 + $0x8] sm:$0xff]
      %v6557 = vld [vmem:[%s6554 + $0x10] sm:$0xff]
      %v6558 = vld [vmem:[%s6554 + $0x18] sm:$0xff]
      %v6559 = vld [vmem:[%s6554 + $0x20] sm:$0xff]
      %v6560 = vld [vmem:[%s6554 + $0x28] sm:$0xff]
      %v6561 = vld [vmem:[%s6554 + $0x30] sm:$0xff]
      %v6562 = vld [vmem:[%s6554 + $0x38] sm:$0xff]
      %6563 = vrot.lane.b32.xlu0 %v6035, 8
      %v6564 = vpop.permute.xlu0 %6563
      %6565 = vrot.lane.b32.xlu0 %v6036, 8
      %v6566 = vpop.permute.xlu0 %6565
      %6567 = vrot.lane.b32.xlu0 %v6037, 8
      %v6568 = vpop.permute.xlu0 %6567
      %6569 = vrot.lane.b32.xlu0 %v6038, 8
      %v6570 = vpop.permute.xlu0 %6569
      %6571 = vrot.lane.b32.xlu0 %v6039, 8
      %v6572 = vpop.permute.xlu0 %6571
      %6573 = vrot.lane.b32.xlu0 %v6040, 8
      %v6574 = vpop.permute.xlu0 %6573
      %6575 = vrot.lane.b32.xlu0 %v6041, 8
      %v6576 = vpop.permute.xlu0 %6575
      %6577 = vrot.lane.b32.xlu0 %v6042, 8
      %v6578 = vpop.permute.xlu0 %6577
      %6579 = vrot.lane.b32.xlu0 %v6043, 8
      %v6580 = vpop.permute.xlu0 %6579
      %6581 = vrot.lane.b32.xlu0 %v6044, 8
      %v6582 = vpop.permute.xlu0 %6581
      %6583 = vrot.lane.b32.xlu0 %v6045, 8
      %v6584 = vpop.permute.xlu0 %6583
      %6585 = vrot.lane.b32.xlu0 %v6046, 8
      %v6586 = vpop.permute.xlu0 %6585
      %6587 = vrot.lane.b32.xlu0 %v6047, 8
      %v6588 = vpop.permute.xlu0 %6587
      %6589 = vrot.lane.b32.xlu0 %v6048, 8
      %v6590 = vpop.permute.xlu0 %6589
      %6591 = vrot.lane.b32.xlu0 %v6049, 8
      %v6592 = vpop.permute.xlu0 %6591
      %6593 = vrot.lane.b32.xlu0 %v6050, 8
      %v6594 = vpop.permute.xlu0 %6593
      %6595 = vrot.lane.b32.xlu0 %v6051, 8
      %v6596 = vpop.permute.xlu0 %6595
      %6597 = vrot.lane.b32.xlu0 %v6052, 8
      %v6598 = vpop.permute.xlu0 %6597
      %6599 = vrot.lane.b32.xlu0 %v6053, 8
      %v6600 = vpop.permute.xlu0 %6599
      %6601 = vrot.lane.b32.xlu0 %v6054, 8
      %v6602 = vpop.permute.xlu0 %6601
      %vm6603 = vcmask 64512
      %v6604 = vsel %vm6603, %v6564, %v6566
      %v6605 = vsel %vm6603, %v6566, %v6568
      %v6606 = vsel %vm6603, %v6570, %v6572
      %v6607 = vsel %vm6603, %v6574, %v6576
      %v6608 = vsel %vm6603, %v6576, %v6578
      %v6609 = vsel %vm6603, %v6580, %v6582
      %v6610 = vsel %vm6603, %v6584, %v6586
      %v6611 = vsel %vm6603, %v6586, %v6588
      %v6612 = vsel %vm6603, %v6590, %v6592
      %v6613 = vsel %vm6603, %v6594, %v6596
      %v6614 = vsel %vm6603, %v6596, %v6598
      %v6615 = vsel %vm6603, %v6600, %v6602
      %v6629 = vsel %vm5498, %v6555, 0
      %v6632 = vsel %vm5498, %v6556, 0
      %v6635 = vsel %vm5498, %v6557, 0
      %v6638 = vsel %vm5498, %v6558, 0
      %v6641 = vsel %vm5498, %v6559, 0
      %v6644 = vsel %vm5498, %v6560, 0
      %v6647 = vsel %vm5498, %v6561, 0
      %v6650 = vsel %vm5498, %v6562, 0
      %6652 = vmatpush.msra.mxu0 0.0
      %6653 = vmatpush.msra.mxu0 0.0
      %6654 = vmatpush.msra.mxu0 0.0
      %6655 = vmatpush.msra.mxu0 0.0
      %6656 = vmatpush.msra.mxu0 0.0
      %6657 = vmatpush.msra.mxu0 0.0
      %6658 = vmatpush.msra.mxu0 0.0
      %6659 = vmatpush.msra.mxu0 0.0
      %6660 = vmatpush.msra.mxu0 0.0
      %6661 = vmatpush.msra.mxu0 0.0
      %6662 = vmatpush.msra.mxu0 0.0
      %6663 = vmatpush.msra.mxu0 0.0
      %6664 = vmatpush.msra.mxu0 %v6613
      %6665 = vmatpush.msra.mxu0 %v6610
      %6666 = vmatpush.msra.mxu0 %v6607
      %6667 = vmatpush.msra.mxu0 %v6604
      %6668 = vmatmul.f32.gmra.mxu0 %v6629
      %v6669 = vpop.f32.mrf.mxu0
      %v6670 = vadd.f32 0.0, %v6669
      %6671 = vmatmul.f32.gmra.mxu0 %v6632
      %v6672 = vpop.f32.mrf.mxu0
      %v6673 = vadd.f32 0.0, %v6672
      %6674 = vmatmul.f32.gmra.mxu0 %v6635
      %v6675 = vpop.f32.mrf.mxu0
      %v6676 = vadd.f32 0.0, %v6675
      %6677 = vmatmul.f32.gmra.mxu0 %v6638
      %v6678 = vpop.f32.mrf.mxu0
      %v6679 = vadd.f32 0.0, %v6678
      %6680 = vmatmul.f32.gmra.mxu0 %v6641
      %v6681 = vpop.f32.mrf.mxu0
      %v6682 = vadd.f32 0.0, %v6681
      %6683 = vmatmul.f32.gmra.mxu0 %v6644
      %v6684 = vpop.f32.mrf.mxu0
      %v6685 = vadd.f32 0.0, %v6684
      %6686 = vmatmul.f32.gmra.mxu0 %v6647
      %v6687 = vpop.f32.mrf.mxu0
      %v6688 = vadd.f32 0.0, %v6687
      %6689 = vmatmul.f32.gmra.mxu0 %v6650
      %v6690 = vpop.f32.mrf.mxu0
      %v6691 = vadd.f32 0.0, %v6690
      %6692 = vdwg.mxu0
      %6693 = vmatpush.msra.mxu0 0.0
      %6694 = vmatpush.msra.mxu0 0.0
      %6695 = vmatpush.msra.mxu0 0.0
      %6696 = vmatpush.msra.mxu0 0.0
      %6697 = vmatpush.msra.mxu0 0.0
      %6698 = vmatpush.msra.mxu0 0.0
      %6699 = vmatpush.msra.mxu0 0.0
      %6700 = vmatpush.msra.mxu0 0.0
      %6701 = vmatpush.msra.mxu0 0.0
      %6702 = vmatpush.msra.mxu0 0.0
      %6703 = vmatpush.msra.mxu0 0.0
      %6704 = vmatpush.msra.mxu0 0.0
      %6705 = vmatpush.msra.mxu0 %v6614
      %6706 = vmatpush.msra.mxu0 %v6611
      %6707 = vmatpush.msra.mxu0 %v6608
      %6708 = vmatpush.msra.mxu0 %v6605
      %6709 = vmatmul.f32.gmra.mxu0 %v6629
      %v6710 = vpop.f32.mrf.mxu0
      %v6711 = vadd.f32 0.0, %v6710
      %6712 = vmatmul.f32.gmra.mxu0 %v6632
      %v6713 = vpop.f32.mrf.mxu0
      %v6714 = vadd.f32 0.0, %v6713
      %6715 = vmatmul.f32.gmra.mxu0 %v6635
      %v6716 = vpop.f32.mrf.mxu0
      %v6717 = vadd.f32 0.0, %v6716
      %6718 = vmatmul.f32.gmra.mxu0 %v6638
      %v6719 = vpop.f32.mrf.mxu0
      %v6720 = vadd.f32 0.0, %v6719
      %6721 = vmatmul.f32.gmra.mxu0 %v6641
      %v6722 = vpop.f32.mrf.mxu0
      %v6723 = vadd.f32 0.0, %v6722
      %6724 = vmatmul.f32.gmra.mxu0 %v6644
      %v6725 = vpop.f32.mrf.mxu0
      %v6726 = vadd.f32 0.0, %v6725
      %6727 = vmatmul.f32.gmra.mxu0 %v6647
      %v6728 = vpop.f32.mrf.mxu0
      %v6729 = vadd.f32 0.0, %v6728
      %6730 = vmatmul.f32.gmra.mxu0 %v6650
      %v6731 = vpop.f32.mrf.mxu0
      %v6732 = vadd.f32 0.0, %v6731
      %6733 = vdwg.mxu0
      %6734 = vmatpush.msra.mxu0 0.0
      %6735 = vmatpush.msra.mxu0 0.0
      %6736 = vmatpush.msra.mxu0 0.0
      %6737 = vmatpush.msra.mxu0 0.0
      %6738 = vmatpush.msra.mxu0 0.0
      %6739 = vmatpush.msra.mxu0 0.0
      %6740 = vmatpush.msra.mxu0 0.0
      %6741 = vmatpush.msra.mxu0 0.0
      %6742 = vmatpush.msra.mxu0 0.0
      %6743 = vmatpush.msra.mxu0 0.0
      %6744 = vmatpush.msra.mxu0 0.0
      %6745 = vmatpush.msra.mxu0 0.0
      %6746 = vmatpush.msra.mxu0 %v6615
      %6747 = vmatpush.msra.mxu0 %v6612
      %6748 = vmatpush.msra.mxu0 %v6609
      %6749 = vmatpush.msra.mxu0 %v6606
      %6750 = vmatmul.f32.gmra.mxu0 %v6629
      %v6751 = vpop.f32.mrf.mxu0
      %v6752 = vadd.f32 0.0, %v6751
      %6753 = vmatmul.f32.gmra.mxu0 %v6632
      %v6754 = vpop.f32.mrf.mxu0
      %v6755 = vadd.f32 0.0, %v6754
      %6756 = vmatmul.f32.gmra.mxu0 %v6635
      %v6757 = vpop.f32.mrf.mxu0
      %v6758 = vadd.f32 0.0, %v6757
      %6759 = vmatmul.f32.gmra.mxu0 %v6638
      %v6760 = vpop.f32.mrf.mxu0
      %v6761 = vadd.f32 0.0, %v6760
      %6762 = vmatmul.f32.gmra.mxu0 %v6641
      %v6763 = vpop.f32.mrf.mxu0
      %v6764 = vadd.f32 0.0, %v6763
      %6765 = vmatmul.f32.gmra.mxu0 %v6644
      %v6766 = vpop.f32.mrf.mxu0
      %v6767 = vadd.f32 0.0, %v6766
      %6768 = vmatmul.f32.gmra.mxu0 %v6647
      %v6769 = vpop.f32.mrf.mxu0
      %v6770 = vadd.f32 0.0, %v6769
      %6771 = vmatmul.f32.gmra.mxu0 %v6650
      %v6772 = vpop.f32.mrf.mxu0
      %v6773 = vadd.f32 0.0, %v6772
      %6774 = vdwg.mxu0
      %v6775 = vadd.f32 %v6530, %v6670
      %v6776 = vadd.f32 %v6531, %v6711
      %v6777 = vadd.f32 %v6532, %v6752
      %v6778 = vadd.f32 %v6533, %v6673
      %v6779 = vadd.f32 %v6534, %v6714
      %v6780 = vadd.f32 %v6535, %v6755
      %v6781 = vadd.f32 %v6536, %v6676
      %v6782 = vadd.f32 %v6537, %v6717
      %v6783 = vadd.f32 %v6538, %v6758
      %v6784 = vadd.f32 %v6539, %v6679
      %v6785 = vadd.f32 %v6540, %v6720
      %v6786 = vadd.f32 %v6541, %v6761
      %v6787 = vadd.f32 %v6542, %v6682
      %v6788 = vadd.f32 %v6543, %v6723
      %v6789 = vadd.f32 %v6544, %v6764
      %v6790 = vadd.f32 %v6545, %v6685
      %v6791 = vadd.f32 %v6546, %v6726
      %v6792 = vadd.f32 %v6547, %v6767
      %v6793 = vadd.f32 %v6548, %v6688
      %v6794 = vadd.f32 %v6549, %v6729
      %v6795 = vadd.f32 %v6550, %v6770
      %v6796 = vadd.f32 %v6551, %v6691
      %v6797 = vadd.f32 %v6552, %v6732
      %v6798 = vadd.f32 %v6553, %v6773
      %s6799 = scalar_lea.vmem %s5, 384
      %v6800 = vld [vmem:[%s6799] sm:$0xff]
      %v6801 = vld [vmem:[%s6799 + $0x8] sm:$0xff]
      %v6802 = vld [vmem:[%s6799 + $0x10] sm:$0xff]
      %v6803 = vld [vmem:[%s6799 + $0x18] sm:$0xff]
      %v6804 = vld [vmem:[%s6799 + $0x20] sm:$0xff]
      %v6805 = vld [vmem:[%s6799 + $0x28] sm:$0xff]
      %v6806 = vld [vmem:[%s6799 + $0x30] sm:$0xff]
      %v6807 = vld [vmem:[%s6799 + $0x38] sm:$0xff]
      %v6808 = vld [vmem:[#allocation3 + $0x8] sm:$0xff]
      %v6809 = vld [vmem:[#allocation3 + $0x10] sm:$0xff]
      %v6810 = vld [vmem:[#allocation3 + $0x18] sm:$0xff]
      %v6811 = vld [vmem:[#allocation3 + $0x20] sm:$0xff]
      %v6812 = vld [vmem:[#allocation3 + $0x28] sm:$0xff]
      %v6813 = vld [vmem:[#allocation3 + $0x38] sm:$0xff]
      %v6814 = vld [vmem:[#allocation3 + $0x40] sm:$0xff]
      %v6815 = vld [vmem:[#allocation3 + $0x48] sm:$0xff]
      %v6816 = vld [vmem:[#allocation3 + $0x50] sm:$0xff]
      %v6817 = vld [vmem:[#allocation3 + $0x58] sm:$0xff]
      %v6818 = vld [vmem:[#allocation3 + $0x68] sm:$0xff]
      %v6819 = vld [vmem:[#allocation3 + $0x70] sm:$0xff]
      %v6820 = vld [vmem:[#allocation3 + $0x78] sm:$0xff]
      %v6821 = vld [vmem:[#allocation3 + $0x80] sm:$0xff]
      %v6822 = vld [vmem:[#allocation3 + $0x88] sm:$0xff]
      %v6823 = vld [vmem:[#allocation3 + $0x98] sm:$0xff]
      %v6824 = vld [vmem:[#allocation3 + $0xa0] sm:$0xff]
      %v6825 = vld [vmem:[#allocation3 + $0xa8] sm:$0xff]
      %v6826 = vld [vmem:[#allocation3 + $0xb0] sm:$0xff]
      %v6827 = vld [vmem:[#allocation3 + $0xb8] sm:$0xff]
      %6848 = vrot.lane.b32.xlu0 %v6808, 32
      %v6849 = vpop.permute.xlu0 %6848
      %6850 = vrot.lane.b32.xlu0 %v6809, 32
      %v6851 = vpop.permute.xlu0 %6850
      %6852 = vrot.lane.b32.xlu0 %v6810, 32
      %v6853 = vpop.permute.xlu0 %6852
      %6854 = vrot.lane.b32.xlu0 %v6811, 32
      %v6855 = vpop.permute.xlu0 %6854
      %6856 = vrot.lane.b32.xlu0 %v6812, 32
      %v6857 = vpop.permute.xlu0 %6856
      %6858 = vrot.lane.b32.xlu0 %v6813, 32
      %v6859 = vpop.permute.xlu0 %6858
      %6860 = vrot.lane.b32.xlu0 %v6814, 32
      %v6861 = vpop.permute.xlu0 %6860
      %6862 = vrot.lane.b32.xlu0 %v6815, 32
      %v6863 = vpop.permute.xlu0 %6862
      %6864 = vrot.lane.b32.xlu0 %v6816, 32
      %v6865 = vpop.permute.xlu0 %6864
      %6866 = vrot.lane.b32.xlu0 %v6817, 32
      %v6867 = vpop.permute.xlu0 %6866
      %6868 = vrot.lane.b32.xlu0 %v6818, 32
      %v6869 = vpop.permute.xlu0 %6868
      %6870 = vrot.lane.b32.xlu0 %v6819, 32
      %v6871 = vpop.permute.xlu0 %6870
      %6872 = vrot.lane.b32.xlu0 %v6820, 32
      %v6873 = vpop.permute.xlu0 %6872
      %6874 = vrot.lane.b32.xlu0 %v6821, 32
      %v6875 = vpop.permute.xlu0 %6874
      %6876 = vrot.lane.b32.xlu0 %v6822, 32
      %v6877 = vpop.permute.xlu0 %6876
      %6878 = vrot.lane.b32.xlu0 %v6823, 32
      %v6879 = vpop.permute.xlu0 %6878
      %6880 = vrot.lane.b32.xlu0 %v6824, 32
      %v6881 = vpop.permute.xlu0 %6880
      %6882 = vrot.lane.b32.xlu0 %v6825, 32
      %v6883 = vpop.permute.xlu0 %6882
      %6884 = vrot.lane.b32.xlu0 %v6826, 32
      %v6885 = vpop.permute.xlu0 %6884
      %6886 = vrot.lane.b32.xlu0 %v6827, 32
      %v6887 = vpop.permute.xlu0 %6886
      %v6888 = vsel %vm5498, %v6849, %v6851
      %v6889 = vsel %vm5498, %v6851, %v6853
      %v6890 = vsel %vm5498, %v6855, %v6857
      %v6891 = vsel %vm5498, %v6859, %v6861
      %v6892 = vsel %vm5498, %v6861, %v6863
      %v6893 = vsel %vm5498, %v6865, %v6867
      %v6894 = vsel %vm5498, %v6869, %v6871
      %v6895 = vsel %vm5498, %v6871, %v6873
      %v6896 = vsel %vm5498, %v6875, %v6877
      %v6897 = vsel %vm5498, %v6879, %v6881
      %v6898 = vsel %vm5498, %v6881, %v6883
      %v6899 = vsel %vm5498, %v6885, %v6887
      %v6913 = vsel %vm5498, %v6800, 0
      %v6916 = vsel %vm5498, %v6801, 0
      %v6919 = vsel %vm5498, %v6802, 0
      %v6922 = vsel %vm5498, %v6803, 0
      %v6925 = vsel %vm5498, %v6804, 0
      %v6928 = vsel %vm5498, %v6805, 0
      %v6931 = vsel %vm5498, %v6806, 0
      %v6934 = vsel %vm5498, %v6807, 0
      %6936 = vmatpush.msra.mxu0 0.0
      %6937 = vmatpush.msra.mxu0 0.0
      %6938 = vmatpush.msra.mxu0 0.0
      %6939 = vmatpush.msra.mxu0 0.0
      %6940 = vmatpush.msra.mxu0 0.0
      %6941 = vmatpush.msra.mxu0 0.0
      %6942 = vmatpush.msra.mxu0 0.0
      %6943 = vmatpush.msra.mxu0 0.0
      %6944 = vmatpush.msra.mxu0 0.0
      %6945 = vmatpush.msra.mxu0 0.0
      %6946 = vmatpush.msra.mxu0 0.0
      %6947 = vmatpush.msra.mxu0 0.0
      %6948 = vmatpush.msra.mxu0 %v6897
      %6949 = vmatpush.msra.mxu0 %v6894
      %6950 = vmatpush.msra.mxu0 %v6891
      %6951 = vmatpush.msra.mxu0 %v6888
      %6952 = vmatmul.f32.gmra.mxu0 %v6913
      %v6953 = vpop.f32.mrf.mxu0
      %v6954 = vadd.f32 0.0, %v6953
      %6955 = vmatmul.f32.gmra.mxu0 %v6916
      %v6956 = vpop.f32.mrf.mxu0
      %v6957 = vadd.f32 0.0, %v6956
      %6958 = vmatmul.f32.gmra.mxu0 %v6919
      %v6959 = vpop.f32.mrf.mxu0
      %v6960 = vadd.f32 0.0, %v6959
      %6961 = vmatmul.f32.gmra.mxu0 %v6922
      %v6962 = vpop.f32.mrf.mxu0
      %v6963 = vadd.f32 0.0, %v6962
      %6964 = vmatmul.f32.gmra.mxu0 %v6925
      %v6965 = vpop.f32.mrf.mxu0
      %v6966 = vadd.f32 0.0, %v6965
      %6967 = vmatmul.f32.gmra.mxu0 %v6928
      %v6968 = vpop.f32.mrf.mxu0
      %v6969 = vadd.f32 0.0, %v6968
      %6970 = vmatmul.f32.gmra.mxu0 %v6931
      %v6971 = vpop.f32.mrf.mxu0
      %v6972 = vadd.f32 0.0, %v6971
      %6973 = vmatmul.f32.gmra.mxu0 %v6934
      %v6974 = vpop.f32.mrf.mxu0
      %v6975 = vadd.f32 0.0, %v6974
      %6976 = vdwg.mxu0
      %6977 = vmatpush.msra.mxu0 0.0
      %6978 = vmatpush.msra.mxu0 0.0
      %6979 = vmatpush.msra.mxu0 0.0
      %6980 = vmatpush.msra.mxu0 0.0
      %6981 = vmatpush.msra.mxu0 0.0
      %6982 = vmatpush.msra.mxu0 0.0
      %6983 = vmatpush.msra.mxu0 0.0
      %6984 = vmatpush.msra.mxu0 0.0
      %6985 = vmatpush.msra.mxu0 0.0
      %6986 = vmatpush.msra.mxu0 0.0
      %6987 = vmatpush.msra.mxu0 0.0
      %6988 = vmatpush.msra.mxu0 0.0
      %6989 = vmatpush.msra.mxu0 %v6898
      %6990 = vmatpush.msra.mxu0 %v6895
      %6991 = vmatpush.msra.mxu0 %v6892
      %6992 = vmatpush.msra.mxu0 %v6889
      %6993 = vmatmul.f32.gmra.mxu0 %v6913
      %v6994 = vpop.f32.mrf.mxu0
      %v6995 = vadd.f32 0.0, %v6994
      %6996 = vmatmul.f32.gmra.mxu0 %v6916
      %v6997 = vpop.f32.mrf.mxu0
      %v6998 = vadd.f32 0.0, %v6997
      %6999 = vmatmul.f32.gmra.mxu0 %v6919
      %v7000 = vpop.f32.mrf.mxu0
      %v7001 = vadd.f32 0.0, %v7000
      %7002 = vmatmul.f32.gmra.mxu0 %v6922
      %v7003 = vpop.f32.mrf.mxu0
      %v7004 = vadd.f32 0.0, %v7003
      %7005 = vmatmul.f32.gmra.mxu0 %v6925
      %v7006 = vpop.f32.mrf.mxu0
      %v7007 = vadd.f32 0.0, %v7006
      %7008 = vmatmul.f32.gmra.mxu0 %v6928
      %v7009 = vpop.f32.mrf.mxu0
      %v7010 = vadd.f32 0.0, %v7009
      %7011 = vmatmul.f32.gmra.mxu0 %v6931
      %v7012 = vpop.f32.mrf.mxu0
      %v7013 = vadd.f32 0.0, %v7012
      %7014 = vmatmul.f32.gmra.mxu0 %v6934
      %v7015 = vpop.f32.mrf.mxu0
      %v7016 = vadd.f32 0.0, %v7015
      %7017 = vdwg.mxu0
      %7018 = vmatpush.msra.mxu0 0.0
      %7019 = vmatpush.msra.mxu0 0.0
      %7020 = vmatpush.msra.mxu0 0.0
      %7021 = vmatpush.msra.mxu0 0.0
      %7022 = vmatpush.msra.mxu0 0.0
      %7023 = vmatpush.msra.mxu0 0.0
      %7024 = vmatpush.msra.mxu0 0.0
      %7025 = vmatpush.msra.mxu0 0.0
      %7026 = vmatpush.msra.mxu0 0.0
      %7027 = vmatpush.msra.mxu0 0.0
      %7028 = vmatpush.msra.mxu0 0.0
      %7029 = vmatpush.msra.mxu0 0.0
      %7030 = vmatpush.msra.mxu0 %v6899
      %7031 = vmatpush.msra.mxu0 %v6896
      %7032 = vmatpush.msra.mxu0 %v6893
      %7033 = vmatpush.msra.mxu0 %v6890
      %7034 = vmatmul.f32.gmra.mxu0 %v6913
      %v7035 = vpop.f32.mrf.mxu0
      %v7036 = vadd.f32 0.0, %v7035
      %7037 = vmatmul.f32.gmra.mxu0 %v6916
      %v7038 = vpop.f32.mrf.mxu0
      %v7039 = vadd.f32 0.0, %v7038
      %7040 = vmatmul.f32.gmra.mxu0 %v6919
      %v7041 = vpop.f32.mrf.mxu0
      %v7042 = vadd.f32 0.0, %v7041
      %7043 = vmatmul.f32.gmra.mxu0 %v6922
      %v7044 = vpop.f32.mrf.mxu0
      %v7045 = vadd.f32 0.0, %v7044
      %7046 = vmatmul.f32.gmra.mxu0 %v6925
      %v7047 = vpop.f32.mrf.mxu0
      %v7048 = vadd.f32 0.0, %v7047
      %7049 = vmatmul.f32.gmra.mxu0 %v6928
      %v7050 = vpop.f32.mrf.mxu0
      %v7051 = vadd.f32 0.0, %v7050
      %7052 = vmatmul.f32.gmra.mxu0 %v6931
      %v7053 = vpop.f32.mrf.mxu0
      %v7054 = vadd.f32 0.0, %v7053
      %7055 = vmatmul.f32.gmra.mxu0 %v6934
      %v7056 = vpop.f32.mrf.mxu0
      %v7057 = vadd.f32 0.0, %v7056
      %7058 = vdwg.mxu0
      %v7059 = vadd.f32 %v6775, %v6954
      %v7060 = vadd.f32 %v6776, %v6995
      %v7061 = vadd.f32 %v6777, %v7036
      %v7062 = vadd.f32 %v6778, %v6957
      %v7063 = vadd.f32 %v6779, %v6998
      %v7064 = vadd.f32 %v6780, %v7039
      %v7065 = vadd.f32 %v6781, %v6960
      %v7066 = vadd.f32 %v6782, %v7001
      %v7067 = vadd.f32 %v6783, %v7042
      %v7068 = vadd.f32 %v6784, %v6963
      %v7069 = vadd.f32 %v6785, %v7004
      %v7070 = vadd.f32 %v6786, %v7045
      %v7071 = vadd.f32 %v6787, %v6966
      %v7072 = vadd.f32 %v6788, %v7007
      %v7073 = vadd.f32 %v6789, %v7048
      %v7074 = vadd.f32 %v6790, %v6969
      %v7075 = vadd.f32 %v6791, %v7010
      %v7076 = vadd.f32 %v6792, %v7051
      %v7077 = vadd.f32 %v6793, %v6972
      %v7078 = vadd.f32 %v6794, %v7013
      %v7079 = vadd.f32 %v6795, %v7054
      %v7080 = vadd.f32 %v6796, %v6975
      %v7081 = vadd.f32 %v6797, %v7016
      %v7082 = vadd.f32 %v6798, %v7057
      %s7083 = scalar_lea.vmem %s5, 448
      %v7084 = vld [vmem:[%s7083] sm:$0xff]
      %v7085 = vld [vmem:[%s7083 + $0x8] sm:$0xff]
      %v7086 = vld [vmem:[%s7083 + $0x10] sm:$0xff]
      %v7087 = vld [vmem:[%s7083 + $0x18] sm:$0xff]
      %v7088 = vld [vmem:[%s7083 + $0x20] sm:$0xff]
      %v7089 = vld [vmem:[%s7083 + $0x28] sm:$0xff]
      %v7090 = vld [vmem:[%s7083 + $0x30] sm:$0xff]
      %v7091 = vld [vmem:[%s7083 + $0x38] sm:$0xff]
      %7092 = vrot.lane.b32.xlu0 %v6808, 28
      %v7093 = vpop.permute.xlu0 %7092
      %7094 = vrot.lane.b32.xlu0 %v6809, 28
      %v7095 = vpop.permute.xlu0 %7094
      %7096 = vrot.lane.b32.xlu0 %v6810, 28
      %v7097 = vpop.permute.xlu0 %7096
      %7098 = vrot.lane.b32.xlu0 %v6811, 28
      %v7099 = vpop.permute.xlu0 %7098
      %7100 = vrot.lane.b32.xlu0 %v6812, 28
      %v7101 = vpop.permute.xlu0 %7100
      %7102 = vrot.lane.b32.xlu0 %v6813, 28
      %v7103 = vpop.permute.xlu0 %7102
      %7104 = vrot.lane.b32.xlu0 %v6814, 28
      %v7105 = vpop.permute.xlu0 %7104
      %7106 = vrot.lane.b32.xlu0 %v6815, 28
      %v7107 = vpop.permute.xlu0 %7106
      %7108 = vrot.lane.b32.xlu0 %v6816, 28
      %v7109 = vpop.permute.xlu0 %7108
      %7110 = vrot.lane.b32.xlu0 %v6817, 28
      %v7111 = vpop.permute.xlu0 %7110
      %7112 = vrot.lane.b32.xlu0 %v6818, 28
      %v7113 = vpop.permute.xlu0 %7112
      %7114 = vrot.lane.b32.xlu0 %v6819, 28
      %v7115 = vpop.permute.xlu0 %7114
      %7116 = vrot.lane.b32.xlu0 %v6820, 28
      %v7117 = vpop.permute.xlu0 %7116
      %7118 = vrot.lane.b32.xlu0 %v6821, 28
      %v7119 = vpop.permute.xlu0 %7118
      %7120 = vrot.lane.b32.xlu0 %v6822, 28
      %v7121 = vpop.permute.xlu0 %7120
      %7122 = vrot.lane.b32.xlu0 %v6823, 28
      %v7123 = vpop.permute.xlu0 %7122
      %7124 = vrot.lane.b32.xlu0 %v6824, 28
      %v7125 = vpop.permute.xlu0 %7124
      %7126 = vrot.lane.b32.xlu0 %v6825, 28
      %v7127 = vpop.permute.xlu0 %7126
      %7128 = vrot.lane.b32.xlu0 %v6826, 28
      %v7129 = vpop.permute.xlu0 %7128
      %7130 = vrot.lane.b32.xlu0 %v6827, 28
      %v7131 = vpop.permute.xlu0 %7130
      %vm7132 = vcmask 228352
      %v7133 = vsel %vm7132, %v7093, %v7095
      %v7134 = vsel %vm7132, %v7095, %v7097
      %v7135 = vsel %vm7132, %v7099, %v7101
      %v7136 = vsel %vm7132, %v7103, %v7105
      %v7137 = vsel %vm7132, %v7105, %v7107
      %v7138 = vsel %vm7132, %v7109, %v7111
      %v7139 = vsel %vm7132, %v7113, %v7115
      %v7140 = vsel %vm7132, %v7115, %v7117
      %v7141 = vsel %vm7132, %v7119, %v7121
      %v7142 = vsel %vm7132, %v7123, %v7125
      %v7143 = vsel %vm7132, %v7125, %v7127
      %v7144 = vsel %vm7132, %v7129, %v7131
      %v7158 = vsel %vm5498, %v7084, 0
      %v7161 = vsel %vm5498, %v7085, 0
      %v7164 = vsel %vm5498, %v7086, 0
      %v7167 = vsel %vm5498, %v7087, 0
      %v7170 = vsel %vm5498, %v7088, 0
      %v7173 = vsel %vm5498, %v7089, 0
      %v7176 = vsel %vm5498, %v7090, 0
      %v7179 = vsel %vm5498, %v7091, 0
      %7181 = vmatpush.msra.mxu0 0.0
      %7182 = vmatpush.msra.mxu0 0.0
      %7183 = vmatpush.msra.mxu0 0.0
      %7184 = vmatpush.msra.mxu0 0.0
      %7185 = vmatpush.msra.mxu0 0.0
      %7186 = vmatpush.msra.mxu0 0.0
      %7187 = vmatpush.msra.mxu0 0.0
      %7188 = vmatpush.msra.mxu0 0.0
      %7189 = vmatpush.msra.mxu0 0.0
      %7190 = vmatpush.msra.mxu0 0.0
      %7191 = vmatpush.msra.mxu0 0.0
      %7192 = vmatpush.msra.mxu0 0.0
      %7193 = vmatpush.msra.mxu0 %v7142
      %7194 = vmatpush.msra.mxu0 %v7139
      %7195 = vmatpush.msra.mxu0 %v7136
      %7196 = vmatpush.msra.mxu0 %v7133
      %7197 = vmatmul.f32.gmra.mxu0 %v7158
      %v7198 = vpop.f32.mrf.mxu0
      %v7199 = vadd.f32 0.0, %v7198
      %7200 = vmatmul.f32.gmra.mxu0 %v7161
      %v7201 = vpop.f32.mrf.mxu0
      %v7202 = vadd.f32 0.0, %v7201
      %7203 = vmatmul.f32.gmra.mxu0 %v7164
      %v7204 = vpop.f32.mrf.mxu0
      %v7205 = vadd.f32 0.0, %v7204
      %7206 = vmatmul.f32.gmra.mxu0 %v7167
      %v7207 = vpop.f32.mrf.mxu0
      %v7208 = vadd.f32 0.0, %v7207
      %7209 = vmatmul.f32.gmra.mxu0 %v7170
      %v7210 = vpop.f32.mrf.mxu0
      %v7211 = vadd.f32 0.0, %v7210
      %7212 = vmatmul.f32.gmra.mxu0 %v7173
      %v7213 = vpop.f32.mrf.mxu0
      %v7214 = vadd.f32 0.0, %v7213
      %7215 = vmatmul.f32.gmra.mxu0 %v7176
      %v7216 = vpop.f32.mrf.mxu0
      %v7217 = vadd.f32 0.0, %v7216
      %7218 = vmatmul.f32.gmra.mxu0 %v7179
      %v7219 = vpop.f32.mrf.mxu0
      %v7220 = vadd.f32 0.0, %v7219
      %7221 = vdwg.mxu0
      %7222 = vmatpush.msra.mxu0 0.0
      %7223 = vmatpush.msra.mxu0 0.0
      %7224 = vmatpush.msra.mxu0 0.0
      %7225 = vmatpush.msra.mxu0 0.0
      %7226 = vmatpush.msra.mxu0 0.0
      %7227 = vmatpush.msra.mxu0 0.0
      %7228 = vmatpush.msra.mxu0 0.0
      %7229 = vmatpush.msra.mxu0 0.0
      %7230 = vmatpush.msra.mxu0 0.0
      %7231 = vmatpush.msra.mxu0 0.0
      %7232 = vmatpush.msra.mxu0 0.0
      %7233 = vmatpush.msra.mxu0 0.0
      %7234 = vmatpush.msra.mxu0 %v7143
      %7235 = vmatpush.msra.mxu0 %v7140
      %7236 = vmatpush.msra.mxu0 %v7137
      %7237 = vmatpush.msra.mxu0 %v7134
      %7238 = vmatmul.f32.gmra.mxu0 %v7158
      %v7239 = vpop.f32.mrf.mxu0
      %v7240 = vadd.f32 0.0, %v7239
      %7241 = vmatmul.f32.gmra.mxu0 %v7161
      %v7242 = vpop.f32.mrf.mxu0
      %v7243 = vadd.f32 0.0, %v7242
      %7244 = vmatmul.f32.gmra.mxu0 %v7164
      %v7245 = vpop.f32.mrf.mxu0
      %v7246 = vadd.f32 0.0, %v7245
      %7247 = vmatmul.f32.gmra.mxu0 %v7167
      %v7248 = vpop.f32.mrf.mxu0
      %v7249 = vadd.f32 0.0, %v7248
      %7250 = vmatmul.f32.gmra.mxu0 %v7170
      %v7251 = vpop.f32.mrf.mxu0
      %v7252 = vadd.f32 0.0, %v7251
      %7253 = vmatmul.f32.gmra.mxu0 %v7173
      %v7254 = vpop.f32.mrf.mxu0
      %v7255 = vadd.f32 0.0, %v7254
      %7256 = vmatmul.f32.gmra.mxu0 %v7176
      %v7257 = vpop.f32.mrf.mxu0
      %v7258 = vadd.f32 0.0, %v7257
      %7259 = vmatmul.f32.gmra.mxu0 %v7179
      %v7260 = vpop.f32.mrf.mxu0
      %v7261 = vadd.f32 0.0, %v7260
      %7262 = vdwg.mxu0
      %7263 = vmatpush.msra.mxu0 0.0
      %7264 = vmatpush.msra.mxu0 0.0
      %7265 = vmatpush.msra.mxu0 0.0
      %7266 = vmatpush.msra.mxu0 0.0
      %7267 = vmatpush.msra.mxu0 0.0
      %7268 = vmatpush.msra.mxu0 0.0
      %7269 = vmatpush.msra.mxu0 0.0
      %7270 = vmatpush.msra.mxu0 0.0
      %7271 = vmatpush.msra.mxu0 0.0
      %7272 = vmatpush.msra.mxu0 0.0
      %7273 = vmatpush.msra.mxu0 0.0
      %7274 = vmatpush.msra.mxu0 0.0
      %7275 = vmatpush.msra.mxu0 %v7144
      %7276 = vmatpush.msra.mxu0 %v7141
      %7277 = vmatpush.msra.mxu0 %v7138
      %7278 = vmatpush.msra.mxu0 %v7135
      %7279 = vmatmul.f32.gmra.mxu0 %v7158
      %v7280 = vpop.f32.mrf.mxu0
      %v7281 = vadd.f32 0.0, %v7280
      %7282 = vmatmul.f32.gmra.mxu0 %v7161
      %v7283 = vpop.f32.mrf.mxu0
      %v7284 = vadd.f32 0.0, %v7283
      %7285 = vmatmul.f32.gmra.mxu0 %v7164
      %v7286 = vpop.f32.mrf.mxu0
      %v7287 = vadd.f32 0.0, %v7286
      %7288 = vmatmul.f32.gmra.mxu0 %v7167
      %v7289 = vpop.f32.mrf.mxu0
      %v7290 = vadd.f32 0.0, %v7289
      %7291 = vmatmul.f32.gmra.mxu0 %v7170
      %v7292 = vpop.f32.mrf.mxu0
      %v7293 = vadd.f32 0.0, %v7292
      %7294 = vmatmul.f32.gmra.mxu0 %v7173
      %v7295 = vpop.f32.mrf.mxu0
      %v7296 = vadd.f32 0.0, %v7295
      %7297 = vmatmul.f32.gmra.mxu0 %v7176
      %v7298 = vpop.f32.mrf.mxu0
      %v7299 = vadd.f32 0.0, %v7298
      %7300 = vmatmul.f32.gmra.mxu0 %v7179
      %v7301 = vpop.f32.mrf.mxu0
      %v7302 = vadd.f32 0.0, %v7301
      %7303 = vdwg.mxu0
      %v7304 = vadd.f32 %v7059, %v7199
      %v7305 = vadd.f32 %v7060, %v7240
      %v7306 = vadd.f32 %v7061, %v7281
      %v7307 = vadd.f32 %v7062, %v7202
      %v7308 = vadd.f32 %v7063, %v7243
      %v7309 = vadd.f32 %v7064, %v7284
      %v7310 = vadd.f32 %v7065, %v7205
      %v7311 = vadd.f32 %v7066, %v7246
      %v7312 = vadd.f32 %v7067, %v7287
      %v7313 = vadd.f32 %v7068, %v7208
      %v7314 = vadd.f32 %v7069, %v7249
      %v7315 = vadd.f32 %v7070, %v7290
      %v7316 = vadd.f32 %v7071, %v7211
      %v7317 = vadd.f32 %v7072, %v7252
      %v7318 = vadd.f32 %v7073, %v7293
      %v7319 = vadd.f32 %v7074, %v7214
      %v7320 = vadd.f32 %v7075, %v7255
      %v7321 = vadd.f32 %v7076, %v7296
      %v7322 = vadd.f32 %v7077, %v7217
      %v7323 = vadd.f32 %v7078, %v7258
      %v7324 = vadd.f32 %v7079, %v7299
      %v7325 = vadd.f32 %v7080, %v7220
      %v7326 = vadd.f32 %v7081, %v7261
      %v7327 = vadd.f32 %v7082, %v7302
      %s7328 = scalar_lea.vmem %s5, 512
      %v7329 = vld [vmem:[%s7328] sm:$0xff]
      %v7330 = vld [vmem:[%s7328 + $0x8] sm:$0xff]
      %v7331 = vld [vmem:[%s7328 + $0x10] sm:$0xff]
      %v7332 = vld [vmem:[%s7328 + $0x18] sm:$0xff]
      %v7333 = vld [vmem:[%s7328 + $0x20] sm:$0xff]
      %v7334 = vld [vmem:[%s7328 + $0x28] sm:$0xff]
      %v7335 = vld [vmem:[%s7328 + $0x30] sm:$0xff]
      %v7336 = vld [vmem:[%s7328 + $0x38] sm:$0xff]
      %7337 = vrot.lane.b32.xlu0 %v6808, 24
      %v7338 = vpop.permute.xlu0 %7337
      %7339 = vrot.lane.b32.xlu0 %v6809, 24
      %v7340 = vpop.permute.xlu0 %7339
      %7341 = vrot.lane.b32.xlu0 %v6810, 24
      %v7342 = vpop.permute.xlu0 %7341
      %7343 = vrot.lane.b32.xlu0 %v6811, 24
      %v7344 = vpop.permute.xlu0 %7343
      %7345 = vrot.lane.b32.xlu0 %v6812, 24
      %v7346 = vpop.permute.xlu0 %7345
      %7347 = vrot.lane.b32.xlu0 %v6813, 24
      %v7348 = vpop.permute.xlu0 %7347
      %7349 = vrot.lane.b32.xlu0 %v6814, 24
      %v7350 = vpop.permute.xlu0 %7349
      %7351 = vrot.lane.b32.xlu0 %v6815, 24
      %v7352 = vpop.permute.xlu0 %7351
      %7353 = vrot.lane.b32.xlu0 %v6816, 24
      %v7354 = vpop.permute.xlu0 %7353
      %7355 = vrot.lane.b32.xlu0 %v6817, 24
      %v7356 = vpop.permute.xlu0 %7355
      %7357 = vrot.lane.b32.xlu0 %v6818, 24
      %v7358 = vpop.permute.xlu0 %7357
      %7359 = vrot.lane.b32.xlu0 %v6819, 24
      %v7360 = vpop.permute.xlu0 %7359
      %7361 = vrot.lane.b32.xlu0 %v6820, 24
      %v7362 = vpop.permute.xlu0 %7361
      %7363 = vrot.lane.b32.xlu0 %v6821, 24
      %v7364 = vpop.permute.xlu0 %7363
      %7365 = vrot.lane.b32.xlu0 %v6822, 24
      %v7366 = vpop.permute.xlu0 %7365
      %7367 = vrot.lane.b32.xlu0 %v6823, 24
      %v7368 = vpop.permute.xlu0 %7367
      %7369 = vrot.lane.b32.xlu0 %v6824, 24
      %v7370 = vpop.permute.xlu0 %7369
      %7371 = vrot.lane.b32.xlu0 %v6825, 24
      %v7372 = vpop.permute.xlu0 %7371
      %7373 = vrot.lane.b32.xlu0 %v6826, 24
      %v7374 = vpop.permute.xlu0 %7373
      %7375 = vrot.lane.b32.xlu0 %v6827, 24
      %v7376 = vpop.permute.xlu0 %7375
      %vm7377 = vcmask 195584
      %v7378 = vsel %vm7377, %v7338, %v7340
      %v7379 = vsel %vm7377, %v7340, %v7342
      %v7380 = vsel %vm7377, %v7344, %v7346
      %v7381 = vsel %vm7377, %v7348, %v7350
      %v7382 = vsel %vm7377, %v7350, %v7352
      %v7383 = vsel %vm7377, %v7354, %v7356
      %v7384 = vsel %vm7377, %v7358, %v7360
      %v7385 = vsel %vm7377, %v7360, %v7362
      %v7386 = vsel %vm7377, %v7364, %v7366
      %v7387 = vsel %vm7377, %v7368, %v7370
      %v7388 = vsel %vm7377, %v7370, %v7372
      %v7389 = vsel %vm7377, %v7374, %v7376
      %v7403 = vsel %vm5498, %v7329, 0
      %v7406 = vsel %vm5498, %v7330, 0
      %v7409 = vsel %vm5498, %v7331, 0
      %v7412 = vsel %vm5498, %v7332, 0
      %v7415 = vsel %vm5498, %v7333, 0
      %v7418 = vsel %vm5498, %v7334, 0
      %v7421 = vsel %vm5498, %v7335, 0
      %v7424 = vsel %vm5498, %v7336, 0
      %7426 = vmatpush.msra.mxu0 0.0
      %7427 = vmatpush.msra.mxu0 0.0
      %7428 = vmatpush.msra.mxu0 0.0
      %7429 = vmatpush.msra.mxu0 0.0
      %7430 = vmatpush.msra.mxu0 0.0
      %7431 = vmatpush.msra.mxu0 0.0
      %7432 = vmatpush.msra.mxu0 0.0
      %7433 = vmatpush.msra.mxu0 0.0
      %7434 = vmatpush.msra.mxu0 0.0
      %7435 = vmatpush.msra.mxu0 0.0
      %7436 = vmatpush.msra.mxu0 0.0
      %7437 = vmatpush.msra.mxu0 0.0
      %7438 = vmatpush.msra.mxu0 %v7387
      %7439 = vmatpush.msra.mxu0 %v7384
      %7440 = vmatpush.msra.mxu0 %v7381
      %7441 = vmatpush.msra.mxu0 %v7378
      %7442 = vmatmul.f32.gmra.mxu0 %v7403
      %v7443 = vpop.f32.mrf.mxu0
      %v7444 = vadd.f32 0.0, %v7443
      %7445 = vmatmul.f32.gmra.mxu0 %v7406
      %v7446 = vpop.f32.mrf.mxu0
      %v7447 = vadd.f32 0.0, %v7446
      %7448 = vmatmul.f32.gmra.mxu0 %v7409
      %v7449 = vpop.f32.mrf.mxu0
      %v7450 = vadd.f32 0.0, %v7449
      %7451 = vmatmul.f32.gmra.mxu0 %v7412
      %v7452 = vpop.f32.mrf.mxu0
      %v7453 = vadd.f32 0.0, %v7452
      %7454 = vmatmul.f32.gmra.mxu0 %v7415
      %v7455 = vpop.f32.mrf.mxu0
      %v7456 = vadd.f32 0.0, %v7455
      %7457 = vmatmul.f32.gmra.mxu0 %v7418
      %v7458 = vpop.f32.mrf.mxu0
      %v7459 = vadd.f32 0.0, %v7458
      %7460 = vmatmul.f32.gmra.mxu0 %v7421
      %v7461 = vpop.f32.mrf.mxu0
      %v7462 = vadd.f32 0.0, %v7461
      %7463 = vmatmul.f32.gmra.mxu0 %v7424
      %v7464 = vpop.f32.mrf.mxu0
      %v7465 = vadd.f32 0.0, %v7464
      %7466 = vdwg.mxu0
      %7467 = vmatpush.msra.mxu0 0.0
      %7468 = vmatpush.msra.mxu0 0.0
      %7469 = vmatpush.msra.mxu0 0.0
      %7470 = vmatpush.msra.mxu0 0.0
      %7471 = vmatpush.msra.mxu0 0.0
      %7472 = vmatpush.msra.mxu0 0.0
      %7473 = vmatpush.msra.mxu0 0.0
      %7474 = vmatpush.msra.mxu0 0.0
      %7475 = vmatpush.msra.mxu0 0.0
      %7476 = vmatpush.msra.mxu0 0.0
      %7477 = vmatpush.msra.mxu0 0.0
      %7478 = vmatpush.msra.mxu0 0.0
      %7479 = vmatpush.msra.mxu0 %v7388
      %7480 = vmatpush.msra.mxu0 %v7385
      %7481 = vmatpush.msra.mxu0 %v7382
      %7482 = vmatpush.msra.mxu0 %v7379
      %7483 = vmatmul.f32.gmra.mxu0 %v7403
      %v7484 = vpop.f32.mrf.mxu0
      %v7485 = vadd.f32 0.0, %v7484
      %7486 = vmatmul.f32.gmra.mxu0 %v7406
      %v7487 = vpop.f32.mrf.mxu0
      %v7488 = vadd.f32 0.0, %v7487
      %7489 = vmatmul.f32.gmra.mxu0 %v7409
      %v7490 = vpop.f32.mrf.mxu0
      %v7491 = vadd.f32 0.0, %v7490
      %7492 = vmatmul.f32.gmra.mxu0 %v7412
      %v7493 = vpop.f32.mrf.mxu0
      %v7494 = vadd.f32 0.0, %v7493
      %7495 = vmatmul.f32.gmra.mxu0 %v7415
      %v7496 = vpop.f32.mrf.mxu0
      %v7497 = vadd.f32 0.0, %v7496
      %7498 = vmatmul.f32.gmra.mxu0 %v7418
      %v7499 = vpop.f32.mrf.mxu0
      %v7500 = vadd.f32 0.0, %v7499
      %7501 = vmatmul.f32.gmra.mxu0 %v7421
      %v7502 = vpop.f32.mrf.mxu0
      %v7503 = vadd.f32 0.0, %v7502
      %7504 = vmatmul.f32.gmra.mxu0 %v7424
      %v7505 = vpop.f32.mrf.mxu0
      %v7506 = vadd.f32 0.0, %v7505
      %7507 = vdwg.mxu0
      %7508 = vmatpush.msra.mxu0 0.0
      %7509 = vmatpush.msra.mxu0 0.0
      %7510 = vmatpush.msra.mxu0 0.0
      %7511 = vmatpush.msra.mxu0 0.0
      %7512 = vmatpush.msra.mxu0 0.0
      %7513 = vmatpush.msra.mxu0 0.0
      %7514 = vmatpush.msra.mxu0 0.0
      %7515 = vmatpush.msra.mxu0 0.0
      %7516 = vmatpush.msra.mxu0 0.0
      %7517 = vmatpush.msra.mxu0 0.0
      %7518 = vmatpush.msra.mxu0 0.0
      %7519 = vmatpush.msra.mxu0 0.0
      %7520 = vmatpush.msra.mxu0 %v7389
      %7521 = vmatpush.msra.mxu0 %v7386
      %7522 = vmatpush.msra.mxu0 %v7383
      %7523 = vmatpush.msra.mxu0 %v7380
      %7524 = vmatmul.f32.gmra.mxu0 %v7403
      %v7525 = vpop.f32.mrf.mxu0
      %v7526 = vadd.f32 0.0, %v7525
      %7527 = vmatmul.f32.gmra.mxu0 %v7406
      %v7528 = vpop.f32.mrf.mxu0
      %v7529 = vadd.f32 0.0, %v7528
      %7530 = vmatmul.f32.gmra.mxu0 %v7409
      %v7531 = vpop.f32.mrf.mxu0
      %v7532 = vadd.f32 0.0, %v7531
      %7533 = vmatmul.f32.gmra.mxu0 %v7412
      %v7534 = vpop.f32.mrf.mxu0
      %v7535 = vadd.f32 0.0, %v7534
      %7536 = vmatmul.f32.gmra.mxu0 %v7415
      %v7537 = vpop.f32.mrf.mxu0
      %v7538 = vadd.f32 0.0, %v7537
      %7539 = vmatmul.f32.gmra.mxu0 %v7418
      %v7540 = vpop.f32.mrf.mxu0
      %v7541 = vadd.f32 0.0, %v7540
      %7542 = vmatmul.f32.gmra.mxu0 %v7421
      %v7543 = vpop.f32.mrf.mxu0
      %v7544 = vadd.f32 0.0, %v7543
      %7545 = vmatmul.f32.gmra.mxu0 %v7424
      %v7546 = vpop.f32.mrf.mxu0
      %v7547 = vadd.f32 0.0, %v7546
      %7548 = vdwg.mxu0
      %v7549 = vadd.f32 %v7304, %v7444
      %v7550 = vadd.f32 %v7305, %v7485
      %v7551 = vadd.f32 %v7306, %v7526
      %v7552 = vadd.f32 %v7307, %v7447
      %v7553 = vadd.f32 %v7308, %v7488
      %v7554 = vadd.f32 %v7309, %v7529
      %v7555 = vadd.f32 %v7310, %v7450
      %v7556 = vadd.f32 %v7311, %v7491
      %v7557 = vadd.f32 %v7312, %v7532
      %v7558 = vadd.f32 %v7313, %v7453
      %v7559 = vadd.f32 %v7314, %v7494
      %v7560 = vadd.f32 %v7315, %v7535
      %v7561 = vadd.f32 %v7316, %v7456
      %v7562 = vadd.f32 %v7317, %v7497
      %v7563 = vadd.f32 %v7318, %v7538
      %v7564 = vadd.f32 %v7319, %v7459
      %v7565 = vadd.f32 %v7320, %v7500
      %v7566 = vadd.f32 %v7321, %v7541
      %v7567 = vadd.f32 %v7322, %v7462
      %v7568 = vadd.f32 %v7323, %v7503
      %v7569 = vadd.f32 %v7324, %v7544
      %v7570 = vadd.f32 %v7325, %v7465
      %v7571 = vadd.f32 %v7326, %v7506
      %v7572 = vadd.f32 %v7327, %v7547
      %v7573 = vld [vmem:[%s6] sm:$0xff]
      %v7574 = vld [vmem:[%s6 + $0x8] sm:$0xff]
      %v7575 = vld [vmem:[%s6 + $0x10] sm:$0xff]
      %v7576 = vld [vmem:[%s6 + $0x18] sm:$0xff]
      %v7577 = vld [vmem:[%s6 + $0x20] sm:$0xff]
      %v7578 = vld [vmem:[%s6 + $0x28] sm:$0xff]
      %v7579 = vld [vmem:[%s6 + $0x30] sm:$0xff]
      %v7580 = vld [vmem:[%s6 + $0x38] sm:$0xff]
      %7582 = vset.pattern.permute.xlu0 0
      %7583 = vperm.xlu0 %7582, %v7573
      %v7584 = vpop.permute.xlu0 %7583
      %7587 = vset.pattern.permute.xlu0 0
      %7588 = vperm.xlu0 %7587, %v7574
      %v7589 = vpop.permute.xlu0 %7588
      %7592 = vset.pattern.permute.xlu0 0
      %7593 = vperm.xlu0 %7592, %v7575
      %v7594 = vpop.permute.xlu0 %7593
      %7597 = vset.pattern.permute.xlu0 0
      %7598 = vperm.xlu0 %7597, %v7576
      %v7599 = vpop.permute.xlu0 %7598
      %7602 = vset.pattern.permute.xlu0 0
      %7603 = vperm.xlu0 %7602, %v7577
      %v7604 = vpop.permute.xlu0 %7603
      %7607 = vset.pattern.permute.xlu0 0
      %7608 = vperm.xlu0 %7607, %v7578
      %v7609 = vpop.permute.xlu0 %7608
      %7612 = vset.pattern.permute.xlu0 0
      %7613 = vperm.xlu0 %7612, %v7579
      %v7614 = vpop.permute.xlu0 %7613
      %7617 = vset.pattern.permute.xlu0 0
      %7618 = vperm.xlu0 %7617, %v7580
      %v7619 = vpop.permute.xlu0 %7618
      %v7621 = vadd.f32 %v7549, %v7584
      %v7622 = vadd.f32 %v7550, %v7584
      %v7623 = vadd.f32 %v7551, %v7584
      %v7624 = vadd.f32 %v7552, %v7589
      %v7625 = vadd.f32 %v7553, %v7589
      %v7626 = vadd.f32 %v7554, %v7589
      %v7627 = vadd.f32 %v7555, %v7594
      %v7628 = vadd.f32 %v7556, %v7594
      %v7629 = vadd.f32 %v7557, %v7594
      %v7630 = vadd.f32 %v7558, %v7599
      %v7631 = vadd.f32 %v7559, %v7599
      %v7632 = vadd.f32 %v7560, %v7599
      %v7633 = vadd.f32 %v7561, %v7604
      %v7634 = vadd.f32 %v7562, %v7604
      %v7635 = vadd.f32 %v7563, %v7604
      %v7636 = vadd.f32 %v7564, %v7609
      %v7637 = vadd.f32 %v7565, %v7609
      %v7638 = vadd.f32 %v7566, %v7609
      %v7639 = vadd.f32 %v7567, %v7614
      %v7640 = vadd.f32 %v7568, %v7614
      %v7641 = vadd.f32 %v7569, %v7614
      %v7642 = vadd.f32 %v7570, %v7619
      %v7643 = vadd.f32 %v7571, %v7619
      %v7644 = vadd.f32 %v7572, %v7619
      %v7645 = vmax.f32 %v7621, 0.0
      %v7646 = vmax.f32 %v7622, 0.0
      %v7647 = vmax.f32 %v7623, 0.0
      %v7648 = vmax.f32 %v7624, 0.0
      %v7649 = vmax.f32 %v7625, 0.0
      %v7650 = vmax.f32 %v7626, 0.0
      %v7651 = vmax.f32 %v7627, 0.0
      %v7652 = vmax.f32 %v7628, 0.0
      %v7653 = vmax.f32 %v7629, 0.0
      %v7654 = vmax.f32 %v7630, 0.0
      %v7655 = vmax.f32 %v7631, 0.0
      %v7656 = vmax.f32 %v7632, 0.0
      %v7657 = vmax.f32 %v7633, 0.0
      %v7658 = vmax.f32 %v7634, 0.0
      %v7659 = vmax.f32 %v7635, 0.0
      %v7660 = vmax.f32 %v7636, 0.0
      %v7661 = vmax.f32 %v7637, 0.0
      %v7662 = vmax.f32 %v7638, 0.0
      %v7663 = vmax.f32 %v7639, 0.0
      %v7664 = vmax.f32 %v7640, 0.0
      %v7665 = vmax.f32 %v7641, 0.0
      %v7666 = vmax.f32 %v7642, 0.0
      %v7667 = vmax.f32 %v7643, 0.0
      %v7668 = vmax.f32 %v7644, 0.0
      %v7669 = vld [vmem:[%s7] sm:$0xff]
      %v7670 = vld [vmem:[%s7 + $0x8] sm:$0xff]
      %v7671 = vld [vmem:[%s7 + $0x10] sm:$0xff]
      %v7672 = vld [vmem:[%s7 + $0x18] sm:$0xff]
      %v7673 = vld [vmem:[%s7 + $0x20] sm:$0xff]
      %v7674 = vld [vmem:[%s7 + $0x28] sm:$0xf]
      %v7675 = vld [vmem:[%s7 + $0x30] sm:$0xf]
      %v7676 = vld [vmem:[%s7 + $0x38] sm:$0xf]
      %v7677 = vld [vmem:[%s7 + $0x40] sm:$0xf]
      %v7678 = vld [vmem:[%s7 + $0x48] sm:$0xf]
      %v7679 = vld [vmem:[%s8] sm:$0xff]
      %v7680 = vld [vmem:[%s8 + $0x8] sm:$0xf]
      %vm7681 = vcmask 523264
      %v7683 = vsel %vm7681, %v7669, 0
      %v7686 = vsel %vm7681, %v7674, 0
      %7688 = vmatpush.msra.mxu0 0.0
      %7689 = vmatpush.msra.mxu0 0.0
      %7690 = vmatpush.msra.mxu0 0.0
      %7691 = vmatpush.msra.mxu0 0.0
      %7692 = vmatpush.msra.mxu0 0.0
      %7693 = vmatpush.msra.mxu0 0.0
      %7694 = vmatpush.msra.mxu0 0.0
      %7695 = vmatpush.msra.mxu0 0.0
      %7696 = vmatpush.msra.mxu0 %v7666
      %7697 = vmatpush.msra.mxu0 %v7663
      %7698 = vmatpush.msra.mxu0 %v7660
      %7699 = vmatpush.msra.mxu0 %v7657
      %7700 = vmatpush.msra.mxu0 %v7654
      %7701 = vmatpush.msra.mxu0 %v7651
      %7702 = vmatpush.msra.mxu0 %v7648
      %7703 = vmatpush.msra.mxu0 %v7645
      %7704 = vmatmul.f32.gmra.mxu0 %v7683
      %v7705 = vpop.f32.mrf.mxu0
      %v7706 = vadd.f32 0.0, %v7705
      %7707 = vmatmul.f32.gmra.mxu0 %v7686
      %v7708 = vpop.f32.mrf.mxu0
      %v7709 = vadd.f32 0.0, %v7708
      %7710 = vdwg.mxu0
      %v7711 = vadd.f32 %v7679, %v7706
      %v7712 = vadd.f32 %v7680, %v7709
      %7713 = vrot.lane.b32.xlu0 %v7669, 64
      %v7714 = vpop.permute.xlu0 %7713
      %7715 = vrot.lane.b32.xlu0 %v7674, 64
      %v7716 = vpop.permute.xlu0 %7715
      %7725 = vrot.lane.b32.xlu0 %v7645, 120
      %v7726 = vpop.permute.xlu0 %7725
      %7727 = vrot.lane.b32.xlu0 %v7648, 120
      %v7728 = vpop.permute.xlu0 %7727
      %7729 = vrot.lane.b32.xlu0 %v7651, 120
      %v7730 = vpop.permute.xlu0 %7729
      %7731 = vrot.lane.b32.xlu0 %v7654, 120
      %v7732 = vpop.permute.xlu0 %7731
      %7733 = vrot.lane.b32.xlu0 %v7657, 120
      %v7734 = vpop.permute.xlu0 %7733
      %7735 = vrot.lane.b32.xlu0 %v7660, 120
      %v7736 = vpop.permute.xlu0 %7735
      %7737 = vrot.lane.b32.xlu0 %v7663, 120
      %v7738 = vpop.permute.xlu0 %7737
      %7739 = vrot.lane.b32.xlu0 %v7666, 120
      %v7740 = vpop.permute.xlu0 %7739
      %v7749 = vsel %vm7681, %v7714, 0
      %v7751 = vsel %vm7681, %v7716, 0
      %7753 = vmatpush.msra.mxu0 0.0
      %7754 = vmatpush.msra.mxu0 0.0
      %7755 = vmatpush.msra.mxu0 0.0
      %7756 = vmatpush.msra.mxu0 0.0
      %7757 = vmatpush.msra.mxu0 0.0
      %7758 = vmatpush.msra.mxu0 0.0
      %7759 = vmatpush.msra.mxu0 0.0
      %7760 = vmatpush.msra.mxu0 0.0
      %7761 = vmatpush.msra.mxu0 %v7740
      %7762 = vmatpush.msra.mxu0 %v7738
      %7763 = vmatpush.msra.mxu0 %v7736
      %7764 = vmatpush.msra.mxu0 %v7734
      %7765 = vmatpush.msra.mxu0 %v7732
      %7766 = vmatpush.msra.mxu0 %v7730
      %7767 = vmatpush.msra.mxu0 %v7728
      %7768 = vmatpush.msra.mxu0 %v7726
      %7769 = vmatmul.f32.gmra.mxu0 %v7749
      %v7770 = vpop.f32.mrf.mxu0
      %v7771 = vadd.f32 0.0, %v7770
      %7772 = vmatmul.f32.gmra.mxu0 %v7751
      %v7773 = vpop.f32.mrf.mxu0
      %v7774 = vadd.f32 0.0, %v7773
      %7775 = vdwg.mxu0
      %v7776 = vadd.f32 %v7711, %v7771
      %v7777 = vadd.f32 %v7712, %v7774
      %7778 = vrot.lane.b32.xlu0 %v7645, 112
      %v7779 = vpop.permute.xlu0 %7778
      %7780 = vrot.lane.b32.xlu0 %v7648, 112
      %v7781 = vpop.permute.xlu0 %7780
      %7782 = vrot.lane.b32.xlu0 %v7651, 112
      %v7783 = vpop.permute.xlu0 %7782
      %7784 = vrot.lane.b32.xlu0 %v7654, 112
      %v7785 = vpop.permute.xlu0 %7784
      %7786 = vrot.lane.b32.xlu0 %v7657, 112
      %v7787 = vpop.permute.xlu0 %7786
      %7788 = vrot.lane.b32.xlu0 %v7660, 112
      %v7789 = vpop.permute.xlu0 %7788
      %7790 = vrot.lane.b32.xlu0 %v7663, 112
      %v7791 = vpop.permute.xlu0 %7790
      %7792 = vrot.lane.b32.xlu0 %v7666, 112
      %v7793 = vpop.permute.xlu0 %7792
      %v7803 = vsel %vm7681, %v7670, 0
      %v7806 = vsel %vm7681, %v7675, 0
      %7808 = vmatpush.msra.mxu0 0.0
      %7809 = vmatpush.msra.mxu0 0.0
      %7810 = vmatpush.msra.mxu0 0.0
      %7811 = vmatpush.msra.mxu0 0.0
      %7812 = vmatpush.msra.mxu0 0.0
      %7813 = vmatpush.msra.mxu0 0.0
      %7814 = vmatpush.msra.mxu0 0.0
      %7815 = vmatpush.msra.mxu0 0.0
      %7816 = vmatpush.msra.mxu0 %v7793
      %7817 = vmatpush.msra.mxu0 %v7791
      %7818 = vmatpush.msra.mxu0 %v7789
      %7819 = vmatpush.msra.mxu0 %v7787
      %7820 = vmatpush.msra.mxu0 %v7785
      %7821 = vmatpush.msra.mxu0 %v7783
      %7822 = vmatpush.msra.mxu0 %v7781
      %7823 = vmatpush.msra.mxu0 %v7779
      %7824 = vmatmul.f32.gmra.mxu0 %v7803
      %v7825 = vpop.f32.mrf.mxu0
      %v7826 = vadd.f32 0.0, %v7825
      %7827 = vmatmul.f32.gmra.mxu0 %v7806
      %v7828 = vpop.f32.mrf.mxu0
      %v7829 = vadd.f32 0.0, %v7828
      %7830 = vdwg.mxu0
      %v7831 = vadd.f32 %v7776, %v7826
      %v7832 = vadd.f32 %v7777, %v7829
      %7833 = vrot.lane.b32.xlu0 %v7670, 64
      %v7834 = vpop.permute.xlu0 %7833
      %7835 = vrot.lane.b32.xlu0 %v7675, 64
      %v7836 = vpop.permute.xlu0 %7835
      %7845 = vrot.lane.b32.xlu0 %v7646, 32
      %v7846 = vpop.permute.xlu0 %7845
      %7847 = vrot.lane.b32.xlu0 %v7649, 32
      %v7848 = vpop.permute.xlu0 %7847
      %7849 = vrot.lane.b32.xlu0 %v7652, 32
      %v7850 = vpop.permute.xlu0 %7849
      %7851 = vrot.lane.b32.xlu0 %v7655, 32
      %v7852 = vpop.permute.xlu0 %7851
      %7853 = vrot.lane.b32.xlu0 %v7658, 32
      %v7854 = vpop.permute.xlu0 %7853
      %7855 = vrot.lane.b32.xlu0 %v7661, 32
      %v7856 = vpop.permute.xlu0 %7855
      %7857 = vrot.lane.b32.xlu0 %v7664, 32
      %v7858 = vpop.permute.xlu0 %7857
      %7859 = vrot.lane.b32.xlu0 %v7667, 32
      %v7860 = vpop.permute.xlu0 %7859
      %v7869 = vsel %vm7681, %v7834, 0
      %v7871 = vsel %vm7681, %v7836, 0
      %7873 = vmatpush.msra.mxu0 0.0
      %7874 = vmatpush.msra.mxu0 0.0
      %7875 = vmatpush.msra.mxu0 0.0
      %7876 = vmatpush.msra.mxu0 0.0
      %7877 = vmatpush.msra.mxu0 0.0
      %7878 = vmatpush.msra.mxu0 0.0
      %7879 = vmatpush.msra.mxu0 0.0
      %7880 = vmatpush.msra.mxu0 0.0
      %7881 = vmatpush.msra.mxu0 %v7860
      %7882 = vmatpush.msra.mxu0 %v7858
      %7883 = vmatpush.msra.mxu0 %v7856
      %7884 = vmatpush.msra.mxu0 %v7854
      %7885 = vmatpush.msra.mxu0 %v7852
      %7886 = vmatpush.msra.mxu0 %v7850
      %7887 = vmatpush.msra.mxu0 %v7848
      %7888 = vmatpush.msra.mxu0 %v7846
      %7889 = vmatmul.f32.gmra.mxu0 %v7869
      %v7890 = vpop.f32.mrf.mxu0
      %v7891 = vadd.f32 0.0, %v7890
      %7892 = vmatmul.f32.gmra.mxu0 %v7871
      %v7893 = vpop.f32.mrf.mxu0
      %v7894 = vadd.f32 0.0, %v7893
      %7895 = vdwg.mxu0
      %v7896 = vadd.f32 %v7831, %v7891
      %v7897 = vadd.f32 %v7832, %v7894
      %7898 = vrot.lane.b32.xlu0 %v7646, 24
      %v7899 = vpop.permute.xlu0 %7898
      %7900 = vrot.lane.b32.xlu0 %v7649, 24
      %v7901 = vpop.permute.xlu0 %7900
      %7902 = vrot.lane.b32.xlu0 %v7652, 24
      %v7903 = vpop.permute.xlu0 %7902
      %7904 = vrot.lane.b32.xlu0 %v7655, 24
      %v7905 = vpop.permute.xlu0 %7904
      %7906 = vrot.lane.b32.xlu0 %v7658, 24
      %v7907 = vpop.permute.xlu0 %7906
      %7908 = vrot.lane.b32.xlu0 %v7661, 24
      %v7909 = vpop.permute.xlu0 %7908
      %7910 = vrot.lane.b32.xlu0 %v7664, 24
      %v7911 = vpop.permute.xlu0 %7910
      %7912 = vrot.lane.b32.xlu0 %v7667, 24
      %v7913 = vpop.permute.xlu0 %7912
      %v7923 = vsel %vm7681, %v7671, 0
      %v7926 = vsel %vm7681, %v7676, 0
      %7928 = vmatpush.msra.mxu0 0.0
      %7929 = vmatpush.msra.mxu0 0.0
      %7930 = vmatpush.msra.mxu0 0.0
      %7931 = vmatpush.msra.mxu0 0.0
      %7932 = vmatpush.msra.mxu0 0.0
      %7933 = vmatpush.msra.mxu0 0.0
      %7934 = vmatpush.msra.mxu0 0.0
      %7935 = vmatpush.msra.mxu0 0.0
      %7936 = vmatpush.msra.mxu0 %v7913
      %7937 = vmatpush.msra.mxu0 %v7911
      %7938 = vmatpush.msra.mxu0 %v7909
      %7939 = vmatpush.msra.mxu0 %v7907
      %7940 = vmatpush.msra.mxu0 %v7905
      %7941 = vmatpush.msra.mxu0 %v7903
      %7942 = vmatpush.msra.mxu0 %v7901
      %7943 = vmatpush.msra.mxu0 %v7899
      %7944 = vmatmul.f32.gmra.mxu0 %v7923
      %v7945 = vpop.f32.mrf.mxu0
      %v7946 = vadd.f32 0.0, %v7945
      %7947 = vmatmul.f32.gmra.mxu0 %v7926
      %v7948 = vpop.f32.mrf.mxu0
      %v7949 = vadd.f32 0.0, %v7948
      %7950 = vdwg.mxu0
      %v7951 = vadd.f32 %v7896, %v7946
      %v7952 = vadd.f32 %v7897, %v7949
      %7953 = vrot.lane.b32.xlu0 %v7671, 64
      %v7954 = vpop.permute.xlu0 %7953
      %7955 = vrot.lane.b32.xlu0 %v7676, 64
      %v7956 = vpop.permute.xlu0 %7955
      %7957 = vrot.lane.b32.xlu0 %v7646, 16
      %v7958 = vpop.permute.xlu0 %7957
      %7959 = vrot.lane.b32.xlu0 %v7649, 16
      %v7960 = vpop.permute.xlu0 %7959
      %7961 = vrot.lane.b32.xlu0 %v7652, 16
      %v7962 = vpop.permute.xlu0 %7961
      %7963 = vrot.lane.b32.xlu0 %v7655, 16
      %v7964 = vpop.permute.xlu0 %7963
      %7965 = vrot.lane.b32.xlu0 %v7658, 16
      %v7966 = vpop.permute.xlu0 %7965
      %7967 = vrot.lane.b32.xlu0 %v7661, 16
      %v7968 = vpop.permute.xlu0 %7967
      %7969 = vrot.lane.b32.xlu0 %v7664, 16
      %v7970 = vpop.permute.xlu0 %7969
      %7971 = vrot.lane.b32.xlu0 %v7667, 16
      %v7972 = vpop.permute.xlu0 %7971
      %v7981 = vsel %vm7681, %v7954, 0
      %v7983 = vsel %vm7681, %v7956, 0
      %7985 = vmatpush.msra.mxu0 0.0
      %7986 = vmatpush.msra.mxu0 0.0
      %7987 = vmatpush.msra.mxu0 0.0
      %7988 = vmatpush.msra.mxu0 0.0
      %7989 = vmatpush.msra.mxu0 0.0
      %7990 = vmatpush.msra.mxu0 0.0
      %7991 = vmatpush.msra.mxu0 0.0
      %7992 = vmatpush.msra.mxu0 0.0
      %7993 = vmatpush.msra.mxu0 %v7972
      %7994 = vmatpush.msra.mxu0 %v7970
      %7995 = vmatpush.msra.mxu0 %v7968
      %7996 = vmatpush.msra.mxu0 %v7966
      %7997 = vmatpush.msra.mxu0 %v7964
      %7998 = vmatpush.msra.mxu0 %v7962
      %7999 = vmatpush.msra.mxu0 %v7960
      %8000 = vmatpush.msra.mxu0 %v7958
      %8001 = vmatmul.f32.gmra.mxu0 %v7981
      %v8002 = vpop.f32.mrf.mxu0
      %v8003 = vadd.f32 0.0, %v8002
      %8004 = vmatmul.f32.gmra.mxu0 %v7983
      %v8005 = vpop.f32.mrf.mxu0
      %v8006 = vadd.f32 0.0, %v8005
      %8007 = vdwg.mxu0
      %v8008 = vadd.f32 %v7951, %v8003
      %v8009 = vadd.f32 %v7952, %v8006
      %8018 = vrot.lane.b32.xlu0 %v7647, 64
      %v8019 = vpop.permute.xlu0 %8018
      %8020 = vrot.lane.b32.xlu0 %v7650, 64
      %v8021 = vpop.permute.xlu0 %8020
      %8022 = vrot.lane.b32.xlu0 %v7653, 64
      %v8023 = vpop.permute.xlu0 %8022
      %8024 = vrot.lane.b32.xlu0 %v7656, 64
      %v8025 = vpop.permute.xlu0 %8024
      %8026 = vrot.lane.b32.xlu0 %v7659, 64
      %v8027 = vpop.permute.xlu0 %8026
      %8028 = vrot.lane.b32.xlu0 %v7662, 64
      %v8029 = vpop.permute.xlu0 %8028
      %8030 = vrot.lane.b32.xlu0 %v7665, 64
      %v8031 = vpop.permute.xlu0 %8030
      %8032 = vrot.lane.b32.xlu0 %v7668, 64
      %v8033 = vpop.permute.xlu0 %8032
      %v8043 = vsel %vm7681, %v7672, 0
      %v8046 = vsel %vm7681, %v7677, 0
      %8048 = vmatpush.msra.mxu0 0.0
      %8049 = vmatpush.msra.mxu0 0.0
      %8050 = vmatpush.msra.mxu0 0.0
      %8051 = vmatpush.msra.mxu0 0.0
      %8052 = vmatpush.msra.mxu0 0.0
      %8053 = vmatpush.msra.mxu0 0.0
      %8054 = vmatpush.msra.mxu0 0.0
      %8055 = vmatpush.msra.mxu0 0.0
      %8056 = vmatpush.msra.mxu0 %v8033
      %8057 = vmatpush.msra.mxu0 %v8031
      %8058 = vmatpush.msra.mxu0 %v8029
      %8059 = vmatpush.msra.mxu0 %v8027
      %8060 = vmatpush.msra.mxu0 %v8025
      %8061 = vmatpush.msra.mxu0 %v8023
      %8062 = vmatpush.msra.mxu0 %v8021
      %8063 = vmatpush.msra.mxu0 %v8019
      %8064 = vmatmul.f32.gmra.mxu0 %v8043
      %v8065 = vpop.f32.mrf.mxu0
      %v8066 = vadd.f32 0.0, %v8065
      %8067 = vmatmul.f32.gmra.mxu0 %v8046
      %v8068 = vpop.f32.mrf.mxu0
      %v8069 = vadd.f32 0.0, %v8068
      %8070 = vdwg.mxu0
      %v8071 = vadd.f32 %v8008, %v8066
      %v8072 = vadd.f32 %v8009, %v8069
      %8073 = vrot.lane.b32.xlu0 %v7672, 64
      %v8074 = vpop.permute.xlu0 %8073
      %8075 = vrot.lane.b32.xlu0 %v7677, 64
      %v8076 = vpop.permute.xlu0 %8075
      %8077 = vrot.lane.b32.xlu0 %v7647, 56
      %v8078 = vpop.permute.xlu0 %8077
      %8079 = vrot.lane.b32.xlu0 %v7650, 56
      %v8080 = vpop.permute.xlu0 %8079
      %8081 = vrot.lane.b32.xlu0 %v7653, 56
      %v8082 = vpop.permute.xlu0 %8081
      %8083 = vrot.lane.b32.xlu0 %v7656, 56
      %v8084 = vpop.permute.xlu0 %8083
      %8085 = vrot.lane.b32.xlu0 %v7659, 56
      %v8086 = vpop.permute.xlu0 %8085
      %8087 = vrot.lane.b32.xlu0 %v7662, 56
      %v8088 = vpop.permute.xlu0 %8087
      %8089 = vrot.lane.b32.xlu0 %v7665, 56
      %v8090 = vpop.permute.xlu0 %8089
      %8091 = vrot.lane.b32.xlu0 %v7668, 56
      %v8092 = vpop.permute.xlu0 %8091
      %v8101 = vsel %vm7681, %v8074, 0
      %v8103 = vsel %vm7681, %v8076, 0
      %8105 = vmatpush.msra.mxu0 0.0
      %8106 = vmatpush.msra.mxu0 0.0
      %8107 = vmatpush.msra.mxu0 0.0
      %8108 = vmatpush.msra.mxu0 0.0
      %8109 = vmatpush.msra.mxu0 0.0
      %8110 = vmatpush.msra.mxu0 0.0
      %8111 = vmatpush.msra.mxu0 0.0
      %8112 = vmatpush.msra.mxu0 0.0
      %8113 = vmatpush.msra.mxu0 %v8092
      %8114 = vmatpush.msra.mxu0 %v8090
      %8115 = vmatpush.msra.mxu0 %v8088
      %8116 = vmatpush.msra.mxu0 %v8086
      %8117 = vmatpush.msra.mxu0 %v8084
      %8118 = vmatpush.msra.mxu0 %v8082
      %8119 = vmatpush.msra.mxu0 %v8080
      %8120 = vmatpush.msra.mxu0 %v8078
      %8121 = vmatmul.f32.gmra.mxu0 %v8101
      %v8122 = vpop.f32.mrf.mxu0
      %v8123 = vadd.f32 0.0, %v8122
      %8124 = vmatmul.f32.gmra.mxu0 %v8103
      %v8125 = vpop.f32.mrf.mxu0
      %v8126 = vadd.f32 0.0, %v8125
      %8127 = vdwg.mxu0
      %v8128 = vadd.f32 %v8071, %v8123
      %v8129 = vadd.f32 %v8072, %v8126
      %8130 = vrot.lane.b32.xlu0 %v7647, 48
      %v8131 = vpop.permute.xlu0 %8130
      %8132 = vrot.lane.b32.xlu0 %v7650, 48
      %v8133 = vpop.permute.xlu0 %8132
      %8134 = vrot.lane.b32.xlu0 %v7653, 48
      %v8135 = vpop.permute.xlu0 %8134
      %8136 = vrot.lane.b32.xlu0 %v7656, 48
      %v8137 = vpop.permute.xlu0 %8136
      %8138 = vrot.lane.b32.xlu0 %v7659, 48
      %v8139 = vpop.permute.xlu0 %8138
      %8140 = vrot.lane.b32.xlu0 %v7662, 48
      %v8141 = vpop.permute.xlu0 %8140
      %8142 = vrot.lane.b32.xlu0 %v7665, 48
      %v8143 = vpop.permute.xlu0 %8142
      %8144 = vrot.lane.b32.xlu0 %v7668, 48
      %v8145 = vpop.permute.xlu0 %8144
      %v8155 = vsel %vm7681, %v7673, 0
      %v8158 = vsel %vm7681, %v7678, 0
      %8160 = vmatpush.msra.mxu0 0.0
      %8161 = vmatpush.msra.mxu0 0.0
      %8162 = vmatpush.msra.mxu0 0.0
      %8163 = vmatpush.msra.mxu0 0.0
      %8164 = vmatpush.msra.mxu0 0.0
      %8165 = vmatpush.msra.mxu0 0.0
      %8166 = vmatpush.msra.mxu0 0.0
      %8167 = vmatpush.msra.mxu0 0.0
      %8168 = vmatpush.msra.mxu0 %v8145
      %8169 = vmatpush.msra.mxu0 %v8143
      %8170 = vmatpush.msra.mxu0 %v8141
      %8171 = vmatpush.msra.mxu0 %v8139
      %8172 = vmatpush.msra.mxu0 %v8137
      %8173 = vmatpush.msra.mxu0 %v8135
      %8174 = vmatpush.msra.mxu0 %v8133
      %8175 = vmatpush.msra.mxu0 %v8131
      %8176 = vmatmul.f32.gmra.mxu0 %v8155
      %v8177 = vpop.f32.mrf.mxu0
      %v8178 = vadd.f32 0.0, %v8177
      %8179 = vmatmul.f32.gmra.mxu0 %v8158
      %v8180 = vpop.f32.mrf.mxu0
      %v8181 = vadd.f32 0.0, %v8180
      %8182 = vdwg.mxu0
      %v8183 = vadd.f32 %v8128, %v8178
      %v8184 = vadd.f32 %v8129, %v8181
      %vm8185 = vcmask 7168
      %8186 = vst.msk [vmem:[%s383] sm:$0xff] %vm8185, %v8183
      %vm8187 = vcmask 3072
      %8188 = vst.msk [vmem:[%s383 + $0x8] sm:$0xf] %vm8187, %v8184
      %p8189 = scmp.lt.s32.totalorder %s22, 1
      %s8190 = scalar_select %p8189, %s22, 1
      %s8191 = smul.addr %s8190, 2
      %s8192 = smul.addr %s8191, 8
      %s8193 = scalar_lea.vmem %s11, %s8192
      // Predicated region
      $region65: #{encoder_forward.1} parent=63 // pred_check
        %p8194 = pneg %p276
      $region66: #{encoder_forward.1} parent=63 // pred_check_branch
        %8196 = sbr.rel (%p8194) target = $region68
      $region67: #{encoder_forward.1} parent=63 // pred_region
        _
      $region68: #{encoder_forward.1} parent=63 // pred_fallthru
        _
    $region64: #{encoder_forward.1} parent=5 // pred_fallthru
      _
    %p8197 = scmp.le.s32.totalorder 2, %s17
    // Predicated region
    $region69: #{encoder_forward.1} parent=5 // pred_check
      %p8198 = pneg %p8197
    $region70: #{encoder_forward.1} parent=5 // pred_check_branch
      %8200 = sbr.rel (%p8198) target = $region72
    $region71: #{encoder_forward.1} parent=5 // pred_region
      %s8201 = ssub.s32 %s17, 2
      // Predicated region
      $region73: #{encoder_forward.1} parent=71 // pred_check
        %p8202 = pneg %p282
      $region74: #{encoder_forward.1} parent=71 // pred_check_branch
        %8204 = sbr.rel (%p8202) target = $region76
      $region75: #{encoder_forward.1} parent=71 // pred_region
        %p8205 = scmp.lt.s32.totalorder %s23, 1
        %s8206 = scalar_select %p8205, %s23, 1
        %s8207 = smul.addr %s8206, 2
        %s8208 = smul.addr %s8207, 8
        %s8209 = scalar_lea.vmem %s11, %s8208
      $region76: #{encoder_forward.1} parent=71 // pred_fallthru
        _
    $region72: #{encoder_forward.1} parent=5 // pred_fallthru
      _
  $region6: #{encoder_forward.1} parent=0 // loop_footer
    %s21 = sadd.s32 1, %s17
  $region7: #{encoder_forward.1} parent=0 // loop_footer_branch
    %16 = sbr.rel target = $region3
  $region8: #{encoder_forward.1} parent=0 // loop_exit
    _

</llo_original>
